<compile_context>
chip_gen: v5e
topology: v5e:2x2
jax: 0.10.0
libtpu: 0.0.40
codegen_flags: <defaults>
</compile_context>

<pallas_src>
import jax
import jax.numpy as jnp
from jax.experimental import pallas as pl
from jax.experimental.pallas import tpu as pltpu


def _se_basic_block_kernel(
    x_ref,     # (Bt, H, W, C)  f32  NHWC input block (Bt batch elements)
    w1_ref,    # (9, C, C)      bf16 conv1 weights, tap t = ky*3 + kx
    s1_ref,    # (1, C)         f32  BN1 folded scale
    b1_ref,    # (1, C)         f32  BN1 folded shift
    w2_ref,    # (9, C, C)      bf16 conv2 weights
    s2_ref,    # (1, C)         f32  BN2 folded scale
    b2_ref,    # (1, C)         f32  BN2 folded shift
    fc1_ref,   # (C, Cr)        f32  SE reduce FC (y @ W layout)
    fc2_ref,   # (Cr, C)        f32  SE expand FC
    o_ref,     # (Bt, H, W, C)  f32  output block
    pad_ref,   # scratch (Bt*(H+2)*(W+2), C) bf16 — flat padded activations
):
    Bt, H, W, C = x_ref.shape
    Wp = W + 2
    PP = (H + 2) * Wp               # padded rows per batch element
    M = Bt * PP - (2 * Wp + 2)      # shifted-output rows (valid + junk)
    inv_hw = 1.0 / float(H * W)

    # ---- validity mask over the shifted-output rows -------------------------
    # row r maps to (b, y, x) with q = r % PP, y = q // Wp, x = q % Wp;
    # rows with y >= H or x >= W are junk (they read halo / cross-row data).
    r = jax.lax.broadcasted_iota(jnp.int32, (M, 1), 0)
    q = r % PP
    valid = (q < H * Wp) & ((q % Wp) < W)             # (M, 1) bool
    maskf = valid.astype(jnp.float32)

    # ---- build the flat padded conv1 input (zero halo, bf16 interior) -------
    pad_ref[...] = jnp.zeros_like(pad_ref)
    for b in range(Bt):
        for yy in range(H):
            d0 = b * PP + (yy + 1) * Wp + 1
            pad_ref[d0:d0 + W, :] = x_ref[b, yy].astype(jnp.bfloat16)

    def conv3x3(w_ref):
        # nine accumulating MXU dots; each LHS is a contiguous row-offset view
        # of the flat padded buffer (no gather / patch materialisation).
        acc = None
        for t in range(9):
            off = (t // 3) * Wp + (t % 3)
            d = jnp.dot(pad_ref[off:off + M, :], w_ref[t],
                        preferred_element_type=jnp.float32)
            acc = d if acc is None else acc + d
        return acc                                     # (M, C) f32

    # ---- conv1 -> BN1 (eval) -> ReLU; junk rows forced to zero --------------
    out1 = jnp.maximum(conv3x3(w1_ref) * s1_ref[...] + b1_ref[...], 0.0)
    out1 = jnp.where(valid, out1, 0.0)

    # ---- hand-off to conv2: one shifted store.  Valid rows land on the
    #      interior; masked junk lands exactly on the halo columns. -----------
    pad_ref[Wp + 1:Wp + 1 + M, :] = out1.astype(jnp.bfloat16)

    # ---- conv2 -> BN2 (eval) -------------------------------------------------
    out2 = conv3x3(w2_ref) * s2_ref[...] + b2_ref[...]  # (M, C) f32

    # ---- SE: per-batch masked GAP -> FC -> ReLU -> FC -> sigmoid -------------
    se_scale = []
    for b in range(Bt):
        lo = b * PP
        hi = min(lo + PP, M)
        ysum = jnp.sum(out2[lo:hi, :] * maskf[lo:hi, :], axis=0, keepdims=True)
        se_y = ysum * inv_hw                                       # (1, C)
        se_y = jnp.maximum(
            jnp.dot(se_y, fc1_ref[...], preferred_element_type=jnp.float32), 0.0)
        se_y = jax.nn.sigmoid(
            jnp.dot(se_y, fc2_ref[...], preferred_element_type=jnp.float32))
        se_scale.append(se_y)                                      # (1, C)

    # ---- SE scale + residual + ReLU, extracting only the valid rows ---------
    for b in range(Bt):
        sb = se_scale[b]
        for yy in range(H):
            r0 = b * PP + yy * Wp
            row = out2[r0:r0 + W, :] * sb + x_ref[b, yy]           # (W, C) f32
            o_ref[b, yy] = jnp.maximum(row, 0.0).astype(o_ref.dtype)


def se_basic_block_pallas_nhwc(x_nhwc, params, *, batch_block=1):
    """NHWC-native entry point.  x_nhwc: (B, H, W, C) float32.

    batch_block: batch elements fused into one grid step (stacked along the
      matmul M dimension).  Use 1 on multi-TensorCore chips (v7x) so the batch
      grid axis shards across cores; use B on single-TC chips (v5e/v6e) to
      amortise per-step overhead with one larger MXU dot.
    """
    B, H, W, C = x_nhwc.shape
    assert B % batch_block == 0
    Bt = batch_block
    Cr = params["fc1"].shape[-1]
    PP = (H + 2) * (W + 2)

    # Fold conv weights into per-tap (9, Cin, Cout) layout and bf16 once.
    w1 = params["w1"].reshape(9, C, C).astype(jnp.bfloat16)
    w2 = params["w2"].reshape(9, C, C).astype(jnp.bfloat16)

    def full(shape):
        zeros = (0,) * len(shape)
        return pl.BlockSpec(shape, lambda i, _z=zeros: _z)

    kernel = pl.pallas_call(
        _se_basic_block_kernel,
        out_shape=jax.ShapeDtypeStruct((B, H, W, C), jnp.float32),
        grid=(B // Bt,),
        in_specs=[
            pl.BlockSpec((Bt, H, W, C), lambda i: (i, 0, 0, 0)),   # x
            full((9, C, C)),                                       # w1 (bf16)
            full((1, C)), full((1, C)),                            # bn1 scale/shift
            full((9, C, C)),                                       # w2 (bf16)
            full((1, C)), full((1, C)),                            # bn2 scale/shift
            full((C, Cr)), full((Cr, C)),                          # SE fc1 / fc2
        ],
        out_specs=pl.BlockSpec((Bt, H, W, C), lambda i: (i, 0, 0, 0)),
        scratch_shapes=[pltpu.VMEM((Bt * PP, C), jnp.bfloat16)],
        compiler_params=pltpu.CompilerParams(
            dimension_semantics=("parallel",),   # shards across TCs on v7x
            vmem_limit_bytes=16 << 20,           # ~4x actual footprint, << 64 MiB
        ),
    )
    return kernel(
        x_nhwc, w1,
        params["bn1_scale"], params["bn1_shift"],
        w2, params["bn2_scale"], params["bn2_shift"],
        params["fc1"], params["fc2"],
    )


def se_basic_block_pallas(x_nchw, params, *, batch_block=1):
    """PyTorch-layout wrapper: (B, C, H, W) -> (B, C, H, W).

    The transposes are glue for NCHW parity only; in an NHWC end-to-end network
    they disappear.
    """
    x_nhwc = jnp.transpose(x_nchw, (0, 2, 3, 1))
    out_nhwc = se_basic_block_pallas_nhwc(x_nhwc, params, batch_block=batch_block)
    return jnp.transpose(out_nhwc, (0, 3, 1, 2))


def make_params(key, channels, reduction=16):
    """Deterministic parameter init matching SEBasicBlock(inplanes=planes=C)."""
    C = channels
    Cr = max(C // reduction, 1)
    eps = 1e-5
    ks = jax.random.split(key, 10)

    # conv3x3 weights, stored HWIO (3, 3, Cin, Cout)
    w1 = 0.1 * jax.random.normal(ks[0], (3, 3, C, C), jnp.float32)
    w2 = 0.1 * jax.random.normal(ks[1], (3, 3, C, C), jnp.float32)

    def bn_fold(kg, kb, km, kv):
        gamma = 1.0 + 0.1 * jax.random.normal(kg, (C,), jnp.float32)
        beta = 0.05 * jax.random.normal(kb, (C,), jnp.float32)
        rmean = 0.02 * jax.random.normal(km, (C,), jnp.float32)
        rvar = 1.0 + 0.1 * jnp.abs(jax.random.normal(kv, (C,), jnp.float32))
        scale = gamma / jnp.sqrt(rvar + eps)
        shift = beta - rmean * scale
        return scale.reshape(1, C), shift.reshape(1, C)

    bn1_scale, bn1_shift = bn_fold(ks[2], ks[3], ks[4], ks[5])
    bn2_scale, bn2_shift = bn_fold(ks[6], ks[7], ks[8], ks[9])

    # SE fc layers (no bias). PyTorch Linear computes y @ W.T; we store W.T.
    k_fc1, k_fc2 = jax.random.split(jax.random.fold_in(key, 123))
    fc1 = 0.2 * jax.random.normal(k_fc1, (C, Cr), jnp.float32)   # reduce
    fc2 = 0.2 * jax.random.normal(k_fc2, (Cr, C), jnp.float32)   # expand

    return dict(w1=w1, w2=w2,
                bn1_scale=bn1_scale, bn1_shift=bn1_shift,
                bn2_scale=bn2_scale, bn2_shift=bn2_shift,
                fc1=fc1, fc2=fc2)


def se_basic_block_reference(x_nchw, params):
    """Pure-JAX reference with the same bf16-input / f32-accumulate convs."""
    x = jnp.transpose(x_nchw, (0, 2, 3, 1))

    def conv3x3(v, w):
        return jax.lax.conv_general_dilated(
            v.astype(jnp.bfloat16), w.astype(jnp.bfloat16),
            window_strides=(1, 1), padding="SAME",
            dimension_numbers=("NHWC", "HWIO", "NHWC"),
            preferred_element_type=jnp.float32)

    out = conv3x3(x, params["w1"]) * params["bn1_scale"] + params["bn1_shift"]
    out = jnp.maximum(out, 0.0)
    out = conv3x3(out, params["w2"]) * params["bn2_scale"] + params["bn2_shift"]
    y = out.mean(axis=(1, 2))
    y = jnp.maximum(y @ params["fc1"], 0.0)
    y = jax.nn.sigmoid(y @ params["fc2"])
    out = out * y[:, None, None, :]
    out = jnp.maximum(out + x, 0.0)
    return jnp.transpose(out, (0, 3, 1, 2))


if __name__ == "__main__":
    # SEBasicBlock(128, 128) — the first SE block in Inception_AttentionNet.
    B, C, H, W = 2, 128, 16, 16
    key = jax.random.PRNGKey(0)
    k_x, k_p = jax.random.split(key)

    x = jax.random.normal(k_x, (B, C, H, W), jnp.float32)
    params = make_params(k_p, C, reduction=16)

    ref = jax.block_until_ready(se_basic_block_reference(x, params))

    # batch_block=1: grid=(B,), batch axis shards across TensorCores (v7x).
    out_a = jax.block_until_ready(
        se_basic_block_pallas(x, params, batch_block=1))
    # batch_block=B: one grid step, all batch elements stacked along the matmul
    # M dimension (preferred on single-TensorCore chips: v5e / v6e).
    out_b = jax.block_until_ready(
        se_basic_block_pallas(x, params, batch_block=B))

    assert out_a.shape == (B, C, H, W)
    # Kernel and reference both use bf16 MXU inputs with f32 accumulation; the
    # residual difference is f32 reassociation only.
    err_a = float(jnp.max(jnp.abs(out_a - ref)))
    err_b = float(jnp.max(jnp.abs(out_b - ref)))
    assert err_a < 2e-2, f"batch_block=1 mismatch vs reference: {err_a}"
    assert err_b < 2e-2, f"batch_block={B} mismatch vs reference: {err_b}"

    print("KERNEL_OK")
</pallas_src>

<mosaic_0001>
module attributes {stable_mosaic.version = 11 : i64} {
  func.func @_se_basic_block_kernel(%arg0: i32, %arg1: memref<1x16x16x128xf32, #tpu.memory_space<vmem>>, %arg2: memref<9x128x128xbf16, #tpu.memory_space<vmem>>, %arg3: memref<1x128xf32, #tpu.memory_space<vmem>>, %arg4: memref<1x128xf32, #tpu.memory_space<vmem>>, %arg5: memref<9x128x128xbf16, #tpu.memory_space<vmem>>, %arg6: memref<1x128xf32, #tpu.memory_space<vmem>>, %arg7: memref<1x128xf32, #tpu.memory_space<vmem>>, %arg8: memref<128x8xf32, #tpu.memory_space<vmem>>, %arg9: memref<8x128xf32, #tpu.memory_space<vmem>>, %arg10: memref<1x16x16x128xf32, #tpu.memory_space<vmem>>, %arg11: memref<324x128xbf16, #tpu.memory_space<vmem>>) attributes {dimension_semantics = [#tpu.dimension_semantics<parallel>], iteration_bounds = array<i64: 2>, scalar_prefetch = 0 : i64, scratch_operands = 1 : i64, tpu.core_type = #tpu.core_type<tc>, window_params = [{transform_indices = @transform_0, window_bounds = array<i64: 1, 16, 16, 128>}, {pipeline_mode = #tpu.pipeline_mode<synchronous>, transform_indices = @transform_1, window_bounds = array<i64: 9, 128, 128>}, {pipeline_mode = #tpu.pipeline_mode<synchronous>, transform_indices = @transform_2, window_bounds = array<i64: 1, 128>}, {pipeline_mode = #tpu.pipeline_mode<synchronous>, transform_indices = @transform_3, window_bounds = array<i64: 1, 128>}, {pipeline_mode = #tpu.pipeline_mode<synchronous>, transform_indices = @transform_4, window_bounds = array<i64: 9, 128, 128>}, {pipeline_mode = #tpu.pipeline_mode<synchronous>, transform_indices = @transform_5, window_bounds = array<i64: 1, 128>}, {pipeline_mode = #tpu.pipeline_mode<synchronous>, transform_indices = @transform_6, window_bounds = array<i64: 1, 128>}, {pipeline_mode = #tpu.pipeline_mode<synchronous>, transform_indices = @transform_7, window_bounds = array<i64: 128, 8>}, {pipeline_mode = #tpu.pipeline_mode<synchronous>, transform_indices = @transform_8, window_bounds = array<i64: 8, 128>}, {transform_indices = @transform_9, window_bounds = array<i64: 1, 16, 16, 128>}]} {
    %0 = tpu.iota {dimensions = array<i32: 0>} : vector<286x1xi32>
    %c324_i32 = arith.constant 324 : i32
    %c0_i32 = arith.constant 0 : i32
    %1 = arith.cmpi eq, %c324_i32, %c0_i32 : i32
    %c1_i32 = arith.constant 1 : i32
    %2 = arith.select %1, %c1_i32, %c324_i32 : i32
    %3 = vector.broadcast %2 : i32 to vector<286x1xi32>
    %4 = arith.remsi %0, %3 : vector<286x1xi32>
    %c0_i32_0 = arith.constant 0 : i32
    %5 = vector.broadcast %c0_i32_0 : i32 to vector<286x1xi32>
    %6 = arith.cmpi ne, %4, %5 : vector<286x1xi32>
    %c0_i32_1 = arith.constant 0 : i32
    %7 = vector.broadcast %c0_i32_1 : i32 to vector<286x1xi32>
    %8 = arith.cmpi slt, %4, %7 : vector<286x1xi32>
    %c0_i32_2 = arith.constant 0 : i32
    %9 = arith.cmpi slt, %2, %c0_i32_2 : i32
    %10 = vector.broadcast %9 : i1 to vector<286x1xi1>
    %11 = vector.broadcast %10 : vector<286x1xi1> to vector<286x1xi1>
    %12 = arith.xori %8, %11 : vector<286x1xi1>
    %13 = arith.andi %12, %6 : vector<286x1xi1>
    %14 = vector.broadcast %2 : i32 to vector<286x1xi32>
    %15 = arith.addi %4, %14 : vector<286x1xi32>
    %16 = arith.select %13, %15, %4 : vector<286x1xi1>, vector<286x1xi32>
    %c288_i32 = arith.constant 288 : i32
    %17 = vector.broadcast %c288_i32 : i32 to vector<286x1xi32>
    %18 = arith.cmpi slt, %16, %17 : vector<286x1xi32>
    %c18_i32 = arith.constant 18 : i32
    %c0_i32_3 = arith.constant 0 : i32
    %19 = arith.cmpi eq, %c18_i32, %c0_i32_3 : i32
    %c1_i32_4 = arith.constant 1 : i32
    %20 = arith.select %19, %c1_i32_4, %c18_i32 : i32
    %21 = vector.broadcast %20 : i32 to vector<286x1xi32>
    %22 = arith.remsi %16, %21 : vector<286x1xi32>
    %c0_i32_5 = arith.constant 0 : i32
    %23 = vector.broadcast %c0_i32_5 : i32 to vector<286x1xi32>
    %24 = arith.cmpi ne, %22, %23 : vector<286x1xi32>
    %c0_i32_6 = arith.constant 0 : i32
    %25 = vector.broadcast %c0_i32_6 : i32 to vector<286x1xi32>
    %26 = arith.cmpi slt, %22, %25 : vector<286x1xi32>
    %c0_i32_7 = arith.constant 0 : i32
    %27 = arith.cmpi slt, %20, %c0_i32_7 : i32
    %28 = vector.broadcast %27 : i1 to vector<286x1xi1>
    %29 = vector.broadcast %28 : vector<286x1xi1> to vector<286x1xi1>
    %30 = arith.xori %26, %29 : vector<286x1xi1>
    %31 = arith.andi %30, %24 : vector<286x1xi1>
    %32 = vector.broadcast %20 : i32 to vector<286x1xi32>
    %33 = arith.addi %22, %32 : vector<286x1xi32>
    %34 = arith.select %31, %33, %22 : vector<286x1xi1>, vector<286x1xi32>
    %c16_i32 = arith.constant 16 : i32
    %35 = vector.broadcast %c16_i32 : i32 to vector<286x1xi32>
    %36 = arith.cmpi slt, %34, %35 : vector<286x1xi32>
    %37 = arith.andi %18, %36 : vector<286x1xi1>
    %38 = arith.extui %37 : vector<286x1xi1> to vector<286x1xi32>
    %39 = arith.sitofp %38 : vector<286x1xi32> to vector<286x1xf32>
    %cst = arith.constant 0.000000e+00 : bf16
    %40 = vector.broadcast %cst : bf16 to vector<324x128xbf16>
    %c0 = arith.constant 0 : index
    %c0_8 = arith.constant 0 : index
    %41 = vector.load %arg11[%c0, %c0_8] : memref<324x128xbf16, #tpu.memory_space<vmem>>, vector<324x128xbf16>
    tpu.vector_store %arg11[%c0, %c0_8], %40 {strides = array<i32>} : memref<324x128xbf16, #tpu.memory_space<vmem>>, vector<324x128xbf16>,
    %c0_9 = arith.constant 0 : index
    %c0_10 = arith.constant 0 : index
    %c0_11 = arith.constant 0 : index
    %c0_12 = arith.constant 0 : index
    %42 = vector.load %arg1[%c0_9, %c0_10, %c0_11, %c0_12] : memref<1x16x16x128xf32, #tpu.memory_space<vmem>>, vector<1x1x16x128xf32>
    %43 = vector.shape_cast %42 : vector<1x1x16x128xf32> to vector<16x128xf32>
    %44 = arith.truncf %43 : vector<16x128xf32> to vector<16x128xbf16>
    %c19 = arith.constant 19 : index
    %c0_13 = arith.constant 0 : index
    %45 = vector.load %arg11[%c19, %c0_13] : memref<324x128xbf16, #tpu.memory_space<vmem>>, vector<16x128xbf16>
    tpu.vector_store %arg11[%c19, %c0_13], %44 {strides = array<i32>} : memref<324x128xbf16, #tpu.memory_space<vmem>>, vector<16x128xbf16>,
    %c0_14 = arith.constant 0 : index
    %c1 = arith.constant 1 : index
    %c0_15 = arith.constant 0 : index
    %c0_16 = arith.constant 0 : index
    %46 = vector.load %arg1[%c0_14, %c1, %c0_15, %c0_16] : memref<1x16x16x128xf32, #tpu.memory_space<vmem>>, vector<1x1x16x128xf32>
    %47 = vector.shape_cast %46 : vector<1x1x16x128xf32> to vector<16x128xf32>
    %48 = arith.truncf %47 : vector<16x128xf32> to vector<16x128xbf16>
    %c37 = arith.constant 37 : index
    %c0_17 = arith.constant 0 : index
    %49 = vector.load %arg11[%c37, %c0_17] : memref<324x128xbf16, #tpu.memory_space<vmem>>, vector<16x128xbf16>
    tpu.vector_store %arg11[%c37, %c0_17], %48 {strides = array<i32>} : memref<324x128xbf16, #tpu.memory_space<vmem>>, vector<16x128xbf16>,
    %c0_18 = arith.constant 0 : index
    %c2 = arith.constant 2 : index
    %c0_19 = arith.constant 0 : index
    %c0_20 = arith.constant 0 : index
    %50 = vector.load %arg1[%c0_18, %c2, %c0_19, %c0_20] : memref<1x16x16x128xf32, #tpu.memory_space<vmem>>, vector<1x1x16x128xf32>
    %51 = vector.shape_cast %50 : vector<1x1x16x128xf32> to vector<16x128xf32>
    %52 = arith.truncf %51 : vector<16x128xf32> to vector<16x128xbf16>
    %c55 = arith.constant 55 : index
    %c0_21 = arith.constant 0 : index
    %53 = vector.load %arg11[%c55, %c0_21] : memref<324x128xbf16, #tpu.memory_space<vmem>>, vector<16x128xbf16>
    tpu.vector_store %arg11[%c55, %c0_21], %52 {strides = array<i32>} : memref<324x128xbf16, #tpu.memory_space<vmem>>, vector<16x128xbf16>,
    %c0_22 = arith.constant 0 : index
    %c3 = arith.constant 3 : index
    %c0_23 = arith.constant 0 : index
    %c0_24 = arith.constant 0 : index
    %54 = vector.load %arg1[%c0_22, %c3, %c0_23, %c0_24] : memref<1x16x16x128xf32, #tpu.memory_space<vmem>>, vector<1x1x16x128xf32>
    %55 = vector.shape_cast %54 : vector<1x1x16x128xf32> to vector<16x128xf32>
    %56 = arith.truncf %55 : vector<16x128xf32> to vector<16x128xbf16>
    %c73 = arith.constant 73 : index
    %c0_25 = arith.constant 0 : index
    %57 = vector.load %arg11[%c73, %c0_25] : memref<324x128xbf16, #tpu.memory_space<vmem>>, vector<16x128xbf16>
    tpu.vector_store %arg11[%c73, %c0_25], %56 {strides = array<i32>} : memref<324x128xbf16, #tpu.memory_space<vmem>>, vector<16x128xbf16>,
    %c0_26 = arith.constant 0 : index
    %c4 = arith.constant 4 : index
    %c0_27 = arith.constant 0 : index
    %c0_28 = arith.constant 0 : index
    %58 = vector.load %arg1[%c0_26, %c4, %c0_27, %c0_28] : memref<1x16x16x128xf32, #tpu.memory_space<vmem>>, vector<1x1x16x128xf32>
    %59 = vector.shape_cast %58 : vector<1x1x16x128xf32> to vector<16x128xf32>
    %60 = arith.truncf %59 : vector<16x128xf32> to vector<16x128xbf16>
    %c91 = arith.constant 91 : index
    %c0_29 = arith.constant 0 : index
    %61 = vector.load %arg11[%c91, %c0_29] : memref<324x128xbf16, #tpu.memory_space<vmem>>, vector<16x128xbf16>
    tpu.vector_store %arg11[%c91, %c0_29], %60 {strides = array<i32>} : memref<324x128xbf16, #tpu.memory_space<vmem>>, vector<16x128xbf16>,
    %c0_30 = arith.constant 0 : index
    %c5 = arith.constant 5 : index
    %c0_31 = arith.constant 0 : index
    %c0_32 = arith.constant 0 : index
    %62 = vector.load %arg1[%c0_30, %c5, %c0_31, %c0_32] : memref<1x16x16x128xf32, #tpu.memory_space<vmem>>, vector<1x1x16x128xf32>
    %63 = vector.shape_cast %62 : vector<1x1x16x128xf32> to vector<16x128xf32>
    %64 = arith.truncf %63 : vector<16x128xf32> to vector<16x128xbf16>
    %c109 = arith.constant 109 : index
    %c0_33 = arith.constant 0 : index
    %65 = vector.load %arg11[%c109, %c0_33] : memref<324x128xbf16, #tpu.memory_space<vmem>>, vector<16x128xbf16>
    tpu.vector_store %arg11[%c109, %c0_33], %64 {strides = array<i32>} : memref<324x128xbf16, #tpu.memory_space<vmem>>, vector<16x128xbf16>,
    %c0_34 = arith.constant 0 : index
    %c6 = arith.constant 6 : index
    %c0_35 = arith.constant 0 : index
    %c0_36 = arith.constant 0 : index
    %66 = vector.load %arg1[%c0_34, %c6, %c0_35, %c0_36] : memref<1x16x16x128xf32, #tpu.memory_space<vmem>>, vector<1x1x16x128xf32>
    %67 = vector.shape_cast %66 : vector<1x1x16x128xf32> to vector<16x128xf32>
    %68 = arith.truncf %67 : vector<16x128xf32> to vector<16x128xbf16>
    %c127 = arith.constant 127 : index
    %c0_37 = arith.constant 0 : index
    %69 = vector.load %arg11[%c127, %c0_37] : memref<324x128xbf16, #tpu.memory_space<vmem>>, vector<16x128xbf16>
    tpu.vector_store %arg11[%c127, %c0_37], %68 {strides = array<i32>} : memref<324x128xbf16, #tpu.memory_space<vmem>>, vector<16x128xbf16>,
    %c0_38 = arith.constant 0 : index
    %c7 = arith.constant 7 : index
    %c0_39 = arith.constant 0 : index
    %c0_40 = arith.constant 0 : index
    %70 = vector.load %arg1[%c0_38, %c7, %c0_39, %c0_40] : memref<1x16x16x128xf32, #tpu.memory_space<vmem>>, vector<1x1x16x128xf32>
    %71 = vector.shape_cast %70 : vector<1x1x16x128xf32> to vector<16x128xf32>
    %72 = arith.truncf %71 : vector<16x128xf32> to vector<16x128xbf16>
    %c145 = arith.constant 145 : index
    %c0_41 = arith.constant 0 : index
    %73 = vector.load %arg11[%c145, %c0_41] : memref<324x128xbf16, #tpu.memory_space<vmem>>, vector<16x128xbf16>
    tpu.vector_store %arg11[%c145, %c0_41], %72 {strides = array<i32>} : memref<324x128xbf16, #tpu.memory_space<vmem>>, vector<16x128xbf16>,
    %c0_42 = arith.constant 0 : index
    %c8 = arith.constant 8 : index
    %c0_43 = arith.constant 0 : index
    %c0_44 = arith.constant 0 : index
    %74 = vector.load %arg1[%c0_42, %c8, %c0_43, %c0_44] : memref<1x16x16x128xf32, #tpu.memory_space<vmem>>, vector<1x1x16x128xf32>
    %75 = vector.shape_cast %74 : vector<1x1x16x128xf32> to vector<16x128xf32>
    %76 = arith.truncf %75 : vector<16x128xf32> to vector<16x128xbf16>
    %c163 = arith.constant 163 : index
    %c0_45 = arith.constant 0 : index
    %77 = vector.load %arg11[%c163, %c0_45] : memref<324x128xbf16, #tpu.memory_space<vmem>>, vector<16x128xbf16>
    tpu.vector_store %arg11[%c163, %c0_45], %76 {strides = array<i32>} : memref<324x128xbf16, #tpu.memory_space<vmem>>, vector<16x128xbf16>,
    %c0_46 = arith.constant 0 : index
    %c9 = arith.constant 9 : index
    %c0_47 = arith.constant 0 : index
    %c0_48 = arith.constant 0 : index
    %78 = vector.load %arg1[%c0_46, %c9, %c0_47, %c0_48] : memref<1x16x16x128xf32, #tpu.memory_space<vmem>>, vector<1x1x16x128xf32>
    %79 = vector.shape_cast %78 : vector<1x1x16x128xf32> to vector<16x128xf32>
    %80 = arith.truncf %79 : vector<16x128xf32> to vector<16x128xbf16>
    %c181 = arith.constant 181 : index
    %c0_49 = arith.constant 0 : index
    %81 = vector.load %arg11[%c181, %c0_49] : memref<324x128xbf16, #tpu.memory_space<vmem>>, vector<16x128xbf16>
    tpu.vector_store %arg11[%c181, %c0_49], %80 {strides = array<i32>} : memref<324x128xbf16, #tpu.memory_space<vmem>>, vector<16x128xbf16>,
    %c0_50 = arith.constant 0 : index
    %c10 = arith.constant 10 : index
    %c0_51 = arith.constant 0 : index
    %c0_52 = arith.constant 0 : index
    %82 = vector.load %arg1[%c0_50, %c10, %c0_51, %c0_52] : memref<1x16x16x128xf32, #tpu.memory_space<vmem>>, vector<1x1x16x128xf32>
    %83 = vector.shape_cast %82 : vector<1x1x16x128xf32> to vector<16x128xf32>
    %84 = arith.truncf %83 : vector<16x128xf32> to vector<16x128xbf16>
    %c199 = arith.constant 199 : index
    %c0_53 = arith.constant 0 : index
    %85 = vector.load %arg11[%c199, %c0_53] : memref<324x128xbf16, #tpu.memory_space<vmem>>, vector<16x128xbf16>
    tpu.vector_store %arg11[%c199, %c0_53], %84 {strides = array<i32>} : memref<324x128xbf16, #tpu.memory_space<vmem>>, vector<16x128xbf16>,
    %c0_54 = arith.constant 0 : index
    %c11 = arith.constant 11 : index
    %c0_55 = arith.constant 0 : index
    %c0_56 = arith.constant 0 : index
    %86 = vector.load %arg1[%c0_54, %c11, %c0_55, %c0_56] : memref<1x16x16x128xf32, #tpu.memory_space<vmem>>, vector<1x1x16x128xf32>
    %87 = vector.shape_cast %86 : vector<1x1x16x128xf32> to vector<16x128xf32>
    %88 = arith.truncf %87 : vector<16x128xf32> to vector<16x128xbf16>
    %c217 = arith.constant 217 : index
    %c0_57 = arith.constant 0 : index
    %89 = vector.load %arg11[%c217, %c0_57] : memref<324x128xbf16, #tpu.memory_space<vmem>>, vector<16x128xbf16>
    tpu.vector_store %arg11[%c217, %c0_57], %88 {strides = array<i32>} : memref<324x128xbf16, #tpu.memory_space<vmem>>, vector<16x128xbf16>,
    %c0_58 = arith.constant 0 : index
    %c12 = arith.constant 12 : index
    %c0_59 = arith.constant 0 : index
    %c0_60 = arith.constant 0 : index
    %90 = vector.load %arg1[%c0_58, %c12, %c0_59, %c0_60] : memref<1x16x16x128xf32, #tpu.memory_space<vmem>>, vector<1x1x16x128xf32>
    %91 = vector.shape_cast %90 : vector<1x1x16x128xf32> to vector<16x128xf32>
    %92 = arith.truncf %91 : vector<16x128xf32> to vector<16x128xbf16>
    %c235 = arith.constant 235 : index
    %c0_61 = arith.constant 0 : index
    %93 = vector.load %arg11[%c235, %c0_61] : memref<324x128xbf16, #tpu.memory_space<vmem>>, vector<16x128xbf16>
    tpu.vector_store %arg11[%c235, %c0_61], %92 {strides = array<i32>} : memref<324x128xbf16, #tpu.memory_space<vmem>>, vector<16x128xbf16>,
    %c0_62 = arith.constant 0 : index
    %c13 = arith.constant 13 : index
    %c0_63 = arith.constant 0 : index
    %c0_64 = arith.constant 0 : index
    %94 = vector.load %arg1[%c0_62, %c13, %c0_63, %c0_64] : memref<1x16x16x128xf32, #tpu.memory_space<vmem>>, vector<1x1x16x128xf32>
    %95 = vector.shape_cast %94 : vector<1x1x16x128xf32> to vector<16x128xf32>
    %96 = arith.truncf %95 : vector<16x128xf32> to vector<16x128xbf16>
    %c253 = arith.constant 253 : index
    %c0_65 = arith.constant 0 : index
    %97 = vector.load %arg11[%c253, %c0_65] : memref<324x128xbf16, #tpu.memory_space<vmem>>, vector<16x128xbf16>
    tpu.vector_store %arg11[%c253, %c0_65], %96 {strides = array<i32>} : memref<324x128xbf16, #tpu.memory_space<vmem>>, vector<16x128xbf16>,
    %c0_66 = arith.constant 0 : index
    %c14 = arith.constant 14 : index
    %c0_67 = arith.constant 0 : index
    %c0_68 = arith.constant 0 : index
    %98 = vector.load %arg1[%c0_66, %c14, %c0_67, %c0_68] : memref<1x16x16x128xf32, #tpu.memory_space<vmem>>, vector<1x1x16x128xf32>
    %99 = vector.shape_cast %98 : vector<1x1x16x128xf32> to vector<16x128xf32>
    %100 = arith.truncf %99 : vector<16x128xf32> to vector<16x128xbf16>
    %c271 = arith.constant 271 : index
    %c0_69 = arith.constant 0 : index
    %101 = vector.load %arg11[%c271, %c0_69] : memref<324x128xbf16, #tpu.memory_space<vmem>>, vector<16x128xbf16>
    tpu.vector_store %arg11[%c271, %c0_69], %100 {strides = array<i32>} : memref<324x128xbf16, #tpu.memory_space<vmem>>, vector<16x128xbf16>,
    %c0_70 = arith.constant 0 : index
    %c15 = arith.constant 15 : index
    %c0_71 = arith.constant 0 : index
    %c0_72 = arith.constant 0 : index
    %102 = vector.load %arg1[%c0_70, %c15, %c0_71, %c0_72] : memref<1x16x16x128xf32, #tpu.memory_space<vmem>>, vector<1x1x16x128xf32>
    %103 = vector.shape_cast %102 : vector<1x1x16x128xf32> to vector<16x128xf32>
    %104 = arith.truncf %103 : vector<16x128xf32> to vector<16x128xbf16>
    %c289 = arith.constant 289 : index
    %c0_73 = arith.constant 0 : index
    %105 = vector.load %arg11[%c289, %c0_73] : memref<324x128xbf16, #tpu.memory_space<vmem>>, vector<16x128xbf16>
    tpu.vector_store %arg11[%c289, %c0_73], %104 {strides = array<i32>} : memref<324x128xbf16, #tpu.memory_space<vmem>>, vector<16x128xbf16>,
    %c0_74 = arith.constant 0 : index
    %c0_75 = arith.constant 0 : index
    %106 = vector.load %arg11[%c0_74, %c0_75] : memref<324x128xbf16, #tpu.memory_space<vmem>>, vector<286x128xbf16>
    %c0_76 = arith.constant 0 : index
    %c0_77 = arith.constant 0 : index
    %c0_78 = arith.constant 0 : index
    %107 = vector.load %arg2[%c0_76, %c0_77, %c0_78] : memref<9x128x128xbf16, #tpu.memory_space<vmem>>, vector<1x128x128xbf16>
    %108 = vector.shape_cast %107 : vector<1x128x128xbf16> to vector<128x128xbf16>
    %cst_79 = arith.constant dense<0.000000e+00> : vector<286x128xf32>
    %109 = tpu.matmul %106, %108, %cst_79 {dimension_numbers = #tpu.dot_dimension_numbers<[1], [0], [0], [1], [0, 0, 1, 1], [], []>} : vector<286x128xbf16>, vector<128x128xbf16>, vector<286x128xf32> -> vector<286x128xf32>
    %c1_80 = arith.constant 1 : index
    %c0_81 = arith.constant 0 : index
    %110 = vector.load %arg11[%c1_80, %c0_81] : memref<324x128xbf16, #tpu.memory_space<vmem>>, vector<286x128xbf16>
    %c1_82 = arith.constant 1 : index
    %c0_83 = arith.constant 0 : index
    %c0_84 = arith.constant 0 : index
    %111 = vector.load %arg2[%c1_82, %c0_83, %c0_84] : memref<9x128x128xbf16, #tpu.memory_space<vmem>>, vector<1x128x128xbf16>
    %112 = vector.shape_cast %111 : vector<1x128x128xbf16> to vector<128x128xbf16>
    %cst_85 = arith.constant dense<0.000000e+00> : vector<286x128xf32>
    %113 = tpu.matmul %110, %112, %cst_85 {dimension_numbers = #tpu.dot_dimension_numbers<[1], [0], [0], [1], [0, 0, 1, 1], [], []>} : vector<286x128xbf16>, vector<128x128xbf16>, vector<286x128xf32> -> vector<286x128xf32>
    %114 = arith.addf %109, %113 : vector<286x128xf32>
    %c2_86 = arith.constant 2 : index
    %c0_87 = arith.constant 0 : index
    %115 = vector.load %arg11[%c2_86, %c0_87] : memref<324x128xbf16, #tpu.memory_space<vmem>>, vector<286x128xbf16>
    %c2_88 = arith.constant 2 : index
    %c0_89 = arith.constant 0 : index
    %c0_90 = arith.constant 0 : index
    %116 = vector.load %arg2[%c2_88, %c0_89, %c0_90] : memref<9x128x128xbf16, #tpu.memory_space<vmem>>, vector<1x128x128xbf16>
    %117 = vector.shape_cast %116 : vector<1x128x128xbf16> to vector<128x128xbf16>
    %cst_91 = arith.constant dense<0.000000e+00> : vector<286x128xf32>
    %118 = tpu.matmul %115, %117, %cst_91 {dimension_numbers = #tpu.dot_dimension_numbers<[1], [0], [0], [1], [0, 0, 1, 1], [], []>} : vector<286x128xbf16>, vector<128x128xbf16>, vector<286x128xf32> -> vector<286x128xf32>
    %119 = arith.addf %114, %118 : vector<286x128xf32>
    %c18 = arith.constant 18 : index
    %c0_92 = arith.constant 0 : index
    %120 = vector.load %arg11[%c18, %c0_92] : memref<324x128xbf16, #tpu.memory_space<vmem>>, vector<286x128xbf16>
    %c3_93 = arith.constant 3 : index
    %c0_94 = arith.constant 0 : index
    %c0_95 = arith.constant 0 : index
    %121 = vector.load %arg2[%c3_93, %c0_94, %c0_95] : memref<9x128x128xbf16, #tpu.memory_space<vmem>>, vector<1x128x128xbf16>
    %122 = vector.shape_cast %121 : vector<1x128x128xbf16> to vector<128x128xbf16>
    %cst_96 = arith.constant dense<0.000000e+00> : vector<286x128xf32>
    %123 = tpu.matmul %120, %122, %cst_96 {dimension_numbers = #tpu.dot_dimension_numbers<[1], [0], [0], [1], [0, 0, 1, 1], [], []>} : vector<286x128xbf16>, vector<128x128xbf16>, vector<286x128xf32> -> vector<286x128xf32>
    %124 = arith.addf %119, %123 : vector<286x128xf32>
    %c19_97 = arith.constant 19 : index
    %c0_98 = arith.constant 0 : index
    %125 = vector.load %arg11[%c19_97, %c0_98] : memref<324x128xbf16, #tpu.memory_space<vmem>>, vector<286x128xbf16>
    %c4_99 = arith.constant 4 : index
    %c0_100 = arith.constant 0 : index
    %c0_101 = arith.constant 0 : index
    %126 = vector.load %arg2[%c4_99, %c0_100, %c0_101] : memref<9x128x128xbf16, #tpu.memory_space<vmem>>, vector<1x128x128xbf16>
    %127 = vector.shape_cast %126 : vector<1x128x128xbf16> to vector<128x128xbf16>
    %cst_102 = arith.constant dense<0.000000e+00> : vector<286x128xf32>
    %128 = tpu.matmul %125, %127, %cst_102 {dimension_numbers = #tpu.dot_dimension_numbers<[1], [0], [0], [1], [0, 0, 1, 1], [], []>} : vector<286x128xbf16>, vector<128x128xbf16>, vector<286x128xf32> -> vector<286x128xf32>
    %129 = arith.addf %124, %128 : vector<286x128xf32>
    %c20 = arith.constant 20 : index
    %c0_103 = arith.constant 0 : index
    %130 = vector.load %arg11[%c20, %c0_103] : memref<324x128xbf16, #tpu.memory_space<vmem>>, vector<286x128xbf16>
    %c5_104 = arith.constant 5 : index
    %c0_105 = arith.constant 0 : index
    %c0_106 = arith.constant 0 : index
    %131 = vector.load %arg2[%c5_104, %c0_105, %c0_106] : memref<9x128x128xbf16, #tpu.memory_space<vmem>>, vector<1x128x128xbf16>
    %132 = vector.shape_cast %131 : vector<1x128x128xbf16> to vector<128x128xbf16>
    %cst_107 = arith.constant dense<0.000000e+00> : vector<286x128xf32>
    %133 = tpu.matmul %130, %132, %cst_107 {dimension_numbers = #tpu.dot_dimension_numbers<[1], [0], [0], [1], [0, 0, 1, 1], [], []>} : vector<286x128xbf16>, vector<128x128xbf16>, vector<286x128xf32> -> vector<286x128xf32>
    %134 = arith.addf %129, %133 : vector<286x128xf32>
    %c36 = arith.constant 36 : index
    %c0_108 = arith.constant 0 : index
    %135 = vector.load %arg11[%c36, %c0_108] : memref<324x128xbf16, #tpu.memory_space<vmem>>, vector<286x128xbf16>
    %c6_109 = arith.constant 6 : index
    %c0_110 = arith.constant 0 : index
    %c0_111 = arith.constant 0 : index
    %136 = vector.load %arg2[%c6_109, %c0_110, %c0_111] : memref<9x128x128xbf16, #tpu.memory_space<vmem>>, vector<1x128x128xbf16>
    %137 = vector.shape_cast %136 : vector<1x128x128xbf16> to vector<128x128xbf16>
    %cst_112 = arith.constant dense<0.000000e+00> : vector<286x128xf32>
    %138 = tpu.matmul %135, %137, %cst_112 {dimension_numbers = #tpu.dot_dimension_numbers<[1], [0], [0], [1], [0, 0, 1, 1], [], []>} : vector<286x128xbf16>, vector<128x128xbf16>, vector<286x128xf32> -> vector<286x128xf32>
    %139 = arith.addf %134, %138 : vector<286x128xf32>
    %c37_113 = arith.constant 37 : index
    %c0_114 = arith.constant 0 : index
    %140 = vector.load %arg11[%c37_113, %c0_114] : memref<324x128xbf16, #tpu.memory_space<vmem>>, vector<286x128xbf16>
    %c7_115 = arith.constant 7 : index
    %c0_116 = arith.constant 0 : index
    %c0_117 = arith.constant 0 : index
    %141 = vector.load %arg2[%c7_115, %c0_116, %c0_117] : memref<9x128x128xbf16, #tpu.memory_space<vmem>>, vector<1x128x128xbf16>
    %142 = vector.shape_cast %141 : vector<1x128x128xbf16> to vector<128x128xbf16>
    %cst_118 = arith.constant dense<0.000000e+00> : vector<286x128xf32>
    %143 = tpu.matmul %140, %142, %cst_118 {dimension_numbers = #tpu.dot_dimension_numbers<[1], [0], [0], [1], [0, 0, 1, 1], [], []>} : vector<286x128xbf16>, vector<128x128xbf16>, vector<286x128xf32> -> vector<286x128xf32>
    %144 = arith.addf %139, %143 : vector<286x128xf32>
    %c38 = arith.constant 38 : index
    %c0_119 = arith.constant 0 : index
    %145 = vector.load %arg11[%c38, %c0_119] : memref<324x128xbf16, #tpu.memory_space<vmem>>, vector<286x128xbf16>
    %c8_120 = arith.constant 8 : index
    %c0_121 = arith.constant 0 : index
    %c0_122 = arith.constant 0 : index
    %146 = vector.load %arg2[%c8_120, %c0_121, %c0_122] : memref<9x128x128xbf16, #tpu.memory_space<vmem>>, vector<1x128x128xbf16>
    %147 = vector.shape_cast %146 : vector<1x128x128xbf16> to vector<128x128xbf16>
    %cst_123 = arith.constant dense<0.000000e+00> : vector<286x128xf32>
    %148 = tpu.matmul %145, %147, %cst_123 {dimension_numbers = #tpu.dot_dimension_numbers<[1], [0], [0], [1], [0, 0, 1, 1], [], []>} : vector<286x128xbf16>, vector<128x128xbf16>, vector<286x128xf32> -> vector<286x128xf32>
    %149 = arith.addf %144, %148 : vector<286x128xf32>
    %c0_124 = arith.constant 0 : index
    %c0_125 = arith.constant 0 : index
    %150 = vector.load %arg3[%c0_124, %c0_125] : memref<1x128xf32, #tpu.memory_space<vmem>>, vector<1x128xf32>
    %151 = vector.broadcast %150 : vector<1x128xf32> to vector<286x128xf32>
    %152 = arith.mulf %149, %151 : vector<286x128xf32>
    %c0_126 = arith.constant 0 : index
    %c0_127 = arith.constant 0 : index
    %153 = vector.load %arg4[%c0_126, %c0_127] : memref<1x128xf32, #tpu.memory_space<vmem>>, vector<1x128xf32>
    %154 = vector.broadcast %153 : vector<1x128xf32> to vector<286x128xf32>
    %155 = arith.addf %152, %154 : vector<286x128xf32>
    %cst_128 = arith.constant 0.000000e+00 : f32
    %156 = vector.broadcast %cst_128 : f32 to vector<286x128xf32>
    %157 = arith.maximumf %155, %156 : vector<286x128xf32>
    %cst_129 = arith.constant 0.000000e+00 : f32
    %158 = vector.shape_cast %37 : vector<286x1xi1> to vector<286x1xi1>
    %159 = vector.broadcast %158 : vector<286x1xi1> to vector<286x128xi1>
    %160 = vector.broadcast %cst_129 : f32 to vector<286x128xf32>
    %161 = arith.select %159, %157, %160 : vector<286x128xi1>, vector<286x128xf32>
    %162 = arith.truncf %161 : vector<286x128xf32> to vector<286x128xbf16>
    %c19_130 = arith.constant 19 : index
    %c0_131 = arith.constant 0 : index
    %163 = vector.load %arg11[%c19_130, %c0_131] : memref<324x128xbf16, #tpu.memory_space<vmem>>, vector<286x128xbf16>
    tpu.vector_store %arg11[%c19_130, %c0_131], %162 {strides = array<i32>} : memref<324x128xbf16, #tpu.memory_space<vmem>>, vector<286x128xbf16>,
    %c0_132 = arith.constant 0 : index
    %c0_133 = arith.constant 0 : index
    %164 = vector.load %arg11[%c0_132, %c0_133] : memref<324x128xbf16, #tpu.memory_space<vmem>>, vector<286x128xbf16>
    %c0_134 = arith.constant 0 : index
    %c0_135 = arith.constant 0 : index
    %c0_136 = arith.constant 0 : index
    %165 = vector.load %arg5[%c0_134, %c0_135, %c0_136] : memref<9x128x128xbf16, #tpu.memory_space<vmem>>, vector<1x128x128xbf16>
    %166 = vector.shape_cast %165 : vector<1x128x128xbf16> to vector<128x128xbf16>
    %cst_137 = arith.constant dense<0.000000e+00> : vector<286x128xf32>
    %167 = tpu.matmul %164, %166, %cst_137 {dimension_numbers = #tpu.dot_dimension_numbers<[1], [0], [0], [1], [0, 0, 1, 1], [], []>} : vector<286x128xbf16>, vector<128x128xbf16>, vector<286x128xf32> -> vector<286x128xf32>
    %c1_138 = arith.constant 1 : index
    %c0_139 = arith.constant 0 : index
    %168 = vector.load %arg11[%c1_138, %c0_139] : memref<324x128xbf16, #tpu.memory_space<vmem>>, vector<286x128xbf16>
    %c1_140 = arith.constant 1 : index
    %c0_141 = arith.constant 0 : index
    %c0_142 = arith.constant 0 : index
    %169 = vector.load %arg5[%c1_140, %c0_141, %c0_142] : memref<9x128x128xbf16, #tpu.memory_space<vmem>>, vector<1x128x128xbf16>
    %170 = vector.shape_cast %169 : vector<1x128x128xbf16> to vector<128x128xbf16>
    %cst_143 = arith.constant dense<0.000000e+00> : vector<286x128xf32>
    %171 = tpu.matmul %168, %170, %cst_143 {dimension_numbers = #tpu.dot_dimension_numbers<[1], [0], [0], [1], [0, 0, 1, 1], [], []>} : vector<286x128xbf16>, vector<128x128xbf16>, vector<286x128xf32> -> vector<286x128xf32>
    %172 = arith.addf %167, %171 : vector<286x128xf32>
    %c2_144 = arith.constant 2 : index
    %c0_145 = arith.constant 0 : index
    %173 = vector.load %arg11[%c2_144, %c0_145] : memref<324x128xbf16, #tpu.memory_space<vmem>>, vector<286x128xbf16>
    %c2_146 = arith.constant 2 : index
    %c0_147 = arith.constant 0 : index
    %c0_148 = arith.constant 0 : index
    %174 = vector.load %arg5[%c2_146, %c0_147, %c0_148] : memref<9x128x128xbf16, #tpu.memory_space<vmem>>, vector<1x128x128xbf16>
    %175 = vector.shape_cast %174 : vector<1x128x128xbf16> to vector<128x128xbf16>
    %cst_149 = arith.constant dense<0.000000e+00> : vector<286x128xf32>
    %176 = tpu.matmul %173, %175, %cst_149 {dimension_numbers = #tpu.dot_dimension_numbers<[1], [0], [0], [1], [0, 0, 1, 1], [], []>} : vector<286x128xbf16>, vector<128x128xbf16>, vector<286x128xf32> -> vector<286x128xf32>
    %177 = arith.addf %172, %176 : vector<286x128xf32>
    %c18_150 = arith.constant 18 : index
    %c0_151 = arith.constant 0 : index
    %178 = vector.load %arg11[%c18_150, %c0_151] : memref<324x128xbf16, #tpu.memory_space<vmem>>, vector<286x128xbf16>
    %c3_152 = arith.constant 3 : index
    %c0_153 = arith.constant 0 : index
    %c0_154 = arith.constant 0 : index
    %179 = vector.load %arg5[%c3_152, %c0_153, %c0_154] : memref<9x128x128xbf16, #tpu.memory_space<vmem>>, vector<1x128x128xbf16>
    %180 = vector.shape_cast %179 : vector<1x128x128xbf16> to vector<128x128xbf16>
    %cst_155 = arith.constant dense<0.000000e+00> : vector<286x128xf32>
    %181 = tpu.matmul %178, %180, %cst_155 {dimension_numbers = #tpu.dot_dimension_numbers<[1], [0], [0], [1], [0, 0, 1, 1], [], []>} : vector<286x128xbf16>, vector<128x128xbf16>, vector<286x128xf32> -> vector<286x128xf32>
    %182 = arith.addf %177, %181 : vector<286x128xf32>
    %c19_156 = arith.constant 19 : index
    %c0_157 = arith.constant 0 : index
    %183 = vector.load %arg11[%c19_156, %c0_157] : memref<324x128xbf16, #tpu.memory_space<vmem>>, vector<286x128xbf16>
    %c4_158 = arith.constant 4 : index
    %c0_159 = arith.constant 0 : index
    %c0_160 = arith.constant 0 : index
    %184 = vector.load %arg5[%c4_158, %c0_159, %c0_160] : memref<9x128x128xbf16, #tpu.memory_space<vmem>>, vector<1x128x128xbf16>
    %185 = vector.shape_cast %184 : vector<1x128x128xbf16> to vector<128x128xbf16>
    %cst_161 = arith.constant dense<0.000000e+00> : vector<286x128xf32>
    %186 = tpu.matmul %183, %185, %cst_161 {dimension_numbers = #tpu.dot_dimension_numbers<[1], [0], [0], [1], [0, 0, 1, 1], [], []>} : vector<286x128xbf16>, vector<128x128xbf16>, vector<286x128xf32> -> vector<286x128xf32>
    %187 = arith.addf %182, %186 : vector<286x128xf32>
    %c20_162 = arith.constant 20 : index
    %c0_163 = arith.constant 0 : index
    %188 = vector.load %arg11[%c20_162, %c0_163] : memref<324x128xbf16, #tpu.memory_space<vmem>>, vector<286x128xbf16>
    %c5_164 = arith.constant 5 : index
    %c0_165 = arith.constant 0 : index
    %c0_166 = arith.constant 0 : index
    %189 = vector.load %arg5[%c5_164, %c0_165, %c0_166] : memref<9x128x128xbf16, #tpu.memory_space<vmem>>, vector<1x128x128xbf16>
    %190 = vector.shape_cast %189 : vector<1x128x128xbf16> to vector<128x128xbf16>
    %cst_167 = arith.constant dense<0.000000e+00> : vector<286x128xf32>
    %191 = tpu.matmul %188, %190, %cst_167 {dimension_numbers = #tpu.dot_dimension_numbers<[1], [0], [0], [1], [0, 0, 1, 1], [], []>} : vector<286x128xbf16>, vector<128x128xbf16>, vector<286x128xf32> -> vector<286x128xf32>
    %192 = arith.addf %187, %191 : vector<286x128xf32>
    %c36_168 = arith.constant 36 : index
    %c0_169 = arith.constant 0 : index
    %193 = vector.load %arg11[%c36_168, %c0_169] : memref<324x128xbf16, #tpu.memory_space<vmem>>, vector<286x128xbf16>
    %c6_170 = arith.constant 6 : index
    %c0_171 = arith.constant 0 : index
    %c0_172 = arith.constant 0 : index
    %194 = vector.load %arg5[%c6_170, %c0_171, %c0_172] : memref<9x128x128xbf16, #tpu.memory_space<vmem>>, vector<1x128x128xbf16>
    %195 = vector.shape_cast %194 : vector<1x128x128xbf16> to vector<128x128xbf16>
    %cst_173 = arith.constant dense<0.000000e+00> : vector<286x128xf32>
    %196 = tpu.matmul %193, %195, %cst_173 {dimension_numbers = #tpu.dot_dimension_numbers<[1], [0], [0], [1], [0, 0, 1, 1], [], []>} : vector<286x128xbf16>, vector<128x128xbf16>, vector<286x128xf32> -> vector<286x128xf32>
    %197 = arith.addf %192, %196 : vector<286x128xf32>
    %c37_174 = arith.constant 37 : index
    %c0_175 = arith.constant 0 : index
    %198 = vector.load %arg11[%c37_174, %c0_175] : memref<324x128xbf16, #tpu.memory_space<vmem>>, vector<286x128xbf16>
    %c7_176 = arith.constant 7 : index
    %c0_177 = arith.constant 0 : index
    %c0_178 = arith.constant 0 : index
    %199 = vector.load %arg5[%c7_176, %c0_177, %c0_178] : memref<9x128x128xbf16, #tpu.memory_space<vmem>>, vector<1x128x128xbf16>
    %200 = vector.shape_cast %199 : vector<1x128x128xbf16> to vector<128x128xbf16>
    %cst_179 = arith.constant dense<0.000000e+00> : vector<286x128xf32>
    %201 = tpu.matmul %198, %200, %cst_179 {dimension_numbers = #tpu.dot_dimension_numbers<[1], [0], [0], [1], [0, 0, 1, 1], [], []>} : vector<286x128xbf16>, vector<128x128xbf16>, vector<286x128xf32> -> vector<286x128xf32>
    %202 = arith.addf %197, %201 : vector<286x128xf32>
    %c38_180 = arith.constant 38 : index
    %c0_181 = arith.constant 0 : index
    %203 = vector.load %arg11[%c38_180, %c0_181] : memref<324x128xbf16, #tpu.memory_space<vmem>>, vector<286x128xbf16>
    %c8_182 = arith.constant 8 : index
    %c0_183 = arith.constant 0 : index
    %c0_184 = arith.constant 0 : index
    %204 = vector.load %arg5[%c8_182, %c0_183, %c0_184] : memref<9x128x128xbf16, #tpu.memory_space<vmem>>, vector<1x128x128xbf16>
    %205 = vector.shape_cast %204 : vector<1x128x128xbf16> to vector<128x128xbf16>
    %cst_185 = arith.constant dense<0.000000e+00> : vector<286x128xf32>
    %206 = tpu.matmul %203, %205, %cst_185 {dimension_numbers = #tpu.dot_dimension_numbers<[1], [0], [0], [1], [0, 0, 1, 1], [], []>} : vector<286x128xbf16>, vector<128x128xbf16>, vector<286x128xf32> -> vector<286x128xf32>
    %207 = arith.addf %202, %206 : vector<286x128xf32>
    %c0_186 = arith.constant 0 : index
    %c0_187 = arith.constant 0 : index
    %208 = vector.load %arg6[%c0_186, %c0_187] : memref<1x128xf32, #tpu.memory_space<vmem>>, vector<1x128xf32>
    %209 = vector.broadcast %208 : vector<1x128xf32> to vector<286x128xf32>
    %210 = arith.mulf %207, %209 : vector<286x128xf32>
    %c0_188 = arith.constant 0 : index
    %c0_189 = arith.constant 0 : index
    %211 = vector.load %arg7[%c0_188, %c0_189] : memref<1x128xf32, #tpu.memory_space<vmem>>, vector<1x128xf32>
    %212 = vector.broadcast %211 : vector<1x128xf32> to vector<286x128xf32>
    %213 = arith.addf %210, %212 : vector<286x128xf32>
    %214 = vector.broadcast %39 : vector<286x1xf32> to vector<286x128xf32>
    %215 = arith.mulf %213, %214 : vector<286x128xf32>
    %cst_190 = arith.constant dense<0.000000e+00> : vector<128xf32>
    %216 = vector.multi_reduction <add>, %215, %cst_190 [0] : vector<286x128xf32> to vector<128xf32>
    %217 = vector.shape_cast %216 : vector<128xf32> to vector<1x128xf32>
    %cst_191 = arith.constant 3.906250e-03 : f32
    %218 = vector.broadcast %cst_191 : f32 to vector<1x128xf32>
    %219 = arith.mulf %217, %218 : vector<1x128xf32>
    %c0_192 = arith.constant 0 : index
    %c0_193 = arith.constant 0 : index
    %220 = vector.load %arg8[%c0_192, %c0_193] : memref<128x8xf32, #tpu.memory_space<vmem>>, vector<128x8xf32>
    %cst_194 = arith.constant dense<0.000000e+00> : vector<1x8xf32>
    %221 = tpu.matmul %219, %220, %cst_194 {dimension_numbers = #tpu.dot_dimension_numbers<[1], [0], [0], [1], [0, 0, 1, 1], [], []>} : vector<1x128xf32>, vector<128x8xf32>, vector<1x8xf32> -> vector<1x8xf32>
    %cst_195 = arith.constant 0.000000e+00 : f32
    %222 = vector.broadcast %cst_195 : f32 to vector<1x8xf32>
    %223 = arith.maximumf %221, %222 : vector<1x8xf32>
    %c0_196 = arith.constant 0 : index
    %c0_197 = arith.constant 0 : index
    %224 = vector.load %arg9[%c0_196, %c0_197] : memref<8x128xf32, #tpu.memory_space<vmem>>, vector<8x128xf32>
    %cst_198 = arith.constant dense<0.000000e+00> : vector<1x128xf32>
    %225 = tpu.matmul %223, %224, %cst_198 {dimension_numbers = #tpu.dot_dimension_numbers<[1], [0], [0], [1], [0, 0, 1, 1], [], []>} : vector<1x8xf32>, vector<8x128xf32>, vector<1x128xf32> -> vector<1x128xf32>
    %226 = arith.negf %225 : vector<1x128xf32>
    %227 = math.exp %226 : vector<1x128xf32>
    %cst_199 = arith.constant 1.000000e+00 : f32
    %228 = vector.broadcast %cst_199 : f32 to vector<1x128xf32>
    %229 = arith.addf %228, %227 : vector<1x128xf32>
    %230 = arith.divf %228, %229 : vector<1x128xf32>
    %231 = vector.extract_strided_slice %213 {offsets = [0, 0], sizes = [16, 128], strides = [1, 1]} : vector<286x128xf32> to vector<16x128xf32>
    %232 = vector.broadcast %230 : vector<1x128xf32> to vector<16x128xf32>
    %233 = arith.mulf %231, %232 : vector<16x128xf32>
    %c0_200 = arith.constant 0 : index
    %c0_201 = arith.constant 0 : index
    %c0_202 = arith.constant 0 : index
    %c0_203 = arith.constant 0 : index
    %234 = vector.load %arg1[%c0_200, %c0_201, %c0_202, %c0_203] : memref<1x16x16x128xf32, #tpu.memory_space<vmem>>, vector<1x1x16x128xf32>
    %235 = vector.shape_cast %234 : vector<1x1x16x128xf32> to vector<16x128xf32>
    %236 = arith.addf %233, %235 : vector<16x128xf32>
    %cst_204 = arith.constant 0.000000e+00 : f32
    %237 = vector.broadcast %cst_204 : f32 to vector<16x128xf32>
    %238 = arith.maximumf %236, %237 : vector<16x128xf32>
    %c0_205 = arith.constant 0 : index
    %c0_206 = arith.constant 0 : index
    %c0_207 = arith.constant 0 : index
    %c0_208 = arith.constant 0 : index
    %239 = vector.load %arg10[%c0_205, %c0_206, %c0_207, %c0_208] : memref<1x16x16x128xf32, #tpu.memory_space<vmem>>, vector<1x1x16x128xf32>
    %240 = vector.shape_cast %239 : vector<1x1x16x128xf32> to vector<16x128xf32>
    %241 = vector.shape_cast %238 : vector<16x128xf32> to vector<1x1x16x128xf32>
    tpu.vector_store %arg10[%c0_205, %c0_206, %c0_207, %c0_208], %241 {strides = array<i32>} : memref<1x16x16x128xf32, #tpu.memory_space<vmem>>, vector<1x1x16x128xf32>,
    %242 = vector.extract_strided_slice %213 {offsets = [18, 0], sizes = [16, 128], strides = [1, 1]} : vector<286x128xf32> to vector<16x128xf32>
    %243 = vector.broadcast %230 : vector<1x128xf32> to vector<16x128xf32>
    %244 = arith.mulf %242, %243 : vector<16x128xf32>
    %c0_209 = arith.constant 0 : index
    %c1_210 = arith.constant 1 : index
    %c0_211 = arith.constant 0 : index
    %c0_212 = arith.constant 0 : index
    %245 = vector.load %arg1[%c0_209, %c1_210, %c0_211, %c0_212] : memref<1x16x16x128xf32, #tpu.memory_space<vmem>>, vector<1x1x16x128xf32>
    %246 = vector.shape_cast %245 : vector<1x1x16x128xf32> to vector<16x128xf32>
    %247 = arith.addf %244, %246 : vector<16x128xf32>
    %cst_213 = arith.constant 0.000000e+00 : f32
    %248 = vector.broadcast %cst_213 : f32 to vector<16x128xf32>
    %249 = arith.maximumf %247, %248 : vector<16x128xf32>
    %c0_214 = arith.constant 0 : index
    %c1_215 = arith.constant 1 : index
    %c0_216 = arith.constant 0 : index
    %c0_217 = arith.constant 0 : index
    %250 = vector.load %arg10[%c0_214, %c1_215, %c0_216, %c0_217] : memref<1x16x16x128xf32, #tpu.memory_space<vmem>>, vector<1x1x16x128xf32>
    %251 = vector.shape_cast %250 : vector<1x1x16x128xf32> to vector<16x128xf32>
    %252 = vector.shape_cast %249 : vector<16x128xf32> to vector<1x1x16x128xf32>
    tpu.vector_store %arg10[%c0_214, %c1_215, %c0_216, %c0_217], %252 {strides = array<i32>} : memref<1x16x16x128xf32, #tpu.memory_space<vmem>>, vector<1x1x16x128xf32>,
    %253 = vector.extract_strided_slice %213 {offsets = [36, 0], sizes = [16, 128], strides = [1, 1]} : vector<286x128xf32> to vector<16x128xf32>
    %254 = vector.broadcast %230 : vector<1x128xf32> to vector<16x128xf32>
    %255 = arith.mulf %253, %254 : vector<16x128xf32>
    %c0_218 = arith.constant 0 : index
    %c2_219 = arith.constant 2 : index
    %c0_220 = arith.constant 0 : index
    %c0_221 = arith.constant 0 : index
    %256 = vector.load %arg1[%c0_218, %c2_219, %c0_220, %c0_221] : memref<1x16x16x128xf32, #tpu.memory_space<vmem>>, vector<1x1x16x128xf32>
    %257 = vector.shape_cast %256 : vector<1x1x16x128xf32> to vector<16x128xf32>
    %258 = arith.addf %255, %257 : vector<16x128xf32>
    %cst_222 = arith.constant 0.000000e+00 : f32
    %259 = vector.broadcast %cst_222 : f32 to vector<16x128xf32>
    %260 = arith.maximumf %258, %259 : vector<16x128xf32>
    %c0_223 = arith.constant 0 : index
    %c2_224 = arith.constant 2 : index
    %c0_225 = arith.constant 0 : index
    %c0_226 = arith.constant 0 : index
    %261 = vector.load %arg10[%c0_223, %c2_224, %c0_225, %c0_226] : memref<1x16x16x128xf32, #tpu.memory_space<vmem>>, vector<1x1x16x128xf32>
    %262 = vector.shape_cast %261 : vector<1x1x16x128xf32> to vector<16x128xf32>
    %263 = vector.shape_cast %260 : vector<16x128xf32> to vector<1x1x16x128xf32>
    tpu.vector_store %arg10[%c0_223, %c2_224, %c0_225, %c0_226], %263 {strides = array<i32>} : memref<1x16x16x128xf32, #tpu.memory_space<vmem>>, vector<1x1x16x128xf32>,
    %264 = vector.extract_strided_slice %213 {offsets = [54, 0], sizes = [16, 128], strides = [1, 1]} : vector<286x128xf32> to vector<16x128xf32>
    %265 = vector.broadcast %230 : vector<1x128xf32> to vector<16x128xf32>
    %266 = arith.mulf %264, %265 : vector<16x128xf32>
    %c0_227 = arith.constant 0 : index
    %c3_228 = arith.constant 3 : index
    %c0_229 = arith.constant 0 : index
    %c0_230 = arith.constant 0 : index
    %267 = vector.load %arg1[%c0_227, %c3_228, %c0_229, %c0_230] : memref<1x16x16x128xf32, #tpu.memory_space<vmem>>, vector<1x1x16x128xf32>
    %268 = vector.shape_cast %267 : vector<1x1x16x128xf32> to vector<16x128xf32>
    %269 = arith.addf %266, %268 : vector<16x128xf32>
    %cst_231 = arith.constant 0.000000e+00 : f32
    %270 = vector.broadcast %cst_231 : f32 to vector<16x128xf32>
    %271 = arith.maximumf %269, %270 : vector<16x128xf32>
    %c0_232 = arith.constant 0 : index
    %c3_233 = arith.constant 3 : index
    %c0_234 = arith.constant 0 : index
    %c0_235 = arith.constant 0 : index
    %272 = vector.load %arg10[%c0_232, %c3_233, %c0_234, %c0_235] : memref<1x16x16x128xf32, #tpu.memory_space<vmem>>, vector<1x1x16x128xf32>
    %273 = vector.shape_cast %272 : vector<1x1x16x128xf32> to vector<16x128xf32>
    %274 = vector.shape_cast %271 : vector<16x128xf32> to vector<1x1x16x128xf32>
    tpu.vector_store %arg10[%c0_232, %c3_233, %c0_234, %c0_235], %274 {strides = array<i32>} : memref<1x16x16x128xf32, #tpu.memory_space<vmem>>, vector<1x1x16x128xf32>,
    %275 = vector.extract_strided_slice %213 {offsets = [72, 0], sizes = [16, 128], strides = [1, 1]} : vector<286x128xf32> to vector<16x128xf32>
    %276 = vector.broadcast %230 : vector<1x128xf32> to vector<16x128xf32>
    %277 = arith.mulf %275, %276 : vector<16x128xf32>
    %c0_236 = arith.constant 0 : index
    %c4_237 = arith.constant 4 : index
    %c0_238 = arith.constant 0 : index
    %c0_239 = arith.constant 0 : index
    %278 = vector.load %arg1[%c0_236, %c4_237, %c0_238, %c0_239] : memref<1x16x16x128xf32, #tpu.memory_space<vmem>>, vector<1x1x16x128xf32>
    %279 = vector.shape_cast %278 : vector<1x1x16x128xf32> to vector<16x128xf32>
    %280 = arith.addf %277, %279 : vector<16x128xf32>
    %cst_240 = arith.constant 0.000000e+00 : f32
    %281 = vector.broadcast %cst_240 : f32 to vector<16x128xf32>
    %282 = arith.maximumf %280, %281 : vector<16x128xf32>
    %c0_241 = arith.constant 0 : index
    %c4_242 = arith.constant 4 : index
    %c0_243 = arith.constant 0 : index
    %c0_244 = arith.constant 0 : index
    %283 = vector.load %arg10[%c0_241, %c4_242, %c0_243, %c0_244] : memref<1x16x16x128xf32, #tpu.memory_space<vmem>>, vector<1x1x16x128xf32>
    %284 = vector.shape_cast %283 : vector<1x1x16x128xf32> to vector<16x128xf32>
    %285 = vector.shape_cast %282 : vector<16x128xf32> to vector<1x1x16x128xf32>
    tpu.vector_store %arg10[%c0_241, %c4_242, %c0_243, %c0_244], %285 {strides = array<i32>} : memref<1x16x16x128xf32, #tpu.memory_space<vmem>>, vector<1x1x16x128xf32>,
    %286 = vector.extract_strided_slice %213 {offsets = [90, 0], sizes = [16, 128], strides = [1, 1]} : vector<286x128xf32> to vector<16x128xf32>
    %287 = vector.broadcast %230 : vector<1x128xf32> to vector<16x128xf32>
    %288 = arith.mulf %286, %287 : vector<16x128xf32>
    %c0_245 = arith.constant 0 : index
    %c5_246 = arith.constant 5 : index
    %c0_247 = arith.constant 0 : index
    %c0_248 = arith.constant 0 : index
    %289 = vector.load %arg1[%c0_245, %c5_246, %c0_247, %c0_248] : memref<1x16x16x128xf32, #tpu.memory_space<vmem>>, vector<1x1x16x128xf32>
    %290 = vector.shape_cast %289 : vector<1x1x16x128xf32> to vector<16x128xf32>
    %291 = arith.addf %288, %290 : vector<16x128xf32>
    %cst_249 = arith.constant 0.000000e+00 : f32
    %292 = vector.broadcast %cst_249 : f32 to vector<16x128xf32>
    %293 = arith.maximumf %291, %292 : vector<16x128xf32>
    %c0_250 = arith.constant 0 : index
    %c5_251 = arith.constant 5 : index
    %c0_252 = arith.constant 0 : index
    %c0_253 = arith.constant 0 : index
    %294 = vector.load %arg10[%c0_250, %c5_251, %c0_252, %c0_253] : memref<1x16x16x128xf32, #tpu.memory_space<vmem>>, vector<1x1x16x128xf32>
    %295 = vector.shape_cast %294 : vector<1x1x16x128xf32> to vector<16x128xf32>
    %296 = vector.shape_cast %293 : vector<16x128xf32> to vector<1x1x16x128xf32>
    tpu.vector_store %arg10[%c0_250, %c5_251, %c0_252, %c0_253], %296 {strides = array<i32>} : memref<1x16x16x128xf32, #tpu.memory_space<vmem>>, vector<1x1x16x128xf32>,
    %297 = vector.extract_strided_slice %213 {offsets = [108, 0], sizes = [16, 128], strides = [1, 1]} : vector<286x128xf32> to vector<16x128xf32>
    %298 = vector.broadcast %230 : vector<1x128xf32> to vector<16x128xf32>
    %299 = arith.mulf %297, %298 : vector<16x128xf32>
    %c0_254 = arith.constant 0 : index
    %c6_255 = arith.constant 6 : index
    %c0_256 = arith.constant 0 : index
    %c0_257 = arith.constant 0 : index
    %300 = vector.load %arg1[%c0_254, %c6_255, %c0_256, %c0_257] : memref<1x16x16x128xf32, #tpu.memory_space<vmem>>, vector<1x1x16x128xf32>
    %301 = vector.shape_cast %300 : vector<1x1x16x128xf32> to vector<16x128xf32>
    %302 = arith.addf %299, %301 : vector<16x128xf32>
    %cst_258 = arith.constant 0.000000e+00 : f32
    %303 = vector.broadcast %cst_258 : f32 to vector<16x128xf32>
    %304 = arith.maximumf %302, %303 : vector<16x128xf32>
    %c0_259 = arith.constant 0 : index
    %c6_260 = arith.constant 6 : index
    %c0_261 = arith.constant 0 : index
    %c0_262 = arith.constant 0 : index
    %305 = vector.load %arg10[%c0_259, %c6_260, %c0_261, %c0_262] : memref<1x16x16x128xf32, #tpu.memory_space<vmem>>, vector<1x1x16x128xf32>
    %306 = vector.shape_cast %305 : vector<1x1x16x128xf32> to vector<16x128xf32>
    %307 = vector.shape_cast %304 : vector<16x128xf32> to vector<1x1x16x128xf32>
    tpu.vector_store %arg10[%c0_259, %c6_260, %c0_261, %c0_262], %307 {strides = array<i32>} : memref<1x16x16x128xf32, #tpu.memory_space<vmem>>, vector<1x1x16x128xf32>,
    %308 = vector.extract_strided_slice %213 {offsets = [126, 0], sizes = [16, 128], strides = [1, 1]} : vector<286x128xf32> to vector<16x128xf32>
    %309 = vector.broadcast %230 : vector<1x128xf32> to vector<16x128xf32>
    %310 = arith.mulf %308, %309 : vector<16x128xf32>
    %c0_263 = arith.constant 0 : index
    %c7_264 = arith.constant 7 : index
    %c0_265 = arith.constant 0 : index
    %c0_266 = arith.constant 0 : index
    %311 = vector.load %arg1[%c0_263, %c7_264, %c0_265, %c0_266] : memref<1x16x16x128xf32, #tpu.memory_space<vmem>>, vector<1x1x16x128xf32>
    %312 = vector.shape_cast %311 : vector<1x1x16x128xf32> to vector<16x128xf32>
    %313 = arith.addf %310, %312 : vector<16x128xf32>
    %cst_267 = arith.constant 0.000000e+00 : f32
    %314 = vector.broadcast %cst_267 : f32 to vector<16x128xf32>
    %315 = arith.maximumf %313, %314 : vector<16x128xf32>
    %c0_268 = arith.constant 0 : index
    %c7_269 = arith.constant 7 : index
    %c0_270 = arith.constant 0 : index
    %c0_271 = arith.constant 0 : index
    %316 = vector.load %arg10[%c0_268, %c7_269, %c0_270, %c0_271] : memref<1x16x16x128xf32, #tpu.memory_space<vmem>>, vector<1x1x16x128xf32>
    %317 = vector.shape_cast %316 : vector<1x1x16x128xf32> to vector<16x128xf32>
    %318 = vector.shape_cast %315 : vector<16x128xf32> to vector<1x1x16x128xf32>
    tpu.vector_store %arg10[%c0_268, %c7_269, %c0_270, %c0_271], %318 {strides = array<i32>} : memref<1x16x16x128xf32, #tpu.memory_space<vmem>>, vector<1x1x16x128xf32>,
    %319 = vector.extract_strided_slice %213 {offsets = [144, 0], sizes = [16, 128], strides = [1, 1]} : vector<286x128xf32> to vector<16x128xf32>
    %320 = vector.broadcast %230 : vector<1x128xf32> to vector<16x128xf32>
    %321 = arith.mulf %319, %320 : vector<16x128xf32>
    %c0_272 = arith.constant 0 : index
    %c8_273 = arith.constant 8 : index
    %c0_274 = arith.constant 0 : index
    %c0_275 = arith.constant 0 : index
    %322 = vector.load %arg1[%c0_272, %c8_273, %c0_274, %c0_275] : memref<1x16x16x128xf32, #tpu.memory_space<vmem>>, vector<1x1x16x128xf32>
    %323 = vector.shape_cast %322 : vector<1x1x16x128xf32> to vector<16x128xf32>
    %324 = arith.addf %321, %323 : vector<16x128xf32>
    %cst_276 = arith.constant 0.000000e+00 : f32
    %325 = vector.broadcast %cst_276 : f32 to vector<16x128xf32>
    %326 = arith.maximumf %324, %325 : vector<16x128xf32>
    %c0_277 = arith.constant 0 : index
    %c8_278 = arith.constant 8 : index
    %c0_279 = arith.constant 0 : index
    %c0_280 = arith.constant 0 : index
    %327 = vector.load %arg10[%c0_277, %c8_278, %c0_279, %c0_280] : memref<1x16x16x128xf32, #tpu.memory_space<vmem>>, vector<1x1x16x128xf32>
    %328 = vector.shape_cast %327 : vector<1x1x16x128xf32> to vector<16x128xf32>
    %329 = vector.shape_cast %326 : vector<16x128xf32> to vector<1x1x16x128xf32>
    tpu.vector_store %arg10[%c0_277, %c8_278, %c0_279, %c0_280], %329 {strides = array<i32>} : memref<1x16x16x128xf32, #tpu.memory_space<vmem>>, vector<1x1x16x128xf32>,
    %330 = vector.extract_strided_slice %213 {offsets = [162, 0], sizes = [16, 128], strides = [1, 1]} : vector<286x128xf32> to vector<16x128xf32>
    %331 = vector.broadcast %230 : vector<1x128xf32> to vector<16x128xf32>
    %332 = arith.mulf %330, %331 : vector<16x128xf32>
    %c0_281 = arith.constant 0 : index
    %c9_282 = arith.constant 9 : index
    %c0_283 = arith.constant 0 : index
    %c0_284 = arith.constant 0 : index
    %333 = vector.load %arg1[%c0_281, %c9_282, %c0_283, %c0_284] : memref<1x16x16x128xf32, #tpu.memory_space<vmem>>, vector<1x1x16x128xf32>
    %334 = vector.shape_cast %333 : vector<1x1x16x128xf32> to vector<16x128xf32>
    %335 = arith.addf %332, %334 : vector<16x128xf32>
    %cst_285 = arith.constant 0.000000e+00 : f32
    %336 = vector.broadcast %cst_285 : f32 to vector<16x128xf32>
    %337 = arith.maximumf %335, %336 : vector<16x128xf32>
    %c0_286 = arith.constant 0 : index
    %c9_287 = arith.constant 9 : index
    %c0_288 = arith.constant 0 : index
    %c0_289 = arith.constant 0 : index
    %338 = vector.load %arg10[%c0_286, %c9_287, %c0_288, %c0_289] : memref<1x16x16x128xf32, #tpu.memory_space<vmem>>, vector<1x1x16x128xf32>
    %339 = vector.shape_cast %338 : vector<1x1x16x128xf32> to vector<16x128xf32>
    %340 = vector.shape_cast %337 : vector<16x128xf32> to vector<1x1x16x128xf32>
    tpu.vector_store %arg10[%c0_286, %c9_287, %c0_288, %c0_289], %340 {strides = array<i32>} : memref<1x16x16x128xf32, #tpu.memory_space<vmem>>, vector<1x1x16x128xf32>,
    %341 = vector.extract_strided_slice %213 {offsets = [180, 0], sizes = [16, 128], strides = [1, 1]} : vector<286x128xf32> to vector<16x128xf32>
    %342 = vector.broadcast %230 : vector<1x128xf32> to vector<16x128xf32>
    %343 = arith.mulf %341, %342 : vector<16x128xf32>
    %c0_290 = arith.constant 0 : index
    %c10_291 = arith.constant 10 : index
    %c0_292 = arith.constant 0 : index
    %c0_293 = arith.constant 0 : index
    %344 = vector.load %arg1[%c0_290, %c10_291, %c0_292, %c0_293] : memref<1x16x16x128xf32, #tpu.memory_space<vmem>>, vector<1x1x16x128xf32>
    %345 = vector.shape_cast %344 : vector<1x1x16x128xf32> to vector<16x128xf32>
    %346 = arith.addf %343, %345 : vector<16x128xf32>
    %cst_294 = arith.constant 0.000000e+00 : f32
    %347 = vector.broadcast %cst_294 : f32 to vector<16x128xf32>
    %348 = arith.maximumf %346, %347 : vector<16x128xf32>
    %c0_295 = arith.constant 0 : index
    %c10_296 = arith.constant 10 : index
    %c0_297 = arith.constant 0 : index
    %c0_298 = arith.constant 0 : index
    %349 = vector.load %arg10[%c0_295, %c10_296, %c0_297, %c0_298] : memref<1x16x16x128xf32, #tpu.memory_space<vmem>>, vector<1x1x16x128xf32>
    %350 = vector.shape_cast %349 : vector<1x1x16x128xf32> to vector<16x128xf32>
    %351 = vector.shape_cast %348 : vector<16x128xf32> to vector<1x1x16x128xf32>
    tpu.vector_store %arg10[%c0_295, %c10_296, %c0_297, %c0_298], %351 {strides = array<i32>} : memref<1x16x16x128xf32, #tpu.memory_space<vmem>>, vector<1x1x16x128xf32>,
    %352 = vector.extract_strided_slice %213 {offsets = [198, 0], sizes = [16, 128], strides = [1, 1]} : vector<286x128xf32> to vector<16x128xf32>
    %353 = vector.broadcast %230 : vector<1x128xf32> to vector<16x128xf32>
    %354 = arith.mulf %352, %353 : vector<16x128xf32>
    %c0_299 = arith.constant 0 : index
    %c11_300 = arith.constant 11 : index
    %c0_301 = arith.constant 0 : index
    %c0_302 = arith.constant 0 : index
    %355 = vector.load %arg1[%c0_299, %c11_300, %c0_301, %c0_302] : memref<1x16x16x128xf32, #tpu.memory_space<vmem>>, vector<1x1x16x128xf32>
    %356 = vector.shape_cast %355 : vector<1x1x16x128xf32> to vector<16x128xf32>
    %357 = arith.addf %354, %356 : vector<16x128xf32>
    %cst_303 = arith.constant 0.000000e+00 : f32
    %358 = vector.broadcast %cst_303 : f32 to vector<16x128xf32>
    %359 = arith.maximumf %357, %358 : vector<16x128xf32>
    %c0_304 = arith.constant 0 : index
    %c11_305 = arith.constant 11 : index
    %c0_306 = arith.constant 0 : index
    %c0_307 = arith.constant 0 : index
    %360 = vector.load %arg10[%c0_304, %c11_305, %c0_306, %c0_307] : memref<1x16x16x128xf32, #tpu.memory_space<vmem>>, vector<1x1x16x128xf32>
    %361 = vector.shape_cast %360 : vector<1x1x16x128xf32> to vector<16x128xf32>
    %362 = vector.shape_cast %359 : vector<16x128xf32> to vector<1x1x16x128xf32>
    tpu.vector_store %arg10[%c0_304, %c11_305, %c0_306, %c0_307], %362 {strides = array<i32>} : memref<1x16x16x128xf32, #tpu.memory_space<vmem>>, vector<1x1x16x128xf32>,
    %363 = vector.extract_strided_slice %213 {offsets = [216, 0], sizes = [16, 128], strides = [1, 1]} : vector<286x128xf32> to vector<16x128xf32>
    %364 = vector.broadcast %230 : vector<1x128xf32> to vector<16x128xf32>
    %365 = arith.mulf %363, %364 : vector<16x128xf32>
    %c0_308 = arith.constant 0 : index
    %c12_309 = arith.constant 12 : index
    %c0_310 = arith.constant 0 : index
    %c0_311 = arith.constant 0 : index
    %366 = vector.load %arg1[%c0_308, %c12_309, %c0_310, %c0_311] : memref<1x16x16x128xf32, #tpu.memory_space<vmem>>, vector<1x1x16x128xf32>
    %367 = vector.shape_cast %366 : vector<1x1x16x128xf32> to vector<16x128xf32>
    %368 = arith.addf %365, %367 : vector<16x128xf32>
    %cst_312 = arith.constant 0.000000e+00 : f32
    %369 = vector.broadcast %cst_312 : f32 to vector<16x128xf32>
    %370 = arith.maximumf %368, %369 : vector<16x128xf32>
    %c0_313 = arith.constant 0 : index
    %c12_314 = arith.constant 12 : index
    %c0_315 = arith.constant 0 : index
    %c0_316 = arith.constant 0 : index
    %371 = vector.load %arg10[%c0_313, %c12_314, %c0_315, %c0_316] : memref<1x16x16x128xf32, #tpu.memory_space<vmem>>, vector<1x1x16x128xf32>
    %372 = vector.shape_cast %371 : vector<1x1x16x128xf32> to vector<16x128xf32>
    %373 = vector.shape_cast %370 : vector<16x128xf32> to vector<1x1x16x128xf32>
    tpu.vector_store %arg10[%c0_313, %c12_314, %c0_315, %c0_316], %373 {strides = array<i32>} : memref<1x16x16x128xf32, #tpu.memory_space<vmem>>, vector<1x1x16x128xf32>,
    %374 = vector.extract_strided_slice %213 {offsets = [234, 0], sizes = [16, 128], strides = [1, 1]} : vector<286x128xf32> to vector<16x128xf32>
    %375 = vector.broadcast %230 : vector<1x128xf32> to vector<16x128xf32>
    %376 = arith.mulf %374, %375 : vector<16x128xf32>
    %c0_317 = arith.constant 0 : index
    %c13_318 = arith.constant 13 : index
    %c0_319 = arith.constant 0 : index
    %c0_320 = arith.constant 0 : index
    %377 = vector.load %arg1[%c0_317, %c13_318, %c0_319, %c0_320] : memref<1x16x16x128xf32, #tpu.memory_space<vmem>>, vector<1x1x16x128xf32>
    %378 = vector.shape_cast %377 : vector<1x1x16x128xf32> to vector<16x128xf32>
    %379 = arith.addf %376, %378 : vector<16x128xf32>
    %cst_321 = arith.constant 0.000000e+00 : f32
    %380 = vector.broadcast %cst_321 : f32 to vector<16x128xf32>
    %381 = arith.maximumf %379, %380 : vector<16x128xf32>
    %c0_322 = arith.constant 0 : index
    %c13_323 = arith.constant 13 : index
    %c0_324 = arith.constant 0 : index
    %c0_325 = arith.constant 0 : index
    %382 = vector.load %arg10[%c0_322, %c13_323, %c0_324, %c0_325] : memref<1x16x16x128xf32, #tpu.memory_space<vmem>>, vector<1x1x16x128xf32>
    %383 = vector.shape_cast %382 : vector<1x1x16x128xf32> to vector<16x128xf32>
    %384 = vector.shape_cast %381 : vector<16x128xf32> to vector<1x1x16x128xf32>
    tpu.vector_store %arg10[%c0_322, %c13_323, %c0_324, %c0_325], %384 {strides = array<i32>} : memref<1x16x16x128xf32, #tpu.memory_space<vmem>>, vector<1x1x16x128xf32>,
    %385 = vector.extract_strided_slice %213 {offsets = [252, 0], sizes = [16, 128], strides = [1, 1]} : vector<286x128xf32> to vector<16x128xf32>
    %386 = vector.broadcast %230 : vector<1x128xf32> to vector<16x128xf32>
    %387 = arith.mulf %385, %386 : vector<16x128xf32>
    %c0_326 = arith.constant 0 : index
    %c14_327 = arith.constant 14 : index
    %c0_328 = arith.constant 0 : index
    %c0_329 = arith.constant 0 : index
    %388 = vector.load %arg1[%c0_326, %c14_327, %c0_328, %c0_329] : memref<1x16x16x128xf32, #tpu.memory_space<vmem>>, vector<1x1x16x128xf32>
    %389 = vector.shape_cast %388 : vector<1x1x16x128xf32> to vector<16x128xf32>
    %390 = arith.addf %387, %389 : vector<16x128xf32>
    %cst_330 = arith.constant 0.000000e+00 : f32
    %391 = vector.broadcast %cst_330 : f32 to vector<16x128xf32>
    %392 = arith.maximumf %390, %391 : vector<16x128xf32>
    %c0_331 = arith.constant 0 : index
    %c14_332 = arith.constant 14 : index
    %c0_333 = arith.constant 0 : index
    %c0_334 = arith.constant 0 : index
    %393 = vector.load %arg10[%c0_331, %c14_332, %c0_333, %c0_334] : memref<1x16x16x128xf32, #tpu.memory_space<vmem>>, vector<1x1x16x128xf32>
    %394 = vector.shape_cast %393 : vector<1x1x16x128xf32> to vector<16x128xf32>
    %395 = vector.shape_cast %392 : vector<16x128xf32> to vector<1x1x16x128xf32>
    tpu.vector_store %arg10[%c0_331, %c14_332, %c0_333, %c0_334], %395 {strides = array<i32>} : memref<1x16x16x128xf32, #tpu.memory_space<vmem>>, vector<1x1x16x128xf32>,
    %396 = vector.extract_strided_slice %213 {offsets = [270, 0], sizes = [16, 128], strides = [1, 1]} : vector<286x128xf32> to vector<16x128xf32>
    %397 = vector.broadcast %230 : vector<1x128xf32> to vector<16x128xf32>
    %398 = arith.mulf %396, %397 : vector<16x128xf32>
    %c0_335 = arith.constant 0 : index
    %c15_336 = arith.constant 15 : index
    %c0_337 = arith.constant 0 : index
    %c0_338 = arith.constant 0 : index
    %399 = vector.load %arg1[%c0_335, %c15_336, %c0_337, %c0_338] : memref<1x16x16x128xf32, #tpu.memory_space<vmem>>, vector<1x1x16x128xf32>
    %400 = vector.shape_cast %399 : vector<1x1x16x128xf32> to vector<16x128xf32>
    %401 = arith.addf %398, %400 : vector<16x128xf32>
    %cst_339 = arith.constant 0.000000e+00 : f32
    %402 = vector.broadcast %cst_339 : f32 to vector<16x128xf32>
    %403 = arith.maximumf %401, %402 : vector<16x128xf32>
    %c0_340 = arith.constant 0 : index
    %c15_341 = arith.constant 15 : index
    %c0_342 = arith.constant 0 : index
    %c0_343 = arith.constant 0 : index
    %404 = vector.load %arg10[%c0_340, %c15_341, %c0_342, %c0_343] : memref<1x16x16x128xf32, #tpu.memory_space<vmem>>, vector<1x1x16x128xf32>
    %405 = vector.shape_cast %404 : vector<1x1x16x128xf32> to vector<16x128xf32>
    %406 = vector.shape_cast %403 : vector<16x128xf32> to vector<1x1x16x128xf32>
    tpu.vector_store %arg10[%c0_340, %c15_341, %c0_342, %c0_343], %406 {strides = array<i32>} : memref<1x16x16x128xf32, #tpu.memory_space<vmem>>, vector<1x1x16x128xf32>,
    return
  }
  func.func @transform_0(%arg0: i32) -> (i32, i32, i32, i32) {
    %c0_i32 = arith.constant 0 : i32
    %c0_i32_0 = arith.constant 0 : i32
    %c0_i32_1 = arith.constant 0 : i32
    %c0_i32_2 = arith.constant 0 : i32
    return %arg0, %c0_i32, %c0_i32_0, %c0_i32_1 : i32, i32, i32, i32
  }
  func.func @transform_1(%arg0: i32) -> (i32, i32, i32) {
    %c0_i32 = arith.constant 0 : i32
    %c0_i32_0 = arith.constant 0 : i32
    %c0_i32_1 = arith.constant 0 : i32
    %c0_i32_2 = arith.constant 0 : i32
    return %c0_i32, %c0_i32_0, %c0_i32_1 : i32, i32, i32
  }
  func.func @transform_2(%arg0: i32) -> (i32, i32) {
    %c0_i32 = arith.constant 0 : i32
    %c0_i32_0 = arith.constant 0 : i32
    %c0_i32_1 = arith.constant 0 : i32
    return %c0_i32, %c0_i32_0 : i32, i32
  }
  func.func @transform_3(%arg0: i32) -> (i32, i32) {
    %c0_i32 = arith.constant 0 : i32
    %c0_i32_0 = arith.constant 0 : i32
    %c0_i32_1 = arith.constant 0 : i32
    return %c0_i32, %c0_i32_0 : i32, i32
  }
  func.func @transform_4(%arg0: i32) -> (i32, i32, i32) {
    %c0_i32 = arith.constant 0 : i32
    %c0_i32_0 = arith.constant 0 : i32
    %c0_i32_1 = arith.constant 0 : i32
    %c0_i32_2 = arith.constant 0 : i32
    return %c0_i32, %c0_i32_0, %c0_i32_1 : i32, i32, i32
  }
  func.func @transform_5(%arg0: i32) -> (i32, i32) {
    %c0_i32 = arith.constant 0 : i32
    %c0_i32_0 = arith.constant 0 : i32
    %c0_i32_1 = arith.constant 0 : i32
    return %c0_i32, %c0_i32_0 : i32, i32
  }
  func.func @transform_6(%arg0: i32) -> (i32, i32) {
    %c0_i32 = arith.constant 0 : i32
    %c0_i32_0 = arith.constant 0 : i32
    %c0_i32_1 = arith.constant 0 : i32
    return %c0_i32, %c0_i32_0 : i32, i32
  }
  func.func @transform_7(%arg0: i32) -> (i32, i32) {
    %c0_i32 = arith.constant 0 : i32
    %c0_i32_0 = arith.constant 0 : i32
    %c0_i32_1 = arith.constant 0 : i32
    return %c0_i32, %c0_i32_0 : i32, i32
  }
  func.func @transform_8(%arg0: i32) -> (i32, i32) {
    %c0_i32 = arith.constant 0 : i32
    %c0_i32_0 = arith.constant 0 : i32
    %c0_i32_1 = arith.constant 0 : i32
    return %c0_i32, %c0_i32_0 : i32, i32
  }
  func.func @transform_9(%arg0: i32) -> (i32, i32, i32, i32) {
    %c0_i32 = arith.constant 0 : i32
    %c0_i32_0 = arith.constant 0 : i32
    %c0_i32_1 = arith.constant 0 : i32
    %c0_i32_2 = arith.constant 0 : i32
    return %arg0, %c0_i32, %c0_i32_0, %c0_i32_1 : i32, i32, i32, i32
  }
}

</mosaic_0001>

<llo_original>
// kernel: tpu_custom_call.1
$region0: #{tpu_custom_call.1}
  #allocation0 [shape = 'u32[]', space=smem, size = 0x4, offset = 0x4, fixed_abs, tag = 'smem constant byte address 0x4 - core index']
  #allocation1 [shape = 'u32[72,128]{1,0:T(1,128)}', space=vmem, size = 0x9000, scoped, tag = 'internal scratch']
  #allocation2 [shape = 'bf16[324,128]{1,0:T(8,128)(2,1)}', space=vmem, size = 0x14800, scoped, tag = 'scratch operand']
  %s0 = inlined_call_operand.hbm [shape: f32[2,16,16,128], index: 0, kind: input, shape index: {}]
  %s1 = inlined_call_operand.hbm [shape: bf16[9,128,128], index: 1, kind: input, shape index: {}]
  %s2 = inlined_call_operand.vmem [shape: f32[1,128], index: 2, kind: input, shape index: {}]
  %s3 = inlined_call_operand.vmem [shape: f32[1,128], index: 3, kind: input, shape index: {}]
  %s4 = inlined_call_operand.hbm [shape: bf16[9,128,128], index: 4, kind: input, shape index: {}]
  %s5 = inlined_call_operand.vmem [shape: f32[1,128], index: 5, kind: input, shape index: {}]
  %s6 = inlined_call_operand.vmem [shape: f32[1,128], index: 6, kind: input, shape index: {}]
  %s7 = inlined_call_operand.vmem [shape: f32[128,8], index: 7, kind: input, shape index: {}]
  %s8 = inlined_call_operand.vmem [shape: f32[8,128], index: 8, kind: input, shape index: {}]
  %s9 = inlined_call_operand.hbm [shape: f32[2,16,16,128], index: 9, kind: output, shape index: {}]
  %s10 = sld [smem:[#allocation0]]
  $region81: #{tpu_custom_call.1} parent=0
    _
  %s12 = ssub.s32 1, %s10
  %s13 = scalar_select 0, %s12, %s10
  $region1: #{tpu_custom_call.1} parent=0
    #allocation3 [shape = 'u8[262144]{0}', space=vmem, size = 0x40000, scoped, tag = 'input window, operand 0']
    #allocation4 [shape = 's32[2]{0}', space=sflag, size = 0x8, scoped, tag = 'scoped memory for tpu_custom_call.1']
    #allocation5 [shape = 's32[2]{0}', space=sflag, size = 0x8, scoped, tag = 'scoped memory for tpu_custom_call.1']
    #allocation6 [shape = 'u8[294912]{0}', space=vmem, size = 0x48000, scoped, tag = 'input window, operand 1, single buffered']
    #allocation7 [shape = 's32[1]{0}', space=sflag, size = 0x4, scoped, tag = 'scoped memory for tpu_custom_call.1']
    #allocation8 [shape = 'u8[294912]{0}', space=vmem, size = 0x48000, scoped, tag = 'input window, operand 4, single buffered']
    #allocation9 [shape = 'u8[262144]{0}', space=vmem, size = 0x40000, scoped, tag = 'output window, operand 0']
    %14 = vsyncpa [#allocation4], 0
    %s15 = scalar_lea.sflag [#allocation4], 1
    %16 = vsyncpa %s15, 0
    %17 = vsyncpa [#allocation7], 0
    %18 = vsyncpa [#allocation5], 0
    %s19 = scalar_lea.sflag [#allocation5], 1
    %20 = vsyncpa %s19, 0
    loop: start=0, step=1, limit=4
    $region2: #{tpu_custom_call.1} parent=1 // loop_pre_header
      _
    $region3: #{tpu_custom_call.1} parent=1 // loop_header
      %s22 = sphi 0, %s26
      %p23 = scmp.ge.s32.totalorder %s22, 4
      %s32 = sphi 0, %s34
      %s35 = sphi 0, %s32
      %s36 = sphi 0, %s35
      %s52 = sphi 0, %s36
      %s56 = sphi 0, %s56
      %s58 = sphi 0, %s56
      %s59 = sphi 0, %s58
      %s73 = sphi 0, %s59
      %s77 = sphi 0, %s77
      %s79 = sphi 0, %s77
      %s80 = sphi 0, %s79
      %s94 = sphi 0, %s80
      %s98 = sphi 0, %s98
      %s100 = sphi 0, %s98
      %s101 = sphi 0, %s100
      %s115 = sphi 0, %s101
      %s119 = sphi 0, %s119
      %s121 = sphi 0, %s119
      %s122 = sphi 0, %s121
      %s136 = sphi 0, %s122
      %s140 = sphi 0, %s140
      %s142 = sphi 0, %s140
      %s143 = sphi 0, %s142
      %s157 = sphi 0, %s143
      %s161 = sphi 0, %s161
      %s163 = sphi 0, %s161
      %s164 = sphi 0, %s163
      %s178 = sphi 0, %s164
      %s182 = sphi 0, %s182
      %s184 = sphi 0, %s182
      %s185 = sphi 0, %s184
      %s199 = sphi 0, %s185
      %s203 = sphi 0, %s203
      %s205 = sphi 0, %s203
      %s206 = sphi 0, %s205
      %s220 = sphi 0, %s206
      %s226 = sphi 0, %s228
      %s229 = sphi 0, %s226
      %s230 = sphi 0, %s229
      %s246 = sphi 0, %s230
    $region4: #{tpu_custom_call.1} parent=1 // loop_header_branch
      %25 = sbr.rel (%p23) target = $region8
    $region5: #{tpu_custom_call.1} parent=1 // loop_body
      %s27 = ssub.s32 %s22, 1
      %s28 = ssub.s32 %s22, 2
      %s29 = sadd.s32 %s22, 1
      %s30 = ssub.s32 %s22, %s29
      %p31 = scmp.eq.s32.totalorder %s30, 0
      %s33 = sadd.s32 %s32, 1
      %s34 = scalar_select %p31, %s32, %s33
      %p37 = pneg %p31
      %p38 = scmp.eq.s32.totalorder %s22, 1
      %p39 = por %p37, %p38
      %p40 = scmp.ne.s32.totalorder %s32, %s35
      %p41 = scmp.eq.s32.totalorder %s22, 0
      %p42 = por %p40, %p41
      %p43 = scmp.ne.s32.totalorder %s32, %s35
      %p44 = scmp.eq.s32.totalorder %s27, 1
      %p45 = por %p43, %p44
      %p46 = scmp.ne.s32.totalorder %s35, %s36
      %p47 = scmp.eq.s32.totalorder %s27, 0
      %p48 = por %p46, %p47
      %p49 = scmp.ne.s32.totalorder %s35, %s36
      %p50 = scmp.eq.s32.totalorder %s28, 1
      %p51 = por %p49, %p50
      %p53 = scmp.ne.s32.totalorder %s36, %s52
      %p54 = scmp.eq.s32.totalorder %s28, 0
      %p55 = por %p53, %p54
      %s57 = sadd.s32 %s56, 1
      %p60 = scmp.eq.s32.totalorder %s22, 1
      %p61 = scmp.ne.s32.totalorder %s56, %s58
      %p62 = scmp.eq.s32.totalorder %s22, 0
      %p63 = por %p61, %p62
      %p64 = scmp.ne.s32.totalorder %s56, %s58
      %p65 = scmp.eq.s32.totalorder %s27, 1
      %p66 = por %p64, %p65
      %p67 = scmp.ne.s32.totalorder %s58, %s59
      %p68 = scmp.eq.s32.totalorder %s27, 0
      %p69 = por %p67, %p68
      %p70 = scmp.ne.s32.totalorder %s58, %s59
      %p71 = scmp.eq.s32.totalorder %s28, 1
      %p72 = por %p70, %p71
      %p74 = scmp.ne.s32.totalorder %s59, %s73
      %p75 = scmp.eq.s32.totalorder %s28, 0
      %p76 = por %p74, %p75
      %s78 = sadd.s32 %s77, 1
      %p81 = scmp.eq.s32.totalorder %s22, 1
      %p82 = scmp.ne.s32.totalorder %s77, %s79
      %p83 = scmp.eq.s32.totalorder %s22, 0
      %p84 = por %p82, %p83
      %p85 = scmp.ne.s32.totalorder %s77, %s79
      %p86 = scmp.eq.s32.totalorder %s27, 1
      %p87 = por %p85, %p86
      %p88 = scmp.ne.s32.totalorder %s79, %s80
      %p89 = scmp.eq.s32.totalorder %s27, 0
      %p90 = por %p88, %p89
      %p91 = scmp.ne.s32.totalorder %s79, %s80
      %p92 = scmp.eq.s32.totalorder %s28, 1
      %p93 = por %p91, %p92
      %p95 = scmp.ne.s32.totalorder %s80, %s94
      %p96 = scmp.eq.s32.totalorder %s28, 0
      %p97 = por %p95, %p96
      %s99 = sadd.s32 %s98, 1
      %p102 = scmp.eq.s32.totalorder %s22, 1
      %p103 = scmp.ne.s32.totalorder %s98, %s100
      %p104 = scmp.eq.s32.totalorder %s22, 0
      %p105 = por %p103, %p104
      %p106 = scmp.ne.s32.totalorder %s98, %s100
      %p107 = scmp.eq.s32.totalorder %s27, 1
      %p108 = por %p106, %p107
      %p109 = scmp.ne.s32.totalorder %s100, %s101
      %p110 = scmp.eq.s32.totalorder %s27, 0
      %p111 = por %p109, %p110
      %p112 = scmp.ne.s32.totalorder %s100, %s101
      %p113 = scmp.eq.s32.totalorder %s28, 1
      %p114 = por %p112, %p113
      %p116 = scmp.ne.s32.totalorder %s101, %s115
      %p117 = scmp.eq.s32.totalorder %s28, 0
      %p118 = por %p116, %p117
      %s120 = sadd.s32 %s119, 1
      %p123 = scmp.eq.s32.totalorder %s22, 1
      %p124 = scmp.ne.s32.totalorder %s119, %s121
      %p125 = scmp.eq.s32.totalorder %s22, 0
      %p126 = por %p124, %p125
      %p127 = scmp.ne.s32.totalorder %s119, %s121
      %p128 = scmp.eq.s32.totalorder %s27, 1
      %p129 = por %p127, %p128
      %p130 = scmp.ne.s32.totalorder %s121, %s122
      %p131 = scmp.eq.s32.totalorder %s27, 0
      %p132 = por %p130, %p131
      %p133 = scmp.ne.s32.totalorder %s121, %s122
      %p134 = scmp.eq.s32.totalorder %s28, 1
      %p135 = por %p133, %p134
      %p137 = scmp.ne.s32.totalorder %s122, %s136
      %p138 = scmp.eq.s32.totalorder %s28, 0
      %p139 = por %p137, %p138
      %s141 = sadd.s32 %s140, 1
      %p144 = scmp.eq.s32.totalorder %s22, 1
      %p145 = scmp.ne.s32.totalorder %s140, %s142
      %p146 = scmp.eq.s32.totalorder %s22, 0
      %p147 = por %p145, %p146
      %p148 = scmp.ne.s32.totalorder %s140, %s142
      %p149 = scmp.eq.s32.totalorder %s27, 1
      %p150 = por %p148, %p149
      %p151 = scmp.ne.s32.totalorder %s142, %s143
      %p152 = scmp.eq.s32.totalorder %s27, 0
      %p153 = por %p151, %p152
      %p154 = scmp.ne.s32.totalorder %s142, %s143
      %p155 = scmp.eq.s32.totalorder %s28, 1
      %p156 = por %p154, %p155
      %p158 = scmp.ne.s32.totalorder %s143, %s157
      %p159 = scmp.eq.s32.totalorder %s28, 0
      %p160 = por %p158, %p159
      %s162 = sadd.s32 %s161, 1
      %p165 = scmp.eq.s32.totalorder %s22, 1
      %p166 = scmp.ne.s32.totalorder %s161, %s163
      %p167 = scmp.eq.s32.totalorder %s22, 0
      %p168 = por %p166, %p167
      %p169 = scmp.ne.s32.totalorder %s161, %s163
      %p170 = scmp.eq.s32.totalorder %s27, 1
      %p171 = por %p169, %p170
      %p172 = scmp.ne.s32.totalorder %s163, %s164
      %p173 = scmp.eq.s32.totalorder %s27, 0
      %p174 = por %p172, %p173
      %p175 = scmp.ne.s32.totalorder %s163, %s164
      %p176 = scmp.eq.s32.totalorder %s28, 1
      %p177 = por %p175, %p176
      %p179 = scmp.ne.s32.totalorder %s164, %s178
      %p180 = scmp.eq.s32.totalorder %s28, 0
      %p181 = por %p179, %p180
      %s183 = sadd.s32 %s182, 1
      %p186 = scmp.eq.s32.totalorder %s22, 1
      %p187 = scmp.ne.s32.totalorder %s182, %s184
      %p188 = scmp.eq.s32.totalorder %s22, 0
      %p189 = por %p187, %p188
      %p190 = scmp.ne.s32.totalorder %s182, %s184
      %p191 = scmp.eq.s32.totalorder %s27, 1
      %p192 = por %p190, %p191
      %p193 = scmp.ne.s32.totalorder %s184, %s185
      %p194 = scmp.eq.s32.totalorder %s27, 0
      %p195 = por %p193, %p194
      %p196 = scmp.ne.s32.totalorder %s184, %s185
      %p197 = scmp.eq.s32.totalorder %s28, 1
      %p198 = por %p196, %p197
      %p200 = scmp.ne.s32.totalorder %s185, %s199
      %p201 = scmp.eq.s32.totalorder %s28, 0
      %p202 = por %p200, %p201
      %s204 = sadd.s32 %s203, 1
      %p207 = scmp.eq.s32.totalorder %s22, 1
      %p208 = scmp.ne.s32.totalorder %s203, %s205
      %p209 = scmp.eq.s32.totalorder %s22, 0
      %p210 = por %p208, %p209
      %p211 = scmp.ne.s32.totalorder %s203, %s205
      %p212 = scmp.eq.s32.totalorder %s27, 1
      %p213 = por %p211, %p212
      %p214 = scmp.ne.s32.totalorder %s205, %s206
      %p215 = scmp.eq.s32.totalorder %s27, 0
      %p216 = por %p214, %p215
      %p217 = scmp.ne.s32.totalorder %s205, %s206
      %p218 = scmp.eq.s32.totalorder %s28, 1
      %p219 = por %p217, %p218
      %p221 = scmp.ne.s32.totalorder %s206, %s220
      %p222 = scmp.eq.s32.totalorder %s28, 0
      %p223 = por %p221, %p222
      %s224 = ssub.s32 %s22, %s29
      %p225 = scmp.eq.s32.totalorder %s224, 0
      %s227 = sadd.s32 %s226, 1
      %s228 = scalar_select %p225, %s226, %s227
      %p231 = pneg %p225
      %p232 = scmp.eq.s32.totalorder %s22, 1
      %p233 = por %p231, %p232
      %p234 = scmp.ne.s32.totalorder %s226, %s229
      %p235 = scmp.eq.s32.totalorder %s22, 0
      %p236 = por %p234, %p235
      %p237 = scmp.ne.s32.totalorder %s226, %s229
      %p238 = scmp.eq.s32.totalorder %s27, 1
      %p239 = por %p237, %p238
      %p240 = scmp.ne.s32.totalorder %s229, %s230
      %p241 = scmp.eq.s32.totalorder %s27, 0
      %p242 = por %p240, %p241
      %p243 = scmp.ne.s32.totalorder %s229, %s230
      %p244 = scmp.eq.s32.totalorder %s28, 1
      %p245 = por %p243, %p244
      %p247 = scmp.ne.s32.totalorder %s230, %s246
      %p248 = scmp.eq.s32.totalorder %s28, 0
      %p249 = por %p247, %p248
      %p250 = scmp.le.s32.totalorder 1, %s22
      %p251 = scmp.lt.s32.totalorder %s22, 3
      %p252 = pnand %p250, %p251
      %p253 = pneg %p252
      // Predicated region
      $region9: #{tpu_custom_call.1} parent=5 // pred_check
        _
      $region10: #{tpu_custom_call.1} parent=5 // pred_check_branch
        %255 = sbr.rel (%p252) target = $region12
      $region11: #{tpu_custom_call.1} parent=5 // pred_region
        %s256 = ssub.s32 %s22, 1
        // Predicated region
        $region13: #{tpu_custom_call.1} parent=11 // pred_check
          %p257 = pneg %p69
        $region14: #{tpu_custom_call.1} parent=11 // pred_check_branch
          %259 = sbr.rel (%p257) target = $region16
        $region15: #{tpu_custom_call.1} parent=11 // pred_region
          %261 = vsyncadd [#allocation7], 0
          %s262 = sshll.u32 %s1, 4
          %s263 = int_to_ptr.hbm [resolvable:$true] %s262
          %s264 = sshll.u32 [#allocation6], 4
          %s265 = int_to_ptr.vmem [resolvable:$true] %s264
          %270 = dma.hbm_to_vmem [thread:$0]  %s263, 9216, %s265, [#allocation7], 64, 64, 4
        $region16: #{tpu_custom_call.1} parent=11 // pred_fallthru
          _
        // Predicated region
        $region17: #{tpu_custom_call.1} parent=11 // pred_check
          %p271 = pneg %p90
        $region18: #{tpu_custom_call.1} parent=11 // pred_check_branch
          %273 = sbr.rel (%p271) target = $region20
        $region19: #{tpu_custom_call.1} parent=11 // pred_region
          _
        $region20: #{tpu_custom_call.1} parent=11 // pred_fallthru
          _
        // Predicated region
        $region21: #{tpu_custom_call.1} parent=11 // pred_check
          %p274 = pneg %p111
        $region22: #{tpu_custom_call.1} parent=11 // pred_check_branch
          %276 = sbr.rel (%p274) target = $region24
        $region23: #{tpu_custom_call.1} parent=11 // pred_region
          _
        $region24: #{tpu_custom_call.1} parent=11 // pred_fallthru
          _
        // Predicated region
        $region25: #{tpu_custom_call.1} parent=11 // pred_check
          %p277 = pneg %p132
        $region26: #{tpu_custom_call.1} parent=11 // pred_check_branch
          %279 = sbr.rel (%p277) target = $region28
        $region27: #{tpu_custom_call.1} parent=11 // pred_region
          %281 = vsyncadd [#allocation7], 0
          %s282 = sshll.u32 %s4, 4
          %s283 = int_to_ptr.hbm [resolvable:$true] %s282
          %s284 = sshll.u32 [#allocation8], 4
          %s285 = int_to_ptr.vmem [resolvable:$true] %s284
          %290 = dma.hbm_to_vmem [thread:$0]  %s283, 9216, %s285, [#allocation7], 64, 64, 4
        $region28: #{tpu_custom_call.1} parent=11 // pred_fallthru
          _
        // Predicated region
        $region29: #{tpu_custom_call.1} parent=11 // pred_check
          %p291 = pneg %p153
        $region30: #{tpu_custom_call.1} parent=11 // pred_check_branch
          %293 = sbr.rel (%p291) target = $region32
        $region31: #{tpu_custom_call.1} parent=11 // pred_region
          _
        $region32: #{tpu_custom_call.1} parent=11 // pred_fallthru
          _
        // Predicated region
        $region33: #{tpu_custom_call.1} parent=11 // pred_check
          %p294 = pneg %p174
        $region34: #{tpu_custom_call.1} parent=11 // pred_check_branch
          %296 = sbr.rel (%p294) target = $region36
        $region35: #{tpu_custom_call.1} parent=11 // pred_region
          _
        $region36: #{tpu_custom_call.1} parent=11 // pred_fallthru
          _
        // Predicated region
        $region37: #{tpu_custom_call.1} parent=11 // pred_check
          %p297 = pneg %p195
        $region38: #{tpu_custom_call.1} parent=11 // pred_check_branch
          %299 = sbr.rel (%p297) target = $region40
        $region39: #{tpu_custom_call.1} parent=11 // pred_region
          _
        $region40: #{tpu_custom_call.1} parent=11 // pred_fallthru
          _
        // Predicated region
        $region41: #{tpu_custom_call.1} parent=11 // pred_check
          %p300 = pneg %p216
        $region42: #{tpu_custom_call.1} parent=11 // pred_check_branch
          %302 = sbr.rel (%p300) target = $region44
        $region43: #{tpu_custom_call.1} parent=11 // pred_region
          _
        $region44: #{tpu_custom_call.1} parent=11 // pred_fallthru
          _
      $region12: #{tpu_custom_call.1} parent=5 // pred_fallthru
        _
      %p303 = scmp.lt.s32.totalorder %s22, 2
      // Predicated region
      $region45: #{tpu_custom_call.1} parent=5 // pred_check
        %p304 = pneg %p303
      $region46: #{tpu_custom_call.1} parent=5 // pred_check_branch
        %306 = sbr.rel (%p304) target = $region48
      $region47: #{tpu_custom_call.1} parent=5 // pred_region
        // Predicated region
        $region49: #{tpu_custom_call.1} parent=47 // pred_check
          %p307 = pneg %p42
        $region50: #{tpu_custom_call.1} parent=47 // pred_check_branch
          %309 = sbr.rel (%p307) target = $region52
        $region51: #{tpu_custom_call.1} parent=47 // pred_region
          %s310 = sand.u32 %s32, 1
          %s311 = scalar_lea.sflag [#allocation4], %s310
          %s312 = sand.u32 %s32, 1
          %s313 = smul.addr %s312, 256
          %s314 = scalar_lea.vmem [#allocation3], %s313
          %316 = vsyncadd %s311, 0
          %s317 = smul.addr %s22, 32
          %s318 = smul.addr %s317, 8
          %s319 = scalar_lea.hbm %s0, %s318
          %s320 = sshll.u32 %s319, 4
          %s321 = int_to_ptr.hbm [resolvable:$true] %s320
          %s322 = sshll.u32 %s314, 4
          %s323 = int_to_ptr.vmem [resolvable:$true] %s322
          %328 = dma.hbm_to_vmem [thread:$0]  %s321, 4096, %s323, %s311, 128, 128, 8
        $region52: #{tpu_custom_call.1} parent=47 // pred_fallthru
          _
      $region48: #{tpu_custom_call.1} parent=5 // pred_fallthru
        _
      %p329 = scmp.le.s32.totalorder 1, %s22
      %p330 = scmp.lt.s32.totalorder %s22, 3
      %p331 = pnand %p329, %p330
      %p332 = pneg %p331
      // Predicated region
      $region53: #{tpu_custom_call.1} parent=5 // pred_check
        _
      $region54: #{tpu_custom_call.1} parent=5 // pred_check_branch
        %334 = sbr.rel (%p331) target = $region56
      $region55: #{tpu_custom_call.1} parent=5 // pred_region
        %s335 = ssub.s32 %s22, 1
        %s336 = sand.u32 %s35, 1
        %s337 = scalar_lea.sflag [#allocation4], %s336
        %s338 = sand.u32 %s35, 1
        %s339 = smul.addr %s338, 256
        %s340 = scalar_lea.vmem [#allocation3], %s339
        // Predicated region
        $region57: #{tpu_custom_call.1} parent=55 // pred_check
          %p341 = pneg %p48
        $region58: #{tpu_custom_call.1} parent=55 // pred_check_branch
          %343 = sbr.rel (%p341) target = $region60
        $region59: #{tpu_custom_call.1} parent=55 // pred_region
          %345 = dma.done %s337, 4096
        $region60: #{tpu_custom_call.1} parent=55 // pred_fallthru
          _
        // Predicated region
        $region61: #{tpu_custom_call.1} parent=55 // pred_check
          %p346 = pneg %p69
        $region62: #{tpu_custom_call.1} parent=55 // pred_check_branch
          %348 = sbr.rel (%p346) target = $region64
        $region63: #{tpu_custom_call.1} parent=55 // pred_region
          %350 = dma.done [#allocation7], 9216
        $region64: #{tpu_custom_call.1} parent=55 // pred_fallthru
          _
        // Predicated region
        $region65: #{tpu_custom_call.1} parent=55 // pred_check
          %p351 = pneg %p132
        $region66: #{tpu_custom_call.1} parent=55 // pred_check_branch
          %353 = sbr.rel (%p351) target = $region68
        $region67: #{tpu_custom_call.1} parent=55 // pred_region
          %355 = dma.done [#allocation7], 9216
        $region68: #{tpu_custom_call.1} parent=55 // pred_fallthru
          _
        %s356 = sand.u32 %s35, 1
        %s357 = scalar_lea.sflag [#allocation4], %s356
        %s358 = sand.u32 %s35, 1
        %s359 = smul.addr %s358, 256
        %s360 = scalar_lea.vmem [#allocation3], %s359
        %p361 = pneg %p48
        %p362 = pneg %p45
        %p363 = pneg %p69
        %p364 = pneg %p66
        %p365 = pneg %p90
        %p366 = pneg %p87
        %p367 = pneg %p111
        %p368 = pneg %p108
        %p369 = pneg %p132
        %p370 = pneg %p129
        %p371 = pneg %p153
        %p372 = pneg %p150
        %p373 = pneg %p174
        %p374 = pneg %p171
        %p375 = pneg %p195
        %p376 = pneg %p192
        %p377 = pneg %p216
        %p378 = pneg %p213
        %p379 = pneg %p242
        %p380 = pneg %p239
        %s381 = sand.u32 %s229, 1
        %s382 = scalar_lea.sflag [#allocation5], %s381
        %s383 = sand.u32 %s229, 1
        %s384 = smul.addr %s383, 256
        %s385 = scalar_lea.vmem [#allocation9], %s384
        %v387 = vlaneseq
        %v388 = vshrl.u32 %v387, 7
        %v389 = vadd.s32 %v388, 8
        %v390 = vadd.s32 %v388, 16
        %v391 = vadd.s32 %v388, 24
        %v392 = vadd.s32 %v388, 32
        %v393 = vadd.s32 %v388, 40
        %v394 = vadd.s32 %v388, 48
        %v395 = vadd.s32 %v388, 56
        %v396 = vadd.s32 %v388, 64
        %v397 = vadd.s32 %v388, 72
        %v398 = vadd.s32 %v388, 80
        %v399 = vadd.s32 %v388, 88
        %v400 = vadd.s32 %v388, 96
        %v401 = vadd.s32 %v388, 104
        %v402 = vadd.s32 %v388, 112
        %v403 = vadd.s32 %v388, 120
        %v404 = vadd.s32 %v388, 128
        %v405 = vadd.s32 %v388, 136
        %v406 = vadd.s32 %v388, 144
        %v407 = vadd.s32 %v388, 152
        %v408 = vadd.s32 %v388, 160
        %v409 = vadd.s32 %v388, 168
        %v410 = vadd.s32 %v388, 176
        %v411 = vadd.s32 %v388, 184
        %v412 = vadd.s32 %v388, 192
        %v413 = vadd.s32 %v388, 200
        %v414 = vadd.s32 %v388, 208
        %v415 = vadd.s32 %v388, 216
        %v416 = vadd.s32 %v388, 224
        %v417 = vadd.s32 %v388, 232
        %v418 = vadd.s32 %v388, 240
        %v419 = vadd.s32 %v388, 248
        %v420 = vadd.s32 %v388, 256
        %v421 = vadd.s32 %v388, 264
        %v422 = vadd.s32 %v388, 272
        %v423 = vadd.s32 %v388, 280
        %vm424 = vcmp.lt.s32.totalorder %v388, 0
        %v425 = vsub.s32 0, %v388
        %v426 = vsel %vm424, %v425, %v388
        %v427 = vand.u32 %v426, 65535
        %v428 = vshrl.u32 %v426, 16
        %v430 = vmul.u32 %v427, 34791
        %v431 = vmul.u32 %v427, 51781
        %v432 = vmul.u32 %v428, 34791
        %v433 = vmul.u32 %v428, 51781
        %v434 = vshll.u32 %v431, 16
        %v435 = vshrl.u32 %v431, 16
        %v436 = vshll.u32 %v432, 16
        %v437 = vshrl.u32 %v432, 16
        %vm438 = vc.u32 %v430, %v434
        %v439 = vsel %vm438, 1, 0
        %v440 = vadd.s32 %v430, %v434
        %v441 = vadd.s32 %v433, %v439
        %vm442 = vc.u32 %v440, %v436
        %v443 = vsel %vm442, 1, 0
        %v444 = vadd.s32 %v440, %v436
        %v445 = vadd.s32 %v441, %v443
        %v446 = vadd.s32 %v445, %v435
        %v447 = vadd.s32 %v446, %v437
        %v448 = vshrl.u32 %v447, 8
        %v449 = vmul.u32 %v448, 324
        %v450 = vsub.s32 %v426, %v449
        %v451 = vsub.s32 0, %v450
        %v452 = vsel %vm424, %v451, %v450
        %vm453 = vcmp.lt.s32.totalorder %v389, 0
        %v454 = vsub.s32 0, %v389
        %v455 = vsel %vm453, %v454, %v389
        %v456 = vand.u32 %v455, 65535
        %v457 = vshrl.u32 %v455, 16
        %v459 = vmul.u32 %v456, 34791
        %v460 = vmul.u32 %v456, 51781
        %v461 = vmul.u32 %v457, 34791
        %v462 = vmul.u32 %v457, 51781
        %v463 = vshll.u32 %v460, 16
        %v464 = vshrl.u32 %v460, 16
        %v465 = vshll.u32 %v461, 16
        %v466 = vshrl.u32 %v461, 16
        %vm467 = vc.u32 %v459, %v463
        %v468 = vsel %vm467, 1, 0
        %v469 = vadd.s32 %v459, %v463
        %v470 = vadd.s32 %v462, %v468
        %vm471 = vc.u32 %v469, %v465
        %v472 = vsel %vm471, 1, 0
        %v473 = vadd.s32 %v469, %v465
        %v474 = vadd.s32 %v470, %v472
        %v475 = vadd.s32 %v474, %v464
        %v476 = vadd.s32 %v475, %v466
        %v477 = vshrl.u32 %v476, 8
        %v478 = vmul.u32 %v477, 324
        %v479 = vsub.s32 %v455, %v478
        %v480 = vsub.s32 0, %v479
        %v481 = vsel %vm453, %v480, %v479
        %vm482 = vcmp.lt.s32.totalorder %v390, 0
        %v483 = vsub.s32 0, %v390
        %v484 = vsel %vm482, %v483, %v390
        %v485 = vand.u32 %v484, 65535
        %v486 = vshrl.u32 %v484, 16
        %v488 = vmul.u32 %v485, 34791
        %v489 = vmul.u32 %v485, 51781
        %v490 = vmul.u32 %v486, 34791
        %v491 = vmul.u32 %v486, 51781
        %v492 = vshll.u32 %v489, 16
        %v493 = vshrl.u32 %v489, 16
        %v494 = vshll.u32 %v490, 16
        %v495 = vshrl.u32 %v490, 16
        %vm496 = vc.u32 %v488, %v492
        %v497 = vsel %vm496, 1, 0
        %v498 = vadd.s32 %v488, %v492
        %v499 = vadd.s32 %v491, %v497
        %vm500 = vc.u32 %v498, %v494
        %v501 = vsel %vm500, 1, 0
        %v502 = vadd.s32 %v498, %v494
        %v503 = vadd.s32 %v499, %v501
        %v504 = vadd.s32 %v503, %v493
        %v505 = vadd.s32 %v504, %v495
        %v506 = vshrl.u32 %v505, 8
        %v507 = vmul.u32 %v506, 324
        %v508 = vsub.s32 %v484, %v507
        %v509 = vsub.s32 0, %v508
        %v510 = vsel %vm482, %v509, %v508
        %vm511 = vcmp.lt.s32.totalorder %v391, 0
        %v512 = vsub.s32 0, %v391
        %v513 = vsel %vm511, %v512, %v391
        %v514 = vand.u32 %v513, 65535
        %v515 = vshrl.u32 %v513, 16
        %v517 = vmul.u32 %v514, 34791
        %v518 = vmul.u32 %v514, 51781
        %v519 = vmul.u32 %v515, 34791
        %v520 = vmul.u32 %v515, 51781
        %v521 = vshll.u32 %v518, 16
        %v522 = vshrl.u32 %v518, 16
        %v523 = vshll.u32 %v519, 16
        %v524 = vshrl.u32 %v519, 16
        %vm525 = vc.u32 %v517, %v521
        %v526 = vsel %vm525, 1, 0
        %v527 = vadd.s32 %v517, %v521
        %v528 = vadd.s32 %v520, %v526
        %vm529 = vc.u32 %v527, %v523
        %v530 = vsel %vm529, 1, 0
        %v531 = vadd.s32 %v527, %v523
        %v532 = vadd.s32 %v528, %v530
        %v533 = vadd.s32 %v532, %v522
        %v534 = vadd.s32 %v533, %v524
        %v535 = vshrl.u32 %v534, 8
        %v536 = vmul.u32 %v535, 324
        %v537 = vsub.s32 %v513, %v536
        %v538 = vsub.s32 0, %v537
        %v539 = vsel %vm511, %v538, %v537
        %vm540 = vcmp.lt.s32.totalorder %v392, 0
        %v541 = vsub.s32 0, %v392
        %v542 = vsel %vm540, %v541, %v392
        %v543 = vand.u32 %v542, 65535
        %v544 = vshrl.u32 %v542, 16
        %v546 = vmul.u32 %v543, 34791
        %v547 = vmul.u32 %v543, 51781
        %v548 = vmul.u32 %v544, 34791
        %v549 = vmul.u32 %v544, 51781
        %v550 = vshll.u32 %v547, 16
        %v551 = vshrl.u32 %v547, 16
        %v552 = vshll.u32 %v548, 16
        %v553 = vshrl.u32 %v548, 16
        %vm554 = vc.u32 %v546, %v550
        %v555 = vsel %vm554, 1, 0
        %v556 = vadd.s32 %v546, %v550
        %v557 = vadd.s32 %v549, %v555
        %vm558 = vc.u32 %v556, %v552
        %v559 = vsel %vm558, 1, 0
        %v560 = vadd.s32 %v556, %v552
        %v561 = vadd.s32 %v557, %v559
        %v562 = vadd.s32 %v561, %v551
        %v563 = vadd.s32 %v562, %v553
        %v564 = vshrl.u32 %v563, 8
        %v565 = vmul.u32 %v564, 324
        %v566 = vsub.s32 %v542, %v565
        %v567 = vsub.s32 0, %v566
        %v568 = vsel %vm540, %v567, %v566
        %vm569 = vcmp.lt.s32.totalorder %v393, 0
        %v570 = vsub.s32 0, %v393
        %v571 = vsel %vm569, %v570, %v393
        %v572 = vand.u32 %v571, 65535
        %v573 = vshrl.u32 %v571, 16
        %v575 = vmul.u32 %v572, 34791
        %v576 = vmul.u32 %v572, 51781
        %v577 = vmul.u32 %v573, 34791
        %v578 = vmul.u32 %v573, 51781
        %v579 = vshll.u32 %v576, 16
        %v580 = vshrl.u32 %v576, 16
        %v581 = vshll.u32 %v577, 16
        %v582 = vshrl.u32 %v577, 16
        %vm583 = vc.u32 %v575, %v579
        %v584 = vsel %vm583, 1, 0
        %v585 = vadd.s32 %v575, %v579
        %v586 = vadd.s32 %v578, %v584
        %vm587 = vc.u32 %v585, %v581
        %v588 = vsel %vm587, 1, 0
        %v589 = vadd.s32 %v585, %v581
        %v590 = vadd.s32 %v586, %v588
        %v591 = vadd.s32 %v590, %v580
        %v592 = vadd.s32 %v591, %v582
        %v593 = vshrl.u32 %v592, 8
        %v594 = vmul.u32 %v593, 324
        %v595 = vsub.s32 %v571, %v594
        %v596 = vsub.s32 0, %v595
        %v597 = vsel %vm569, %v596, %v595
        %vm598 = vcmp.lt.s32.totalorder %v394, 0
        %v599 = vsub.s32 0, %v394
        %v600 = vsel %vm598, %v599, %v394
        %v601 = vand.u32 %v600, 65535
        %v602 = vshrl.u32 %v600, 16
        %v604 = vmul.u32 %v601, 34791
        %v605 = vmul.u32 %v601, 51781
        %v606 = vmul.u32 %v602, 34791
        %v607 = vmul.u32 %v602, 51781
        %v608 = vshll.u32 %v605, 16
        %v609 = vshrl.u32 %v605, 16
        %v610 = vshll.u32 %v606, 16
        %v611 = vshrl.u32 %v606, 16
        %vm612 = vc.u32 %v604, %v608
        %v613 = vsel %vm612, 1, 0
        %v614 = vadd.s32 %v604, %v608
        %v615 = vadd.s32 %v607, %v613
        %vm616 = vc.u32 %v614, %v610
        %v617 = vsel %vm616, 1, 0
        %v618 = vadd.s32 %v614, %v610
        %v619 = vadd.s32 %v615, %v617
        %v620 = vadd.s32 %v619, %v609
        %v621 = vadd.s32 %v620, %v611
        %v622 = vshrl.u32 %v621, 8
        %v623 = vmul.u32 %v622, 324
        %v624 = vsub.s32 %v600, %v623
        %v625 = vsub.s32 0, %v624
        %v626 = vsel %vm598, %v625, %v624
        %vm627 = vcmp.lt.s32.totalorder %v395, 0
        %v628 = vsub.s32 0, %v395
        %v629 = vsel %vm627, %v628, %v395
        %v630 = vand.u32 %v629, 65535
        %v631 = vshrl.u32 %v629, 16
        %v633 = vmul.u32 %v630, 34791
        %v634 = vmul.u32 %v630, 51781
        %v635 = vmul.u32 %v631, 34791
        %v636 = vmul.u32 %v631, 51781
        %v637 = vshll.u32 %v634, 16
        %v638 = vshrl.u32 %v634, 16
        %v639 = vshll.u32 %v635, 16
        %v640 = vshrl.u32 %v635, 16
        %vm641 = vc.u32 %v633, %v637
        %v642 = vsel %vm641, 1, 0
        %v643 = vadd.s32 %v633, %v637
        %v644 = vadd.s32 %v636, %v642
        %vm645 = vc.u32 %v643, %v639
        %v646 = vsel %vm645, 1, 0
        %v647 = vadd.s32 %v643, %v639
        %v648 = vadd.s32 %v644, %v646
        %v649 = vadd.s32 %v648, %v638
        %v650 = vadd.s32 %v649, %v640
        %v651 = vshrl.u32 %v650, 8
        %v652 = vmul.u32 %v651, 324
        %v653 = vsub.s32 %v629, %v652
        %v654 = vsub.s32 0, %v653
        %v655 = vsel %vm627, %v654, %v653
        %vm656 = vcmp.lt.s32.totalorder %v396, 0
        %v657 = vsub.s32 0, %v396
        %v658 = vsel %vm656, %v657, %v396
        %v659 = vand.u32 %v658, 65535
        %v660 = vshrl.u32 %v658, 16
        %v662 = vmul.u32 %v659, 34791
        %v663 = vmul.u32 %v659, 51781
        %v664 = vmul.u32 %v660, 34791
        %v665 = vmul.u32 %v660, 51781
        %v666 = vshll.u32 %v663, 16
        %v667 = vshrl.u32 %v663, 16
        %v668 = vshll.u32 %v664, 16
        %v669 = vshrl.u32 %v664, 16
        %vm670 = vc.u32 %v662, %v666
        %v671 = vsel %vm670, 1, 0
        %v672 = vadd.s32 %v662, %v666
        %v673 = vadd.s32 %v665, %v671
        %vm674 = vc.u32 %v672, %v668
        %v675 = vsel %vm674, 1, 0
        %v676 = vadd.s32 %v672, %v668
        %v677 = vadd.s32 %v673, %v675
        %v678 = vadd.s32 %v677, %v667
        %v679 = vadd.s32 %v678, %v669
        %v680 = vshrl.u32 %v679, 8
        %v681 = vmul.u32 %v680, 324
        %v682 = vsub.s32 %v658, %v681
        %v683 = vsub.s32 0, %v682
        %v684 = vsel %vm656, %v683, %v682
        %vm685 = vcmp.lt.s32.totalorder %v397, 0
        %v686 = vsub.s32 0, %v397
        %v687 = vsel %vm685, %v686, %v397
        %v688 = vand.u32 %v687, 65535
        %v689 = vshrl.u32 %v687, 16
        %v691 = vmul.u32 %v688, 34791
        %v692 = vmul.u32 %v688, 51781
        %v693 = vmul.u32 %v689, 34791
        %v694 = vmul.u32 %v689, 51781
        %v695 = vshll.u32 %v692, 16
        %v696 = vshrl.u32 %v692, 16
        %v697 = vshll.u32 %v693, 16
        %v698 = vshrl.u32 %v693, 16
        %vm699 = vc.u32 %v691, %v695
        %v700 = vsel %vm699, 1, 0
        %v701 = vadd.s32 %v691, %v695
        %v702 = vadd.s32 %v694, %v700
        %vm703 = vc.u32 %v701, %v697
        %v704 = vsel %vm703, 1, 0
        %v705 = vadd.s32 %v701, %v697
        %v706 = vadd.s32 %v702, %v704
        %v707 = vadd.s32 %v706, %v696
        %v708 = vadd.s32 %v707, %v698
        %v709 = vshrl.u32 %v708, 8
        %v710 = vmul.u32 %v709, 324
        %v711 = vsub.s32 %v687, %v710
        %v712 = vsub.s32 0, %v711
        %v713 = vsel %vm685, %v712, %v711
        %vm714 = vcmp.lt.s32.totalorder %v398, 0
        %v715 = vsub.s32 0, %v398
        %v716 = vsel %vm714, %v715, %v398
        %v717 = vand.u32 %v716, 65535
        %v718 = vshrl.u32 %v716, 16
        %v720 = vmul.u32 %v717, 34791
        %v721 = vmul.u32 %v717, 51781
        %v722 = vmul.u32 %v718, 34791
        %v723 = vmul.u32 %v718, 51781
        %v724 = vshll.u32 %v721, 16
        %v725 = vshrl.u32 %v721, 16
        %v726 = vshll.u32 %v722, 16
        %v727 = vshrl.u32 %v722, 16
        %vm728 = vc.u32 %v720, %v724
        %v729 = vsel %vm728, 1, 0
        %v730 = vadd.s32 %v720, %v724
        %v731 = vadd.s32 %v723, %v729
        %vm732 = vc.u32 %v730, %v726
        %v733 = vsel %vm732, 1, 0
        %v734 = vadd.s32 %v730, %v726
        %v735 = vadd.s32 %v731, %v733
        %v736 = vadd.s32 %v735, %v725
        %v737 = vadd.s32 %v736, %v727
        %v738 = vshrl.u32 %v737, 8
        %v739 = vmul.u32 %v738, 324
        %v740 = vsub.s32 %v716, %v739
        %v741 = vsub.s32 0, %v740
        %v742 = vsel %vm714, %v741, %v740
        %vm743 = vcmp.lt.s32.totalorder %v399, 0
        %v744 = vsub.s32 0, %v399
        %v745 = vsel %vm743, %v744, %v399
        %v746 = vand.u32 %v745, 65535
        %v747 = vshrl.u32 %v745, 16
        %v749 = vmul.u32 %v746, 34791
        %v750 = vmul.u32 %v746, 51781
        %v751 = vmul.u32 %v747, 34791
        %v752 = vmul.u32 %v747, 51781
        %v753 = vshll.u32 %v750, 16
        %v754 = vshrl.u32 %v750, 16
        %v755 = vshll.u32 %v751, 16
        %v756 = vshrl.u32 %v751, 16
        %vm757 = vc.u32 %v749, %v753
        %v758 = vsel %vm757, 1, 0
        %v759 = vadd.s32 %v749, %v753
        %v760 = vadd.s32 %v752, %v758
        %vm761 = vc.u32 %v759, %v755
        %v762 = vsel %vm761, 1, 0
        %v763 = vadd.s32 %v759, %v755
        %v764 = vadd.s32 %v760, %v762
        %v765 = vadd.s32 %v764, %v754
        %v766 = vadd.s32 %v765, %v756
        %v767 = vshrl.u32 %v766, 8
        %v768 = vmul.u32 %v767, 324
        %v769 = vsub.s32 %v745, %v768
        %v770 = vsub.s32 0, %v769
        %v771 = vsel %vm743, %v770, %v769
        %vm772 = vcmp.lt.s32.totalorder %v400, 0
        %v773 = vsub.s32 0, %v400
        %v774 = vsel %vm772, %v773, %v400
        %v775 = vand.u32 %v774, 65535
        %v776 = vshrl.u32 %v774, 16
        %v778 = vmul.u32 %v775, 34791
        %v779 = vmul.u32 %v775, 51781
        %v780 = vmul.u32 %v776, 34791
        %v781 = vmul.u32 %v776, 51781
        %v782 = vshll.u32 %v779, 16
        %v783 = vshrl.u32 %v779, 16
        %v784 = vshll.u32 %v780, 16
        %v785 = vshrl.u32 %v780, 16
        %vm786 = vc.u32 %v778, %v782
        %v787 = vsel %vm786, 1, 0
        %v788 = vadd.s32 %v778, %v782
        %v789 = vadd.s32 %v781, %v787
        %vm790 = vc.u32 %v788, %v784
        %v791 = vsel %vm790, 1, 0
        %v792 = vadd.s32 %v788, %v784
        %v793 = vadd.s32 %v789, %v791
        %v794 = vadd.s32 %v793, %v783
        %v795 = vadd.s32 %v794, %v785
        %v796 = vshrl.u32 %v795, 8
        %v797 = vmul.u32 %v796, 324
        %v798 = vsub.s32 %v774, %v797
        %v799 = vsub.s32 0, %v798
        %v800 = vsel %vm772, %v799, %v798
        %vm801 = vcmp.lt.s32.totalorder %v401, 0
        %v802 = vsub.s32 0, %v401
        %v803 = vsel %vm801, %v802, %v401
        %v804 = vand.u32 %v803, 65535
        %v805 = vshrl.u32 %v803, 16
        %v807 = vmul.u32 %v804, 34791
        %v808 = vmul.u32 %v804, 51781
        %v809 = vmul.u32 %v805, 34791
        %v810 = vmul.u32 %v805, 51781
        %v811 = vshll.u32 %v808, 16
        %v812 = vshrl.u32 %v808, 16
        %v813 = vshll.u32 %v809, 16
        %v814 = vshrl.u32 %v809, 16
        %vm815 = vc.u32 %v807, %v811
        %v816 = vsel %vm815, 1, 0
        %v817 = vadd.s32 %v807, %v811
        %v818 = vadd.s32 %v810, %v816
        %vm819 = vc.u32 %v817, %v813
        %v820 = vsel %vm819, 1, 0
        %v821 = vadd.s32 %v817, %v813
        %v822 = vadd.s32 %v818, %v820
        %v823 = vadd.s32 %v822, %v812
        %v824 = vadd.s32 %v823, %v814
        %v825 = vshrl.u32 %v824, 8
        %v826 = vmul.u32 %v825, 324
        %v827 = vsub.s32 %v803, %v826
        %v828 = vsub.s32 0, %v827
        %v829 = vsel %vm801, %v828, %v827
        %vm830 = vcmp.lt.s32.totalorder %v402, 0
        %v831 = vsub.s32 0, %v402
        %v832 = vsel %vm830, %v831, %v402
        %v833 = vand.u32 %v832, 65535
        %v834 = vshrl.u32 %v832, 16
        %v836 = vmul.u32 %v833, 34791
        %v837 = vmul.u32 %v833, 51781
        %v838 = vmul.u32 %v834, 34791
        %v839 = vmul.u32 %v834, 51781
        %v840 = vshll.u32 %v837, 16
        %v841 = vshrl.u32 %v837, 16
        %v842 = vshll.u32 %v838, 16
        %v843 = vshrl.u32 %v838, 16
        %vm844 = vc.u32 %v836, %v840
        %v845 = vsel %vm844, 1, 0
        %v846 = vadd.s32 %v836, %v840
        %v847 = vadd.s32 %v839, %v845
        %vm848 = vc.u32 %v846, %v842
        %v849 = vsel %vm848, 1, 0
        %v850 = vadd.s32 %v846, %v842
        %v851 = vadd.s32 %v847, %v849
        %v852 = vadd.s32 %v851, %v841
        %v853 = vadd.s32 %v852, %v843
        %v854 = vshrl.u32 %v853, 8
        %v855 = vmul.u32 %v854, 324
        %v856 = vsub.s32 %v832, %v855
        %v857 = vsub.s32 0, %v856
        %v858 = vsel %vm830, %v857, %v856
        %vm859 = vcmp.lt.s32.totalorder %v403, 0
        %v860 = vsub.s32 0, %v403
        %v861 = vsel %vm859, %v860, %v403
        %v862 = vand.u32 %v861, 65535
        %v863 = vshrl.u32 %v861, 16
        %v865 = vmul.u32 %v862, 34791
        %v866 = vmul.u32 %v862, 51781
        %v867 = vmul.u32 %v863, 34791
        %v868 = vmul.u32 %v863, 51781
        %v869 = vshll.u32 %v866, 16
        %v870 = vshrl.u32 %v866, 16
        %v871 = vshll.u32 %v867, 16
        %v872 = vshrl.u32 %v867, 16
        %vm873 = vc.u32 %v865, %v869
        %v874 = vsel %vm873, 1, 0
        %v875 = vadd.s32 %v865, %v869
        %v876 = vadd.s32 %v868, %v874
        %vm877 = vc.u32 %v875, %v871
        %v878 = vsel %vm877, 1, 0
        %v879 = vadd.s32 %v875, %v871
        %v880 = vadd.s32 %v876, %v878
        %v881 = vadd.s32 %v880, %v870
        %v882 = vadd.s32 %v881, %v872
        %v883 = vshrl.u32 %v882, 8
        %v884 = vmul.u32 %v883, 324
        %v885 = vsub.s32 %v861, %v884
        %v886 = vsub.s32 0, %v885
        %v887 = vsel %vm859, %v886, %v885
        %vm888 = vcmp.lt.s32.totalorder %v404, 0
        %v889 = vsub.s32 0, %v404
        %v890 = vsel %vm888, %v889, %v404
        %v891 = vand.u32 %v890, 65535
        %v892 = vshrl.u32 %v890, 16
        %v894 = vmul.u32 %v891, 34791
        %v895 = vmul.u32 %v891, 51781
        %v896 = vmul.u32 %v892, 34791
        %v897 = vmul.u32 %v892, 51781
        %v898 = vshll.u32 %v895, 16
        %v899 = vshrl.u32 %v895, 16
        %v900 = vshll.u32 %v896, 16
        %v901 = vshrl.u32 %v896, 16
        %vm902 = vc.u32 %v894, %v898
        %v903 = vsel %vm902, 1, 0
        %v904 = vadd.s32 %v894, %v898
        %v905 = vadd.s32 %v897, %v903
        %vm906 = vc.u32 %v904, %v900
        %v907 = vsel %vm906, 1, 0
        %v908 = vadd.s32 %v904, %v900
        %v909 = vadd.s32 %v905, %v907
        %v910 = vadd.s32 %v909, %v899
        %v911 = vadd.s32 %v910, %v901
        %v912 = vshrl.u32 %v911, 8
        %v913 = vmul.u32 %v912, 324
        %v914 = vsub.s32 %v890, %v913
        %v915 = vsub.s32 0, %v914
        %v916 = vsel %vm888, %v915, %v914
        %vm917 = vcmp.lt.s32.totalorder %v405, 0
        %v918 = vsub.s32 0, %v405
        %v919 = vsel %vm917, %v918, %v405
        %v920 = vand.u32 %v919, 65535
        %v921 = vshrl.u32 %v919, 16
        %v923 = vmul.u32 %v920, 34791
        %v924 = vmul.u32 %v920, 51781
        %v925 = vmul.u32 %v921, 34791
        %v926 = vmul.u32 %v921, 51781
        %v927 = vshll.u32 %v924, 16
        %v928 = vshrl.u32 %v924, 16
        %v929 = vshll.u32 %v925, 16
        %v930 = vshrl.u32 %v925, 16
        %vm931 = vc.u32 %v923, %v927
        %v932 = vsel %vm931, 1, 0
        %v933 = vadd.s32 %v923, %v927
        %v934 = vadd.s32 %v926, %v932
        %vm935 = vc.u32 %v933, %v929
        %v936 = vsel %vm935, 1, 0
        %v937 = vadd.s32 %v933, %v929
        %v938 = vadd.s32 %v934, %v936
        %v939 = vadd.s32 %v938, %v928
        %v940 = vadd.s32 %v939, %v930
        %v941 = vshrl.u32 %v940, 8
        %v942 = vmul.u32 %v941, 324
        %v943 = vsub.s32 %v919, %v942
        %v944 = vsub.s32 0, %v943
        %v945 = vsel %vm917, %v944, %v943
        %vm946 = vcmp.lt.s32.totalorder %v406, 0
        %v947 = vsub.s32 0, %v406
        %v948 = vsel %vm946, %v947, %v406
        %v949 = vand.u32 %v948, 65535
        %v950 = vshrl.u32 %v948, 16
        %v952 = vmul.u32 %v949, 34791
        %v953 = vmul.u32 %v949, 51781
        %v954 = vmul.u32 %v950, 34791
        %v955 = vmul.u32 %v950, 51781
        %v956 = vshll.u32 %v953, 16
        %v957 = vshrl.u32 %v953, 16
        %v958 = vshll.u32 %v954, 16
        %v959 = vshrl.u32 %v954, 16
        %vm960 = vc.u32 %v952, %v956
        %v961 = vsel %vm960, 1, 0
        %v962 = vadd.s32 %v952, %v956
        %v963 = vadd.s32 %v955, %v961
        %vm964 = vc.u32 %v962, %v958
        %v965 = vsel %vm964, 1, 0
        %v966 = vadd.s32 %v962, %v958
        %v967 = vadd.s32 %v963, %v965
        %v968 = vadd.s32 %v967, %v957
        %v969 = vadd.s32 %v968, %v959
        %v970 = vshrl.u32 %v969, 8
        %v971 = vmul.u32 %v970, 324
        %v972 = vsub.s32 %v948, %v971
        %v973 = vsub.s32 0, %v972
        %v974 = vsel %vm946, %v973, %v972
        %vm975 = vcmp.lt.s32.totalorder %v407, 0
        %v976 = vsub.s32 0, %v407
        %v977 = vsel %vm975, %v976, %v407
        %v978 = vand.u32 %v977, 65535
        %v979 = vshrl.u32 %v977, 16
        %v981 = vmul.u32 %v978, 34791
        %v982 = vmul.u32 %v978, 51781
        %v983 = vmul.u32 %v979, 34791
        %v984 = vmul.u32 %v979, 51781
        %v985 = vshll.u32 %v982, 16
        %v986 = vshrl.u32 %v982, 16
        %v987 = vshll.u32 %v983, 16
        %v988 = vshrl.u32 %v983, 16
        %vm989 = vc.u32 %v981, %v985
        %v990 = vsel %vm989, 1, 0
        %v991 = vadd.s32 %v981, %v985
        %v992 = vadd.s32 %v984, %v990
        %vm993 = vc.u32 %v991, %v987
        %v994 = vsel %vm993, 1, 0
        %v995 = vadd.s32 %v991, %v987
        %v996 = vadd.s32 %v992, %v994
        %v997 = vadd.s32 %v996, %v986
        %v998 = vadd.s32 %v997, %v988
        %v999 = vshrl.u32 %v998, 8
        %v1000 = vmul.u32 %v999, 324
        %v1001 = vsub.s32 %v977, %v1000
        %v1002 = vsub.s32 0, %v1001
        %v1003 = vsel %vm975, %v1002, %v1001
        %vm1004 = vcmp.lt.s32.totalorder %v408, 0
        %v1005 = vsub.s32 0, %v408
        %v1006 = vsel %vm1004, %v1005, %v408
        %v1007 = vand.u32 %v1006, 65535
        %v1008 = vshrl.u32 %v1006, 16
        %v1010 = vmul.u32 %v1007, 34791
        %v1011 = vmul.u32 %v1007, 51781
        %v1012 = vmul.u32 %v1008, 34791
        %v1013 = vmul.u32 %v1008, 51781
        %v1014 = vshll.u32 %v1011, 16
        %v1015 = vshrl.u32 %v1011, 16
        %v1016 = vshll.u32 %v1012, 16
        %v1017 = vshrl.u32 %v1012, 16
        %vm1018 = vc.u32 %v1010, %v1014
        %v1019 = vsel %vm1018, 1, 0
        %v1020 = vadd.s32 %v1010, %v1014
        %v1021 = vadd.s32 %v1013, %v1019
        %vm1022 = vc.u32 %v1020, %v1016
        %v1023 = vsel %vm1022, 1, 0
        %v1024 = vadd.s32 %v1020, %v1016
        %v1025 = vadd.s32 %v1021, %v1023
        %v1026 = vadd.s32 %v1025, %v1015
        %v1027 = vadd.s32 %v1026, %v1017
        %v1028 = vshrl.u32 %v1027, 8
        %v1029 = vmul.u32 %v1028, 324
        %v1030 = vsub.s32 %v1006, %v1029
        %v1031 = vsub.s32 0, %v1030
        %v1032 = vsel %vm1004, %v1031, %v1030
        %vm1033 = vcmp.lt.s32.totalorder %v409, 0
        %v1034 = vsub.s32 0, %v409
        %v1035 = vsel %vm1033, %v1034, %v409
        %v1036 = vand.u32 %v1035, 65535
        %v1037 = vshrl.u32 %v1035, 16
        %v1039 = vmul.u32 %v1036, 34791
        %v1040 = vmul.u32 %v1036, 51781
        %v1041 = vmul.u32 %v1037, 34791
        %v1042 = vmul.u32 %v1037, 51781
        %v1043 = vshll.u32 %v1040, 16
        %v1044 = vshrl.u32 %v1040, 16
        %v1045 = vshll.u32 %v1041, 16
        %v1046 = vshrl.u32 %v1041, 16
        %vm1047 = vc.u32 %v1039, %v1043
        %v1048 = vsel %vm1047, 1, 0
        %v1049 = vadd.s32 %v1039, %v1043
        %v1050 = vadd.s32 %v1042, %v1048
        %vm1051 = vc.u32 %v1049, %v1045
        %v1052 = vsel %vm1051, 1, 0
        %v1053 = vadd.s32 %v1049, %v1045
        %v1054 = vadd.s32 %v1050, %v1052
        %v1055 = vadd.s32 %v1054, %v1044
        %v1056 = vadd.s32 %v1055, %v1046
        %v1057 = vshrl.u32 %v1056, 8
        %v1058 = vmul.u32 %v1057, 324
        %v1059 = vsub.s32 %v1035, %v1058
        %v1060 = vsub.s32 0, %v1059
        %v1061 = vsel %vm1033, %v1060, %v1059
        %vm1062 = vcmp.lt.s32.totalorder %v410, 0
        %v1063 = vsub.s32 0, %v410
        %v1064 = vsel %vm1062, %v1063, %v410
        %v1065 = vand.u32 %v1064, 65535
        %v1066 = vshrl.u32 %v1064, 16
        %v1068 = vmul.u32 %v1065, 34791
        %v1069 = vmul.u32 %v1065, 51781
        %v1070 = vmul.u32 %v1066, 34791
        %v1071 = vmul.u32 %v1066, 51781
        %v1072 = vshll.u32 %v1069, 16
        %v1073 = vshrl.u32 %v1069, 16
        %v1074 = vshll.u32 %v1070, 16
        %v1075 = vshrl.u32 %v1070, 16
        %vm1076 = vc.u32 %v1068, %v1072
        %v1077 = vsel %vm1076, 1, 0
        %v1078 = vadd.s32 %v1068, %v1072
        %v1079 = vadd.s32 %v1071, %v1077
        %vm1080 = vc.u32 %v1078, %v1074
        %v1081 = vsel %vm1080, 1, 0
        %v1082 = vadd.s32 %v1078, %v1074
        %v1083 = vadd.s32 %v1079, %v1081
        %v1084 = vadd.s32 %v1083, %v1073
        %v1085 = vadd.s32 %v1084, %v1075
        %v1086 = vshrl.u32 %v1085, 8
        %v1087 = vmul.u32 %v1086, 324
        %v1088 = vsub.s32 %v1064, %v1087
        %v1089 = vsub.s32 0, %v1088
        %v1090 = vsel %vm1062, %v1089, %v1088
        %vm1091 = vcmp.lt.s32.totalorder %v411, 0
        %v1092 = vsub.s32 0, %v411
        %v1093 = vsel %vm1091, %v1092, %v411
        %v1094 = vand.u32 %v1093, 65535
        %v1095 = vshrl.u32 %v1093, 16
        %v1097 = vmul.u32 %v1094, 34791
        %v1098 = vmul.u32 %v1094, 51781
        %v1099 = vmul.u32 %v1095, 34791
        %v1100 = vmul.u32 %v1095, 51781
        %v1101 = vshll.u32 %v1098, 16
        %v1102 = vshrl.u32 %v1098, 16
        %v1103 = vshll.u32 %v1099, 16
        %v1104 = vshrl.u32 %v1099, 16
        %vm1105 = vc.u32 %v1097, %v1101
        %v1106 = vsel %vm1105, 1, 0
        %v1107 = vadd.s32 %v1097, %v1101
        %v1108 = vadd.s32 %v1100, %v1106
        %vm1109 = vc.u32 %v1107, %v1103
        %v1110 = vsel %vm1109, 1, 0
        %v1111 = vadd.s32 %v1107, %v1103
        %v1112 = vadd.s32 %v1108, %v1110
        %v1113 = vadd.s32 %v1112, %v1102
        %v1114 = vadd.s32 %v1113, %v1104
        %v1115 = vshrl.u32 %v1114, 8
        %v1116 = vmul.u32 %v1115, 324
        %v1117 = vsub.s32 %v1093, %v1116
        %v1118 = vsub.s32 0, %v1117
        %v1119 = vsel %vm1091, %v1118, %v1117
        %vm1120 = vcmp.lt.s32.totalorder %v412, 0
        %v1121 = vsub.s32 0, %v412
        %v1122 = vsel %vm1120, %v1121, %v412
        %v1123 = vand.u32 %v1122, 65535
        %v1124 = vshrl.u32 %v1122, 16
        %v1126 = vmul.u32 %v1123, 34791
        %v1127 = vmul.u32 %v1123, 51781
        %v1128 = vmul.u32 %v1124, 34791
        %v1129 = vmul.u32 %v1124, 51781
        %v1130 = vshll.u32 %v1127, 16
        %v1131 = vshrl.u32 %v1127, 16
        %v1132 = vshll.u32 %v1128, 16
        %v1133 = vshrl.u32 %v1128, 16
        %vm1134 = vc.u32 %v1126, %v1130
        %v1135 = vsel %vm1134, 1, 0
        %v1136 = vadd.s32 %v1126, %v1130
        %v1137 = vadd.s32 %v1129, %v1135
        %vm1138 = vc.u32 %v1136, %v1132
        %v1139 = vsel %vm1138, 1, 0
        %v1140 = vadd.s32 %v1136, %v1132
        %v1141 = vadd.s32 %v1137, %v1139
        %v1142 = vadd.s32 %v1141, %v1131
        %v1143 = vadd.s32 %v1142, %v1133
        %v1144 = vshrl.u32 %v1143, 8
        %v1145 = vmul.u32 %v1144, 324
        %v1146 = vsub.s32 %v1122, %v1145
        %v1147 = vsub.s32 0, %v1146
        %v1148 = vsel %vm1120, %v1147, %v1146
        %vm1149 = vcmp.lt.s32.totalorder %v413, 0
        %v1150 = vsub.s32 0, %v413
        %v1151 = vsel %vm1149, %v1150, %v413
        %v1152 = vand.u32 %v1151, 65535
        %v1153 = vshrl.u32 %v1151, 16
        %v1155 = vmul.u32 %v1152, 34791
        %v1156 = vmul.u32 %v1152, 51781
        %v1157 = vmul.u32 %v1153, 34791
        %v1158 = vmul.u32 %v1153, 51781
        %v1159 = vshll.u32 %v1156, 16
        %v1160 = vshrl.u32 %v1156, 16
        %v1161 = vshll.u32 %v1157, 16
        %v1162 = vshrl.u32 %v1157, 16
        %vm1163 = vc.u32 %v1155, %v1159
        %v1164 = vsel %vm1163, 1, 0
        %v1165 = vadd.s32 %v1155, %v1159
        %v1166 = vadd.s32 %v1158, %v1164
        %vm1167 = vc.u32 %v1165, %v1161
        %v1168 = vsel %vm1167, 1, 0
        %v1169 = vadd.s32 %v1165, %v1161
        %v1170 = vadd.s32 %v1166, %v1168
        %v1171 = vadd.s32 %v1170, %v1160
        %v1172 = vadd.s32 %v1171, %v1162
        %v1173 = vshrl.u32 %v1172, 8
        %v1174 = vmul.u32 %v1173, 324
        %v1175 = vsub.s32 %v1151, %v1174
        %v1176 = vsub.s32 0, %v1175
        %v1177 = vsel %vm1149, %v1176, %v1175
        %vm1178 = vcmp.lt.s32.totalorder %v414, 0
        %v1179 = vsub.s32 0, %v414
        %v1180 = vsel %vm1178, %v1179, %v414
        %v1181 = vand.u32 %v1180, 65535
        %v1182 = vshrl.u32 %v1180, 16
        %v1184 = vmul.u32 %v1181, 34791
        %v1185 = vmul.u32 %v1181, 51781
        %v1186 = vmul.u32 %v1182, 34791
        %v1187 = vmul.u32 %v1182, 51781
        %v1188 = vshll.u32 %v1185, 16
        %v1189 = vshrl.u32 %v1185, 16
        %v1190 = vshll.u32 %v1186, 16
        %v1191 = vshrl.u32 %v1186, 16
        %vm1192 = vc.u32 %v1184, %v1188
        %v1193 = vsel %vm1192, 1, 0
        %v1194 = vadd.s32 %v1184, %v1188
        %v1195 = vadd.s32 %v1187, %v1193
        %vm1196 = vc.u32 %v1194, %v1190
        %v1197 = vsel %vm1196, 1, 0
        %v1198 = vadd.s32 %v1194, %v1190
        %v1199 = vadd.s32 %v1195, %v1197
        %v1200 = vadd.s32 %v1199, %v1189
        %v1201 = vadd.s32 %v1200, %v1191
        %v1202 = vshrl.u32 %v1201, 8
        %v1203 = vmul.u32 %v1202, 324
        %v1204 = vsub.s32 %v1180, %v1203
        %v1205 = vsub.s32 0, %v1204
        %v1206 = vsel %vm1178, %v1205, %v1204
        %vm1207 = vcmp.lt.s32.totalorder %v415, 0
        %v1208 = vsub.s32 0, %v415
        %v1209 = vsel %vm1207, %v1208, %v415
        %v1210 = vand.u32 %v1209, 65535
        %v1211 = vshrl.u32 %v1209, 16
        %v1213 = vmul.u32 %v1210, 34791
        %v1214 = vmul.u32 %v1210, 51781
        %v1215 = vmul.u32 %v1211, 34791
        %v1216 = vmul.u32 %v1211, 51781
        %v1217 = vshll.u32 %v1214, 16
        %v1218 = vshrl.u32 %v1214, 16
        %v1219 = vshll.u32 %v1215, 16
        %v1220 = vshrl.u32 %v1215, 16
        %vm1221 = vc.u32 %v1213, %v1217
        %v1222 = vsel %vm1221, 1, 0
        %v1223 = vadd.s32 %v1213, %v1217
        %v1224 = vadd.s32 %v1216, %v1222
        %vm1225 = vc.u32 %v1223, %v1219
        %v1226 = vsel %vm1225, 1, 0
        %v1227 = vadd.s32 %v1223, %v1219
        %v1228 = vadd.s32 %v1224, %v1226
        %v1229 = vadd.s32 %v1228, %v1218
        %v1230 = vadd.s32 %v1229, %v1220
        %v1231 = vshrl.u32 %v1230, 8
        %v1232 = vmul.u32 %v1231, 324
        %v1233 = vsub.s32 %v1209, %v1232
        %v1234 = vsub.s32 0, %v1233
        %v1235 = vsel %vm1207, %v1234, %v1233
        %vm1236 = vcmp.lt.s32.totalorder %v416, 0
        %v1237 = vsub.s32 0, %v416
        %v1238 = vsel %vm1236, %v1237, %v416
        %v1239 = vand.u32 %v1238, 65535
        %v1240 = vshrl.u32 %v1238, 16
        %v1242 = vmul.u32 %v1239, 34791
        %v1243 = vmul.u32 %v1239, 51781
        %v1244 = vmul.u32 %v1240, 34791
        %v1245 = vmul.u32 %v1240, 51781
        %v1246 = vshll.u32 %v1243, 16
        %v1247 = vshrl.u32 %v1243, 16
        %v1248 = vshll.u32 %v1244, 16
        %v1249 = vshrl.u32 %v1244, 16
        %vm1250 = vc.u32 %v1242, %v1246
        %v1251 = vsel %vm1250, 1, 0
        %v1252 = vadd.s32 %v1242, %v1246
        %v1253 = vadd.s32 %v1245, %v1251
        %vm1254 = vc.u32 %v1252, %v1248
        %v1255 = vsel %vm1254, 1, 0
        %v1256 = vadd.s32 %v1252, %v1248
        %v1257 = vadd.s32 %v1253, %v1255
        %v1258 = vadd.s32 %v1257, %v1247
        %v1259 = vadd.s32 %v1258, %v1249
        %v1260 = vshrl.u32 %v1259, 8
        %v1261 = vmul.u32 %v1260, 324
        %v1262 = vsub.s32 %v1238, %v1261
        %v1263 = vsub.s32 0, %v1262
        %v1264 = vsel %vm1236, %v1263, %v1262
        %vm1265 = vcmp.lt.s32.totalorder %v417, 0
        %v1266 = vsub.s32 0, %v417
        %v1267 = vsel %vm1265, %v1266, %v417
        %v1268 = vand.u32 %v1267, 65535
        %v1269 = vshrl.u32 %v1267, 16
        %v1271 = vmul.u32 %v1268, 34791
        %v1272 = vmul.u32 %v1268, 51781
        %v1273 = vmul.u32 %v1269, 34791
        %v1274 = vmul.u32 %v1269, 51781
        %v1275 = vshll.u32 %v1272, 16
        %v1276 = vshrl.u32 %v1272, 16
        %v1277 = vshll.u32 %v1273, 16
        %v1278 = vshrl.u32 %v1273, 16
        %vm1279 = vc.u32 %v1271, %v1275
        %v1280 = vsel %vm1279, 1, 0
        %v1281 = vadd.s32 %v1271, %v1275
        %v1282 = vadd.s32 %v1274, %v1280
        %vm1283 = vc.u32 %v1281, %v1277
        %v1284 = vsel %vm1283, 1, 0
        %v1285 = vadd.s32 %v1281, %v1277
        %v1286 = vadd.s32 %v1282, %v1284
        %v1287 = vadd.s32 %v1286, %v1276
        %v1288 = vadd.s32 %v1287, %v1278
        %v1289 = vshrl.u32 %v1288, 8
        %v1290 = vmul.u32 %v1289, 324
        %v1291 = vsub.s32 %v1267, %v1290
        %v1292 = vsub.s32 0, %v1291
        %v1293 = vsel %vm1265, %v1292, %v1291
        %vm1294 = vcmp.lt.s32.totalorder %v418, 0
        %v1295 = vsub.s32 0, %v418
        %v1296 = vsel %vm1294, %v1295, %v418
        %v1297 = vand.u32 %v1296, 65535
        %v1298 = vshrl.u32 %v1296, 16
        %v1300 = vmul.u32 %v1297, 34791
        %v1301 = vmul.u32 %v1297, 51781
        %v1302 = vmul.u32 %v1298, 34791
        %v1303 = vmul.u32 %v1298, 51781
        %v1304 = vshll.u32 %v1301, 16
        %v1305 = vshrl.u32 %v1301, 16
        %v1306 = vshll.u32 %v1302, 16
        %v1307 = vshrl.u32 %v1302, 16
        %vm1308 = vc.u32 %v1300, %v1304
        %v1309 = vsel %vm1308, 1, 0
        %v1310 = vadd.s32 %v1300, %v1304
        %v1311 = vadd.s32 %v1303, %v1309
        %vm1312 = vc.u32 %v1310, %v1306
        %v1313 = vsel %vm1312, 1, 0
        %v1314 = vadd.s32 %v1310, %v1306
        %v1315 = vadd.s32 %v1311, %v1313
        %v1316 = vadd.s32 %v1315, %v1305
        %v1317 = vadd.s32 %v1316, %v1307
        %v1318 = vshrl.u32 %v1317, 8
        %v1319 = vmul.u32 %v1318, 324
        %v1320 = vsub.s32 %v1296, %v1319
        %v1321 = vsub.s32 0, %v1320
        %v1322 = vsel %vm1294, %v1321, %v1320
        %vm1323 = vcmp.lt.s32.totalorder %v419, 0
        %v1324 = vsub.s32 0, %v419
        %v1325 = vsel %vm1323, %v1324, %v419
        %v1326 = vand.u32 %v1325, 65535
        %v1327 = vshrl.u32 %v1325, 16
        %v1329 = vmul.u32 %v1326, 34791
        %v1330 = vmul.u32 %v1326, 51781
        %v1331 = vmul.u32 %v1327, 34791
        %v1332 = vmul.u32 %v1327, 51781
        %v1333 = vshll.u32 %v1330, 16
        %v1334 = vshrl.u32 %v1330, 16
        %v1335 = vshll.u32 %v1331, 16
        %v1336 = vshrl.u32 %v1331, 16
        %vm1337 = vc.u32 %v1329, %v1333
        %v1338 = vsel %vm1337, 1, 0
        %v1339 = vadd.s32 %v1329, %v1333
        %v1340 = vadd.s32 %v1332, %v1338
        %vm1341 = vc.u32 %v1339, %v1335
        %v1342 = vsel %vm1341, 1, 0
        %v1343 = vadd.s32 %v1339, %v1335
        %v1344 = vadd.s32 %v1340, %v1342
        %v1345 = vadd.s32 %v1344, %v1334
        %v1346 = vadd.s32 %v1345, %v1336
        %v1347 = vshrl.u32 %v1346, 8
        %v1348 = vmul.u32 %v1347, 324
        %v1349 = vsub.s32 %v1325, %v1348
        %v1350 = vsub.s32 0, %v1349
        %v1351 = vsel %vm1323, %v1350, %v1349
        %vm1352 = vcmp.lt.s32.totalorder %v420, 0
        %v1353 = vsub.s32 0, %v420
        %v1354 = vsel %vm1352, %v1353, %v420
        %v1355 = vand.u32 %v1354, 65535
        %v1356 = vshrl.u32 %v1354, 16
        %v1358 = vmul.u32 %v1355, 34791
        %v1359 = vmul.u32 %v1355, 51781
        %v1360 = vmul.u32 %v1356, 34791
        %v1361 = vmul.u32 %v1356, 51781
        %v1362 = vshll.u32 %v1359, 16
        %v1363 = vshrl.u32 %v1359, 16
        %v1364 = vshll.u32 %v1360, 16
        %v1365 = vshrl.u32 %v1360, 16
        %vm1366 = vc.u32 %v1358, %v1362
        %v1367 = vsel %vm1366, 1, 0
        %v1368 = vadd.s32 %v1358, %v1362
        %v1369 = vadd.s32 %v1361, %v1367
        %vm1370 = vc.u32 %v1368, %v1364
        %v1371 = vsel %vm1370, 1, 0
        %v1372 = vadd.s32 %v1368, %v1364
        %v1373 = vadd.s32 %v1369, %v1371
        %v1374 = vadd.s32 %v1373, %v1363
        %v1375 = vadd.s32 %v1374, %v1365
        %v1376 = vshrl.u32 %v1375, 8
        %v1377 = vmul.u32 %v1376, 324
        %v1378 = vsub.s32 %v1354, %v1377
        %v1379 = vsub.s32 0, %v1378
        %v1380 = vsel %vm1352, %v1379, %v1378
        %vm1381 = vcmp.lt.s32.totalorder %v421, 0
        %v1382 = vsub.s32 0, %v421
        %v1383 = vsel %vm1381, %v1382, %v421
        %v1384 = vand.u32 %v1383, 65535
        %v1385 = vshrl.u32 %v1383, 16
        %v1387 = vmul.u32 %v1384, 34791
        %v1388 = vmul.u32 %v1384, 51781
        %v1389 = vmul.u32 %v1385, 34791
        %v1390 = vmul.u32 %v1385, 51781
        %v1391 = vshll.u32 %v1388, 16
        %v1392 = vshrl.u32 %v1388, 16
        %v1393 = vshll.u32 %v1389, 16
        %v1394 = vshrl.u32 %v1389, 16
        %vm1395 = vc.u32 %v1387, %v1391
        %v1396 = vsel %vm1395, 1, 0
        %v1397 = vadd.s32 %v1387, %v1391
        %v1398 = vadd.s32 %v1390, %v1396
        %vm1399 = vc.u32 %v1397, %v1393
        %v1400 = vsel %vm1399, 1, 0
        %v1401 = vadd.s32 %v1397, %v1393
        %v1402 = vadd.s32 %v1398, %v1400
        %v1403 = vadd.s32 %v1402, %v1392
        %v1404 = vadd.s32 %v1403, %v1394
        %v1405 = vshrl.u32 %v1404, 8
        %v1406 = vmul.u32 %v1405, 324
        %v1407 = vsub.s32 %v1383, %v1406
        %v1408 = vsub.s32 0, %v1407
        %v1409 = vsel %vm1381, %v1408, %v1407
        %vm1410 = vcmp.lt.s32.totalorder %v422, 0
        %v1411 = vsub.s32 0, %v422
        %v1412 = vsel %vm1410, %v1411, %v422
        %v1413 = vand.u32 %v1412, 65535
        %v1414 = vshrl.u32 %v1412, 16
        %v1416 = vmul.u32 %v1413, 34791
        %v1417 = vmul.u32 %v1413, 51781
        %v1418 = vmul.u32 %v1414, 34791
        %v1419 = vmul.u32 %v1414, 51781
        %v1420 = vshll.u32 %v1417, 16
        %v1421 = vshrl.u32 %v1417, 16
        %v1422 = vshll.u32 %v1418, 16
        %v1423 = vshrl.u32 %v1418, 16
        %vm1424 = vc.u32 %v1416, %v1420
        %v1425 = vsel %vm1424, 1, 0
        %v1426 = vadd.s32 %v1416, %v1420
        %v1427 = vadd.s32 %v1419, %v1425
        %vm1428 = vc.u32 %v1426, %v1422
        %v1429 = vsel %vm1428, 1, 0
        %v1430 = vadd.s32 %v1426, %v1422
        %v1431 = vadd.s32 %v1427, %v1429
        %v1432 = vadd.s32 %v1431, %v1421
        %v1433 = vadd.s32 %v1432, %v1423
        %v1434 = vshrl.u32 %v1433, 8
        %v1435 = vmul.u32 %v1434, 324
        %v1436 = vsub.s32 %v1412, %v1435
        %v1437 = vsub.s32 0, %v1436
        %v1438 = vsel %vm1410, %v1437, %v1436
        %vm1439 = vcmp.lt.s32.totalorder %v423, 0
        %v1440 = vsub.s32 0, %v423
        %v1441 = vsel %vm1439, %v1440, %v423
        %v1442 = vand.u32 %v1441, 65535
        %v1443 = vshrl.u32 %v1441, 16
        %v1445 = vmul.u32 %v1442, 34791
        %v1446 = vmul.u32 %v1442, 51781
        %v1447 = vmul.u32 %v1443, 34791
        %v1448 = vmul.u32 %v1443, 51781
        %v1449 = vshll.u32 %v1446, 16
        %v1450 = vshrl.u32 %v1446, 16
        %v1451 = vshll.u32 %v1447, 16
        %v1452 = vshrl.u32 %v1447, 16
        %vm1453 = vc.u32 %v1445, %v1449
        %v1454 = vsel %vm1453, 1, 0
        %v1455 = vadd.s32 %v1445, %v1449
        %v1456 = vadd.s32 %v1448, %v1454
        %vm1457 = vc.u32 %v1455, %v1451
        %v1458 = vsel %vm1457, 1, 0
        %v1459 = vadd.s32 %v1455, %v1451
        %v1460 = vadd.s32 %v1456, %v1458
        %v1461 = vadd.s32 %v1460, %v1450
        %v1462 = vadd.s32 %v1461, %v1452
        %v1463 = vshrl.u32 %v1462, 8
        %v1464 = vmul.u32 %v1463, 324
        %v1465 = vsub.s32 %v1441, %v1464
        %v1466 = vsub.s32 0, %v1465
        %v1467 = vsel %vm1439, %v1466, %v1465
        %vm1468 = vcmp.ne.s32.totalorder %v452, 0
        %vm1469 = vcmp.ne.s32.totalorder %v481, 0
        %vm1470 = vcmp.ne.s32.totalorder %v510, 0
        %vm1471 = vcmp.ne.s32.totalorder %v539, 0
        %vm1472 = vcmp.ne.s32.totalorder %v568, 0
        %vm1473 = vcmp.ne.s32.totalorder %v597, 0
        %vm1474 = vcmp.ne.s32.totalorder %v626, 0
        %vm1475 = vcmp.ne.s32.totalorder %v655, 0
        %vm1476 = vcmp.ne.s32.totalorder %v684, 0
        %vm1477 = vcmp.ne.s32.totalorder %v713, 0
        %vm1478 = vcmp.ne.s32.totalorder %v742, 0
        %vm1479 = vcmp.ne.s32.totalorder %v771, 0
        %vm1480 = vcmp.ne.s32.totalorder %v800, 0
        %vm1481 = vcmp.ne.s32.totalorder %v829, 0
        %vm1482 = vcmp.ne.s32.totalorder %v858, 0
        %vm1483 = vcmp.ne.s32.totalorder %v887, 0
        %vm1484 = vcmp.ne.s32.totalorder %v916, 0
        %vm1485 = vcmp.ne.s32.totalorder %v945, 0
        %vm1486 = vcmp.ne.s32.totalorder %v974, 0
        %vm1487 = vcmp.ne.s32.totalorder %v1003, 0
        %vm1488 = vcmp.ne.s32.totalorder %v1032, 0
        %vm1489 = vcmp.ne.s32.totalorder %v1061, 0
        %vm1490 = vcmp.ne.s32.totalorder %v1090, 0
        %vm1491 = vcmp.ne.s32.totalorder %v1119, 0
        %vm1492 = vcmp.ne.s32.totalorder %v1148, 0
        %vm1493 = vcmp.ne.s32.totalorder %v1177, 0
        %vm1494 = vcmp.ne.s32.totalorder %v1206, 0
        %vm1495 = vcmp.ne.s32.totalorder %v1235, 0
        %vm1496 = vcmp.ne.s32.totalorder %v1264, 0
        %vm1497 = vcmp.ne.s32.totalorder %v1293, 0
        %vm1498 = vcmp.ne.s32.totalorder %v1322, 0
        %vm1499 = vcmp.ne.s32.totalorder %v1351, 0
        %vm1500 = vcmp.ne.s32.totalorder %v1380, 0
        %vm1501 = vcmp.ne.s32.totalorder %v1409, 0
        %vm1502 = vcmp.ne.s32.totalorder %v1438, 0
        %vm1503 = vcmp.ne.s32.totalorder %v1467, 0
        %vm1504 = vcmp.lt.s32.totalorder %v452, 0
        %vm1505 = vcmp.lt.s32.totalorder %v481, 0
        %vm1506 = vcmp.lt.s32.totalorder %v510, 0
        %vm1507 = vcmp.lt.s32.totalorder %v539, 0
        %vm1508 = vcmp.lt.s32.totalorder %v568, 0
        %vm1509 = vcmp.lt.s32.totalorder %v597, 0
        %vm1510 = vcmp.lt.s32.totalorder %v626, 0
        %vm1511 = vcmp.lt.s32.totalorder %v655, 0
        %vm1512 = vcmp.lt.s32.totalorder %v684, 0
        %vm1513 = vcmp.lt.s32.totalorder %v713, 0
        %vm1514 = vcmp.lt.s32.totalorder %v742, 0
        %vm1515 = vcmp.lt.s32.totalorder %v771, 0
        %vm1516 = vcmp.lt.s32.totalorder %v800, 0
        %vm1517 = vcmp.lt.s32.totalorder %v829, 0
        %vm1518 = vcmp.lt.s32.totalorder %v858, 0
        %vm1519 = vcmp.lt.s32.totalorder %v887, 0
        %vm1520 = vcmp.lt.s32.totalorder %v916, 0
        %vm1521 = vcmp.lt.s32.totalorder %v945, 0
        %vm1522 = vcmp.lt.s32.totalorder %v974, 0
        %vm1523 = vcmp.lt.s32.totalorder %v1003, 0
        %vm1524 = vcmp.lt.s32.totalorder %v1032, 0
        %vm1525 = vcmp.lt.s32.totalorder %v1061, 0
        %vm1526 = vcmp.lt.s32.totalorder %v1090, 0
        %vm1527 = vcmp.lt.s32.totalorder %v1119, 0
        %vm1528 = vcmp.lt.s32.totalorder %v1148, 0
        %vm1529 = vcmp.lt.s32.totalorder %v1177, 0
        %vm1530 = vcmp.lt.s32.totalorder %v1206, 0
        %vm1531 = vcmp.lt.s32.totalorder %v1235, 0
        %vm1532 = vcmp.lt.s32.totalorder %v1264, 0
        %vm1533 = vcmp.lt.s32.totalorder %v1293, 0
        %vm1534 = vcmp.lt.s32.totalorder %v1322, 0
        %vm1535 = vcmp.lt.s32.totalorder %v1351, 0
        %vm1536 = vcmp.lt.s32.totalorder %v1380, 0
        %vm1537 = vcmp.lt.s32.totalorder %v1409, 0
        %vm1538 = vcmp.lt.s32.totalorder %v1438, 0
        %vm1539 = vcmp.lt.s32.totalorder %v1467, 0
        %vm1540 = vmand %vm1504, %vm1468
        %vm1541 = vmand %vm1505, %vm1469
        %vm1542 = vmand %vm1506, %vm1470
        %vm1543 = vmand %vm1507, %vm1471
        %vm1544 = vmand %vm1508, %vm1472
        %vm1545 = vmand %vm1509, %vm1473
        %vm1546 = vmand %vm1510, %vm1474
        %vm1547 = vmand %vm1511, %vm1475
        %vm1548 = vmand %vm1512, %vm1476
        %vm1549 = vmand %vm1513, %vm1477
        %vm1550 = vmand %vm1514, %vm1478
        %vm1551 = vmand %vm1515, %vm1479
        %vm1552 = vmand %vm1516, %vm1480
        %vm1553 = vmand %vm1517, %vm1481
        %vm1554 = vmand %vm1518, %vm1482
        %vm1555 = vmand %vm1519, %vm1483
        %vm1556 = vmand %vm1520, %vm1484
        %vm1557 = vmand %vm1521, %vm1485
        %vm1558 = vmand %vm1522, %vm1486
        %vm1559 = vmand %vm1523, %vm1487
        %vm1560 = vmand %vm1524, %vm1488
        %vm1561 = vmand %vm1525, %vm1489
        %vm1562 = vmand %vm1526, %vm1490
        %vm1563 = vmand %vm1527, %vm1491
        %vm1564 = vmand %vm1528, %vm1492
        %vm1565 = vmand %vm1529, %vm1493
        %vm1566 = vmand %vm1530, %vm1494
        %vm1567 = vmand %vm1531, %vm1495
        %vm1568 = vmand %vm1532, %vm1496
        %vm1569 = vmand %vm1533, %vm1497
        %vm1570 = vmand %vm1534, %vm1498
        %vm1571 = vmand %vm1535, %vm1499
        %vm1572 = vmand %vm1536, %vm1500
        %vm1573 = vmand %vm1537, %vm1501
        %vm1574 = vmand %vm1538, %vm1502
        %vm1575 = vmand %vm1539, %vm1503
        %v1576 = vadd.s32 %v452, 324
        %v1577 = vadd.s32 %v481, 324
        %v1578 = vadd.s32 %v510, 324
        %v1579 = vadd.s32 %v539, 324
        %v1580 = vadd.s32 %v568, 324
        %v1581 = vadd.s32 %v597, 324
        %v1582 = vadd.s32 %v626, 324
        %v1583 = vadd.s32 %v655, 324
        %v1584 = vadd.s32 %v684, 324
        %v1585 = vadd.s32 %v713, 324
        %v1586 = vadd.s32 %v742, 324
        %v1587 = vadd.s32 %v771, 324
        %v1588 = vadd.s32 %v800, 324
        %v1589 = vadd.s32 %v829, 324
        %v1590 = vadd.s32 %v858, 324
        %v1591 = vadd.s32 %v887, 324
        %v1592 = vadd.s32 %v916, 324
        %v1593 = vadd.s32 %v945, 324
        %v1594 = vadd.s32 %v974, 324
        %v1595 = vadd.s32 %v1003, 324
        %v1596 = vadd.s32 %v1032, 324
        %v1597 = vadd.s32 %v1061, 324
        %v1598 = vadd.s32 %v1090, 324
        %v1599 = vadd.s32 %v1119, 324
        %v1600 = vadd.s32 %v1148, 324
        %v1601 = vadd.s32 %v1177, 324
        %v1602 = vadd.s32 %v1206, 324
        %v1603 = vadd.s32 %v1235, 324
        %v1604 = vadd.s32 %v1264, 324
        %v1605 = vadd.s32 %v1293, 324
        %v1606 = vadd.s32 %v1322, 324
        %v1607 = vadd.s32 %v1351, 324
        %v1608 = vadd.s32 %v1380, 324
        %v1609 = vadd.s32 %v1409, 324
        %v1610 = vadd.s32 %v1438, 324
        %v1611 = vadd.s32 %v1467, 324
        %v1612 = vsel %vm1540, %v1576, %v452
        %v1613 = vsel %vm1541, %v1577, %v481
        %v1614 = vsel %vm1542, %v1578, %v510
        %v1615 = vsel %vm1543, %v1579, %v539
        %v1616 = vsel %vm1544, %v1580, %v568
        %v1617 = vsel %vm1545, %v1581, %v597
        %v1618 = vsel %vm1546, %v1582, %v626
        %v1619 = vsel %vm1547, %v1583, %v655
        %v1620 = vsel %vm1548, %v1584, %v684
        %v1621 = vsel %vm1549, %v1585, %v713
        %v1622 = vsel %vm1550, %v1586, %v742
        %v1623 = vsel %vm1551, %v1587, %v771
        %v1624 = vsel %vm1552, %v1588, %v800
        %v1625 = vsel %vm1553, %v1589, %v829
        %v1626 = vsel %vm1554, %v1590, %v858
        %v1627 = vsel %vm1555, %v1591, %v887
        %v1628 = vsel %vm1556, %v1592, %v916
        %v1629 = vsel %vm1557, %v1593, %v945
        %v1630 = vsel %vm1558, %v1594, %v974
        %v1631 = vsel %vm1559, %v1595, %v1003
        %v1632 = vsel %vm1560, %v1596, %v1032
        %v1633 = vsel %vm1561, %v1597, %v1061
        %v1634 = vsel %vm1562, %v1598, %v1090
        %v1635 = vsel %vm1563, %v1599, %v1119
        %v1636 = vsel %vm1564, %v1600, %v1148
        %v1637 = vsel %vm1565, %v1601, %v1177
        %v1638 = vsel %vm1566, %v1602, %v1206
        %v1639 = vsel %vm1567, %v1603, %v1235
        %v1640 = vsel %vm1568, %v1604, %v1264
        %v1641 = vsel %vm1569, %v1605, %v1293
        %v1642 = vsel %vm1570, %v1606, %v1322
        %v1643 = vsel %vm1571, %v1607, %v1351
        %v1644 = vsel %vm1572, %v1608, %v1380
        %v1645 = vsel %vm1573, %v1609, %v1409
        %v1646 = vsel %vm1574, %v1610, %v1438
        %v1647 = vsel %vm1575, %v1611, %v1467
        %vm1648 = vcmp.lt.s32.totalorder %v1612, 288
        %vm1649 = vcmp.lt.s32.totalorder %v1613, 288
        %vm1650 = vcmp.lt.s32.totalorder %v1614, 288
        %vm1651 = vcmp.lt.s32.totalorder %v1615, 288
        %vm1652 = vcmp.lt.s32.totalorder %v1616, 288
        %vm1653 = vcmp.lt.s32.totalorder %v1617, 288
        %vm1654 = vcmp.lt.s32.totalorder %v1618, 288
        %vm1655 = vcmp.lt.s32.totalorder %v1619, 288
        %vm1656 = vcmp.lt.s32.totalorder %v1620, 288
        %vm1657 = vcmp.lt.s32.totalorder %v1621, 288
        %vm1658 = vcmp.lt.s32.totalorder %v1622, 288
        %vm1659 = vcmp.lt.s32.totalorder %v1623, 288
        %vm1660 = vcmp.lt.s32.totalorder %v1624, 288
        %vm1661 = vcmp.lt.s32.totalorder %v1625, 288
        %vm1662 = vcmp.lt.s32.totalorder %v1626, 288
        %vm1663 = vcmp.lt.s32.totalorder %v1627, 288
        %vm1664 = vcmp.lt.s32.totalorder %v1628, 288
        %vm1665 = vcmp.lt.s32.totalorder %v1629, 288
        %vm1666 = vcmp.lt.s32.totalorder %v1630, 288
        %vm1667 = vcmp.lt.s32.totalorder %v1631, 288
        %vm1668 = vcmp.lt.s32.totalorder %v1632, 288
        %vm1669 = vcmp.lt.s32.totalorder %v1633, 288
        %vm1670 = vcmp.lt.s32.totalorder %v1634, 288
        %vm1671 = vcmp.lt.s32.totalorder %v1635, 288
        %vm1672 = vcmp.lt.s32.totalorder %v1636, 288
        %vm1673 = vcmp.lt.s32.totalorder %v1637, 288
        %vm1674 = vcmp.lt.s32.totalorder %v1638, 288
        %vm1675 = vcmp.lt.s32.totalorder %v1639, 288
        %vm1676 = vcmp.lt.s32.totalorder %v1640, 288
        %vm1677 = vcmp.lt.s32.totalorder %v1641, 288
        %vm1678 = vcmp.lt.s32.totalorder %v1642, 288
        %vm1679 = vcmp.lt.s32.totalorder %v1643, 288
        %vm1680 = vcmp.lt.s32.totalorder %v1644, 288
        %vm1681 = vcmp.lt.s32.totalorder %v1645, 288
        %vm1682 = vcmp.lt.s32.totalorder %v1646, 288
        %vm1683 = vcmp.lt.s32.totalorder %v1647, 288
        %vm1684 = vcmp.lt.s32.totalorder %v1612, 0
        %v1685 = vsub.s32 0, %v1612
        %v1686 = vsel %vm1684, %v1685, %v1612
        %v1687 = vand.u32 %v1686, 65535
        %v1688 = vshrl.u32 %v1686, 16
        %v1690 = vmul.u32 %v1687, 14564
        %v1691 = vmul.u32 %v1687, 58254
        %v1692 = vmul.u32 %v1688, 14564
        %v1693 = vmul.u32 %v1688, 58254
        %v1694 = vshll.u32 %v1691, 16
        %v1695 = vshrl.u32 %v1691, 16
        %v1696 = vshll.u32 %v1692, 16
        %v1697 = vshrl.u32 %v1692, 16
        %vm1698 = vc.u32 %v1690, %v1694
        %v1699 = vsel %vm1698, 1, 0
        %v1700 = vadd.s32 %v1690, %v1694
        %v1701 = vadd.s32 %v1693, %v1699
        %vm1702 = vc.u32 %v1700, %v1696
        %v1703 = vsel %vm1702, 1, 0
        %v1704 = vadd.s32 %v1700, %v1696
        %v1705 = vadd.s32 %v1701, %v1703
        %v1706 = vadd.s32 %v1705, %v1695
        %v1707 = vadd.s32 %v1706, %v1697
        %v1708 = vshrl.u32 %v1707, 4
        %v1709 = vmul.u32 %v1708, 18
        %v1710 = vsub.s32 %v1686, %v1709
        %v1711 = vsub.s32 0, %v1710
        %v1712 = vsel %vm1684, %v1711, %v1710
        %vm1713 = vcmp.lt.s32.totalorder %v1613, 0
        %v1714 = vsub.s32 0, %v1613
        %v1715 = vsel %vm1713, %v1714, %v1613
        %v1716 = vand.u32 %v1715, 65535
        %v1717 = vshrl.u32 %v1715, 16
        %v1719 = vmul.u32 %v1716, 14564
        %v1720 = vmul.u32 %v1716, 58254
        %v1721 = vmul.u32 %v1717, 14564
        %v1722 = vmul.u32 %v1717, 58254
        %v1723 = vshll.u32 %v1720, 16
        %v1724 = vshrl.u32 %v1720, 16
        %v1725 = vshll.u32 %v1721, 16
        %v1726 = vshrl.u32 %v1721, 16
        %vm1727 = vc.u32 %v1719, %v1723
        %v1728 = vsel %vm1727, 1, 0
        %v1729 = vadd.s32 %v1719, %v1723
        %v1730 = vadd.s32 %v1722, %v1728
        %vm1731 = vc.u32 %v1729, %v1725
        %v1732 = vsel %vm1731, 1, 0
        %v1733 = vadd.s32 %v1729, %v1725
        %v1734 = vadd.s32 %v1730, %v1732
        %v1735 = vadd.s32 %v1734, %v1724
        %v1736 = vadd.s32 %v1735, %v1726
        %v1737 = vshrl.u32 %v1736, 4
        %v1738 = vmul.u32 %v1737, 18
        %v1739 = vsub.s32 %v1715, %v1738
        %v1740 = vsub.s32 0, %v1739
        %v1741 = vsel %vm1713, %v1740, %v1739
        %vm1742 = vcmp.lt.s32.totalorder %v1614, 0
        %v1743 = vsub.s32 0, %v1614
        %v1744 = vsel %vm1742, %v1743, %v1614
        %v1745 = vand.u32 %v1744, 65535
        %v1746 = vshrl.u32 %v1744, 16
        %v1748 = vmul.u32 %v1745, 14564
        %v1749 = vmul.u32 %v1745, 58254
        %v1750 = vmul.u32 %v1746, 14564
        %v1751 = vmul.u32 %v1746, 58254
        %v1752 = vshll.u32 %v1749, 16
        %v1753 = vshrl.u32 %v1749, 16
        %v1754 = vshll.u32 %v1750, 16
        %v1755 = vshrl.u32 %v1750, 16
        %vm1756 = vc.u32 %v1748, %v1752
        %v1757 = vsel %vm1756, 1, 0
        %v1758 = vadd.s32 %v1748, %v1752
        %v1759 = vadd.s32 %v1751, %v1757
        %vm1760 = vc.u32 %v1758, %v1754
        %v1761 = vsel %vm1760, 1, 0
        %v1762 = vadd.s32 %v1758, %v1754
        %v1763 = vadd.s32 %v1759, %v1761
        %v1764 = vadd.s32 %v1763, %v1753
        %v1765 = vadd.s32 %v1764, %v1755
        %v1766 = vshrl.u32 %v1765, 4
        %v1767 = vmul.u32 %v1766, 18
        %v1768 = vsub.s32 %v1744, %v1767
        %v1769 = vsub.s32 0, %v1768
        %v1770 = vsel %vm1742, %v1769, %v1768
        %vm1771 = vcmp.lt.s32.totalorder %v1615, 0
        %v1772 = vsub.s32 0, %v1615
        %v1773 = vsel %vm1771, %v1772, %v1615
        %v1774 = vand.u32 %v1773, 65535
        %v1775 = vshrl.u32 %v1773, 16
        %v1777 = vmul.u32 %v1774, 14564
        %v1778 = vmul.u32 %v1774, 58254
        %v1779 = vmul.u32 %v1775, 14564
        %v1780 = vmul.u32 %v1775, 58254
        %v1781 = vshll.u32 %v1778, 16
        %v1782 = vshrl.u32 %v1778, 16
        %v1783 = vshll.u32 %v1779, 16
        %v1784 = vshrl.u32 %v1779, 16
        %vm1785 = vc.u32 %v1777, %v1781
        %v1786 = vsel %vm1785, 1, 0
        %v1787 = vadd.s32 %v1777, %v1781
        %v1788 = vadd.s32 %v1780, %v1786
        %vm1789 = vc.u32 %v1787, %v1783
        %v1790 = vsel %vm1789, 1, 0
        %v1791 = vadd.s32 %v1787, %v1783
        %v1792 = vadd.s32 %v1788, %v1790
        %v1793 = vadd.s32 %v1792, %v1782
        %v1794 = vadd.s32 %v1793, %v1784
        %v1795 = vshrl.u32 %v1794, 4
        %v1796 = vmul.u32 %v1795, 18
        %v1797 = vsub.s32 %v1773, %v1796
        %v1798 = vsub.s32 0, %v1797
        %v1799 = vsel %vm1771, %v1798, %v1797
        %vm1800 = vcmp.lt.s32.totalorder %v1616, 0
        %v1801 = vsub.s32 0, %v1616
        %v1802 = vsel %vm1800, %v1801, %v1616
        %v1803 = vand.u32 %v1802, 65535
        %v1804 = vshrl.u32 %v1802, 16
        %v1806 = vmul.u32 %v1803, 14564
        %v1807 = vmul.u32 %v1803, 58254
        %v1808 = vmul.u32 %v1804, 14564
        %v1809 = vmul.u32 %v1804, 58254
        %v1810 = vshll.u32 %v1807, 16
        %v1811 = vshrl.u32 %v1807, 16
        %v1812 = vshll.u32 %v1808, 16
        %v1813 = vshrl.u32 %v1808, 16
        %vm1814 = vc.u32 %v1806, %v1810
        %v1815 = vsel %vm1814, 1, 0
        %v1816 = vadd.s32 %v1806, %v1810
        %v1817 = vadd.s32 %v1809, %v1815
        %vm1818 = vc.u32 %v1816, %v1812
        %v1819 = vsel %vm1818, 1, 0
        %v1820 = vadd.s32 %v1816, %v1812
        %v1821 = vadd.s32 %v1817, %v1819
        %v1822 = vadd.s32 %v1821, %v1811
        %v1823 = vadd.s32 %v1822, %v1813
        %v1824 = vshrl.u32 %v1823, 4
        %v1825 = vmul.u32 %v1824, 18
        %v1826 = vsub.s32 %v1802, %v1825
        %v1827 = vsub.s32 0, %v1826
        %v1828 = vsel %vm1800, %v1827, %v1826
        %vm1829 = vcmp.lt.s32.totalorder %v1617, 0
        %v1830 = vsub.s32 0, %v1617
        %v1831 = vsel %vm1829, %v1830, %v1617
        %v1832 = vand.u32 %v1831, 65535
        %v1833 = vshrl.u32 %v1831, 16
        %v1835 = vmul.u32 %v1832, 14564
        %v1836 = vmul.u32 %v1832, 58254
        %v1837 = vmul.u32 %v1833, 14564
        %v1838 = vmul.u32 %v1833, 58254
        %v1839 = vshll.u32 %v1836, 16
        %v1840 = vshrl.u32 %v1836, 16
        %v1841 = vshll.u32 %v1837, 16
        %v1842 = vshrl.u32 %v1837, 16
        %vm1843 = vc.u32 %v1835, %v1839
        %v1844 = vsel %vm1843, 1, 0
        %v1845 = vadd.s32 %v1835, %v1839
        %v1846 = vadd.s32 %v1838, %v1844
        %vm1847 = vc.u32 %v1845, %v1841
        %v1848 = vsel %vm1847, 1, 0
        %v1849 = vadd.s32 %v1845, %v1841
        %v1850 = vadd.s32 %v1846, %v1848
        %v1851 = vadd.s32 %v1850, %v1840
        %v1852 = vadd.s32 %v1851, %v1842
        %v1853 = vshrl.u32 %v1852, 4
        %v1854 = vmul.u32 %v1853, 18
        %v1855 = vsub.s32 %v1831, %v1854
        %v1856 = vsub.s32 0, %v1855
        %v1857 = vsel %vm1829, %v1856, %v1855
        %vm1858 = vcmp.lt.s32.totalorder %v1618, 0
        %v1859 = vsub.s32 0, %v1618
        %v1860 = vsel %vm1858, %v1859, %v1618
        %v1861 = vand.u32 %v1860, 65535
        %v1862 = vshrl.u32 %v1860, 16
        %v1864 = vmul.u32 %v1861, 14564
        %v1865 = vmul.u32 %v1861, 58254
        %v1866 = vmul.u32 %v1862, 14564
        %v1867 = vmul.u32 %v1862, 58254
        %v1868 = vshll.u32 %v1865, 16
        %v1869 = vshrl.u32 %v1865, 16
        %v1870 = vshll.u32 %v1866, 16
        %v1871 = vshrl.u32 %v1866, 16
        %vm1872 = vc.u32 %v1864, %v1868
        %v1873 = vsel %vm1872, 1, 0
        %v1874 = vadd.s32 %v1864, %v1868
        %v1875 = vadd.s32 %v1867, %v1873
        %vm1876 = vc.u32 %v1874, %v1870
        %v1877 = vsel %vm1876, 1, 0
        %v1878 = vadd.s32 %v1874, %v1870
        %v1879 = vadd.s32 %v1875, %v1877
        %v1880 = vadd.s32 %v1879, %v1869
        %v1881 = vadd.s32 %v1880, %v1871
        %v1882 = vshrl.u32 %v1881, 4
        %v1883 = vmul.u32 %v1882, 18
        %v1884 = vsub.s32 %v1860, %v1883
        %v1885 = vsub.s32 0, %v1884
        %v1886 = vsel %vm1858, %v1885, %v1884
        %vm1887 = vcmp.lt.s32.totalorder %v1619, 0
        %v1888 = vsub.s32 0, %v1619
        %v1889 = vsel %vm1887, %v1888, %v1619
        %v1890 = vand.u32 %v1889, 65535
        %v1891 = vshrl.u32 %v1889, 16
        %v1893 = vmul.u32 %v1890, 14564
        %v1894 = vmul.u32 %v1890, 58254
        %v1895 = vmul.u32 %v1891, 14564
        %v1896 = vmul.u32 %v1891, 58254
        %v1897 = vshll.u32 %v1894, 16
        %v1898 = vshrl.u32 %v1894, 16
        %v1899 = vshll.u32 %v1895, 16
        %v1900 = vshrl.u32 %v1895, 16
        %vm1901 = vc.u32 %v1893, %v1897
        %v1902 = vsel %vm1901, 1, 0
        %v1903 = vadd.s32 %v1893, %v1897
        %v1904 = vadd.s32 %v1896, %v1902
        %vm1905 = vc.u32 %v1903, %v1899
        %v1906 = vsel %vm1905, 1, 0
        %v1907 = vadd.s32 %v1903, %v1899
        %v1908 = vadd.s32 %v1904, %v1906
        %v1909 = vadd.s32 %v1908, %v1898
        %v1910 = vadd.s32 %v1909, %v1900
        %v1911 = vshrl.u32 %v1910, 4
        %v1912 = vmul.u32 %v1911, 18
        %v1913 = vsub.s32 %v1889, %v1912
        %v1914 = vsub.s32 0, %v1913
        %v1915 = vsel %vm1887, %v1914, %v1913
        %vm1916 = vcmp.lt.s32.totalorder %v1620, 0
        %v1917 = vsub.s32 0, %v1620
        %v1918 = vsel %vm1916, %v1917, %v1620
        %v1919 = vand.u32 %v1918, 65535
        %v1920 = vshrl.u32 %v1918, 16
        %v1922 = vmul.u32 %v1919, 14564
        %v1923 = vmul.u32 %v1919, 58254
        %v1924 = vmul.u32 %v1920, 14564
        %v1925 = vmul.u32 %v1920, 58254
        %v1926 = vshll.u32 %v1923, 16
        %v1927 = vshrl.u32 %v1923, 16
        %v1928 = vshll.u32 %v1924, 16
        %v1929 = vshrl.u32 %v1924, 16
        %vm1930 = vc.u32 %v1922, %v1926
        %v1931 = vsel %vm1930, 1, 0
        %v1932 = vadd.s32 %v1922, %v1926
        %v1933 = vadd.s32 %v1925, %v1931
        %vm1934 = vc.u32 %v1932, %v1928
        %v1935 = vsel %vm1934, 1, 0
        %v1936 = vadd.s32 %v1932, %v1928
        %v1937 = vadd.s32 %v1933, %v1935
        %v1938 = vadd.s32 %v1937, %v1927
        %v1939 = vadd.s32 %v1938, %v1929
        %v1940 = vshrl.u32 %v1939, 4
        %v1941 = vmul.u32 %v1940, 18
        %v1942 = vsub.s32 %v1918, %v1941
        %v1943 = vsub.s32 0, %v1942
        %v1944 = vsel %vm1916, %v1943, %v1942
        %vm1945 = vcmp.lt.s32.totalorder %v1621, 0
        %v1946 = vsub.s32 0, %v1621
        %v1947 = vsel %vm1945, %v1946, %v1621
        %v1948 = vand.u32 %v1947, 65535
        %v1949 = vshrl.u32 %v1947, 16
        %v1951 = vmul.u32 %v1948, 14564
        %v1952 = vmul.u32 %v1948, 58254
        %v1953 = vmul.u32 %v1949, 14564
        %v1954 = vmul.u32 %v1949, 58254
        %v1955 = vshll.u32 %v1952, 16
        %v1956 = vshrl.u32 %v1952, 16
        %v1957 = vshll.u32 %v1953, 16
        %v1958 = vshrl.u32 %v1953, 16
        %vm1959 = vc.u32 %v1951, %v1955
        %v1960 = vsel %vm1959, 1, 0
        %v1961 = vadd.s32 %v1951, %v1955
        %v1962 = vadd.s32 %v1954, %v1960
        %vm1963 = vc.u32 %v1961, %v1957
        %v1964 = vsel %vm1963, 1, 0
        %v1965 = vadd.s32 %v1961, %v1957
        %v1966 = vadd.s32 %v1962, %v1964
        %v1967 = vadd.s32 %v1966, %v1956
        %v1968 = vadd.s32 %v1967, %v1958
        %v1969 = vshrl.u32 %v1968, 4
        %v1970 = vmul.u32 %v1969, 18
        %v1971 = vsub.s32 %v1947, %v1970
        %v1972 = vsub.s32 0, %v1971
        %v1973 = vsel %vm1945, %v1972, %v1971
        %vm1974 = vcmp.lt.s32.totalorder %v1622, 0
        %v1975 = vsub.s32 0, %v1622
        %v1976 = vsel %vm1974, %v1975, %v1622
        %v1977 = vand.u32 %v1976, 65535
        %v1978 = vshrl.u32 %v1976, 16
        %v1980 = vmul.u32 %v1977, 14564
        %v1981 = vmul.u32 %v1977, 58254
        %v1982 = vmul.u32 %v1978, 14564
        %v1983 = vmul.u32 %v1978, 58254
        %v1984 = vshll.u32 %v1981, 16
        %v1985 = vshrl.u32 %v1981, 16
        %v1986 = vshll.u32 %v1982, 16
        %v1987 = vshrl.u32 %v1982, 16
        %vm1988 = vc.u32 %v1980, %v1984
        %v1989 = vsel %vm1988, 1, 0
        %v1990 = vadd.s32 %v1980, %v1984
        %v1991 = vadd.s32 %v1983, %v1989
        %vm1992 = vc.u32 %v1990, %v1986
        %v1993 = vsel %vm1992, 1, 0
        %v1994 = vadd.s32 %v1990, %v1986
        %v1995 = vadd.s32 %v1991, %v1993
        %v1996 = vadd.s32 %v1995, %v1985
        %v1997 = vadd.s32 %v1996, %v1987
        %v1998 = vshrl.u32 %v1997, 4
        %v1999 = vmul.u32 %v1998, 18
        %v2000 = vsub.s32 %v1976, %v1999
        %v2001 = vsub.s32 0, %v2000
        %v2002 = vsel %vm1974, %v2001, %v2000
        %vm2003 = vcmp.lt.s32.totalorder %v1623, 0
        %v2004 = vsub.s32 0, %v1623
        %v2005 = vsel %vm2003, %v2004, %v1623
        %v2006 = vand.u32 %v2005, 65535
        %v2007 = vshrl.u32 %v2005, 16
        %v2009 = vmul.u32 %v2006, 14564
        %v2010 = vmul.u32 %v2006, 58254
        %v2011 = vmul.u32 %v2007, 14564
        %v2012 = vmul.u32 %v2007, 58254
        %v2013 = vshll.u32 %v2010, 16
        %v2014 = vshrl.u32 %v2010, 16
        %v2015 = vshll.u32 %v2011, 16
        %v2016 = vshrl.u32 %v2011, 16
        %vm2017 = vc.u32 %v2009, %v2013
        %v2018 = vsel %vm2017, 1, 0
        %v2019 = vadd.s32 %v2009, %v2013
        %v2020 = vadd.s32 %v2012, %v2018
        %vm2021 = vc.u32 %v2019, %v2015
        %v2022 = vsel %vm2021, 1, 0
        %v2023 = vadd.s32 %v2019, %v2015
        %v2024 = vadd.s32 %v2020, %v2022
        %v2025 = vadd.s32 %v2024, %v2014
        %v2026 = vadd.s32 %v2025, %v2016
        %v2027 = vshrl.u32 %v2026, 4
        %v2028 = vmul.u32 %v2027, 18
        %v2029 = vsub.s32 %v2005, %v2028
        %v2030 = vsub.s32 0, %v2029
        %v2031 = vsel %vm2003, %v2030, %v2029
        %vm2032 = vcmp.lt.s32.totalorder %v1624, 0
        %v2033 = vsub.s32 0, %v1624
        %v2034 = vsel %vm2032, %v2033, %v1624
        %v2035 = vand.u32 %v2034, 65535
        %v2036 = vshrl.u32 %v2034, 16
        %v2038 = vmul.u32 %v2035, 14564
        %v2039 = vmul.u32 %v2035, 58254
        %v2040 = vmul.u32 %v2036, 14564
        %v2041 = vmul.u32 %v2036, 58254
        %v2042 = vshll.u32 %v2039, 16
        %v2043 = vshrl.u32 %v2039, 16
        %v2044 = vshll.u32 %v2040, 16
        %v2045 = vshrl.u32 %v2040, 16
        %vm2046 = vc.u32 %v2038, %v2042
        %v2047 = vsel %vm2046, 1, 0
        %v2048 = vadd.s32 %v2038, %v2042
        %v2049 = vadd.s32 %v2041, %v2047
        %vm2050 = vc.u32 %v2048, %v2044
        %v2051 = vsel %vm2050, 1, 0
        %v2052 = vadd.s32 %v2048, %v2044
        %v2053 = vadd.s32 %v2049, %v2051
        %v2054 = vadd.s32 %v2053, %v2043
        %v2055 = vadd.s32 %v2054, %v2045
        %v2056 = vshrl.u32 %v2055, 4
        %v2057 = vmul.u32 %v2056, 18
        %v2058 = vsub.s32 %v2034, %v2057
        %v2059 = vsub.s32 0, %v2058
        %v2060 = vsel %vm2032, %v2059, %v2058
        %vm2061 = vcmp.lt.s32.totalorder %v1625, 0
        %v2062 = vsub.s32 0, %v1625
        %v2063 = vsel %vm2061, %v2062, %v1625
        %v2064 = vand.u32 %v2063, 65535
        %v2065 = vshrl.u32 %v2063, 16
        %v2067 = vmul.u32 %v2064, 14564
        %v2068 = vmul.u32 %v2064, 58254
        %v2069 = vmul.u32 %v2065, 14564
        %v2070 = vmul.u32 %v2065, 58254
        %v2071 = vshll.u32 %v2068, 16
        %v2072 = vshrl.u32 %v2068, 16
        %v2073 = vshll.u32 %v2069, 16
        %v2074 = vshrl.u32 %v2069, 16
        %vm2075 = vc.u32 %v2067, %v2071
        %v2076 = vsel %vm2075, 1, 0
        %v2077 = vadd.s32 %v2067, %v2071
        %v2078 = vadd.s32 %v2070, %v2076
        %vm2079 = vc.u32 %v2077, %v2073
        %v2080 = vsel %vm2079, 1, 0
        %v2081 = vadd.s32 %v2077, %v2073
        %v2082 = vadd.s32 %v2078, %v2080
        %v2083 = vadd.s32 %v2082, %v2072
        %v2084 = vadd.s32 %v2083, %v2074
        %v2085 = vshrl.u32 %v2084, 4
        %v2086 = vmul.u32 %v2085, 18
        %v2087 = vsub.s32 %v2063, %v2086
        %v2088 = vsub.s32 0, %v2087
        %v2089 = vsel %vm2061, %v2088, %v2087
        %vm2090 = vcmp.lt.s32.totalorder %v1626, 0
        %v2091 = vsub.s32 0, %v1626
        %v2092 = vsel %vm2090, %v2091, %v1626
        %v2093 = vand.u32 %v2092, 65535
        %v2094 = vshrl.u32 %v2092, 16
        %v2096 = vmul.u32 %v2093, 14564
        %v2097 = vmul.u32 %v2093, 58254
        %v2098 = vmul.u32 %v2094, 14564
        %v2099 = vmul.u32 %v2094, 58254
        %v2100 = vshll.u32 %v2097, 16
        %v2101 = vshrl.u32 %v2097, 16
        %v2102 = vshll.u32 %v2098, 16
        %v2103 = vshrl.u32 %v2098, 16
        %vm2104 = vc.u32 %v2096, %v2100
        %v2105 = vsel %vm2104, 1, 0
        %v2106 = vadd.s32 %v2096, %v2100
        %v2107 = vadd.s32 %v2099, %v2105
        %vm2108 = vc.u32 %v2106, %v2102
        %v2109 = vsel %vm2108, 1, 0
        %v2110 = vadd.s32 %v2106, %v2102
        %v2111 = vadd.s32 %v2107, %v2109
        %v2112 = vadd.s32 %v2111, %v2101
        %v2113 = vadd.s32 %v2112, %v2103
        %v2114 = vshrl.u32 %v2113, 4
        %v2115 = vmul.u32 %v2114, 18
        %v2116 = vsub.s32 %v2092, %v2115
        %v2117 = vsub.s32 0, %v2116
        %v2118 = vsel %vm2090, %v2117, %v2116
        %vm2119 = vcmp.lt.s32.totalorder %v1627, 0
        %v2120 = vsub.s32 0, %v1627
        %v2121 = vsel %vm2119, %v2120, %v1627
        %v2122 = vand.u32 %v2121, 65535
        %v2123 = vshrl.u32 %v2121, 16
        %v2125 = vmul.u32 %v2122, 14564
        %v2126 = vmul.u32 %v2122, 58254
        %v2127 = vmul.u32 %v2123, 14564
        %v2128 = vmul.u32 %v2123, 58254
        %v2129 = vshll.u32 %v2126, 16
        %v2130 = vshrl.u32 %v2126, 16
        %v2131 = vshll.u32 %v2127, 16
        %v2132 = vshrl.u32 %v2127, 16
        %vm2133 = vc.u32 %v2125, %v2129
        %v2134 = vsel %vm2133, 1, 0
        %v2135 = vadd.s32 %v2125, %v2129
        %v2136 = vadd.s32 %v2128, %v2134
        %vm2137 = vc.u32 %v2135, %v2131
        %v2138 = vsel %vm2137, 1, 0
        %v2139 = vadd.s32 %v2135, %v2131
        %v2140 = vadd.s32 %v2136, %v2138
        %v2141 = vadd.s32 %v2140, %v2130
        %v2142 = vadd.s32 %v2141, %v2132
        %v2143 = vshrl.u32 %v2142, 4
        %v2144 = vmul.u32 %v2143, 18
        %v2145 = vsub.s32 %v2121, %v2144
        %v2146 = vsub.s32 0, %v2145
        %v2147 = vsel %vm2119, %v2146, %v2145
        %vm2148 = vcmp.lt.s32.totalorder %v1628, 0
        %v2149 = vsub.s32 0, %v1628
        %v2150 = vsel %vm2148, %v2149, %v1628
        %v2151 = vand.u32 %v2150, 65535
        %v2152 = vshrl.u32 %v2150, 16
        %v2154 = vmul.u32 %v2151, 14564
        %v2155 = vmul.u32 %v2151, 58254
        %v2156 = vmul.u32 %v2152, 14564
        %v2157 = vmul.u32 %v2152, 58254
        %v2158 = vshll.u32 %v2155, 16
        %v2159 = vshrl.u32 %v2155, 16
        %v2160 = vshll.u32 %v2156, 16
        %v2161 = vshrl.u32 %v2156, 16
        %vm2162 = vc.u32 %v2154, %v2158
        %v2163 = vsel %vm2162, 1, 0
        %v2164 = vadd.s32 %v2154, %v2158
        %v2165 = vadd.s32 %v2157, %v2163
        %vm2166 = vc.u32 %v2164, %v2160
        %v2167 = vsel %vm2166, 1, 0
        %v2168 = vadd.s32 %v2164, %v2160
        %v2169 = vadd.s32 %v2165, %v2167
        %v2170 = vadd.s32 %v2169, %v2159
        %v2171 = vadd.s32 %v2170, %v2161
        %v2172 = vshrl.u32 %v2171, 4
        %v2173 = vmul.u32 %v2172, 18
        %v2174 = vsub.s32 %v2150, %v2173
        %v2175 = vsub.s32 0, %v2174
        %v2176 = vsel %vm2148, %v2175, %v2174
        %vm2177 = vcmp.lt.s32.totalorder %v1629, 0
        %v2178 = vsub.s32 0, %v1629
        %v2179 = vsel %vm2177, %v2178, %v1629
        %v2180 = vand.u32 %v2179, 65535
        %v2181 = vshrl.u32 %v2179, 16
        %v2183 = vmul.u32 %v2180, 14564
        %v2184 = vmul.u32 %v2180, 58254
        %v2185 = vmul.u32 %v2181, 14564
        %v2186 = vmul.u32 %v2181, 58254
        %v2187 = vshll.u32 %v2184, 16
        %v2188 = vshrl.u32 %v2184, 16
        %v2189 = vshll.u32 %v2185, 16
        %v2190 = vshrl.u32 %v2185, 16
        %vm2191 = vc.u32 %v2183, %v2187
        %v2192 = vsel %vm2191, 1, 0
        %v2193 = vadd.s32 %v2183, %v2187
        %v2194 = vadd.s32 %v2186, %v2192
        %vm2195 = vc.u32 %v2193, %v2189
        %v2196 = vsel %vm2195, 1, 0
        %v2197 = vadd.s32 %v2193, %v2189
        %v2198 = vadd.s32 %v2194, %v2196
        %v2199 = vadd.s32 %v2198, %v2188
        %v2200 = vadd.s32 %v2199, %v2190
        %v2201 = vshrl.u32 %v2200, 4
        %v2202 = vmul.u32 %v2201, 18
        %v2203 = vsub.s32 %v2179, %v2202
        %v2204 = vsub.s32 0, %v2203
        %v2205 = vsel %vm2177, %v2204, %v2203
        %vm2206 = vcmp.lt.s32.totalorder %v1630, 0
        %v2207 = vsub.s32 0, %v1630
        %v2208 = vsel %vm2206, %v2207, %v1630
        %v2209 = vand.u32 %v2208, 65535
        %v2210 = vshrl.u32 %v2208, 16
        %v2212 = vmul.u32 %v2209, 14564
        %v2213 = vmul.u32 %v2209, 58254
        %v2214 = vmul.u32 %v2210, 14564
        %v2215 = vmul.u32 %v2210, 58254
        %v2216 = vshll.u32 %v2213, 16
        %v2217 = vshrl.u32 %v2213, 16
        %v2218 = vshll.u32 %v2214, 16
        %v2219 = vshrl.u32 %v2214, 16
        %vm2220 = vc.u32 %v2212, %v2216
        %v2221 = vsel %vm2220, 1, 0
        %v2222 = vadd.s32 %v2212, %v2216
        %v2223 = vadd.s32 %v2215, %v2221
        %vm2224 = vc.u32 %v2222, %v2218
        %v2225 = vsel %vm2224, 1, 0
        %v2226 = vadd.s32 %v2222, %v2218
        %v2227 = vadd.s32 %v2223, %v2225
        %v2228 = vadd.s32 %v2227, %v2217
        %v2229 = vadd.s32 %v2228, %v2219
        %v2230 = vshrl.u32 %v2229, 4
        %v2231 = vmul.u32 %v2230, 18
        %v2232 = vsub.s32 %v2208, %v2231
        %v2233 = vsub.s32 0, %v2232
        %v2234 = vsel %vm2206, %v2233, %v2232
        %vm2235 = vcmp.lt.s32.totalorder %v1631, 0
        %v2236 = vsub.s32 0, %v1631
        %v2237 = vsel %vm2235, %v2236, %v1631
        %v2238 = vand.u32 %v2237, 65535
        %v2239 = vshrl.u32 %v2237, 16
        %v2241 = vmul.u32 %v2238, 14564
        %v2242 = vmul.u32 %v2238, 58254
        %v2243 = vmul.u32 %v2239, 14564
        %v2244 = vmul.u32 %v2239, 58254
        %v2245 = vshll.u32 %v2242, 16
        %v2246 = vshrl.u32 %v2242, 16
        %v2247 = vshll.u32 %v2243, 16
        %v2248 = vshrl.u32 %v2243, 16
        %vm2249 = vc.u32 %v2241, %v2245
        %v2250 = vsel %vm2249, 1, 0
        %v2251 = vadd.s32 %v2241, %v2245
        %v2252 = vadd.s32 %v2244, %v2250
        %vm2253 = vc.u32 %v2251, %v2247
        %v2254 = vsel %vm2253, 1, 0
        %v2255 = vadd.s32 %v2251, %v2247
        %v2256 = vadd.s32 %v2252, %v2254
        %v2257 = vadd.s32 %v2256, %v2246
        %v2258 = vadd.s32 %v2257, %v2248
        %v2259 = vshrl.u32 %v2258, 4
        %v2260 = vmul.u32 %v2259, 18
        %v2261 = vsub.s32 %v2237, %v2260
        %v2262 = vsub.s32 0, %v2261
        %v2263 = vsel %vm2235, %v2262, %v2261
        %vm2264 = vcmp.lt.s32.totalorder %v1632, 0
        %v2265 = vsub.s32 0, %v1632
        %v2266 = vsel %vm2264, %v2265, %v1632
        %v2267 = vand.u32 %v2266, 65535
        %v2268 = vshrl.u32 %v2266, 16
        %v2270 = vmul.u32 %v2267, 14564
        %v2271 = vmul.u32 %v2267, 58254
        %v2272 = vmul.u32 %v2268, 14564
        %v2273 = vmul.u32 %v2268, 58254
        %v2274 = vshll.u32 %v2271, 16
        %v2275 = vshrl.u32 %v2271, 16
        %v2276 = vshll.u32 %v2272, 16
        %v2277 = vshrl.u32 %v2272, 16
        %vm2278 = vc.u32 %v2270, %v2274
        %v2279 = vsel %vm2278, 1, 0
        %v2280 = vadd.s32 %v2270, %v2274
        %v2281 = vadd.s32 %v2273, %v2279
        %vm2282 = vc.u32 %v2280, %v2276
        %v2283 = vsel %vm2282, 1, 0
        %v2284 = vadd.s32 %v2280, %v2276
        %v2285 = vadd.s32 %v2281, %v2283
        %v2286 = vadd.s32 %v2285, %v2275
        %v2287 = vadd.s32 %v2286, %v2277
        %v2288 = vshrl.u32 %v2287, 4
        %v2289 = vmul.u32 %v2288, 18
        %v2290 = vsub.s32 %v2266, %v2289
        %v2291 = vsub.s32 0, %v2290
        %v2292 = vsel %vm2264, %v2291, %v2290
        %vm2293 = vcmp.lt.s32.totalorder %v1633, 0
        %v2294 = vsub.s32 0, %v1633
        %v2295 = vsel %vm2293, %v2294, %v1633
        %v2296 = vand.u32 %v2295, 65535
        %v2297 = vshrl.u32 %v2295, 16
        %v2299 = vmul.u32 %v2296, 14564
        %v2300 = vmul.u32 %v2296, 58254
        %v2301 = vmul.u32 %v2297, 14564
        %v2302 = vmul.u32 %v2297, 58254
        %v2303 = vshll.u32 %v2300, 16
        %v2304 = vshrl.u32 %v2300, 16
        %v2305 = vshll.u32 %v2301, 16
        %v2306 = vshrl.u32 %v2301, 16
        %vm2307 = vc.u32 %v2299, %v2303
        %v2308 = vsel %vm2307, 1, 0
        %v2309 = vadd.s32 %v2299, %v2303
        %v2310 = vadd.s32 %v2302, %v2308
        %vm2311 = vc.u32 %v2309, %v2305
        %v2312 = vsel %vm2311, 1, 0
        %v2313 = vadd.s32 %v2309, %v2305
        %v2314 = vadd.s32 %v2310, %v2312
        %v2315 = vadd.s32 %v2314, %v2304
        %v2316 = vadd.s32 %v2315, %v2306
        %v2317 = vshrl.u32 %v2316, 4
        %v2318 = vmul.u32 %v2317, 18
        %v2319 = vsub.s32 %v2295, %v2318
        %v2320 = vsub.s32 0, %v2319
        %v2321 = vsel %vm2293, %v2320, %v2319
        %vm2322 = vcmp.lt.s32.totalorder %v1634, 0
        %v2323 = vsub.s32 0, %v1634
        %v2324 = vsel %vm2322, %v2323, %v1634
        %v2325 = vand.u32 %v2324, 65535
        %v2326 = vshrl.u32 %v2324, 16
        %v2328 = vmul.u32 %v2325, 14564
        %v2329 = vmul.u32 %v2325, 58254
        %v2330 = vmul.u32 %v2326, 14564
        %v2331 = vmul.u32 %v2326, 58254
        %v2332 = vshll.u32 %v2329, 16
        %v2333 = vshrl.u32 %v2329, 16
        %v2334 = vshll.u32 %v2330, 16
        %v2335 = vshrl.u32 %v2330, 16
        %vm2336 = vc.u32 %v2328, %v2332
        %v2337 = vsel %vm2336, 1, 0
        %v2338 = vadd.s32 %v2328, %v2332
        %v2339 = vadd.s32 %v2331, %v2337
        %vm2340 = vc.u32 %v2338, %v2334
        %v2341 = vsel %vm2340, 1, 0
        %v2342 = vadd.s32 %v2338, %v2334
        %v2343 = vadd.s32 %v2339, %v2341
        %v2344 = vadd.s32 %v2343, %v2333
        %v2345 = vadd.s32 %v2344, %v2335
        %v2346 = vshrl.u32 %v2345, 4
        %v2347 = vmul.u32 %v2346, 18
        %v2348 = vsub.s32 %v2324, %v2347
        %v2349 = vsub.s32 0, %v2348
        %v2350 = vsel %vm2322, %v2349, %v2348
        %vm2351 = vcmp.lt.s32.totalorder %v1635, 0
        %v2352 = vsub.s32 0, %v1635
        %v2353 = vsel %vm2351, %v2352, %v1635
        %v2354 = vand.u32 %v2353, 65535
        %v2355 = vshrl.u32 %v2353, 16
        %v2357 = vmul.u32 %v2354, 14564
        %v2358 = vmul.u32 %v2354, 58254
        %v2359 = vmul.u32 %v2355, 14564
        %v2360 = vmul.u32 %v2355, 58254
        %v2361 = vshll.u32 %v2358, 16
        %v2362 = vshrl.u32 %v2358, 16
        %v2363 = vshll.u32 %v2359, 16
        %v2364 = vshrl.u32 %v2359, 16
        %vm2365 = vc.u32 %v2357, %v2361
        %v2366 = vsel %vm2365, 1, 0
        %v2367 = vadd.s32 %v2357, %v2361
        %v2368 = vadd.s32 %v2360, %v2366
        %vm2369 = vc.u32 %v2367, %v2363
        %v2370 = vsel %vm2369, 1, 0
        %v2371 = vadd.s32 %v2367, %v2363
        %v2372 = vadd.s32 %v2368, %v2370
        %v2373 = vadd.s32 %v2372, %v2362
        %v2374 = vadd.s32 %v2373, %v2364
        %v2375 = vshrl.u32 %v2374, 4
        %v2376 = vmul.u32 %v2375, 18
        %v2377 = vsub.s32 %v2353, %v2376
        %v2378 = vsub.s32 0, %v2377
        %v2379 = vsel %vm2351, %v2378, %v2377
        %vm2380 = vcmp.lt.s32.totalorder %v1636, 0
        %v2381 = vsub.s32 0, %v1636
        %v2382 = vsel %vm2380, %v2381, %v1636
        %v2383 = vand.u32 %v2382, 65535
        %v2384 = vshrl.u32 %v2382, 16
        %v2386 = vmul.u32 %v2383, 14564
        %v2387 = vmul.u32 %v2383, 58254
        %v2388 = vmul.u32 %v2384, 14564
        %v2389 = vmul.u32 %v2384, 58254
        %v2390 = vshll.u32 %v2387, 16
        %v2391 = vshrl.u32 %v2387, 16
        %v2392 = vshll.u32 %v2388, 16
        %v2393 = vshrl.u32 %v2388, 16
        %vm2394 = vc.u32 %v2386, %v2390
        %v2395 = vsel %vm2394, 1, 0
        %v2396 = vadd.s32 %v2386, %v2390
        %v2397 = vadd.s32 %v2389, %v2395
        %vm2398 = vc.u32 %v2396, %v2392
        %v2399 = vsel %vm2398, 1, 0
        %v2400 = vadd.s32 %v2396, %v2392
        %v2401 = vadd.s32 %v2397, %v2399
        %v2402 = vadd.s32 %v2401, %v2391
        %v2403 = vadd.s32 %v2402, %v2393
        %v2404 = vshrl.u32 %v2403, 4
        %v2405 = vmul.u32 %v2404, 18
        %v2406 = vsub.s32 %v2382, %v2405
        %v2407 = vsub.s32 0, %v2406
        %v2408 = vsel %vm2380, %v2407, %v2406
        %vm2409 = vcmp.lt.s32.totalorder %v1637, 0
        %v2410 = vsub.s32 0, %v1637
        %v2411 = vsel %vm2409, %v2410, %v1637
        %v2412 = vand.u32 %v2411, 65535
        %v2413 = vshrl.u32 %v2411, 16
        %v2415 = vmul.u32 %v2412, 14564
        %v2416 = vmul.u32 %v2412, 58254
        %v2417 = vmul.u32 %v2413, 14564
        %v2418 = vmul.u32 %v2413, 58254
        %v2419 = vshll.u32 %v2416, 16
        %v2420 = vshrl.u32 %v2416, 16
        %v2421 = vshll.u32 %v2417, 16
        %v2422 = vshrl.u32 %v2417, 16
        %vm2423 = vc.u32 %v2415, %v2419
        %v2424 = vsel %vm2423, 1, 0
        %v2425 = vadd.s32 %v2415, %v2419
        %v2426 = vadd.s32 %v2418, %v2424
        %vm2427 = vc.u32 %v2425, %v2421
        %v2428 = vsel %vm2427, 1, 0
        %v2429 = vadd.s32 %v2425, %v2421
        %v2430 = vadd.s32 %v2426, %v2428
        %v2431 = vadd.s32 %v2430, %v2420
        %v2432 = vadd.s32 %v2431, %v2422
        %v2433 = vshrl.u32 %v2432, 4
        %v2434 = vmul.u32 %v2433, 18
        %v2435 = vsub.s32 %v2411, %v2434
        %v2436 = vsub.s32 0, %v2435
        %v2437 = vsel %vm2409, %v2436, %v2435
        %vm2438 = vcmp.lt.s32.totalorder %v1638, 0
        %v2439 = vsub.s32 0, %v1638
        %v2440 = vsel %vm2438, %v2439, %v1638
        %v2441 = vand.u32 %v2440, 65535
        %v2442 = vshrl.u32 %v2440, 16
        %v2444 = vmul.u32 %v2441, 14564
        %v2445 = vmul.u32 %v2441, 58254
        %v2446 = vmul.u32 %v2442, 14564
        %v2447 = vmul.u32 %v2442, 58254
        %v2448 = vshll.u32 %v2445, 16
        %v2449 = vshrl.u32 %v2445, 16
        %v2450 = vshll.u32 %v2446, 16
        %v2451 = vshrl.u32 %v2446, 16
        %vm2452 = vc.u32 %v2444, %v2448
        %v2453 = vsel %vm2452, 1, 0
        %v2454 = vadd.s32 %v2444, %v2448
        %v2455 = vadd.s32 %v2447, %v2453
        %vm2456 = vc.u32 %v2454, %v2450
        %v2457 = vsel %vm2456, 1, 0
        %v2458 = vadd.s32 %v2454, %v2450
        %v2459 = vadd.s32 %v2455, %v2457
        %v2460 = vadd.s32 %v2459, %v2449
        %v2461 = vadd.s32 %v2460, %v2451
        %v2462 = vshrl.u32 %v2461, 4
        %v2463 = vmul.u32 %v2462, 18
        %v2464 = vsub.s32 %v2440, %v2463
        %v2465 = vsub.s32 0, %v2464
        %v2466 = vsel %vm2438, %v2465, %v2464
        %vm2467 = vcmp.lt.s32.totalorder %v1639, 0
        %v2468 = vsub.s32 0, %v1639
        %v2469 = vsel %vm2467, %v2468, %v1639
        %v2470 = vand.u32 %v2469, 65535
        %v2471 = vshrl.u32 %v2469, 16
        %v2473 = vmul.u32 %v2470, 14564
        %v2474 = vmul.u32 %v2470, 58254
        %v2475 = vmul.u32 %v2471, 14564
        %v2476 = vmul.u32 %v2471, 58254
        %v2477 = vshll.u32 %v2474, 16
        %v2478 = vshrl.u32 %v2474, 16
        %v2479 = vshll.u32 %v2475, 16
        %v2480 = vshrl.u32 %v2475, 16
        %vm2481 = vc.u32 %v2473, %v2477
        %v2482 = vsel %vm2481, 1, 0
        %v2483 = vadd.s32 %v2473, %v2477
        %v2484 = vadd.s32 %v2476, %v2482
        %vm2485 = vc.u32 %v2483, %v2479
        %v2486 = vsel %vm2485, 1, 0
        %v2487 = vadd.s32 %v2483, %v2479
        %v2488 = vadd.s32 %v2484, %v2486
        %v2489 = vadd.s32 %v2488, %v2478
        %v2490 = vadd.s32 %v2489, %v2480
        %v2491 = vshrl.u32 %v2490, 4
        %v2492 = vmul.u32 %v2491, 18
        %v2493 = vsub.s32 %v2469, %v2492
        %v2494 = vsub.s32 0, %v2493
        %v2495 = vsel %vm2467, %v2494, %v2493
        %vm2496 = vcmp.lt.s32.totalorder %v1640, 0
        %v2497 = vsub.s32 0, %v1640
        %v2498 = vsel %vm2496, %v2497, %v1640
        %v2499 = vand.u32 %v2498, 65535
        %v2500 = vshrl.u32 %v2498, 16
        %v2502 = vmul.u32 %v2499, 14564
        %v2503 = vmul.u32 %v2499, 58254
        %v2504 = vmul.u32 %v2500, 14564
        %v2505 = vmul.u32 %v2500, 58254
        %v2506 = vshll.u32 %v2503, 16
        %v2507 = vshrl.u32 %v2503, 16
        %v2508 = vshll.u32 %v2504, 16
        %v2509 = vshrl.u32 %v2504, 16
        %vm2510 = vc.u32 %v2502, %v2506
        %v2511 = vsel %vm2510, 1, 0
        %v2512 = vadd.s32 %v2502, %v2506
        %v2513 = vadd.s32 %v2505, %v2511
        %vm2514 = vc.u32 %v2512, %v2508
        %v2515 = vsel %vm2514, 1, 0
        %v2516 = vadd.s32 %v2512, %v2508
        %v2517 = vadd.s32 %v2513, %v2515
        %v2518 = vadd.s32 %v2517, %v2507
        %v2519 = vadd.s32 %v2518, %v2509
        %v2520 = vshrl.u32 %v2519, 4
        %v2521 = vmul.u32 %v2520, 18
        %v2522 = vsub.s32 %v2498, %v2521
        %v2523 = vsub.s32 0, %v2522
        %v2524 = vsel %vm2496, %v2523, %v2522
        %vm2525 = vcmp.lt.s32.totalorder %v1641, 0
        %v2526 = vsub.s32 0, %v1641
        %v2527 = vsel %vm2525, %v2526, %v1641
        %v2528 = vand.u32 %v2527, 65535
        %v2529 = vshrl.u32 %v2527, 16
        %v2531 = vmul.u32 %v2528, 14564
        %v2532 = vmul.u32 %v2528, 58254
        %v2533 = vmul.u32 %v2529, 14564
        %v2534 = vmul.u32 %v2529, 58254
        %v2535 = vshll.u32 %v2532, 16
        %v2536 = vshrl.u32 %v2532, 16
        %v2537 = vshll.u32 %v2533, 16
        %v2538 = vshrl.u32 %v2533, 16
        %vm2539 = vc.u32 %v2531, %v2535
        %v2540 = vsel %vm2539, 1, 0
        %v2541 = vadd.s32 %v2531, %v2535
        %v2542 = vadd.s32 %v2534, %v2540
        %vm2543 = vc.u32 %v2541, %v2537
        %v2544 = vsel %vm2543, 1, 0
        %v2545 = vadd.s32 %v2541, %v2537
        %v2546 = vadd.s32 %v2542, %v2544
        %v2547 = vadd.s32 %v2546, %v2536
        %v2548 = vadd.s32 %v2547, %v2538
        %v2549 = vshrl.u32 %v2548, 4
        %v2550 = vmul.u32 %v2549, 18
        %v2551 = vsub.s32 %v2527, %v2550
        %v2552 = vsub.s32 0, %v2551
        %v2553 = vsel %vm2525, %v2552, %v2551
        %vm2554 = vcmp.lt.s32.totalorder %v1642, 0
        %v2555 = vsub.s32 0, %v1642
        %v2556 = vsel %vm2554, %v2555, %v1642
        %v2557 = vand.u32 %v2556, 65535
        %v2558 = vshrl.u32 %v2556, 16
        %v2560 = vmul.u32 %v2557, 14564
        %v2561 = vmul.u32 %v2557, 58254
        %v2562 = vmul.u32 %v2558, 14564
        %v2563 = vmul.u32 %v2558, 58254
        %v2564 = vshll.u32 %v2561, 16
        %v2565 = vshrl.u32 %v2561, 16
        %v2566 = vshll.u32 %v2562, 16
        %v2567 = vshrl.u32 %v2562, 16
        %vm2568 = vc.u32 %v2560, %v2564
        %v2569 = vsel %vm2568, 1, 0
        %v2570 = vadd.s32 %v2560, %v2564
        %v2571 = vadd.s32 %v2563, %v2569
        %vm2572 = vc.u32 %v2570, %v2566
        %v2573 = vsel %vm2572, 1, 0
        %v2574 = vadd.s32 %v2570, %v2566
        %v2575 = vadd.s32 %v2571, %v2573
        %v2576 = vadd.s32 %v2575, %v2565
        %v2577 = vadd.s32 %v2576, %v2567
        %v2578 = vshrl.u32 %v2577, 4
        %v2579 = vmul.u32 %v2578, 18
        %v2580 = vsub.s32 %v2556, %v2579
        %v2581 = vsub.s32 0, %v2580
        %v2582 = vsel %vm2554, %v2581, %v2580
        %vm2583 = vcmp.lt.s32.totalorder %v1643, 0
        %v2584 = vsub.s32 0, %v1643
        %v2585 = vsel %vm2583, %v2584, %v1643
        %v2586 = vand.u32 %v2585, 65535
        %v2587 = vshrl.u32 %v2585, 16
        %v2589 = vmul.u32 %v2586, 14564
        %v2590 = vmul.u32 %v2586, 58254
        %v2591 = vmul.u32 %v2587, 14564
        %v2592 = vmul.u32 %v2587, 58254
        %v2593 = vshll.u32 %v2590, 16
        %v2594 = vshrl.u32 %v2590, 16
        %v2595 = vshll.u32 %v2591, 16
        %v2596 = vshrl.u32 %v2591, 16
        %vm2597 = vc.u32 %v2589, %v2593
        %v2598 = vsel %vm2597, 1, 0
        %v2599 = vadd.s32 %v2589, %v2593
        %v2600 = vadd.s32 %v2592, %v2598
        %vm2601 = vc.u32 %v2599, %v2595
        %v2602 = vsel %vm2601, 1, 0
        %v2603 = vadd.s32 %v2599, %v2595
        %v2604 = vadd.s32 %v2600, %v2602
        %v2605 = vadd.s32 %v2604, %v2594
        %v2606 = vadd.s32 %v2605, %v2596
        %v2607 = vshrl.u32 %v2606, 4
        %v2608 = vmul.u32 %v2607, 18
        %v2609 = vsub.s32 %v2585, %v2608
        %v2610 = vsub.s32 0, %v2609
        %v2611 = vsel %vm2583, %v2610, %v2609
        %vm2612 = vcmp.lt.s32.totalorder %v1644, 0
        %v2613 = vsub.s32 0, %v1644
        %v2614 = vsel %vm2612, %v2613, %v1644
        %v2615 = vand.u32 %v2614, 65535
        %v2616 = vshrl.u32 %v2614, 16
        %v2618 = vmul.u32 %v2615, 14564
        %v2619 = vmul.u32 %v2615, 58254
        %v2620 = vmul.u32 %v2616, 14564
        %v2621 = vmul.u32 %v2616, 58254
        %v2622 = vshll.u32 %v2619, 16
        %v2623 = vshrl.u32 %v2619, 16
        %v2624 = vshll.u32 %v2620, 16
        %v2625 = vshrl.u32 %v2620, 16
        %vm2626 = vc.u32 %v2618, %v2622
        %v2627 = vsel %vm2626, 1, 0
        %v2628 = vadd.s32 %v2618, %v2622
        %v2629 = vadd.s32 %v2621, %v2627
        %vm2630 = vc.u32 %v2628, %v2624
        %v2631 = vsel %vm2630, 1, 0
        %v2632 = vadd.s32 %v2628, %v2624
        %v2633 = vadd.s32 %v2629, %v2631
        %v2634 = vadd.s32 %v2633, %v2623
        %v2635 = vadd.s32 %v2634, %v2625
        %v2636 = vshrl.u32 %v2635, 4
        %v2637 = vmul.u32 %v2636, 18
        %v2638 = vsub.s32 %v2614, %v2637
        %v2639 = vsub.s32 0, %v2638
        %v2640 = vsel %vm2612, %v2639, %v2638
        %vm2641 = vcmp.lt.s32.totalorder %v1645, 0
        %v2642 = vsub.s32 0, %v1645
        %v2643 = vsel %vm2641, %v2642, %v1645
        %v2644 = vand.u32 %v2643, 65535
        %v2645 = vshrl.u32 %v2643, 16
        %v2647 = vmul.u32 %v2644, 14564
        %v2648 = vmul.u32 %v2644, 58254
        %v2649 = vmul.u32 %v2645, 14564
        %v2650 = vmul.u32 %v2645, 58254
        %v2651 = vshll.u32 %v2648, 16
        %v2652 = vshrl.u32 %v2648, 16
        %v2653 = vshll.u32 %v2649, 16
        %v2654 = vshrl.u32 %v2649, 16
        %vm2655 = vc.u32 %v2647, %v2651
        %v2656 = vsel %vm2655, 1, 0
        %v2657 = vadd.s32 %v2647, %v2651
        %v2658 = vadd.s32 %v2650, %v2656
        %vm2659 = vc.u32 %v2657, %v2653
        %v2660 = vsel %vm2659, 1, 0
        %v2661 = vadd.s32 %v2657, %v2653
        %v2662 = vadd.s32 %v2658, %v2660
        %v2663 = vadd.s32 %v2662, %v2652
        %v2664 = vadd.s32 %v2663, %v2654
        %v2665 = vshrl.u32 %v2664, 4
        %v2666 = vmul.u32 %v2665, 18
        %v2667 = vsub.s32 %v2643, %v2666
        %v2668 = vsub.s32 0, %v2667
        %v2669 = vsel %vm2641, %v2668, %v2667
        %vm2670 = vcmp.lt.s32.totalorder %v1646, 0
        %v2671 = vsub.s32 0, %v1646
        %v2672 = vsel %vm2670, %v2671, %v1646
        %v2673 = vand.u32 %v2672, 65535
        %v2674 = vshrl.u32 %v2672, 16
        %v2676 = vmul.u32 %v2673, 14564
        %v2677 = vmul.u32 %v2673, 58254
        %v2678 = vmul.u32 %v2674, 14564
        %v2679 = vmul.u32 %v2674, 58254
        %v2680 = vshll.u32 %v2677, 16
        %v2681 = vshrl.u32 %v2677, 16
        %v2682 = vshll.u32 %v2678, 16
        %v2683 = vshrl.u32 %v2678, 16
        %vm2684 = vc.u32 %v2676, %v2680
        %v2685 = vsel %vm2684, 1, 0
        %v2686 = vadd.s32 %v2676, %v2680
        %v2687 = vadd.s32 %v2679, %v2685
        %vm2688 = vc.u32 %v2686, %v2682
        %v2689 = vsel %vm2688, 1, 0
        %v2690 = vadd.s32 %v2686, %v2682
        %v2691 = vadd.s32 %v2687, %v2689
        %v2692 = vadd.s32 %v2691, %v2681
        %v2693 = vadd.s32 %v2692, %v2683
        %v2694 = vshrl.u32 %v2693, 4
        %v2695 = vmul.u32 %v2694, 18
        %v2696 = vsub.s32 %v2672, %v2695
        %v2697 = vsub.s32 0, %v2696
        %v2698 = vsel %vm2670, %v2697, %v2696
        %vm2699 = vcmp.lt.s32.totalorder %v1647, 0
        %v2700 = vsub.s32 0, %v1647
        %v2701 = vsel %vm2699, %v2700, %v1647
        %v2702 = vand.u32 %v2701, 65535
        %v2703 = vshrl.u32 %v2701, 16
        %v2705 = vmul.u32 %v2702, 14564
        %v2706 = vmul.u32 %v2702, 58254
        %v2707 = vmul.u32 %v2703, 14564
        %v2708 = vmul.u32 %v2703, 58254
        %v2709 = vshll.u32 %v2706, 16
        %v2710 = vshrl.u32 %v2706, 16
        %v2711 = vshll.u32 %v2707, 16
        %v2712 = vshrl.u32 %v2707, 16
        %vm2713 = vc.u32 %v2705, %v2709
        %v2714 = vsel %vm2713, 1, 0
        %v2715 = vadd.s32 %v2705, %v2709
        %v2716 = vadd.s32 %v2708, %v2714
        %vm2717 = vc.u32 %v2715, %v2711
        %v2718 = vsel %vm2717, 1, 0
        %v2719 = vadd.s32 %v2715, %v2711
        %v2720 = vadd.s32 %v2716, %v2718
        %v2721 = vadd.s32 %v2720, %v2710
        %v2722 = vadd.s32 %v2721, %v2712
        %v2723 = vshrl.u32 %v2722, 4
        %v2724 = vmul.u32 %v2723, 18
        %v2725 = vsub.s32 %v2701, %v2724
        %v2726 = vsub.s32 0, %v2725
        %v2727 = vsel %vm2699, %v2726, %v2725
        %vm2728 = vcmp.ne.s32.totalorder %v1712, 0
        %vm2729 = vcmp.ne.s32.totalorder %v1741, 0
        %vm2730 = vcmp.ne.s32.totalorder %v1770, 0
        %vm2731 = vcmp.ne.s32.totalorder %v1799, 0
        %vm2732 = vcmp.ne.s32.totalorder %v1828, 0
        %vm2733 = vcmp.ne.s32.totalorder %v1857, 0
        %vm2734 = vcmp.ne.s32.totalorder %v1886, 0
        %vm2735 = vcmp.ne.s32.totalorder %v1915, 0
        %vm2736 = vcmp.ne.s32.totalorder %v1944, 0
        %vm2737 = vcmp.ne.s32.totalorder %v1973, 0
        %vm2738 = vcmp.ne.s32.totalorder %v2002, 0
        %vm2739 = vcmp.ne.s32.totalorder %v2031, 0
        %vm2740 = vcmp.ne.s32.totalorder %v2060, 0
        %vm2741 = vcmp.ne.s32.totalorder %v2089, 0
        %vm2742 = vcmp.ne.s32.totalorder %v2118, 0
        %vm2743 = vcmp.ne.s32.totalorder %v2147, 0
        %vm2744 = vcmp.ne.s32.totalorder %v2176, 0
        %vm2745 = vcmp.ne.s32.totalorder %v2205, 0
        %vm2746 = vcmp.ne.s32.totalorder %v2234, 0
        %vm2747 = vcmp.ne.s32.totalorder %v2263, 0
        %vm2748 = vcmp.ne.s32.totalorder %v2292, 0
        %vm2749 = vcmp.ne.s32.totalorder %v2321, 0
        %vm2750 = vcmp.ne.s32.totalorder %v2350, 0
        %vm2751 = vcmp.ne.s32.totalorder %v2379, 0
        %vm2752 = vcmp.ne.s32.totalorder %v2408, 0
        %vm2753 = vcmp.ne.s32.totalorder %v2437, 0
        %vm2754 = vcmp.ne.s32.totalorder %v2466, 0
        %vm2755 = vcmp.ne.s32.totalorder %v2495, 0
        %vm2756 = vcmp.ne.s32.totalorder %v2524, 0
        %vm2757 = vcmp.ne.s32.totalorder %v2553, 0
        %vm2758 = vcmp.ne.s32.totalorder %v2582, 0
        %vm2759 = vcmp.ne.s32.totalorder %v2611, 0
        %vm2760 = vcmp.ne.s32.totalorder %v2640, 0
        %vm2761 = vcmp.ne.s32.totalorder %v2669, 0
        %vm2762 = vcmp.ne.s32.totalorder %v2698, 0
        %vm2763 = vcmp.ne.s32.totalorder %v2727, 0
        %vm2764 = vcmp.lt.s32.totalorder %v1712, 0
        %vm2765 = vcmp.lt.s32.totalorder %v1741, 0
        %vm2766 = vcmp.lt.s32.totalorder %v1770, 0
        %vm2767 = vcmp.lt.s32.totalorder %v1799, 0
        %vm2768 = vcmp.lt.s32.totalorder %v1828, 0
        %vm2769 = vcmp.lt.s32.totalorder %v1857, 0
        %vm2770 = vcmp.lt.s32.totalorder %v1886, 0
        %vm2771 = vcmp.lt.s32.totalorder %v1915, 0
        %vm2772 = vcmp.lt.s32.totalorder %v1944, 0
        %vm2773 = vcmp.lt.s32.totalorder %v1973, 0
        %vm2774 = vcmp.lt.s32.totalorder %v2002, 0
        %vm2775 = vcmp.lt.s32.totalorder %v2031, 0
        %vm2776 = vcmp.lt.s32.totalorder %v2060, 0
        %vm2777 = vcmp.lt.s32.totalorder %v2089, 0
        %vm2778 = vcmp.lt.s32.totalorder %v2118, 0
        %vm2779 = vcmp.lt.s32.totalorder %v2147, 0
        %vm2780 = vcmp.lt.s32.totalorder %v2176, 0
        %vm2781 = vcmp.lt.s32.totalorder %v2205, 0
        %vm2782 = vcmp.lt.s32.totalorder %v2234, 0
        %vm2783 = vcmp.lt.s32.totalorder %v2263, 0
        %vm2784 = vcmp.lt.s32.totalorder %v2292, 0
        %vm2785 = vcmp.lt.s32.totalorder %v2321, 0
        %vm2786 = vcmp.lt.s32.totalorder %v2350, 0
        %vm2787 = vcmp.lt.s32.totalorder %v2379, 0
        %vm2788 = vcmp.lt.s32.totalorder %v2408, 0
        %vm2789 = vcmp.lt.s32.totalorder %v2437, 0
        %vm2790 = vcmp.lt.s32.totalorder %v2466, 0
        %vm2791 = vcmp.lt.s32.totalorder %v2495, 0
        %vm2792 = vcmp.lt.s32.totalorder %v2524, 0
        %vm2793 = vcmp.lt.s32.totalorder %v2553, 0
        %vm2794 = vcmp.lt.s32.totalorder %v2582, 0
        %vm2795 = vcmp.lt.s32.totalorder %v2611, 0
        %vm2796 = vcmp.lt.s32.totalorder %v2640, 0
        %vm2797 = vcmp.lt.s32.totalorder %v2669, 0
        %vm2798 = vcmp.lt.s32.totalorder %v2698, 0
        %vm2799 = vcmp.lt.s32.totalorder %v2727, 0
        %vm2800 = vmand %vm2764, %vm2728
        %vm2801 = vmand %vm2765, %vm2729
        %vm2802 = vmand %vm2766, %vm2730
        %vm2803 = vmand %vm2767, %vm2731
        %vm2804 = vmand %vm2768, %vm2732
        %vm2805 = vmand %vm2769, %vm2733
        %vm2806 = vmand %vm2770, %vm2734
        %vm2807 = vmand %vm2771, %vm2735
        %vm2808 = vmand %vm2772, %vm2736
        %vm2809 = vmand %vm2773, %vm2737
        %vm2810 = vmand %vm2774, %vm2738
        %vm2811 = vmand %vm2775, %vm2739
        %vm2812 = vmand %vm2776, %vm2740
        %vm2813 = vmand %vm2777, %vm2741
        %vm2814 = vmand %vm2778, %vm2742
        %vm2815 = vmand %vm2779, %vm2743
        %vm2816 = vmand %vm2780, %vm2744
        %vm2817 = vmand %vm2781, %vm2745
        %vm2818 = vmand %vm2782, %vm2746
        %vm2819 = vmand %vm2783, %vm2747
        %vm2820 = vmand %vm2784, %vm2748
        %vm2821 = vmand %vm2785, %vm2749
        %vm2822 = vmand %vm2786, %vm2750
        %vm2823 = vmand %vm2787, %vm2751
        %vm2824 = vmand %vm2788, %vm2752
        %vm2825 = vmand %vm2789, %vm2753
        %vm2826 = vmand %vm2790, %vm2754
        %vm2827 = vmand %vm2791, %vm2755
        %vm2828 = vmand %vm2792, %vm2756
        %vm2829 = vmand %vm2793, %vm2757
        %vm2830 = vmand %vm2794, %vm2758
        %vm2831 = vmand %vm2795, %vm2759
        %vm2832 = vmand %vm2796, %vm2760
        %vm2833 = vmand %vm2797, %vm2761
        %vm2834 = vmand %vm2798, %vm2762
        %vm2835 = vmand %vm2799, %vm2763
        %v2836 = vadd.s32 %v1712, 18
        %v2837 = vadd.s32 %v1741, 18
        %v2838 = vadd.s32 %v1770, 18
        %v2839 = vadd.s32 %v1799, 18
        %v2840 = vadd.s32 %v1828, 18
        %v2841 = vadd.s32 %v1857, 18
        %v2842 = vadd.s32 %v1886, 18
        %v2843 = vadd.s32 %v1915, 18
        %v2844 = vadd.s32 %v1944, 18
        %v2845 = vadd.s32 %v1973, 18
        %v2846 = vadd.s32 %v2002, 18
        %v2847 = vadd.s32 %v2031, 18
        %v2848 = vadd.s32 %v2060, 18
        %v2849 = vadd.s32 %v2089, 18
        %v2850 = vadd.s32 %v2118, 18
        %v2851 = vadd.s32 %v2147, 18
        %v2852 = vadd.s32 %v2176, 18
        %v2853 = vadd.s32 %v2205, 18
        %v2854 = vadd.s32 %v2234, 18
        %v2855 = vadd.s32 %v2263, 18
        %v2856 = vadd.s32 %v2292, 18
        %v2857 = vadd.s32 %v2321, 18
        %v2858 = vadd.s32 %v2350, 18
        %v2859 = vadd.s32 %v2379, 18
        %v2860 = vadd.s32 %v2408, 18
        %v2861 = vadd.s32 %v2437, 18
        %v2862 = vadd.s32 %v2466, 18
        %v2863 = vadd.s32 %v2495, 18
        %v2864 = vadd.s32 %v2524, 18
        %v2865 = vadd.s32 %v2553, 18
        %v2866 = vadd.s32 %v2582, 18
        %v2867 = vadd.s32 %v2611, 18
        %v2868 = vadd.s32 %v2640, 18
        %v2869 = vadd.s32 %v2669, 18
        %v2870 = vadd.s32 %v2698, 18
        %v2871 = vadd.s32 %v2727, 18
        %v2872 = vsel %vm2800, %v2836, %v1712
        %v2873 = vsel %vm2801, %v2837, %v1741
        %v2874 = vsel %vm2802, %v2838, %v1770
        %v2875 = vsel %vm2803, %v2839, %v1799
        %v2876 = vsel %vm2804, %v2840, %v1828
        %v2877 = vsel %vm2805, %v2841, %v1857
        %v2878 = vsel %vm2806, %v2842, %v1886
        %v2879 = vsel %vm2807, %v2843, %v1915
        %v2880 = vsel %vm2808, %v2844, %v1944
        %v2881 = vsel %vm2809, %v2845, %v1973
        %v2882 = vsel %vm2810, %v2846, %v2002
        %v2883 = vsel %vm2811, %v2847, %v2031
        %v2884 = vsel %vm2812, %v2848, %v2060
        %v2885 = vsel %vm2813, %v2849, %v2089
        %v2886 = vsel %vm2814, %v2850, %v2118
        %v2887 = vsel %vm2815, %v2851, %v2147
        %v2888 = vsel %vm2816, %v2852, %v2176
        %v2889 = vsel %vm2817, %v2853, %v2205
        %v2890 = vsel %vm2818, %v2854, %v2234
        %v2891 = vsel %vm2819, %v2855, %v2263
        %v2892 = vsel %vm2820, %v2856, %v2292
        %v2893 = vsel %vm2821, %v2857, %v2321
        %v2894 = vsel %vm2822, %v2858, %v2350
        %v2895 = vsel %vm2823, %v2859, %v2379
        %v2896 = vsel %vm2824, %v2860, %v2408
        %v2897 = vsel %vm2825, %v2861, %v2437
        %v2898 = vsel %vm2826, %v2862, %v2466
        %v2899 = vsel %vm2827, %v2863, %v2495
        %v2900 = vsel %vm2828, %v2864, %v2524
        %v2901 = vsel %vm2829, %v2865, %v2553
        %v2902 = vsel %vm2830, %v2866, %v2582
        %v2903 = vsel %vm2831, %v2867, %v2611
        %v2904 = vsel %vm2832, %v2868, %v2640
        %v2905 = vsel %vm2833, %v2869, %v2669
        %v2906 = vsel %vm2834, %v2870, %v2698
        %v2907 = vsel %vm2835, %v2871, %v2727
        %vm2908 = vcmp.lt.s32.totalorder %v2872, 16
        %vm2909 = vcmp.lt.s32.totalorder %v2873, 16
        %vm2910 = vcmp.lt.s32.totalorder %v2874, 16
        %vm2911 = vcmp.lt.s32.totalorder %v2875, 16
        %vm2912 = vcmp.lt.s32.totalorder %v2876, 16
        %vm2913 = vcmp.lt.s32.totalorder %v2877, 16
        %vm2914 = vcmp.lt.s32.totalorder %v2878, 16
        %vm2915 = vcmp.lt.s32.totalorder %v2879, 16
        %vm2916 = vcmp.lt.s32.totalorder %v2880, 16
        %vm2917 = vcmp.lt.s32.totalorder %v2881, 16
        %vm2918 = vcmp.lt.s32.totalorder %v2882, 16
        %vm2919 = vcmp.lt.s32.totalorder %v2883, 16
        %vm2920 = vcmp.lt.s32.totalorder %v2884, 16
        %vm2921 = vcmp.lt.s32.totalorder %v2885, 16
        %vm2922 = vcmp.lt.s32.totalorder %v2886, 16
        %vm2923 = vcmp.lt.s32.totalorder %v2887, 16
        %vm2924 = vcmp.lt.s32.totalorder %v2888, 16
        %vm2925 = vcmp.lt.s32.totalorder %v2889, 16
        %vm2926 = vcmp.lt.s32.totalorder %v2890, 16
        %vm2927 = vcmp.lt.s32.totalorder %v2891, 16
        %vm2928 = vcmp.lt.s32.totalorder %v2892, 16
        %vm2929 = vcmp.lt.s32.totalorder %v2893, 16
        %vm2930 = vcmp.lt.s32.totalorder %v2894, 16
        %vm2931 = vcmp.lt.s32.totalorder %v2895, 16
        %vm2932 = vcmp.lt.s32.totalorder %v2896, 16
        %vm2933 = vcmp.lt.s32.totalorder %v2897, 16
        %vm2934 = vcmp.lt.s32.totalorder %v2898, 16
        %vm2935 = vcmp.lt.s32.totalorder %v2899, 16
        %vm2936 = vcmp.lt.s32.totalorder %v2900, 16
        %vm2937 = vcmp.lt.s32.totalorder %v2901, 16
        %vm2938 = vcmp.lt.s32.totalorder %v2902, 16
        %vm2939 = vcmp.lt.s32.totalorder %v2903, 16
        %vm2940 = vcmp.lt.s32.totalorder %v2904, 16
        %vm2941 = vcmp.lt.s32.totalorder %v2905, 16
        %vm2942 = vcmp.lt.s32.totalorder %v2906, 16
        %vm2943 = vcmp.lt.s32.totalorder %v2907, 16
        %vm2944 = vmand %vm1648, %vm2908
        %vm2945 = vmand %vm1649, %vm2909
        %vm2946 = vmand %vm1650, %vm2910
        %vm2947 = vmand %vm1651, %vm2911
        %vm2948 = vmand %vm1652, %vm2912
        %vm2949 = vmand %vm1653, %vm2913
        %vm2950 = vmand %vm1654, %vm2914
        %vm2951 = vmand %vm1655, %vm2915
        %vm2952 = vmand %vm1656, %vm2916
        %vm2953 = vmand %vm1657, %vm2917
        %vm2954 = vmand %vm1658, %vm2918
        %vm2955 = vmand %vm1659, %vm2919
        %vm2956 = vmand %vm1660, %vm2920
        %vm2957 = vmand %vm1661, %vm2921
        %vm2958 = vmand %vm1662, %vm2922
        %vm2959 = vmand %vm1663, %vm2923
        %vm2960 = vmand %vm1664, %vm2924
        %vm2961 = vmand %vm1665, %vm2925
        %vm2962 = vmand %vm1666, %vm2926
        %vm2963 = vmand %vm1667, %vm2927
        %vm2964 = vmand %vm1668, %vm2928
        %vm2965 = vmand %vm1669, %vm2929
        %vm2966 = vmand %vm1670, %vm2930
        %vm2967 = vmand %vm1671, %vm2931
        %vm2968 = vmand %vm1672, %vm2932
        %vm2969 = vmand %vm1673, %vm2933
        %vm2970 = vmand %vm1674, %vm2934
        %vm2971 = vmand %vm1675, %vm2935
        %vm2972 = vmand %vm1676, %vm2936
        %vm2973 = vmand %vm1677, %vm2937
        %vm2974 = vmand %vm1678, %vm2938
        %vm2975 = vmand %vm1679, %vm2939
        %vm2976 = vmand %vm1680, %vm2940
        %vm2977 = vmand %vm1681, %vm2941
        %vm2978 = vmand %vm1682, %vm2942
        %vm2979 = vmand %vm1683, %vm2943
        %v2980 = vsel %vm2944, 1, 0
        %v2981 = vsel %vm2945, 1, 0
        %v2982 = vsel %vm2946, 1, 0
        %v2983 = vsel %vm2947, 1, 0
        %v2984 = vsel %vm2948, 1, 0
        %v2985 = vsel %vm2949, 1, 0
        %v2986 = vsel %vm2950, 1, 0
        %v2987 = vsel %vm2951, 1, 0
        %v2988 = vsel %vm2952, 1, 0
        %v2989 = vsel %vm2953, 1, 0
        %v2990 = vsel %vm2954, 1, 0
        %v2991 = vsel %vm2955, 1, 0
        %v2992 = vsel %vm2956, 1, 0
        %v2993 = vsel %vm2957, 1, 0
        %v2994 = vsel %vm2958, 1, 0
        %v2995 = vsel %vm2959, 1, 0
        %v2996 = vsel %vm2960, 1, 0
        %v2997 = vsel %vm2961, 1, 0
        %v2998 = vsel %vm2962, 1, 0
        %v2999 = vsel %vm2963, 1, 0
        %v3000 = vsel %vm2964, 1, 0
        %v3001 = vsel %vm2965, 1, 0
        %v3002 = vsel %vm2966, 1, 0
        %v3003 = vsel %vm2967, 1, 0
        %v3004 = vsel %vm2968, 1, 0
        %v3005 = vsel %vm2969, 1, 0
        %v3006 = vsel %vm2970, 1, 0
        %v3007 = vsel %vm2971, 1, 0
        %v3008 = vsel %vm2972, 1, 0
        %v3009 = vsel %vm2973, 1, 0
        %v3010 = vsel %vm2974, 1, 0
        %v3011 = vsel %vm2975, 1, 0
        %v3012 = vsel %vm2976, 1, 0
        %v3013 = vsel %vm2977, 1, 0
        %v3014 = vsel %vm2978, 1, 0
        %v3015 = vsel %vm2979, 1, 0
        %v3016 = vcvt.s32.f32 %v2980
        %v3017 = vcvt.s32.f32 %v2981
        %v3018 = vcvt.s32.f32 %v2982
        %v3019 = vcvt.s32.f32 %v2983
        %v3020 = vcvt.s32.f32 %v2984
        %v3021 = vcvt.s32.f32 %v2985
        %v3022 = vcvt.s32.f32 %v2986
        %v3023 = vcvt.s32.f32 %v2987
        %v3024 = vcvt.s32.f32 %v2988
        %v3025 = vcvt.s32.f32 %v2989
        %v3026 = vcvt.s32.f32 %v2990
        %v3027 = vcvt.s32.f32 %v2991
        %v3028 = vcvt.s32.f32 %v2992
        %v3029 = vcvt.s32.f32 %v2993
        %v3030 = vcvt.s32.f32 %v2994
        %v3031 = vcvt.s32.f32 %v2995
        %v3032 = vcvt.s32.f32 %v2996
        %v3033 = vcvt.s32.f32 %v2997
        %v3034 = vcvt.s32.f32 %v2998
        %v3035 = vcvt.s32.f32 %v2999
        %v3036 = vcvt.s32.f32 %v3000
        %v3037 = vcvt.s32.f32 %v3001
        %v3038 = vcvt.s32.f32 %v3002
        %v3039 = vcvt.s32.f32 %v3003
        %v3040 = vcvt.s32.f32 %v3004
        %v3041 = vcvt.s32.f32 %v3005
        %v3042 = vcvt.s32.f32 %v3006
        %v3043 = vcvt.s32.f32 %v3007
        %v3044 = vcvt.s32.f32 %v3008
        %v3045 = vcvt.s32.f32 %v3009
        %v3046 = vcvt.s32.f32 %v3010
        %v3047 = vcvt.s32.f32 %v3011
        %v3048 = vcvt.s32.f32 %v3012
        %v3049 = vcvt.s32.f32 %v3013
        %v3050 = vcvt.s32.f32 %v3014
        %v3051 = vcvt.s32.f32 %v3015
        %3052 = vst [vmem:[#allocation2] sm:$0xf] 0
        %3053 = vst [vmem:[#allocation2 + $0x4] sm:$0xf] 0
        %3054 = vst [vmem:[#allocation2 + $0x8] sm:$0xf] 0
        %3055 = vst [vmem:[#allocation2 + $0xc] sm:$0xf] 0
        %3056 = vst [vmem:[#allocation2 + $0x10] sm:$0xf] 0
        %3057 = vst [vmem:[#allocation2 + $0x14] sm:$0xf] 0
        %3058 = vst [vmem:[#allocation2 + $0x18] sm:$0xf] 0
        %3059 = vst [vmem:[#allocation2 + $0x1c] sm:$0xf] 0
        %3060 = vst [vmem:[#allocation2 + $0x20] sm:$0xf] 0
        %3061 = vst [vmem:[#allocation2 + $0x24] sm:$0xf] 0
        %3062 = vst [vmem:[#allocation2 + $0x28] sm:$0xf] 0
        %3063 = vst [vmem:[#allocation2 + $0x2c] sm:$0xf] 0
        %3064 = vst [vmem:[#allocation2 + $0x30] sm:$0xf] 0
        %3065 = vst [vmem:[#allocation2 + $0x34] sm:$0xf] 0
        %3066 = vst [vmem:[#allocation2 + $0x38] sm:$0xf] 0
        %3067 = vst [vmem:[#allocation2 + $0x3c] sm:$0xf] 0
        %3068 = vst [vmem:[#allocation2 + $0x40] sm:$0xf] 0
        %3069 = vst [vmem:[#allocation2 + $0x44] sm:$0xf] 0
        %3070 = vst [vmem:[#allocation2 + $0x48] sm:$0xf] 0
        %3071 = vst [vmem:[#allocation2 + $0x4c] sm:$0xf] 0
        %3072 = vst [vmem:[#allocation2 + $0x50] sm:$0xf] 0
        %3073 = vst [vmem:[#allocation2 + $0x54] sm:$0xf] 0
        %3074 = vst [vmem:[#allocation2 + $0x58] sm:$0xf] 0
        %3075 = vst [vmem:[#allocation2 + $0x5c] sm:$0xf] 0
        %3076 = vst [vmem:[#allocation2 + $0x60] sm:$0xf] 0
        %3077 = vst [vmem:[#allocation2 + $0x64] sm:$0xf] 0
        %3078 = vst [vmem:[#allocation2 + $0x68] sm:$0xf] 0
        %3079 = vst [vmem:[#allocation2 + $0x6c] sm:$0xf] 0
        %3080 = vst [vmem:[#allocation2 + $0x70] sm:$0xf] 0
        %3081 = vst [vmem:[#allocation2 + $0x74] sm:$0xf] 0
        %3082 = vst [vmem:[#allocation2 + $0x78] sm:$0xf] 0
        %3083 = vst [vmem:[#allocation2 + $0x7c] sm:$0xf] 0
        %3084 = vst [vmem:[#allocation2 + $0x80] sm:$0xf] 0
        %3085 = vst [vmem:[#allocation2 + $0x84] sm:$0xf] 0
        %3086 = vst [vmem:[#allocation2 + $0x88] sm:$0xf] 0
        %3087 = vst [vmem:[#allocation2 + $0x8c] sm:$0xf] 0
        %3088 = vst [vmem:[#allocation2 + $0x90] sm:$0xf] 0
        %3089 = vst [vmem:[#allocation2 + $0x94] sm:$0xf] 0
        %3090 = vst [vmem:[#allocation2 + $0x98] sm:$0xf] 0
        %3091 = vst [vmem:[#allocation2 + $0x9c] sm:$0xf] 0
        %3092 = vst [vmem:[#allocation2 + $0xa0] sm:$0x3] 0
        %v3093 = vld [vmem:[%s340] sm:$0xff]
        %v3094 = vld [vmem:[%s340 + $0x8] sm:$0xff]
        %v3095 = vpack.c.bf16 %v3093, %v3093
        %v3096 = vpack.c.bf16 %v3094, %v3094
        %vm3097 = vsmask.f32 1280
        %vm3098 = vsmask.f32 5392
        %vm3099 = vmor %vm3097, %vm3098
        %v3101 = vshrl.u32 %v3095, 16
        %v3103 = vrot.slane %v3101, 6
        %v3104 = vshll.u32 %v3095, 16
        %v3106 = vrot.slane %v3104, 7
        %v3107 = vor.u32 %v3103, %v3106
        %v3108 = vrot.slane %v3107, 4
        %v3110 = vshrl.u32 %v3096, 16
        %v3112 = vrot.slane %v3110, 6
        %v3113 = vshll.u32 %v3096, 16
        %v3115 = vrot.slane %v3113, 7
        %v3116 = vor.u32 %v3112, %v3115
        %v3117 = vsel %vm3099, %v3108, %v3116
        %v3118 = vrot.slane %v3116, 4
        %vm3122 = vcmask 1043457
        %vm3123 = vsmask.f32 7942
        %vm3124 = vmand %vm3122, %vm3123
        %v3125 = vld [vmem:[#allocation2 + $0x8] sm:$0xe]
        %v3126 = vsel %vm3124, %v3107, %v3125
        %3127 = vst [vmem:[#allocation2 + $0x8] sm:$0xe] %v3126
        %3128 = vst [vmem:[#allocation2 + $0xc] sm:$0xf] %v3117
        %vm3129 = vcmask 1041408
        %vm3130 = vmand %vm3129, %vm3097
        %v3131 = vld [vmem:[#allocation2 + $0x10] sm:$0x3]
        %v3132 = vsel %vm3130, %v3118, %v3131
        %3133 = vst [vmem:[#allocation2 + $0x10] sm:$0x3] %v3132
        %s3134 = scalar_lea.vmem %s340, 16 [#allocation3]
        %v3135 = vld [vmem:[%s3134] sm:$0xff]
        %v3136 = vld [vmem:[%s3134 + $0x8] sm:$0xff]
        %v3137 = vpack.c.bf16 %v3135, %v3135
        %v3138 = vpack.c.bf16 %v3136, %v3136
        %vm3139 = vsmask.f32 2304
        %vm3140 = vsmask.f32 6416
        %vm3141 = vmor %vm3139, %vm3140
        %v3143 = vshrl.u32 %v3137, 16
        %v3145 = vrot.slane %v3143, 5
        %v3146 = vshll.u32 %v3137, 16
        %v3148 = vrot.slane %v3146, 6
        %v3149 = vor.u32 %v3145, %v3148
        %v3150 = vrot.slane %v3149, 4
        %v3152 = vshrl.u32 %v3138, 16
        %v3154 = vrot.slane %v3152, 5
        %v3155 = vshll.u32 %v3138, 16
        %v3157 = vrot.slane %v3155, 6
        %v3158 = vor.u32 %v3154, %v3157
        %v3159 = vsel %vm3141, %v3150, %v3158
        %v3160 = vrot.slane %v3158, 4
        %vm3164 = vcmask 1043458
        %vm3165 = vsmask.f32 7946
        %vm3166 = vmand %vm3164, %vm3165
        %v3167 = vld [vmem:[#allocation2 + $0x10] sm:$0xc]
        %v3168 = vsel %vm3166, %v3149, %v3167
        %3169 = vst [vmem:[#allocation2 + $0x10] sm:$0xc] %v3168
        %3170 = vst [vmem:[#allocation2 + $0x14] sm:$0xf] %v3159
        %vm3171 = vcmask 1042432
        %vm3172 = vmand %vm3171, %vm3139
        %v3173 = vld [vmem:[#allocation2 + $0x18] sm:$0x7]
        %v3174 = vsel %vm3172, %v3160, %v3173
        %3175 = vst [vmem:[#allocation2 + $0x18] sm:$0x7] %v3174
        %s3176 = scalar_lea.vmem %s340, 32 [#allocation3]
        %v3177 = vld [vmem:[%s3176] sm:$0xff]
        %v3178 = vld [vmem:[%s3176 + $0x8] sm:$0xff]
        %v3179 = vpack.c.bf16 %v3177, %v3177
        %v3180 = vpack.c.bf16 %v3178, %v3178
        %vm3181 = vsmask.f32 3328
        %vm3182 = vsmask.f32 7440
        %vm3183 = vmor %vm3181, %vm3182
        %v3185 = vshll.u32 %v3179, 16
        %v3187 = vrot.slane %v3185, 5
        %v3188 = vshrl.u32 %v3179, 16
        %v3190 = vrot.slane %v3188, 4
        %v3191 = vor.u32 %v3190, %v3187
        %v3192 = vrot.slane %v3191, 4
        %v3194 = vshll.u32 %v3180, 16
        %v3196 = vrot.slane %v3194, 5
        %v3197 = vsel %vm3183, %v3192, %v3196
        %v3198 = vshrl.u32 %v3180, 16
        %v3200 = vrot.slane %v3198, 4
        %v3201 = vor.u32 %v3200, %v3196
        %v3202 = vrot.slane %v3201, 4
        %vm3206 = vcmask 1043459
        %vm3207 = vsmask.f32 7950
        %vm3208 = vmand %vm3206, %vm3207
        %v3209 = vld [vmem:[#allocation2 + $0x18] sm:$0x8]
        %v3210 = vsel %vm3208, %v3187, %v3209
        %3211 = vst [vmem:[#allocation2 + $0x18] sm:$0x8] %v3210
        %3212 = vst [vmem:[#allocation2 + $0x1c] sm:$0xf] %v3197
        %vm3213 = vcmask 1043456
        %vm3214 = vmand %vm3213, %vm3181
        %v3215 = vld [vmem:[#allocation2 + $0x20] sm:$0xf]
        %v3216 = vsel %vm3214, %v3202, %v3215
        %3217 = vst [vmem:[#allocation2 + $0x20] sm:$0xf] %v3216
        %s3218 = scalar_lea.vmem %s340, 48 [#allocation3]
        %v3219 = vld [vmem:[%s3218] sm:$0xff]
        %v3220 = vld [vmem:[%s3218 + $0x8] sm:$0xff]
        %v3221 = vpack.c.bf16 %v3219, %v3219
        %v3222 = vpack.c.bf16 %v3220, %v3220
        %vm3223 = vsmask.f32 256
        %vm3224 = vsmask.f32 4368
        %vm3225 = vmor %vm3223, %vm3224
        %v3227 = vshrl.u32 %v3221, 16
        %v3229 = vrot.slane %v3227, 7
        %v3230 = vshll.u32 %v3221, 16
        %v3232 = vor.u32 %v3229, %v3230
        %v3233 = vrot.slane %v3229, 4
        %v3235 = vshrl.u32 %v3222, 16
        %v3237 = vrot.slane %v3235, 7
        %v3238 = vshll.u32 %v3222, 16
        %v3240 = vor.u32 %v3237, %v3238
        %v3241 = vsel %vm3225, %v3233, %v3240
        %v3242 = vrot.slane %v3237, 4
        %vm3246 = vsmask.f32 7938
        %vm3247 = vmand %vm3213, %vm3246
        %v3248 = vld [vmem:[#allocation2 + $0x24] sm:$0xf]
        %v3249 = vsel %vm3247, %v3232, %v3248
        %3250 = vst [vmem:[#allocation2 + $0x24] sm:$0xf] %v3249
        %3251 = vst [vmem:[#allocation2 + $0x28] sm:$0xf] %v3241
        %vm3252 = vcmask 1040384
        %vm3253 = vmand %vm3252, %vm3223
        %v3254 = vld [vmem:[#allocation2 + $0x2c] sm:$0x1]
        %v3255 = vsel %vm3253, %v3242, %v3254
        %3256 = vst [vmem:[#allocation2 + $0x2c] sm:$0x1] %v3255
        %s3257 = scalar_lea.vmem %s340, 64 [#allocation3]
        %v3258 = vld [vmem:[%s3257] sm:$0xff]
        %v3259 = vld [vmem:[%s3257 + $0x8] sm:$0xff]
        %v3260 = vpack.c.bf16 %v3258, %v3258
        %v3261 = vpack.c.bf16 %v3259, %v3259
        %v3263 = vshrl.u32 %v3260, 16
        %v3265 = vrot.slane %v3263, 6
        %v3266 = vshll.u32 %v3260, 16
        %v3268 = vrot.slane %v3266, 7
        %v3269 = vor.u32 %v3265, %v3268
        %v3270 = vrot.slane %v3269, 4
        %v3272 = vshrl.u32 %v3261, 16
        %v3274 = vrot.slane %v3272, 6
        %v3275 = vshll.u32 %v3261, 16
        %v3277 = vrot.slane %v3275, 7
        %v3278 = vor.u32 %v3274, %v3277
        %v3279 = vsel %vm3099, %v3270, %v3278
        %v3280 = vrot.slane %v3278, 4
        %v3284 = vld [vmem:[#allocation2 + $0x2c] sm:$0xe]
        %v3285 = vsel %vm3124, %v3269, %v3284
        %3286 = vst [vmem:[#allocation2 + $0x2c] sm:$0xe] %v3285
        %3287 = vst [vmem:[#allocation2 + $0x30] sm:$0xf] %v3279
        %v3288 = vld [vmem:[#allocation2 + $0x34] sm:$0x3]
        %v3289 = vsel %vm3130, %v3280, %v3288
        %3290 = vst [vmem:[#allocation2 + $0x34] sm:$0x3] %v3289
        %s3291 = scalar_lea.vmem %s340, 80 [#allocation3]
        %v3292 = vld [vmem:[%s3291] sm:$0xff]
        %v3293 = vld [vmem:[%s3291 + $0x8] sm:$0xff]
        %v3294 = vpack.c.bf16 %v3292, %v3292
        %v3295 = vpack.c.bf16 %v3293, %v3293
        %v3297 = vshrl.u32 %v3294, 16
        %v3299 = vrot.slane %v3297, 5
        %v3300 = vshll.u32 %v3294, 16
        %v3302 = vrot.slane %v3300, 6
        %v3303 = vor.u32 %v3299, %v3302
        %v3304 = vrot.slane %v3303, 4
        %v3306 = vshrl.u32 %v3295, 16
        %v3308 = vrot.slane %v3306, 5
        %v3309 = vshll.u32 %v3295, 16
        %v3311 = vrot.slane %v3309, 6
        %v3312 = vor.u32 %v3308, %v3311
        %v3313 = vsel %vm3141, %v3304, %v3312
        %v3314 = vrot.slane %v3312, 4
        %v3318 = vld [vmem:[#allocation2 + $0x34] sm:$0xc]
        %v3319 = vsel %vm3166, %v3303, %v3318
        %3320 = vst [vmem:[#allocation2 + $0x34] sm:$0xc] %v3319
        %3321 = vst [vmem:[#allocation2 + $0x38] sm:$0xf] %v3313
        %v3322 = vld [vmem:[#allocation2 + $0x3c] sm:$0x7]
        %v3323 = vsel %vm3172, %v3314, %v3322
        %3324 = vst [vmem:[#allocation2 + $0x3c] sm:$0x7] %v3323
        %s3325 = scalar_lea.vmem %s340, 96 [#allocation3]
        %v3326 = vld [vmem:[%s3325] sm:$0xff]
        %v3327 = vld [vmem:[%s3325 + $0x8] sm:$0xff]
        %v3328 = vpack.c.bf16 %v3326, %v3326
        %v3329 = vpack.c.bf16 %v3327, %v3327
        %v3331 = vshll.u32 %v3328, 16
        %v3333 = vrot.slane %v3331, 5
        %v3334 = vshrl.u32 %v3328, 16
        %v3336 = vrot.slane %v3334, 4
        %v3337 = vor.u32 %v3336, %v3333
        %v3338 = vrot.slane %v3337, 4
        %v3340 = vshll.u32 %v3329, 16
        %v3342 = vrot.slane %v3340, 5
        %v3343 = vsel %vm3183, %v3338, %v3342
        %v3344 = vshrl.u32 %v3329, 16
        %v3346 = vrot.slane %v3344, 4
        %v3347 = vor.u32 %v3346, %v3342
        %v3348 = vrot.slane %v3347, 4
        %v3352 = vld [vmem:[#allocation2 + $0x3c] sm:$0x8]
        %v3353 = vsel %vm3208, %v3333, %v3352
        %3354 = vst [vmem:[#allocation2 + $0x3c] sm:$0x8] %v3353
        %3355 = vst [vmem:[#allocation2 + $0x40] sm:$0xf] %v3343
        %v3356 = vld [vmem:[#allocation2 + $0x44] sm:$0xf]
        %v3357 = vsel %vm3214, %v3348, %v3356
        %3358 = vst [vmem:[#allocation2 + $0x44] sm:$0xf] %v3357
        %s3359 = scalar_lea.vmem %s340, 112 [#allocation3]
        %v3360 = vld [vmem:[%s3359] sm:$0xff]
        %v3361 = vld [vmem:[%s3359 + $0x8] sm:$0xff]
        %v3362 = vpack.c.bf16 %v3360, %v3360
        %v3363 = vpack.c.bf16 %v3361, %v3361
        %v3365 = vshrl.u32 %v3362, 16
        %v3367 = vrot.slane %v3365, 7
        %v3368 = vshll.u32 %v3362, 16
        %v3370 = vor.u32 %v3367, %v3368
        %v3371 = vrot.slane %v3367, 4
        %v3373 = vshrl.u32 %v3363, 16
        %v3375 = vrot.slane %v3373, 7
        %v3376 = vshll.u32 %v3363, 16
        %v3378 = vor.u32 %v3375, %v3376
        %v3379 = vsel %vm3225, %v3371, %v3378
        %v3380 = vrot.slane %v3375, 4
        %v3384 = vld [vmem:[#allocation2 + $0x48] sm:$0xf]
        %v3385 = vsel %vm3247, %v3370, %v3384
        %3386 = vst [vmem:[#allocation2 + $0x48] sm:$0xf] %v3385
        %3387 = vst [vmem:[#allocation2 + $0x4c] sm:$0xf] %v3379
        %v3388 = vld [vmem:[#allocation2 + $0x50] sm:$0x1]
        %v3389 = vsel %vm3253, %v3380, %v3388
        %3390 = vst [vmem:[#allocation2 + $0x50] sm:$0x1] %v3389
        %s3391 = scalar_lea.vmem %s340, 128 [#allocation3]
        %v3392 = vld [vmem:[%s3391] sm:$0xff]
        %v3393 = vld [vmem:[%s3391 + $0x8] sm:$0xff]
        %v3394 = vpack.c.bf16 %v3392, %v3392
        %v3395 = vpack.c.bf16 %v3393, %v3393
        %v3397 = vshrl.u32 %v3394, 16
        %v3399 = vrot.slane %v3397, 6
        %v3400 = vshll.u32 %v3394, 16
        %v3402 = vrot.slane %v3400, 7
        %v3403 = vor.u32 %v3399, %v3402
        %v3404 = vrot.slane %v3403, 4
        %v3406 = vshrl.u32 %v3395, 16
        %v3408 = vrot.slane %v3406, 6
        %v3409 = vshll.u32 %v3395, 16
        %v3411 = vrot.slane %v3409, 7
        %v3412 = vor.u32 %v3408, %v3411
        %v3413 = vsel %vm3099, %v3404, %v3412
        %v3414 = vrot.slane %v3412, 4
        %v3418 = vld [vmem:[#allocation2 + $0x50] sm:$0xe]
        %v3419 = vsel %vm3124, %v3403, %v3418
        %3420 = vst [vmem:[#allocation2 + $0x50] sm:$0xe] %v3419
        %3421 = vst [vmem:[#allocation2 + $0x54] sm:$0xf] %v3413
        %v3422 = vld [vmem:[#allocation2 + $0x58] sm:$0x3]
        %v3423 = vsel %vm3130, %v3414, %v3422
        %3424 = vst [vmem:[#allocation2 + $0x58] sm:$0x3] %v3423
        %s3425 = scalar_lea.vmem %s340, 144 [#allocation3]
        %v3426 = vld [vmem:[%s3425] sm:$0xff]
        %v3427 = vld [vmem:[%s3425 + $0x8] sm:$0xff]
        %v3428 = vpack.c.bf16 %v3426, %v3426
        %v3429 = vpack.c.bf16 %v3427, %v3427
        %v3431 = vshrl.u32 %v3428, 16
        %v3433 = vrot.slane %v3431, 5
        %v3434 = vshll.u32 %v3428, 16
        %v3436 = vrot.slane %v3434, 6
        %v3437 = vor.u32 %v3433, %v3436
        %v3438 = vrot.slane %v3437, 4
        %v3440 = vshrl.u32 %v3429, 16
        %v3442 = vrot.slane %v3440, 5
        %v3443 = vshll.u32 %v3429, 16
        %v3445 = vrot.slane %v3443, 6
        %v3446 = vor.u32 %v3442, %v3445
        %v3447 = vsel %vm3141, %v3438, %v3446
        %v3448 = vrot.slane %v3446, 4
        %v3452 = vld [vmem:[#allocation2 + $0x58] sm:$0xc]
        %v3453 = vsel %vm3166, %v3437, %v3452
        %3454 = vst [vmem:[#allocation2 + $0x58] sm:$0xc] %v3453
        %3455 = vst [vmem:[#allocation2 + $0x5c] sm:$0xf] %v3447
        %v3456 = vld [vmem:[#allocation2 + $0x60] sm:$0x7]
        %v3457 = vsel %vm3172, %v3448, %v3456
        %3458 = vst [vmem:[#allocation2 + $0x60] sm:$0x7] %v3457
        %s3459 = scalar_lea.vmem %s340, 160 [#allocation3]
        %v3460 = vld [vmem:[%s3459] sm:$0xff]
        %v3461 = vld [vmem:[%s3459 + $0x8] sm:$0xff]
        %v3462 = vpack.c.bf16 %v3460, %v3460
        %v3463 = vpack.c.bf16 %v3461, %v3461
        %v3465 = vshll.u32 %v3462, 16
        %v3467 = vrot.slane %v3465, 5
        %v3468 = vshrl.u32 %v3462, 16
        %v3470 = vrot.slane %v3468, 4
        %v3471 = vor.u32 %v3470, %v3467
        %v3472 = vrot.slane %v3471, 4
        %v3474 = vshll.u32 %v3463, 16
        %v3476 = vrot.slane %v3474, 5
        %v3477 = vsel %vm3183, %v3472, %v3476
        %v3478 = vshrl.u32 %v3463, 16
        %v3480 = vrot.slane %v3478, 4
        %v3481 = vor.u32 %v3480, %v3476
        %v3482 = vrot.slane %v3481, 4
        %v3486 = vld [vmem:[#allocation2 + $0x60] sm:$0x8]
        %v3487 = vsel %vm3208, %v3467, %v3486
        %3488 = vst [vmem:[#allocation2 + $0x60] sm:$0x8] %v3487
        %3489 = vst [vmem:[#allocation2 + $0x64] sm:$0xf] %v3477
        %v3490 = vld [vmem:[#allocation2 + $0x68] sm:$0xf]
        %v3491 = vsel %vm3214, %v3482, %v3490
        %3492 = vst [vmem:[#allocation2 + $0x68] sm:$0xf] %v3491
        %s3493 = scalar_lea.vmem %s340, 176 [#allocation3]
        %v3494 = vld [vmem:[%s3493] sm:$0xff]
        %v3495 = vld [vmem:[%s3493 + $0x8] sm:$0xff]
        %v3496 = vpack.c.bf16 %v3494, %v3494
        %v3497 = vpack.c.bf16 %v3495, %v3495
        %v3499 = vshrl.u32 %v3496, 16
        %v3501 = vrot.slane %v3499, 7
        %v3502 = vshll.u32 %v3496, 16
        %v3504 = vor.u32 %v3501, %v3502
        %v3505 = vrot.slane %v3501, 4
        %v3507 = vshrl.u32 %v3497, 16
        %v3509 = vrot.slane %v3507, 7
        %v3510 = vshll.u32 %v3497, 16
        %v3512 = vor.u32 %v3509, %v3510
        %v3513 = vsel %vm3225, %v3505, %v3512
        %v3514 = vrot.slane %v3509, 4
        %v3518 = vld [vmem:[#allocation2 + $0x6c] sm:$0xf]
        %v3519 = vsel %vm3247, %v3504, %v3518
        %3520 = vst [vmem:[#allocation2 + $0x6c] sm:$0xf] %v3519
        %3521 = vst [vmem:[#allocation2 + $0x70] sm:$0xf] %v3513
        %v3522 = vld [vmem:[#allocation2 + $0x74] sm:$0x1]
        %v3523 = vsel %vm3253, %v3514, %v3522
        %3524 = vst [vmem:[#allocation2 + $0x74] sm:$0x1] %v3523
        %s3525 = scalar_lea.vmem %s340, 192 [#allocation3]
        %v3526 = vld [vmem:[%s3525] sm:$0xff]
        %v3527 = vld [vmem:[%s3525 + $0x8] sm:$0xff]
        %v3528 = vpack.c.bf16 %v3526, %v3526
        %v3529 = vpack.c.bf16 %v3527, %v3527
        %v3531 = vshrl.u32 %v3528, 16
        %v3533 = vrot.slane %v3531, 6
        %v3534 = vshll.u32 %v3528, 16
        %v3536 = vrot.slane %v3534, 7
        %v3537 = vor.u32 %v3533, %v3536
        %v3538 = vrot.slane %v3537, 4
        %v3540 = vshrl.u32 %v3529, 16
        %v3542 = vrot.slane %v3540, 6
        %v3543 = vshll.u32 %v3529, 16
        %v3545 = vrot.slane %v3543, 7
        %v3546 = vor.u32 %v3542, %v3545
        %v3547 = vsel %vm3099, %v3538, %v3546
        %v3548 = vrot.slane %v3546, 4
        %v3552 = vld [vmem:[#allocation2 + $0x74] sm:$0xe]
        %v3553 = vsel %vm3124, %v3537, %v3552
        %3554 = vst [vmem:[#allocation2 + $0x74] sm:$0xe] %v3553
        %3555 = vst [vmem:[#allocation2 + $0x78] sm:$0xf] %v3547
        %v3556 = vld [vmem:[#allocation2 + $0x7c] sm:$0x3]
        %v3557 = vsel %vm3130, %v3548, %v3556
        %3558 = vst [vmem:[#allocation2 + $0x7c] sm:$0x3] %v3557
        %s3559 = scalar_lea.vmem %s340, 208 [#allocation3]
        %v3560 = vld [vmem:[%s3559] sm:$0xff]
        %v3561 = vld [vmem:[%s3559 + $0x8] sm:$0xff]
        %v3562 = vpack.c.bf16 %v3560, %v3560
        %v3563 = vpack.c.bf16 %v3561, %v3561
        %v3565 = vshrl.u32 %v3562, 16
        %v3567 = vrot.slane %v3565, 5
        %v3568 = vshll.u32 %v3562, 16
        %v3570 = vrot.slane %v3568, 6
        %v3571 = vor.u32 %v3567, %v3570
        %v3572 = vrot.slane %v3571, 4
        %v3574 = vshrl.u32 %v3563, 16
        %v3576 = vrot.slane %v3574, 5
        %v3577 = vshll.u32 %v3563, 16
        %v3579 = vrot.slane %v3577, 6
        %v3580 = vor.u32 %v3576, %v3579
        %v3581 = vsel %vm3141, %v3572, %v3580
        %v3582 = vrot.slane %v3580, 4
        %v3586 = vld [vmem:[#allocation2 + $0x7c] sm:$0xc]
        %v3587 = vsel %vm3166, %v3571, %v3586
        %3588 = vst [vmem:[#allocation2 + $0x7c] sm:$0xc] %v3587
        %3589 = vst [vmem:[#allocation2 + $0x80] sm:$0xf] %v3581
        %v3590 = vld [vmem:[#allocation2 + $0x84] sm:$0x7]
        %v3591 = vsel %vm3172, %v3582, %v3590
        %3592 = vst [vmem:[#allocation2 + $0x84] sm:$0x7] %v3591
        %s3593 = scalar_lea.vmem %s340, 224 [#allocation3]
        %v3594 = vld [vmem:[%s3593] sm:$0xff]
        %v3595 = vld [vmem:[%s3593 + $0x8] sm:$0xff]
        %v3596 = vpack.c.bf16 %v3594, %v3594
        %v3597 = vpack.c.bf16 %v3595, %v3595
        %v3599 = vshll.u32 %v3596, 16
        %v3601 = vrot.slane %v3599, 5
        %v3602 = vshrl.u32 %v3596, 16
        %v3604 = vrot.slane %v3602, 4
        %v3605 = vor.u32 %v3604, %v3601
        %v3606 = vrot.slane %v3605, 4
        %v3608 = vshll.u32 %v3597, 16
        %v3610 = vrot.slane %v3608, 5
        %v3611 = vsel %vm3183, %v3606, %v3610
        %v3612 = vshrl.u32 %v3597, 16
        %v3614 = vrot.slane %v3612, 4
        %v3615 = vor.u32 %v3614, %v3610
        %v3616 = vrot.slane %v3615, 4
        %v3620 = vld [vmem:[#allocation2 + $0x84] sm:$0x8]
        %v3621 = vsel %vm3208, %v3601, %v3620
        %3622 = vst [vmem:[#allocation2 + $0x84] sm:$0x8] %v3621
        %3623 = vst [vmem:[#allocation2 + $0x88] sm:$0xf] %v3611
        %v3624 = vld [vmem:[#allocation2 + $0x8c] sm:$0xf]
        %v3625 = vsel %vm3214, %v3616, %v3624
        %3626 = vst [vmem:[#allocation2 + $0x8c] sm:$0xf] %v3625
        %s3627 = scalar_lea.vmem %s340, 240 [#allocation3]
        %v3628 = vld [vmem:[%s3627] sm:$0xff]
        %v3629 = vld [vmem:[%s3627 + $0x8] sm:$0xff]
        %v3630 = vpack.c.bf16 %v3628, %v3628
        %v3631 = vpack.c.bf16 %v3629, %v3629
        %v3633 = vshrl.u32 %v3630, 16
        %v3635 = vrot.slane %v3633, 7
        %v3636 = vshll.u32 %v3630, 16
        %v3638 = vor.u32 %v3635, %v3636
        %v3639 = vrot.slane %v3635, 4
        %v3641 = vshrl.u32 %v3631, 16
        %v3643 = vrot.slane %v3641, 7
        %v3644 = vshll.u32 %v3631, 16
        %v3646 = vor.u32 %v3643, %v3644
        %v3647 = vsel %vm3225, %v3639, %v3646
        %v3648 = vrot.slane %v3643, 4
        %v3652 = vld [vmem:[#allocation2 + $0x90] sm:$0xf]
        %v3653 = vsel %vm3247, %v3638, %v3652
        %3654 = vst [vmem:[#allocation2 + $0x90] sm:$0xf] %v3653
        %3655 = vst [vmem:[#allocation2 + $0x94] sm:$0xf] %v3647
        %v3656 = vld [vmem:[#allocation2 + $0x98] sm:$0x1]
        %v3657 = vsel %vm3253, %v3648, %v3656
        %3658 = vst [vmem:[#allocation2 + $0x98] sm:$0x1] %v3657
        %v3659 = vld [vmem:[#allocation2] sm:$0xf]
        %v3660 = vld [vmem:[#allocation2 + $0x4] sm:$0xf]
        %v3661 = vld [vmem:[#allocation2 + $0x8] sm:$0xf]
        %v3662 = vld [vmem:[#allocation2 + $0xc] sm:$0xf]
        %v3663 = vld [vmem:[#allocation2 + $0x10] sm:$0xf]
        %v3664 = vld [vmem:[#allocation2 + $0x14] sm:$0xf]
        %v3665 = vld [vmem:[#allocation2 + $0x18] sm:$0xf]
        %v3666 = vld [vmem:[#allocation2 + $0x1c] sm:$0xf]
        %v3667 = vld [vmem:[#allocation2 + $0x20] sm:$0xf]
        %v3668 = vld [vmem:[#allocation2 + $0x24] sm:$0xf]
        %v3669 = vld [vmem:[#allocation2 + $0x28] sm:$0xf]
        %v3670 = vld [vmem:[#allocation2 + $0x2c] sm:$0xf]
        %v3671 = vld [vmem:[#allocation2 + $0x30] sm:$0xf]
        %v3672 = vld [vmem:[#allocation2 + $0x34] sm:$0xf]
        %v3673 = vld [vmem:[#allocation2 + $0x38] sm:$0xf]
        %v3674 = vld [vmem:[#allocation2 + $0x3c] sm:$0xf]
        %v3675 = vld [vmem:[#allocation2 + $0x40] sm:$0xf]
        %v3676 = vld [vmem:[#allocation2 + $0x44] sm:$0xf]
        %v3677 = vld [vmem:[#allocation2 + $0x48] sm:$0xf]
        %v3678 = vld [vmem:[#allocation2 + $0x4c] sm:$0xf]
        %v3679 = vld [vmem:[#allocation2 + $0x50] sm:$0xf]
        %v3680 = vld [vmem:[#allocation2 + $0x54] sm:$0xf]
        %v3681 = vld [vmem:[#allocation2 + $0x58] sm:$0xf]
        %v3682 = vld [vmem:[#allocation2 + $0x5c] sm:$0xf]
        %v3683 = vld [vmem:[#allocation2 + $0x60] sm:$0xf]
        %v3684 = vld [vmem:[#allocation2 + $0x64] sm:$0xf]
        %v3685 = vld [vmem:[#allocation2 + $0x68] sm:$0xf]
        %v3686 = vld [vmem:[#allocation2 + $0x6c] sm:$0xf]
        %v3687 = vld [vmem:[#allocation2 + $0x70] sm:$0xf]
        %v3688 = vld [vmem:[#allocation2 + $0x74] sm:$0xf]
        %v3689 = vld [vmem:[#allocation2 + $0x78] sm:$0xf]
        %v3690 = vld [vmem:[#allocation2 + $0x7c] sm:$0xf]
        %v3691 = vld [vmem:[#allocation2 + $0x80] sm:$0xf]
        %v3692 = vld [vmem:[#allocation2 + $0x84] sm:$0xf]
        %v3693 = vld [vmem:[#allocation2 + $0x88] sm:$0xf]
        %v3694 = vld [vmem:[#allocation2 + $0x8c] sm:$0x7]
        %v3695 = vld [vmem:[#allocation6] sm:$0xf]
        %v3696 = vld [vmem:[#allocation6 + $0x4] sm:$0xf]
        %v3697 = vld [vmem:[#allocation6 + $0x8] sm:$0xf]
        %v3698 = vld [vmem:[#allocation6 + $0xc] sm:$0xf]
        %v3699 = vld [vmem:[#allocation6 + $0x10] sm:$0xf]
        %v3700 = vld [vmem:[#allocation6 + $0x14] sm:$0xf]
        %v3701 = vld [vmem:[#allocation6 + $0x18] sm:$0xf]
        %v3702 = vld [vmem:[#allocation6 + $0x1c] sm:$0xf]
        %v3703 = vld [vmem:[#allocation6 + $0x20] sm:$0xf]
        %v3704 = vld [vmem:[#allocation6 + $0x24] sm:$0xf]
        %v3705 = vld [vmem:[#allocation6 + $0x28] sm:$0xf]
        %v3706 = vld [vmem:[#allocation6 + $0x2c] sm:$0xf]
        %v3707 = vld [vmem:[#allocation6 + $0x30] sm:$0xf]
        %v3708 = vld [vmem:[#allocation6 + $0x34] sm:$0xf]
        %v3709 = vld [vmem:[#allocation6 + $0x38] sm:$0xf]
        %v3710 = vld [vmem:[#allocation6 + $0x3c] sm:$0xf]
        %v3711 = vld [vmem:[#allocation2 + $0x8c] sm:$0xf]
        %s3712 = scalar_lea.vmem [#allocation6], 64
        %v3713 = vld [vmem:[%s3712] sm:$0xf]
        %v3714 = vld [vmem:[%s3712 + $0x4] sm:$0xf]
        %v3715 = vld [vmem:[%s3712 + $0x8] sm:$0xf]
        %v3716 = vld [vmem:[%s3712 + $0xc] sm:$0xf]
        %v3717 = vld [vmem:[%s3712 + $0x10] sm:$0xf]
        %v3718 = vld [vmem:[%s3712 + $0x14] sm:$0xf]
        %v3719 = vld [vmem:[%s3712 + $0x18] sm:$0xf]
        %v3720 = vld [vmem:[%s3712 + $0x1c] sm:$0xf]
        %v3721 = vld [vmem:[%s3712 + $0x20] sm:$0xf]
        %v3722 = vld [vmem:[%s3712 + $0x24] sm:$0xf]
        %v3723 = vld [vmem:[%s3712 + $0x28] sm:$0xf]
        %v3724 = vld [vmem:[%s3712 + $0x2c] sm:$0xf]
        %v3725 = vld [vmem:[%s3712 + $0x30] sm:$0xf]
        %v3726 = vld [vmem:[%s3712 + $0x34] sm:$0xf]
        %v3727 = vld [vmem:[%s3712 + $0x38] sm:$0xf]
        %v3728 = vld [vmem:[%s3712 + $0x3c] sm:$0xf]
        %v3765 = vunpack.c.l.b16 %v3659
        %v3766 = vunpack.c.l.b16 %v3660
        %v3767 = vunpack.c.l.b16 %v3661
        %v3768 = vunpack.c.l.b16 %v3662
        %v3769 = vunpack.c.l.b16 %v3663
        %v3770 = vunpack.c.l.b16 %v3664
        %v3771 = vunpack.c.l.b16 %v3665
        %v3772 = vunpack.c.l.b16 %v3666
        %v3773 = vunpack.c.l.b16 %v3667
        %v3774 = vunpack.c.l.b16 %v3668
        %v3775 = vunpack.c.l.b16 %v3669
        %v3776 = vunpack.c.l.b16 %v3670
        %v3777 = vunpack.c.l.b16 %v3671
        %v3778 = vunpack.c.l.b16 %v3672
        %v3779 = vunpack.c.l.b16 %v3673
        %v3780 = vunpack.c.l.b16 %v3674
        %v3781 = vunpack.c.l.b16 %v3675
        %v3782 = vunpack.c.l.b16 %v3676
        %v3783 = vunpack.c.l.b16 %v3677
        %v3784 = vunpack.c.l.b16 %v3678
        %v3785 = vunpack.c.l.b16 %v3679
        %v3786 = vunpack.c.l.b16 %v3680
        %v3787 = vunpack.c.l.b16 %v3681
        %v3788 = vunpack.c.l.b16 %v3682
        %v3789 = vunpack.c.l.b16 %v3683
        %v3790 = vunpack.c.l.b16 %v3684
        %v3791 = vunpack.c.l.b16 %v3685
        %v3792 = vunpack.c.l.b16 %v3686
        %v3793 = vunpack.c.l.b16 %v3687
        %v3794 = vunpack.c.l.b16 %v3688
        %v3795 = vunpack.c.l.b16 %v3689
        %v3796 = vunpack.c.l.b16 %v3690
        %v3797 = vunpack.c.l.b16 %v3691
        %v3798 = vunpack.c.l.b16 %v3692
        %v3799 = vunpack.c.l.b16 %v3693
        %v3800 = vunpack.c.l.b16 %v3711
        %v3801 = vpack.c.b16 %v3766, %v3765
        %v3802 = vpack.c.b16 %v3768, %v3767
        %v3803 = vpack.c.b16 %v3770, %v3769
        %v3804 = vpack.c.b16 %v3772, %v3771
        %v3805 = vpack.c.b16 %v3774, %v3773
        %v3806 = vpack.c.b16 %v3776, %v3775
        %v3807 = vpack.c.b16 %v3778, %v3777
        %v3808 = vpack.c.b16 %v3780, %v3779
        %v3809 = vpack.c.b16 %v3782, %v3781
        %v3810 = vpack.c.b16 %v3784, %v3783
        %v3811 = vpack.c.b16 %v3786, %v3785
        %v3812 = vpack.c.b16 %v3788, %v3787
        %v3813 = vpack.c.b16 %v3790, %v3789
        %v3814 = vpack.c.b16 %v3792, %v3791
        %v3815 = vpack.c.b16 %v3794, %v3793
        %v3816 = vpack.c.b16 %v3796, %v3795
        %v3817 = vpack.c.b16 %v3798, %v3797
        %v3818 = vpack.c.b16 %v3800, %v3799
        %vm3819 = vsmask.f32 7424
        %v3821 = vshrl.u32 %v3801, 16
        %v3823 = vshll.u32 %v3801, 16
        %v3825 = vrot.slane %v3823, 1
        %v3826 = vor.u32 %v3821, %v3825
        %v3828 = vshll.u32 %v3802, 16
        %v3830 = vrot.slane %v3828, 1
        %v3831 = vsel %vm3819, %v3826, %v3830
        %v3832 = vshrl.u32 %v3802, 16
        %v3834 = vor.u32 %v3832, %v3830
        %v3836 = vshll.u32 %v3803, 16
        %v3838 = vrot.slane %v3836, 1
        %v3839 = vsel %vm3819, %v3834, %v3838
        %v3840 = vshrl.u32 %v3803, 16
        %v3842 = vor.u32 %v3840, %v3838
        %v3844 = vshll.u32 %v3804, 16
        %v3846 = vrot.slane %v3844, 1
        %v3847 = vsel %vm3819, %v3842, %v3846
        %v3848 = vshrl.u32 %v3804, 16
        %v3850 = vor.u32 %v3848, %v3846
        %v3852 = vshll.u32 %v3805, 16
        %v3854 = vrot.slane %v3852, 1
        %v3855 = vsel %vm3819, %v3850, %v3854
        %v3856 = vshrl.u32 %v3805, 16
        %v3858 = vor.u32 %v3856, %v3854
        %v3860 = vshll.u32 %v3806, 16
        %v3862 = vrot.slane %v3860, 1
        %v3863 = vsel %vm3819, %v3858, %v3862
        %v3864 = vshrl.u32 %v3806, 16
        %v3866 = vor.u32 %v3864, %v3862
        %v3868 = vshll.u32 %v3807, 16
        %v3870 = vrot.slane %v3868, 1
        %v3871 = vsel %vm3819, %v3866, %v3870
        %v3872 = vshrl.u32 %v3807, 16
        %v3874 = vor.u32 %v3872, %v3870
        %v3876 = vshll.u32 %v3808, 16
        %v3878 = vrot.slane %v3876, 1
        %v3879 = vsel %vm3819, %v3874, %v3878
        %v3880 = vshrl.u32 %v3808, 16
        %v3882 = vor.u32 %v3880, %v3878
        %v3884 = vshll.u32 %v3809, 16
        %v3886 = vrot.slane %v3884, 1
        %v3887 = vsel %vm3819, %v3882, %v3886
        %v3888 = vshrl.u32 %v3809, 16
        %v3890 = vor.u32 %v3888, %v3886
        %v3892 = vshll.u32 %v3810, 16
        %v3894 = vrot.slane %v3892, 1
        %v3895 = vsel %vm3819, %v3890, %v3894
        %v3896 = vshrl.u32 %v3810, 16
        %v3898 = vor.u32 %v3896, %v3894
        %v3900 = vshll.u32 %v3811, 16
        %v3902 = vrot.slane %v3900, 1
        %v3903 = vsel %vm3819, %v3898, %v3902
        %v3904 = vshrl.u32 %v3811, 16
        %v3906 = vor.u32 %v3904, %v3902
        %v3908 = vshll.u32 %v3812, 16
        %v3910 = vrot.slane %v3908, 1
        %v3911 = vsel %vm3819, %v3906, %v3910
        %v3912 = vshrl.u32 %v3812, 16
        %v3914 = vor.u32 %v3912, %v3910
        %v3916 = vshll.u32 %v3813, 16
        %v3918 = vrot.slane %v3916, 1
        %v3919 = vsel %vm3819, %v3914, %v3918
        %v3920 = vshrl.u32 %v3813, 16
        %v3922 = vor.u32 %v3920, %v3918
        %v3924 = vshll.u32 %v3814, 16
        %v3926 = vrot.slane %v3924, 1
        %v3927 = vsel %vm3819, %v3922, %v3926
        %v3928 = vshrl.u32 %v3814, 16
        %v3930 = vor.u32 %v3928, %v3926
        %v3932 = vshll.u32 %v3815, 16
        %v3934 = vrot.slane %v3932, 1
        %v3935 = vsel %vm3819, %v3930, %v3934
        %v3936 = vshrl.u32 %v3815, 16
        %v3938 = vor.u32 %v3936, %v3934
        %v3940 = vshll.u32 %v3816, 16
        %v3942 = vrot.slane %v3940, 1
        %v3943 = vsel %vm3819, %v3938, %v3942
        %v3944 = vshrl.u32 %v3816, 16
        %v3946 = vor.u32 %v3944, %v3942
        %v3948 = vshll.u32 %v3817, 16
        %v3950 = vrot.slane %v3948, 1
        %v3951 = vsel %vm3819, %v3946, %v3950
        %v3952 = vshrl.u32 %v3817, 16
        %v3954 = vor.u32 %v3952, %v3950
        %v3956 = vshll.u32 %v3818, 16
        %v3958 = vrot.slane %v3956, 1
        %v3959 = vsel %vm3819, %v3954, %v3958
        %v3960 = vshrl.u32 %v3818, 16
        %v3962 = vor.u32 %v3960, %v3958
        %v3997 = vunpack.c.l.b16 %v3713
        %v3998 = vunpack.c.l.b16 %v3714
        %v3999 = vunpack.c.l.b16 %v3715
        %v4000 = vunpack.c.l.b16 %v3716
        %v4001 = vunpack.c.l.b16 %v3717
        %v4002 = vunpack.c.l.b16 %v3718
        %v4003 = vunpack.c.l.b16 %v3719
        %v4004 = vunpack.c.l.b16 %v3720
        %v4005 = vunpack.c.l.b16 %v3721
        %v4006 = vunpack.c.l.b16 %v3722
        %v4007 = vunpack.c.l.b16 %v3723
        %v4008 = vunpack.c.l.b16 %v3724
        %v4009 = vunpack.c.l.b16 %v3725
        %v4010 = vunpack.c.l.b16 %v3726
        %v4011 = vunpack.c.l.b16 %v3727
        %v4012 = vunpack.c.l.b16 %v3728
        %v4013 = vpack.c.b16 %v3998, %v3997
        %v4014 = vpack.c.b16 %v4000, %v3999
        %v4015 = vpack.c.b16 %v4002, %v4001
        %v4016 = vpack.c.b16 %v4004, %v4003
        %v4017 = vpack.c.b16 %v4006, %v4005
        %v4018 = vpack.c.b16 %v4008, %v4007
        %v4019 = vpack.c.b16 %v4010, %v4009
        %v4020 = vpack.c.b16 %v4012, %v4011
        %4029 = vmatpush.bf16.msra.mxu0 %v4020
        %4030 = vmatpush.bf16.msra.mxu0 %v4019
        %4031 = vmatpush.bf16.msra.mxu0 %v4018
        %4032 = vmatpush.bf16.msra.mxu0 %v4017
        %4033 = vmatpush.bf16.msra.mxu0 %v4016
        %4034 = vmatpush.bf16.msra.mxu0 %v4015
        %4035 = vmatpush.bf16.msra.mxu0 %v4014
        %4036 = vmatpush.bf16.msra.mxu0 %v4013
        %4037 = vmatmul.bf16.gmra.mxu0 %v3831
        %v4038 = vpop.f32.mrf.mxu0
        %v4039 = vadd.f32 0.0, %v4038
        %v4040 = vpop.f32.mrf.mxu0
        %v4041 = vadd.f32 0.0, %v4040
        %4042 = vmatmul.bf16.gmra.mxu0 %v3839
        %v4043 = vpop.f32.mrf.mxu0
        %v4044 = vadd.f32 0.0, %v4043
        %v4045 = vpop.f32.mrf.mxu0
        %v4046 = vadd.f32 0.0, %v4045
        %4047 = vmatmul.bf16.gmra.mxu0 %v3847
        %v4048 = vpop.f32.mrf.mxu0
        %v4049 = vadd.f32 0.0, %v4048
        %v4050 = vpop.f32.mrf.mxu0
        %v4051 = vadd.f32 0.0, %v4050
        %4052 = vmatmul.bf16.gmra.mxu0 %v3855
        %v4053 = vpop.f32.mrf.mxu0
        %v4054 = vadd.f32 0.0, %v4053
        %v4055 = vpop.f32.mrf.mxu0
        %v4056 = vadd.f32 0.0, %v4055
        %4057 = vmatmul.bf16.gmra.mxu0 %v3863
        %v4058 = vpop.f32.mrf.mxu0
        %v4059 = vadd.f32 0.0, %v4058
        %v4060 = vpop.f32.mrf.mxu0
        %v4061 = vadd.f32 0.0, %v4060
        %4062 = vmatmul.bf16.gmra.mxu0 %v3871
        %v4063 = vpop.f32.mrf.mxu0
        %v4064 = vadd.f32 0.0, %v4063
        %v4065 = vpop.f32.mrf.mxu0
        %v4066 = vadd.f32 0.0, %v4065
        %4067 = vmatmul.bf16.gmra.mxu0 %v3879
        %v4068 = vpop.f32.mrf.mxu0
        %v4069 = vadd.f32 0.0, %v4068
        %v4070 = vpop.f32.mrf.mxu0
        %v4071 = vadd.f32 0.0, %v4070
        %4072 = vmatmul.bf16.gmra.mxu0 %v3887
        %v4073 = vpop.f32.mrf.mxu0
        %v4074 = vadd.f32 0.0, %v4073
        %v4075 = vpop.f32.mrf.mxu0
        %v4076 = vadd.f32 0.0, %v4075
        %4077 = vmatmul.bf16.gmra.mxu0 %v3895
        %v4078 = vpop.f32.mrf.mxu0
        %v4079 = vadd.f32 0.0, %v4078
        %v4080 = vpop.f32.mrf.mxu0
        %v4081 = vadd.f32 0.0, %v4080
        %4082 = vmatmul.bf16.gmra.mxu0 %v3903
        %v4083 = vpop.f32.mrf.mxu0
        %v4084 = vadd.f32 0.0, %v4083
        %v4085 = vpop.f32.mrf.mxu0
        %v4086 = vadd.f32 0.0, %v4085
        %4087 = vmatmul.bf16.gmra.mxu0 %v3911
        %v4088 = vpop.f32.mrf.mxu0
        %v4089 = vadd.f32 0.0, %v4088
        %v4090 = vpop.f32.mrf.mxu0
        %v4091 = vadd.f32 0.0, %v4090
        %4092 = vmatmul.bf16.gmra.mxu0 %v3919
        %v4093 = vpop.f32.mrf.mxu0
        %v4094 = vadd.f32 0.0, %v4093
        %v4095 = vpop.f32.mrf.mxu0
        %v4096 = vadd.f32 0.0, %v4095
        %4097 = vmatmul.bf16.gmra.mxu0 %v3927
        %v4098 = vpop.f32.mrf.mxu0
        %v4099 = vadd.f32 0.0, %v4098
        %v4100 = vpop.f32.mrf.mxu0
        %v4101 = vadd.f32 0.0, %v4100
        %4102 = vmatmul.bf16.gmra.mxu0 %v3935
        %v4103 = vpop.f32.mrf.mxu0
        %v4104 = vadd.f32 0.0, %v4103
        %v4105 = vpop.f32.mrf.mxu0
        %v4106 = vadd.f32 0.0, %v4105
        %4107 = vmatmul.bf16.gmra.mxu0 %v3943
        %v4108 = vpop.f32.mrf.mxu0
        %v4109 = vadd.f32 0.0, %v4108
        %v4110 = vpop.f32.mrf.mxu0
        %v4111 = vadd.f32 0.0, %v4110
        %4112 = vmatmul.bf16.gmra.mxu0 %v3951
        %v4113 = vpop.f32.mrf.mxu0
        %v4114 = vadd.f32 0.0, %v4113
        %v4115 = vpop.f32.mrf.mxu0
        %v4116 = vadd.f32 0.0, %v4115
        %4117 = vmatmul.bf16.gmra.mxu0 %v3959
        %v4118 = vpop.f32.mrf.mxu0
        %v4119 = vadd.f32 0.0, %v4118
        %v4120 = vpop.f32.mrf.mxu0
        %v4121 = vadd.f32 0.0, %v4120
        %4122 = vmatmul.bf16.gmra.mxu0 %v3962
        %v4123 = vpop.f32.mrf.mxu0
        %v4124 = vadd.f32 0.0, %v4123
        %v4125 = vpop.f32.mrf.mxu0
        %v4126 = vadd.f32 0.0, %v4125
        %4127 = vdwg.mxu0
        %v4129 = vunpack.c.l.b16 %v3694
        %v4130 = vpack.c.b16 %v4129, %v3799
        %v4165 = vunpack.c.l.b16 %v3695
        %v4166 = vunpack.c.l.b16 %v3696
        %v4167 = vunpack.c.l.b16 %v3697
        %v4168 = vunpack.c.l.b16 %v3698
        %v4169 = vunpack.c.l.b16 %v3699
        %v4170 = vunpack.c.l.b16 %v3700
        %v4171 = vunpack.c.l.b16 %v3701
        %v4172 = vunpack.c.l.b16 %v3702
        %v4173 = vunpack.c.l.b16 %v3703
        %v4174 = vunpack.c.l.b16 %v3704
        %v4175 = vunpack.c.l.b16 %v3705
        %v4176 = vunpack.c.l.b16 %v3706
        %v4177 = vunpack.c.l.b16 %v3707
        %v4178 = vunpack.c.l.b16 %v3708
        %v4179 = vunpack.c.l.b16 %v3709
        %v4180 = vunpack.c.l.b16 %v3710
        %v4181 = vpack.c.b16 %v4166, %v4165
        %v4182 = vpack.c.b16 %v4168, %v4167
        %v4183 = vpack.c.b16 %v4170, %v4169
        %v4184 = vpack.c.b16 %v4172, %v4171
        %v4185 = vpack.c.b16 %v4174, %v4173
        %v4186 = vpack.c.b16 %v4176, %v4175
        %v4187 = vpack.c.b16 %v4178, %v4177
        %v4188 = vpack.c.b16 %v4180, %v4179
        %4197 = vmatpush.bf16.msra.mxu0 %v4188
        %4198 = vmatpush.bf16.msra.mxu0 %v4187
        %4199 = vmatpush.bf16.msra.mxu0 %v4186
        %4200 = vmatpush.bf16.msra.mxu0 %v4185
        %4201 = vmatpush.bf16.msra.mxu0 %v4184
        %4202 = vmatpush.bf16.msra.mxu0 %v4183
        %4203 = vmatpush.bf16.msra.mxu0 %v4182
        %4204 = vmatpush.bf16.msra.mxu0 %v4181
        %4205 = vmatmul.bf16.gmra.mxu0 %v3801
        %v4206 = vpop.f32.mrf.mxu0
        %v4207 = vadd.f32 %v4039, %v4206
        %v4208 = vpop.f32.mrf.mxu0
        %v4209 = vadd.f32 %v4041, %v4208
        %4210 = vmatmul.bf16.gmra.mxu0 %v3802
        %v4211 = vpop.f32.mrf.mxu0
        %v4212 = vadd.f32 %v4044, %v4211
        %v4213 = vpop.f32.mrf.mxu0
        %v4214 = vadd.f32 %v4046, %v4213
        %4215 = vmatmul.bf16.gmra.mxu0 %v3803
        %v4216 = vpop.f32.mrf.mxu0
        %v4217 = vadd.f32 %v4049, %v4216
        %v4218 = vpop.f32.mrf.mxu0
        %v4219 = vadd.f32 %v4051, %v4218
        %4220 = vmatmul.bf16.gmra.mxu0 %v3804
        %v4221 = vpop.f32.mrf.mxu0
        %v4222 = vadd.f32 %v4054, %v4221
        %v4223 = vpop.f32.mrf.mxu0
        %v4224 = vadd.f32 %v4056, %v4223
        %4225 = vmatmul.bf16.gmra.mxu0 %v3805
        %v4226 = vpop.f32.mrf.mxu0
        %v4227 = vadd.f32 %v4059, %v4226
        %v4228 = vpop.f32.mrf.mxu0
        %v4229 = vadd.f32 %v4061, %v4228
        %4230 = vmatmul.bf16.gmra.mxu0 %v3806
        %v4231 = vpop.f32.mrf.mxu0
        %v4232 = vadd.f32 %v4064, %v4231
        %v4233 = vpop.f32.mrf.mxu0
        %v4234 = vadd.f32 %v4066, %v4233
        %4235 = vmatmul.bf16.gmra.mxu0 %v3807
        %v4236 = vpop.f32.mrf.mxu0
        %v4237 = vadd.f32 %v4069, %v4236
        %v4238 = vpop.f32.mrf.mxu0
        %v4239 = vadd.f32 %v4071, %v4238
        %4240 = vmatmul.bf16.gmra.mxu0 %v3808
        %v4241 = vpop.f32.mrf.mxu0
        %v4242 = vadd.f32 %v4074, %v4241
        %v4243 = vpop.f32.mrf.mxu0
        %v4244 = vadd.f32 %v4076, %v4243
        %4245 = vmatmul.bf16.gmra.mxu0 %v3809
        %v4246 = vpop.f32.mrf.mxu0
        %v4247 = vadd.f32 %v4079, %v4246
        %v4248 = vpop.f32.mrf.mxu0
        %v4249 = vadd.f32 %v4081, %v4248
        %4250 = vmatmul.bf16.gmra.mxu0 %v3810
        %v4251 = vpop.f32.mrf.mxu0
        %v4252 = vadd.f32 %v4084, %v4251
        %v4253 = vpop.f32.mrf.mxu0
        %v4254 = vadd.f32 %v4086, %v4253
        %4255 = vmatmul.bf16.gmra.mxu0 %v3811
        %v4256 = vpop.f32.mrf.mxu0
        %v4257 = vadd.f32 %v4089, %v4256
        %v4258 = vpop.f32.mrf.mxu0
        %v4259 = vadd.f32 %v4091, %v4258
        %4260 = vmatmul.bf16.gmra.mxu0 %v3812
        %v4261 = vpop.f32.mrf.mxu0
        %v4262 = vadd.f32 %v4094, %v4261
        %v4263 = vpop.f32.mrf.mxu0
        %v4264 = vadd.f32 %v4096, %v4263
        %4265 = vmatmul.bf16.gmra.mxu0 %v3813
        %v4266 = vpop.f32.mrf.mxu0
        %v4267 = vadd.f32 %v4099, %v4266
        %v4268 = vpop.f32.mrf.mxu0
        %v4269 = vadd.f32 %v4101, %v4268
        %4270 = vmatmul.bf16.gmra.mxu0 %v3814
        %v4271 = vpop.f32.mrf.mxu0
        %v4272 = vadd.f32 %v4104, %v4271
        %v4273 = vpop.f32.mrf.mxu0
        %v4274 = vadd.f32 %v4106, %v4273
        %4275 = vmatmul.bf16.gmra.mxu0 %v3815
        %v4276 = vpop.f32.mrf.mxu0
        %v4277 = vadd.f32 %v4109, %v4276
        %v4278 = vpop.f32.mrf.mxu0
        %v4279 = vadd.f32 %v4111, %v4278
        %4280 = vmatmul.bf16.gmra.mxu0 %v3816
        %v4281 = vpop.f32.mrf.mxu0
        %v4282 = vadd.f32 %v4114, %v4281
        %v4283 = vpop.f32.mrf.mxu0
        %v4284 = vadd.f32 %v4116, %v4283
        %4285 = vmatmul.bf16.gmra.mxu0 %v3817
        %v4286 = vpop.f32.mrf.mxu0
        %v4287 = vadd.f32 %v4119, %v4286
        %v4288 = vpop.f32.mrf.mxu0
        %v4289 = vadd.f32 %v4121, %v4288
        %4290 = vmatmul.bf16.gmra.mxu0 %v4130
        %v4291 = vpop.f32.mrf.mxu0
        %v4292 = vadd.f32 %v4124, %v4291
        %v4293 = vpop.f32.mrf.mxu0
        %v4294 = vadd.f32 %v4126, %v4293
        %4295 = vdwg.mxu0
        %v4296 = vld [vmem:[#allocation2] sm:$0xe]
        %s4297 = scalar_lea.vmem [#allocation6], 128
        %v4298 = vld [vmem:[%s4297] sm:$0xf]
        %v4299 = vld [vmem:[%s4297 + $0x4] sm:$0xf]
        %v4300 = vld [vmem:[%s4297 + $0x8] sm:$0xf]
        %v4301 = vld [vmem:[%s4297 + $0xc] sm:$0xf]
        %v4302 = vld [vmem:[%s4297 + $0x10] sm:$0xf]
        %v4303 = vld [vmem:[%s4297 + $0x14] sm:$0xf]
        %v4304 = vld [vmem:[%s4297 + $0x18] sm:$0xf]
        %v4305 = vld [vmem:[%s4297 + $0x1c] sm:$0xf]
        %v4306 = vld [vmem:[%s4297 + $0x20] sm:$0xf]
        %v4307 = vld [vmem:[%s4297 + $0x24] sm:$0xf]
        %v4308 = vld [vmem:[%s4297 + $0x28] sm:$0xf]
        %v4309 = vld [vmem:[%s4297 + $0x2c] sm:$0xf]
        %v4310 = vld [vmem:[%s4297 + $0x30] sm:$0xf]
        %v4311 = vld [vmem:[%s4297 + $0x34] sm:$0xf]
        %v4312 = vld [vmem:[%s4297 + $0x38] sm:$0xf]
        %v4313 = vld [vmem:[%s4297 + $0x3c] sm:$0xf]
        %v4315 = vunpack.c.l.b16 %v4296
        %v4316 = vpack.c.b16 %v3766, %v4315
        %vm4317 = vcmask 1046528
        %v4318 = vrot.slane %v4316, 1
        %v4319 = vrot.slane %v3802, 1
        %v4320 = vsel %vm4317, %v4318, %v4319
        %v4321 = vrot.slane %v3803, 1
        %v4322 = vsel %vm4317, %v4319, %v4321
        %v4323 = vrot.slane %v3804, 1
        %v4324 = vsel %vm4317, %v4321, %v4323
        %v4325 = vrot.slane %v3805, 1
        %v4326 = vsel %vm4317, %v4323, %v4325
        %v4327 = vrot.slane %v3806, 1
        %v4328 = vsel %vm4317, %v4325, %v4327
        %v4329 = vrot.slane %v3807, 1
        %v4330 = vsel %vm4317, %v4327, %v4329
        %v4331 = vrot.slane %v3808, 1
        %v4332 = vsel %vm4317, %v4329, %v4331
        %v4333 = vrot.slane %v3809, 1
        %v4334 = vsel %vm4317, %v4331, %v4333
        %v4335 = vrot.slane %v3810, 1
        %v4336 = vsel %vm4317, %v4333, %v4335
        %v4337 = vrot.slane %v3811, 1
        %v4338 = vsel %vm4317, %v4335, %v4337
        %v4339 = vrot.slane %v3812, 1
        %v4340 = vsel %vm4317, %v4337, %v4339
        %v4341 = vrot.slane %v3813, 1
        %v4342 = vsel %vm4317, %v4339, %v4341
        %v4343 = vrot.slane %v3814, 1
        %v4344 = vsel %vm4317, %v4341, %v4343
        %v4345 = vrot.slane %v3815, 1
        %v4346 = vsel %vm4317, %v4343, %v4345
        %v4347 = vrot.slane %v3816, 1
        %v4348 = vsel %vm4317, %v4345, %v4347
        %v4349 = vrot.slane %v3817, 1
        %v4350 = vsel %vm4317, %v4347, %v4349
        %v4351 = vrot.slane %v3818, 1
        %v4352 = vsel %vm4317, %v4349, %v4351
        %v4387 = vunpack.c.l.b16 %v4298
        %v4388 = vunpack.c.l.b16 %v4299
        %v4389 = vunpack.c.l.b16 %v4300
        %v4390 = vunpack.c.l.b16 %v4301
        %v4391 = vunpack.c.l.b16 %v4302
        %v4392 = vunpack.c.l.b16 %v4303
        %v4393 = vunpack.c.l.b16 %v4304
        %v4394 = vunpack.c.l.b16 %v4305
        %v4395 = vunpack.c.l.b16 %v4306
        %v4396 = vunpack.c.l.b16 %v4307
        %v4397 = vunpack.c.l.b16 %v4308
        %v4398 = vunpack.c.l.b16 %v4309
        %v4399 = vunpack.c.l.b16 %v4310
        %v4400 = vunpack.c.l.b16 %v4311
        %v4401 = vunpack.c.l.b16 %v4312
        %v4402 = vunpack.c.l.b16 %v4313
        %v4403 = vpack.c.b16 %v4388, %v4387
        %v4404 = vpack.c.b16 %v4390, %v4389
        %v4405 = vpack.c.b16 %v4392, %v4391
        %v4406 = vpack.c.b16 %v4394, %v4393
        %v4407 = vpack.c.b16 %v4396, %v4395
        %v4408 = vpack.c.b16 %v4398, %v4397
        %v4409 = vpack.c.b16 %v4400, %v4399
        %v4410 = vpack.c.b16 %v4402, %v4401
        %4419 = vmatpush.bf16.msra.mxu0 %v4410
        %4420 = vmatpush.bf16.msra.mxu0 %v4409
        %4421 = vmatpush.bf16.msra.mxu0 %v4408
        %4422 = vmatpush.bf16.msra.mxu0 %v4407
        %4423 = vmatpush.bf16.msra.mxu0 %v4406
        %4424 = vmatpush.bf16.msra.mxu0 %v4405
        %4425 = vmatpush.bf16.msra.mxu0 %v4404
        %4426 = vmatpush.bf16.msra.mxu0 %v4403
        %4427 = vmatmul.bf16.gmra.mxu0 %v4320
        %v4428 = vpop.f32.mrf.mxu0
        %v4429 = vadd.f32 0.0, %v4428
        %v4430 = vpop.f32.mrf.mxu0
        %v4431 = vadd.f32 0.0, %v4430
        %4432 = vmatmul.bf16.gmra.mxu0 %v4322
        %v4433 = vpop.f32.mrf.mxu0
        %v4434 = vadd.f32 0.0, %v4433
        %v4435 = vpop.f32.mrf.mxu0
        %v4436 = vadd.f32 0.0, %v4435
        %4437 = vmatmul.bf16.gmra.mxu0 %v4324
        %v4438 = vpop.f32.mrf.mxu0
        %v4439 = vadd.f32 0.0, %v4438
        %v4440 = vpop.f32.mrf.mxu0
        %v4441 = vadd.f32 0.0, %v4440
        %4442 = vmatmul.bf16.gmra.mxu0 %v4326
        %v4443 = vpop.f32.mrf.mxu0
        %v4444 = vadd.f32 0.0, %v4443
        %v4445 = vpop.f32.mrf.mxu0
        %v4446 = vadd.f32 0.0, %v4445
        %4447 = vmatmul.bf16.gmra.mxu0 %v4328
        %v4448 = vpop.f32.mrf.mxu0
        %v4449 = vadd.f32 0.0, %v4448
        %v4450 = vpop.f32.mrf.mxu0
        %v4451 = vadd.f32 0.0, %v4450
        %4452 = vmatmul.bf16.gmra.mxu0 %v4330
        %v4453 = vpop.f32.mrf.mxu0
        %v4454 = vadd.f32 0.0, %v4453
        %v4455 = vpop.f32.mrf.mxu0
        %v4456 = vadd.f32 0.0, %v4455
        %4457 = vmatmul.bf16.gmra.mxu0 %v4332
        %v4458 = vpop.f32.mrf.mxu0
        %v4459 = vadd.f32 0.0, %v4458
        %v4460 = vpop.f32.mrf.mxu0
        %v4461 = vadd.f32 0.0, %v4460
        %4462 = vmatmul.bf16.gmra.mxu0 %v4334
        %v4463 = vpop.f32.mrf.mxu0
        %v4464 = vadd.f32 0.0, %v4463
        %v4465 = vpop.f32.mrf.mxu0
        %v4466 = vadd.f32 0.0, %v4465
        %4467 = vmatmul.bf16.gmra.mxu0 %v4336
        %v4468 = vpop.f32.mrf.mxu0
        %v4469 = vadd.f32 0.0, %v4468
        %v4470 = vpop.f32.mrf.mxu0
        %v4471 = vadd.f32 0.0, %v4470
        %4472 = vmatmul.bf16.gmra.mxu0 %v4338
        %v4473 = vpop.f32.mrf.mxu0
        %v4474 = vadd.f32 0.0, %v4473
        %v4475 = vpop.f32.mrf.mxu0
        %v4476 = vadd.f32 0.0, %v4475
        %4477 = vmatmul.bf16.gmra.mxu0 %v4340
        %v4478 = vpop.f32.mrf.mxu0
        %v4479 = vadd.f32 0.0, %v4478
        %v4480 = vpop.f32.mrf.mxu0
        %v4481 = vadd.f32 0.0, %v4480
        %4482 = vmatmul.bf16.gmra.mxu0 %v4342
        %v4483 = vpop.f32.mrf.mxu0
        %v4484 = vadd.f32 0.0, %v4483
        %v4485 = vpop.f32.mrf.mxu0
        %v4486 = vadd.f32 0.0, %v4485
        %4487 = vmatmul.bf16.gmra.mxu0 %v4344
        %v4488 = vpop.f32.mrf.mxu0
        %v4489 = vadd.f32 0.0, %v4488
        %v4490 = vpop.f32.mrf.mxu0
        %v4491 = vadd.f32 0.0, %v4490
        %4492 = vmatmul.bf16.gmra.mxu0 %v4346
        %v4493 = vpop.f32.mrf.mxu0
        %v4494 = vadd.f32 0.0, %v4493
        %v4495 = vpop.f32.mrf.mxu0
        %v4496 = vadd.f32 0.0, %v4495
        %4497 = vmatmul.bf16.gmra.mxu0 %v4348
        %v4498 = vpop.f32.mrf.mxu0
        %v4499 = vadd.f32 0.0, %v4498
        %v4500 = vpop.f32.mrf.mxu0
        %v4501 = vadd.f32 0.0, %v4500
        %4502 = vmatmul.bf16.gmra.mxu0 %v4350
        %v4503 = vpop.f32.mrf.mxu0
        %v4504 = vadd.f32 0.0, %v4503
        %v4505 = vpop.f32.mrf.mxu0
        %v4506 = vadd.f32 0.0, %v4505
        %4507 = vmatmul.bf16.gmra.mxu0 %v4352
        %v4508 = vpop.f32.mrf.mxu0
        %v4509 = vadd.f32 0.0, %v4508
        %v4510 = vpop.f32.mrf.mxu0
        %v4511 = vadd.f32 0.0, %v4510
        %4512 = vmatmul.bf16.gmra.mxu0 %v4351
        %v4513 = vpop.f32.mrf.mxu0
        %v4514 = vadd.f32 0.0, %v4513
        %v4515 = vpop.f32.mrf.mxu0
        %v4516 = vadd.f32 0.0, %v4515
        %4517 = vdwg.mxu0
        %v4518 = vadd.f32 %v4207, %v4429
        %v4519 = vadd.f32 %v4209, %v4431
        %v4520 = vadd.f32 %v4212, %v4434
        %v4521 = vadd.f32 %v4214, %v4436
        %v4522 = vadd.f32 %v4217, %v4439
        %v4523 = vadd.f32 %v4219, %v4441
        %v4524 = vadd.f32 %v4222, %v4444
        %v4525 = vadd.f32 %v4224, %v4446
        %v4526 = vadd.f32 %v4227, %v4449
        %v4527 = vadd.f32 %v4229, %v4451
        %v4528 = vadd.f32 %v4232, %v4454
        %v4529 = vadd.f32 %v4234, %v4456
        %v4530 = vadd.f32 %v4237, %v4459
        %v4531 = vadd.f32 %v4239, %v4461
        %v4532 = vadd.f32 %v4242, %v4464
        %v4533 = vadd.f32 %v4244, %v4466
        %v4534 = vadd.f32 %v4247, %v4469
        %v4535 = vadd.f32 %v4249, %v4471
        %v4536 = vadd.f32 %v4252, %v4474
        %v4537 = vadd.f32 %v4254, %v4476
        %v4538 = vadd.f32 %v4257, %v4479
        %v4539 = vadd.f32 %v4259, %v4481
        %v4540 = vadd.f32 %v4262, %v4484
        %v4541 = vadd.f32 %v4264, %v4486
        %v4542 = vadd.f32 %v4267, %v4489
        %v4543 = vadd.f32 %v4269, %v4491
        %v4544 = vadd.f32 %v4272, %v4494
        %v4545 = vadd.f32 %v4274, %v4496
        %v4546 = vadd.f32 %v4277, %v4499
        %v4547 = vadd.f32 %v4279, %v4501
        %v4548 = vadd.f32 %v4282, %v4504
        %v4549 = vadd.f32 %v4284, %v4506
        %v4550 = vadd.f32 %v4287, %v4509
        %v4551 = vadd.f32 %v4289, %v4511
        %v4552 = vadd.f32 %v4292, %v4514
        %v4553 = vadd.f32 %v4294, %v4516
        %v4554 = vld [vmem:[#allocation2 + $0x8] sm:$0xe]
        %v4555 = vld [vmem:[#allocation2 + $0xc] sm:$0xf]
        %v4556 = vld [vmem:[#allocation2 + $0x10] sm:$0xf]
        %v4557 = vld [vmem:[#allocation2 + $0x14] sm:$0xf]
        %v4558 = vld [vmem:[#allocation2 + $0x18] sm:$0xf]
        %v4559 = vld [vmem:[#allocation2 + $0x1c] sm:$0xf]
        %v4560 = vld [vmem:[#allocation2 + $0x20] sm:$0xf]
        %v4561 = vld [vmem:[#allocation2 + $0x24] sm:$0xf]
        %v4562 = vld [vmem:[#allocation2 + $0x28] sm:$0xf]
        %v4563 = vld [vmem:[#allocation2 + $0x2c] sm:$0xf]
        %v4564 = vld [vmem:[#allocation2 + $0x30] sm:$0xf]
        %v4565 = vld [vmem:[#allocation2 + $0x34] sm:$0xf]
        %v4566 = vld [vmem:[#allocation2 + $0x38] sm:$0xf]
        %v4567 = vld [vmem:[#allocation2 + $0x3c] sm:$0xf]
        %v4568 = vld [vmem:[#allocation2 + $0x40] sm:$0xf]
        %v4569 = vld [vmem:[#allocation2 + $0x44] sm:$0xf]
        %v4570 = vld [vmem:[#allocation2 + $0x48] sm:$0xf]
        %v4571 = vld [vmem:[#allocation2 + $0x4c] sm:$0xf]
        %v4572 = vld [vmem:[#allocation2 + $0x50] sm:$0xf]
        %v4573 = vld [vmem:[#allocation2 + $0x54] sm:$0xf]
        %v4574 = vld [vmem:[#allocation2 + $0x58] sm:$0xf]
        %v4575 = vld [vmem:[#allocation2 + $0x5c] sm:$0xf]
        %v4576 = vld [vmem:[#allocation2 + $0x60] sm:$0xf]
        %v4577 = vld [vmem:[#allocation2 + $0x64] sm:$0xf]
        %v4578 = vld [vmem:[#allocation2 + $0x68] sm:$0xf]
        %v4579 = vld [vmem:[#allocation2 + $0x6c] sm:$0xf]
        %v4580 = vld [vmem:[#allocation2 + $0x70] sm:$0xf]
        %v4581 = vld [vmem:[#allocation2 + $0x74] sm:$0xf]
        %v4582 = vld [vmem:[#allocation2 + $0x78] sm:$0xf]
        %v4583 = vld [vmem:[#allocation2 + $0x7c] sm:$0xf]
        %v4584 = vld [vmem:[#allocation2 + $0x80] sm:$0xf]
        %v4585 = vld [vmem:[#allocation2 + $0x84] sm:$0xf]
        %v4586 = vld [vmem:[#allocation2 + $0x88] sm:$0xf]
        %v4587 = vld [vmem:[#allocation2 + $0x8c] sm:$0xf]
        %v4588 = vld [vmem:[#allocation2 + $0x90] sm:$0xf]
        %v4589 = vld [vmem:[#allocation2 + $0x94] sm:$0xf]
        %s4590 = scalar_lea.vmem [#allocation6], 192
        %v4591 = vld [vmem:[%s4590] sm:$0xf]
        %v4592 = vld [vmem:[%s4590 + $0x4] sm:$0xf]
        %v4593 = vld [vmem:[%s4590 + $0x8] sm:$0xf]
        %v4594 = vld [vmem:[%s4590 + $0xc] sm:$0xf]
        %v4595 = vld [vmem:[%s4590 + $0x10] sm:$0xf]
        %v4596 = vld [vmem:[%s4590 + $0x14] sm:$0xf]
        %v4597 = vld [vmem:[%s4590 + $0x18] sm:$0xf]
        %v4598 = vld [vmem:[%s4590 + $0x1c] sm:$0xf]
        %v4599 = vld [vmem:[%s4590 + $0x20] sm:$0xf]
        %v4600 = vld [vmem:[%s4590 + $0x24] sm:$0xf]
        %v4601 = vld [vmem:[%s4590 + $0x28] sm:$0xf]
        %v4602 = vld [vmem:[%s4590 + $0x2c] sm:$0xf]
        %v4603 = vld [vmem:[%s4590 + $0x30] sm:$0xf]
        %v4604 = vld [vmem:[%s4590 + $0x34] sm:$0xf]
        %v4605 = vld [vmem:[%s4590 + $0x38] sm:$0xf]
        %v4606 = vld [vmem:[%s4590 + $0x3c] sm:$0xf]
        %v4643 = vunpack.c.l.b16 %v4554
        %v4644 = vunpack.c.l.b16 %v4555
        %v4645 = vunpack.c.l.b16 %v4556
        %v4646 = vunpack.c.l.b16 %v4557
        %v4647 = vunpack.c.l.b16 %v4558
        %v4648 = vunpack.c.l.b16 %v4559
        %v4649 = vunpack.c.l.b16 %v4560
        %v4650 = vunpack.c.l.b16 %v4561
        %v4651 = vunpack.c.l.b16 %v4562
        %v4652 = vunpack.c.l.b16 %v4563
        %v4653 = vunpack.c.l.b16 %v4564
        %v4654 = vunpack.c.l.b16 %v4565
        %v4655 = vunpack.c.l.b16 %v4566
        %v4656 = vunpack.c.l.b16 %v4567
        %v4657 = vunpack.c.l.b16 %v4568
        %v4658 = vunpack.c.l.b16 %v4569
        %v4659 = vunpack.c.l.b16 %v4570
        %v4660 = vunpack.c.l.b16 %v4571
        %v4661 = vunpack.c.l.b16 %v4572
        %v4662 = vunpack.c.l.b16 %v4573
        %v4663 = vunpack.c.l.b16 %v4574
        %v4664 = vunpack.c.l.b16 %v4575
        %v4665 = vunpack.c.l.b16 %v4576
        %v4666 = vunpack.c.l.b16 %v4577
        %v4667 = vunpack.c.l.b16 %v4578
        %v4668 = vunpack.c.l.b16 %v4579
        %v4669 = vunpack.c.l.b16 %v4580
        %v4670 = vunpack.c.l.b16 %v4581
        %v4671 = vunpack.c.l.b16 %v4582
        %v4672 = vunpack.c.l.b16 %v4583
        %v4673 = vunpack.c.l.b16 %v4584
        %v4674 = vunpack.c.l.b16 %v4585
        %v4675 = vunpack.c.l.b16 %v4586
        %v4676 = vunpack.c.l.b16 %v4587
        %v4677 = vunpack.c.l.b16 %v4588
        %v4678 = vunpack.c.l.b16 %v4589
        %v4679 = vpack.c.b16 %v4644, %v4643
        %v4680 = vpack.c.b16 %v4646, %v4645
        %v4681 = vpack.c.b16 %v4648, %v4647
        %v4682 = vpack.c.b16 %v4650, %v4649
        %v4683 = vpack.c.b16 %v4652, %v4651
        %v4684 = vpack.c.b16 %v4654, %v4653
        %v4685 = vpack.c.b16 %v4656, %v4655
        %v4686 = vpack.c.b16 %v4658, %v4657
        %v4687 = vpack.c.b16 %v4660, %v4659
        %v4688 = vpack.c.b16 %v4662, %v4661
        %v4689 = vpack.c.b16 %v4664, %v4663
        %v4690 = vpack.c.b16 %v4666, %v4665
        %v4691 = vpack.c.b16 %v4668, %v4667
        %v4692 = vpack.c.b16 %v4670, %v4669
        %v4693 = vpack.c.b16 %v4672, %v4671
        %v4694 = vpack.c.b16 %v4674, %v4673
        %v4695 = vpack.c.b16 %v4676, %v4675
        %v4696 = vpack.c.b16 %v4678, %v4677
        %v4697 = vrot.slane %v4679, 1
        %v4698 = vrot.slane %v4680, 1
        %v4699 = vsel %vm4317, %v4697, %v4698
        %v4700 = vrot.slane %v4681, 1
        %v4701 = vsel %vm4317, %v4698, %v4700
        %v4702 = vrot.slane %v4682, 1
        %v4703 = vsel %vm4317, %v4700, %v4702
        %v4704 = vrot.slane %v4683, 1
        %v4705 = vsel %vm4317, %v4702, %v4704
        %v4706 = vrot.slane %v4684, 1
        %v4707 = vsel %vm4317, %v4704, %v4706
        %v4708 = vrot.slane %v4685, 1
        %v4709 = vsel %vm4317, %v4706, %v4708
        %v4710 = vrot.slane %v4686, 1
        %v4711 = vsel %vm4317, %v4708, %v4710
        %v4712 = vrot.slane %v4687, 1
        %v4713 = vsel %vm4317, %v4710, %v4712
        %v4714 = vrot.slane %v4688, 1
        %v4715 = vsel %vm4317, %v4712, %v4714
        %v4716 = vrot.slane %v4689, 1
        %v4717 = vsel %vm4317, %v4714, %v4716
        %v4718 = vrot.slane %v4690, 1
        %v4719 = vsel %vm4317, %v4716, %v4718
        %v4720 = vrot.slane %v4691, 1
        %v4721 = vsel %vm4317, %v4718, %v4720
        %v4722 = vrot.slane %v4692, 1
        %v4723 = vsel %vm4317, %v4720, %v4722
        %v4724 = vrot.slane %v4693, 1
        %v4725 = vsel %vm4317, %v4722, %v4724
        %v4726 = vrot.slane %v4694, 1
        %v4727 = vsel %vm4317, %v4724, %v4726
        %v4728 = vrot.slane %v4695, 1
        %v4729 = vsel %vm4317, %v4726, %v4728
        %v4730 = vrot.slane %v4696, 1
        %v4731 = vsel %vm4317, %v4728, %v4730
        %v4766 = vunpack.c.l.b16 %v4591
        %v4767 = vunpack.c.l.b16 %v4592
        %v4768 = vunpack.c.l.b16 %v4593
        %v4769 = vunpack.c.l.b16 %v4594
        %v4770 = vunpack.c.l.b16 %v4595
        %v4771 = vunpack.c.l.b16 %v4596
        %v4772 = vunpack.c.l.b16 %v4597
        %v4773 = vunpack.c.l.b16 %v4598
        %v4774 = vunpack.c.l.b16 %v4599
        %v4775 = vunpack.c.l.b16 %v4600
        %v4776 = vunpack.c.l.b16 %v4601
        %v4777 = vunpack.c.l.b16 %v4602
        %v4778 = vunpack.c.l.b16 %v4603
        %v4779 = vunpack.c.l.b16 %v4604
        %v4780 = vunpack.c.l.b16 %v4605
        %v4781 = vunpack.c.l.b16 %v4606
        %v4782 = vpack.c.b16 %v4767, %v4766
        %v4783 = vpack.c.b16 %v4769, %v4768
        %v4784 = vpack.c.b16 %v4771, %v4770
        %v4785 = vpack.c.b16 %v4773, %v4772
        %v4786 = vpack.c.b16 %v4775, %v4774
        %v4787 = vpack.c.b16 %v4777, %v4776
        %v4788 = vpack.c.b16 %v4779, %v4778
        %v4789 = vpack.c.b16 %v4781, %v4780
        %4798 = vmatpush.bf16.msra.mxu0 %v4789
        %4799 = vmatpush.bf16.msra.mxu0 %v4788
        %4800 = vmatpush.bf16.msra.mxu0 %v4787
        %4801 = vmatpush.bf16.msra.mxu0 %v4786
        %4802 = vmatpush.bf16.msra.mxu0 %v4785
        %4803 = vmatpush.bf16.msra.mxu0 %v4784
        %4804 = vmatpush.bf16.msra.mxu0 %v4783
        %4805 = vmatpush.bf16.msra.mxu0 %v4782
        %4806 = vmatmul.bf16.gmra.mxu0 %v4699
        %v4807 = vpop.f32.mrf.mxu0
        %v4808 = vadd.f32 0.0, %v4807
        %v4809 = vpop.f32.mrf.mxu0
        %v4810 = vadd.f32 0.0, %v4809
        %4811 = vmatmul.bf16.gmra.mxu0 %v4701
        %v4812 = vpop.f32.mrf.mxu0
        %v4813 = vadd.f32 0.0, %v4812
        %v4814 = vpop.f32.mrf.mxu0
        %v4815 = vadd.f32 0.0, %v4814
        %4816 = vmatmul.bf16.gmra.mxu0 %v4703
        %v4817 = vpop.f32.mrf.mxu0
        %v4818 = vadd.f32 0.0, %v4817
        %v4819 = vpop.f32.mrf.mxu0
        %v4820 = vadd.f32 0.0, %v4819
        %4821 = vmatmul.bf16.gmra.mxu0 %v4705
        %v4822 = vpop.f32.mrf.mxu0
        %v4823 = vadd.f32 0.0, %v4822
        %v4824 = vpop.f32.mrf.mxu0
        %v4825 = vadd.f32 0.0, %v4824
        %4826 = vmatmul.bf16.gmra.mxu0 %v4707
        %v4827 = vpop.f32.mrf.mxu0
        %v4828 = vadd.f32 0.0, %v4827
        %v4829 = vpop.f32.mrf.mxu0
        %v4830 = vadd.f32 0.0, %v4829
        %4831 = vmatmul.bf16.gmra.mxu0 %v4709
        %v4832 = vpop.f32.mrf.mxu0
        %v4833 = vadd.f32 0.0, %v4832
        %v4834 = vpop.f32.mrf.mxu0
        %v4835 = vadd.f32 0.0, %v4834
        %4836 = vmatmul.bf16.gmra.mxu0 %v4711
        %v4837 = vpop.f32.mrf.mxu0
        %v4838 = vadd.f32 0.0, %v4837
        %v4839 = vpop.f32.mrf.mxu0
        %v4840 = vadd.f32 0.0, %v4839
        %4841 = vmatmul.bf16.gmra.mxu0 %v4713
        %v4842 = vpop.f32.mrf.mxu0
        %v4843 = vadd.f32 0.0, %v4842
        %v4844 = vpop.f32.mrf.mxu0
        %v4845 = vadd.f32 0.0, %v4844
        %4846 = vmatmul.bf16.gmra.mxu0 %v4715
        %v4847 = vpop.f32.mrf.mxu0
        %v4848 = vadd.f32 0.0, %v4847
        %v4849 = vpop.f32.mrf.mxu0
        %v4850 = vadd.f32 0.0, %v4849
        %4851 = vmatmul.bf16.gmra.mxu0 %v4717
        %v4852 = vpop.f32.mrf.mxu0
        %v4853 = vadd.f32 0.0, %v4852
        %v4854 = vpop.f32.mrf.mxu0
        %v4855 = vadd.f32 0.0, %v4854
        %4856 = vmatmul.bf16.gmra.mxu0 %v4719
        %v4857 = vpop.f32.mrf.mxu0
        %v4858 = vadd.f32 0.0, %v4857
        %v4859 = vpop.f32.mrf.mxu0
        %v4860 = vadd.f32 0.0, %v4859
        %4861 = vmatmul.bf16.gmra.mxu0 %v4721
        %v4862 = vpop.f32.mrf.mxu0
        %v4863 = vadd.f32 0.0, %v4862
        %v4864 = vpop.f32.mrf.mxu0
        %v4865 = vadd.f32 0.0, %v4864
        %4866 = vmatmul.bf16.gmra.mxu0 %v4723
        %v4867 = vpop.f32.mrf.mxu0
        %v4868 = vadd.f32 0.0, %v4867
        %v4869 = vpop.f32.mrf.mxu0
        %v4870 = vadd.f32 0.0, %v4869
        %4871 = vmatmul.bf16.gmra.mxu0 %v4725
        %v4872 = vpop.f32.mrf.mxu0
        %v4873 = vadd.f32 0.0, %v4872
        %v4874 = vpop.f32.mrf.mxu0
        %v4875 = vadd.f32 0.0, %v4874
        %4876 = vmatmul.bf16.gmra.mxu0 %v4727
        %v4877 = vpop.f32.mrf.mxu0
        %v4878 = vadd.f32 0.0, %v4877
        %v4879 = vpop.f32.mrf.mxu0
        %v4880 = vadd.f32 0.0, %v4879
        %4881 = vmatmul.bf16.gmra.mxu0 %v4729
        %v4882 = vpop.f32.mrf.mxu0
        %v4883 = vadd.f32 0.0, %v4882
        %v4884 = vpop.f32.mrf.mxu0
        %v4885 = vadd.f32 0.0, %v4884
        %4886 = vmatmul.bf16.gmra.mxu0 %v4731
        %v4887 = vpop.f32.mrf.mxu0
        %v4888 = vadd.f32 0.0, %v4887
        %v4889 = vpop.f32.mrf.mxu0
        %v4890 = vadd.f32 0.0, %v4889
        %4891 = vmatmul.bf16.gmra.mxu0 %v4730
        %v4892 = vpop.f32.mrf.mxu0
        %v4893 = vadd.f32 0.0, %v4892
        %v4894 = vpop.f32.mrf.mxu0
        %v4895 = vadd.f32 0.0, %v4894
        %4896 = vdwg.mxu0
        %v4897 = vadd.f32 %v4518, %v4808
        %v4898 = vadd.f32 %v4519, %v4810
        %v4899 = vadd.f32 %v4520, %v4813
        %v4900 = vadd.f32 %v4521, %v4815
        %v4901 = vadd.f32 %v4522, %v4818
        %v4902 = vadd.f32 %v4523, %v4820
        %v4903 = vadd.f32 %v4524, %v4823
        %v4904 = vadd.f32 %v4525, %v4825
        %v4905 = vadd.f32 %v4526, %v4828
        %v4906 = vadd.f32 %v4527, %v4830
        %v4907 = vadd.f32 %v4528, %v4833
        %v4908 = vadd.f32 %v4529, %v4835
        %v4909 = vadd.f32 %v4530, %v4838
        %v4910 = vadd.f32 %v4531, %v4840
        %v4911 = vadd.f32 %v4532, %v4843
        %v4912 = vadd.f32 %v4533, %v4845
        %v4913 = vadd.f32 %v4534, %v4848
        %v4914 = vadd.f32 %v4535, %v4850
        %v4915 = vadd.f32 %v4536, %v4853
        %v4916 = vadd.f32 %v4537, %v4855
        %v4917 = vadd.f32 %v4538, %v4858
        %v4918 = vadd.f32 %v4539, %v4860
        %v4919 = vadd.f32 %v4540, %v4863
        %v4920 = vadd.f32 %v4541, %v4865
        %v4921 = vadd.f32 %v4542, %v4868
        %v4922 = vadd.f32 %v4543, %v4870
        %v4923 = vadd.f32 %v4544, %v4873
        %v4924 = vadd.f32 %v4545, %v4875
        %v4925 = vadd.f32 %v4546, %v4878
        %v4926 = vadd.f32 %v4547, %v4880
        %v4927 = vadd.f32 %v4548, %v4883
        %v4928 = vadd.f32 %v4549, %v4885
        %v4929 = vadd.f32 %v4550, %v4888
        %v4930 = vadd.f32 %v4551, %v4890
        %v4931 = vadd.f32 %v4552, %v4893
        %v4932 = vadd.f32 %v4553, %v4895
        %v4933 = vld [vmem:[#allocation2 + $0x8] sm:$0xe]
        %v4934 = vld [vmem:[#allocation2 + $0xc] sm:$0xf]
        %v4935 = vld [vmem:[#allocation2 + $0x10] sm:$0xf]
        %v4936 = vld [vmem:[#allocation2 + $0x14] sm:$0xf]
        %v4937 = vld [vmem:[#allocation2 + $0x18] sm:$0xf]
        %v4938 = vld [vmem:[#allocation2 + $0x1c] sm:$0xf]
        %v4939 = vld [vmem:[#allocation2 + $0x20] sm:$0xf]
        %v4940 = vld [vmem:[#allocation2 + $0x24] sm:$0xf]
        %v4941 = vld [vmem:[#allocation2 + $0x28] sm:$0xf]
        %v4942 = vld [vmem:[#allocation2 + $0x2c] sm:$0xf]
        %v4943 = vld [vmem:[#allocation2 + $0x30] sm:$0xf]
        %v4944 = vld [vmem:[#allocation2 + $0x34] sm:$0xf]
        %v4945 = vld [vmem:[#allocation2 + $0x38] sm:$0xf]
        %v4946 = vld [vmem:[#allocation2 + $0x3c] sm:$0xf]
        %v4947 = vld [vmem:[#allocation2 + $0x40] sm:$0xf]
        %v4948 = vld [vmem:[#allocation2 + $0x44] sm:$0xf]
        %v4949 = vld [vmem:[#allocation2 + $0x48] sm:$0xf]
        %v4950 = vld [vmem:[#allocation2 + $0x4c] sm:$0xf]
        %v4951 = vld [vmem:[#allocation2 + $0x50] sm:$0xf]
        %v4952 = vld [vmem:[#allocation2 + $0x54] sm:$0xf]
        %v4953 = vld [vmem:[#allocation2 + $0x58] sm:$0xf]
        %v4954 = vld [vmem:[#allocation2 + $0x5c] sm:$0xf]
        %v4955 = vld [vmem:[#allocation2 + $0x60] sm:$0xf]
        %v4956 = vld [vmem:[#allocation2 + $0x64] sm:$0xf]
        %v4957 = vld [vmem:[#allocation2 + $0x68] sm:$0xf]
        %v4958 = vld [vmem:[#allocation2 + $0x6c] sm:$0xf]
        %v4959 = vld [vmem:[#allocation2 + $0x70] sm:$0xf]
        %v4960 = vld [vmem:[#allocation2 + $0x74] sm:$0xf]
        %v4961 = vld [vmem:[#allocation2 + $0x78] sm:$0xf]
        %v4962 = vld [vmem:[#allocation2 + $0x7c] sm:$0xf]
        %v4963 = vld [vmem:[#allocation2 + $0x80] sm:$0xf]
        %v4964 = vld [vmem:[#allocation2 + $0x84] sm:$0xf]
        %v4965 = vld [vmem:[#allocation2 + $0x88] sm:$0xf]
        %v4966 = vld [vmem:[#allocation2 + $0x8c] sm:$0xf]
        %v4967 = vld [vmem:[#allocation2 + $0x90] sm:$0xf]
        %v4968 = vld [vmem:[#allocation2 + $0x94] sm:$0xf]
        %v4969 = vld [vmem:[#allocation2 + $0x98] sm:$0x1]
        %s4970 = scalar_lea.vmem [#allocation6], 256
        %v4971 = vld [vmem:[%s4970] sm:$0xf]
        %v4972 = vld [vmem:[%s4970 + $0x4] sm:$0xf]
        %v4973 = vld [vmem:[%s4970 + $0x8] sm:$0xf]
        %v4974 = vld [vmem:[%s4970 + $0xc] sm:$0xf]
        %v4975 = vld [vmem:[%s4970 + $0x10] sm:$0xf]
        %v4976 = vld [vmem:[%s4970 + $0x14] sm:$0xf]
        %v4977 = vld [vmem:[%s4970 + $0x18] sm:$0xf]
        %v4978 = vld [vmem:[%s4970 + $0x1c] sm:$0xf]
        %v4979 = vld [vmem:[%s4970 + $0x20] sm:$0xf]
        %v4980 = vld [vmem:[%s4970 + $0x24] sm:$0xf]
        %v4981 = vld [vmem:[%s4970 + $0x28] sm:$0xf]
        %v4982 = vld [vmem:[%s4970 + $0x2c] sm:$0xf]
        %v4983 = vld [vmem:[%s4970 + $0x30] sm:$0xf]
        %v4984 = vld [vmem:[%s4970 + $0x34] sm:$0xf]
        %v4985 = vld [vmem:[%s4970 + $0x38] sm:$0xf]
        %v4986 = vld [vmem:[%s4970 + $0x3c] sm:$0xf]
        %v5024 = vunpack.c.l.b16 %v4933
        %v5025 = vunpack.c.l.b16 %v4934
        %v5026 = vunpack.c.l.b16 %v4935
        %v5027 = vunpack.c.l.b16 %v4936
        %v5028 = vunpack.c.l.b16 %v4937
        %v5029 = vunpack.c.l.b16 %v4938
        %v5030 = vunpack.c.l.b16 %v4939
        %v5031 = vunpack.c.l.b16 %v4940
        %v5032 = vunpack.c.l.b16 %v4941
        %v5033 = vunpack.c.l.b16 %v4942
        %v5034 = vunpack.c.l.b16 %v4943
        %v5035 = vunpack.c.l.b16 %v4944
        %v5036 = vunpack.c.l.b16 %v4945
        %v5037 = vunpack.c.l.b16 %v4946
        %v5038 = vunpack.c.l.b16 %v4947
        %v5039 = vunpack.c.l.b16 %v4948
        %v5040 = vunpack.c.l.b16 %v4949
        %v5041 = vunpack.c.l.b16 %v4950
        %v5042 = vunpack.c.l.b16 %v4951
        %v5043 = vunpack.c.l.b16 %v4952
        %v5044 = vunpack.c.l.b16 %v4953
        %v5045 = vunpack.c.l.b16 %v4954
        %v5046 = vunpack.c.l.b16 %v4955
        %v5047 = vunpack.c.l.b16 %v4956
        %v5048 = vunpack.c.l.b16 %v4957
        %v5049 = vunpack.c.l.b16 %v4958
        %v5050 = vunpack.c.l.b16 %v4959
        %v5051 = vunpack.c.l.b16 %v4960
        %v5052 = vunpack.c.l.b16 %v4961
        %v5053 = vunpack.c.l.b16 %v4962
        %v5054 = vunpack.c.l.b16 %v4963
        %v5055 = vunpack.c.l.b16 %v4964
        %v5056 = vunpack.c.l.b16 %v4965
        %v5057 = vunpack.c.l.b16 %v4966
        %v5058 = vunpack.c.l.b16 %v4967
        %v5059 = vunpack.c.l.b16 %v4968
        %v5060 = vunpack.c.l.b16 %v4969
        %v5061 = vpack.c.b16 %v5025, %v5024
        %v5062 = vpack.c.b16 %v5027, %v5026
        %v5063 = vpack.c.b16 %v5029, %v5028
        %v5064 = vpack.c.b16 %v5031, %v5030
        %v5065 = vpack.c.b16 %v5033, %v5032
        %v5066 = vpack.c.b16 %v5035, %v5034
        %v5067 = vpack.c.b16 %v5037, %v5036
        %v5068 = vpack.c.b16 %v5039, %v5038
        %v5069 = vpack.c.b16 %v5041, %v5040
        %v5070 = vpack.c.b16 %v5043, %v5042
        %v5071 = vpack.c.b16 %v5045, %v5044
        %v5072 = vpack.c.b16 %v5047, %v5046
        %v5073 = vpack.c.b16 %v5049, %v5048
        %v5074 = vpack.c.b16 %v5051, %v5050
        %v5075 = vpack.c.b16 %v5053, %v5052
        %v5076 = vpack.c.b16 %v5055, %v5054
        %v5077 = vpack.c.b16 %v5057, %v5056
        %v5078 = vpack.c.b16 %v5059, %v5058
        %v5079 = vpack.c.b16 %v5060, %v5060
        %vm5080 = vsmask.f32 6400
        %v5082 = vshrl.u32 %v5061, 16
        %v5084 = vrot.slane %v5082, 1
        %v5085 = vshll.u32 %v5061, 16
        %v5087 = vrot.slane %v5085, 2
        %v5088 = vor.u32 %v5084, %v5087
        %v5090 = vshrl.u32 %v5062, 16
        %v5092 = vrot.slane %v5090, 1
        %v5093 = vshll.u32 %v5062, 16
        %v5095 = vrot.slane %v5093, 2
        %v5096 = vor.u32 %v5092, %v5095
        %v5097 = vsel %vm5080, %v5088, %v5096
        %v5099 = vshrl.u32 %v5063, 16
        %v5101 = vrot.slane %v5099, 1
        %v5102 = vshll.u32 %v5063, 16
        %v5104 = vrot.slane %v5102, 2
        %v5105 = vor.u32 %v5101, %v5104
        %v5106 = vsel %vm5080, %v5096, %v5105
        %v5108 = vshrl.u32 %v5064, 16
        %v5110 = vrot.slane %v5108, 1
        %v5111 = vshll.u32 %v5064, 16
        %v5113 = vrot.slane %v5111, 2
        %v5114 = vor.u32 %v5110, %v5113
        %v5115 = vsel %vm5080, %v5105, %v5114
        %v5117 = vshrl.u32 %v5065, 16
        %v5119 = vrot.slane %v5117, 1
        %v5120 = vshll.u32 %v5065, 16
        %v5122 = vrot.slane %v5120, 2
        %v5123 = vor.u32 %v5119, %v5122
        %v5124 = vsel %vm5080, %v5114, %v5123
        %v5126 = vshrl.u32 %v5066, 16
        %v5128 = vrot.slane %v5126, 1
        %v5129 = vshll.u32 %v5066, 16
        %v5131 = vrot.slane %v5129, 2
        %v5132 = vor.u32 %v5128, %v5131
        %v5133 = vsel %vm5080, %v5123, %v5132
        %v5135 = vshrl.u32 %v5067, 16
        %v5137 = vrot.slane %v5135, 1
        %v5138 = vshll.u32 %v5067, 16
        %v5140 = vrot.slane %v5138, 2
        %v5141 = vor.u32 %v5137, %v5140
        %v5142 = vsel %vm5080, %v5132, %v5141
        %v5144 = vshrl.u32 %v5068, 16
        %v5146 = vrot.slane %v5144, 1
        %v5147 = vshll.u32 %v5068, 16
        %v5149 = vrot.slane %v5147, 2
        %v5150 = vor.u32 %v5146, %v5149
        %v5151 = vsel %vm5080, %v5141, %v5150
        %v5153 = vshrl.u32 %v5069, 16
        %v5155 = vrot.slane %v5153, 1
        %v5156 = vshll.u32 %v5069, 16
        %v5158 = vrot.slane %v5156, 2
        %v5159 = vor.u32 %v5155, %v5158
        %v5160 = vsel %vm5080, %v5150, %v5159
        %v5162 = vshrl.u32 %v5070, 16
        %v5164 = vrot.slane %v5162, 1
        %v5165 = vshll.u32 %v5070, 16
        %v5167 = vrot.slane %v5165, 2
        %v5168 = vor.u32 %v5164, %v5167
        %v5169 = vsel %vm5080, %v5159, %v5168
        %v5171 = vshrl.u32 %v5071, 16
        %v5173 = vrot.slane %v5171, 1
        %v5174 = vshll.u32 %v5071, 16
        %v5176 = vrot.slane %v5174, 2
        %v5177 = vor.u32 %v5173, %v5176
        %v5178 = vsel %vm5080, %v5168, %v5177
        %v5180 = vshrl.u32 %v5072, 16
        %v5182 = vrot.slane %v5180, 1
        %v5183 = vshll.u32 %v5072, 16
        %v5185 = vrot.slane %v5183, 2
        %v5186 = vor.u32 %v5182, %v5185
        %v5187 = vsel %vm5080, %v5177, %v5186
        %v5189 = vshrl.u32 %v5073, 16
        %v5191 = vrot.slane %v5189, 1
        %v5192 = vshll.u32 %v5073, 16
        %v5194 = vrot.slane %v5192, 2
        %v5195 = vor.u32 %v5191, %v5194
        %v5196 = vsel %vm5080, %v5186, %v5195
        %v5198 = vshrl.u32 %v5074, 16
        %v5200 = vrot.slane %v5198, 1
        %v5201 = vshll.u32 %v5074, 16
        %v5203 = vrot.slane %v5201, 2
        %v5204 = vor.u32 %v5200, %v5203
        %v5205 = vsel %vm5080, %v5195, %v5204
        %v5207 = vshrl.u32 %v5075, 16
        %v5209 = vrot.slane %v5207, 1
        %v5210 = vshll.u32 %v5075, 16
        %v5212 = vrot.slane %v5210, 2
        %v5213 = vor.u32 %v5209, %v5212
        %v5214 = vsel %vm5080, %v5204, %v5213
        %v5216 = vshrl.u32 %v5076, 16
        %v5218 = vrot.slane %v5216, 1
        %v5219 = vshll.u32 %v5076, 16
        %v5221 = vrot.slane %v5219, 2
        %v5222 = vor.u32 %v5218, %v5221
        %v5223 = vsel %vm5080, %v5213, %v5222
        %v5225 = vshrl.u32 %v5077, 16
        %v5227 = vrot.slane %v5225, 1
        %v5228 = vshll.u32 %v5077, 16
        %v5230 = vrot.slane %v5228, 2
        %v5231 = vor.u32 %v5227, %v5230
        %v5232 = vsel %vm5080, %v5222, %v5231
        %v5234 = vshrl.u32 %v5078, 16
        %v5236 = vrot.slane %v5234, 1
        %v5237 = vshll.u32 %v5078, 16
        %v5239 = vrot.slane %v5237, 2
        %v5240 = vor.u32 %v5236, %v5239
        %v5241 = vsel %vm5080, %v5231, %v5240
        %v5243 = vshll.u32 %v5079, 16
        %v5245 = vrot.slane %v5243, 2
        %v5246 = vsel %vm5080, %v5240, %v5245
        %v5281 = vunpack.c.l.b16 %v4971
        %v5282 = vunpack.c.l.b16 %v4972
        %v5283 = vunpack.c.l.b16 %v4973
        %v5284 = vunpack.c.l.b16 %v4974
        %v5285 = vunpack.c.l.b16 %v4975
        %v5286 = vunpack.c.l.b16 %v4976
        %v5287 = vunpack.c.l.b16 %v4977
        %v5288 = vunpack.c.l.b16 %v4978
        %v5289 = vunpack.c.l.b16 %v4979
        %v5290 = vunpack.c.l.b16 %v4980
        %v5291 = vunpack.c.l.b16 %v4981
        %v5292 = vunpack.c.l.b16 %v4982
        %v5293 = vunpack.c.l.b16 %v4983
        %v5294 = vunpack.c.l.b16 %v4984
        %v5295 = vunpack.c.l.b16 %v4985
        %v5296 = vunpack.c.l.b16 %v4986
        %v5297 = vpack.c.b16 %v5282, %v5281
        %v5298 = vpack.c.b16 %v5284, %v5283
        %v5299 = vpack.c.b16 %v5286, %v5285
        %v5300 = vpack.c.b16 %v5288, %v5287
        %v5301 = vpack.c.b16 %v5290, %v5289
        %v5302 = vpack.c.b16 %v5292, %v5291
        %v5303 = vpack.c.b16 %v5294, %v5293
        %v5304 = vpack.c.b16 %v5296, %v5295
        %5313 = vmatpush.bf16.msra.mxu0 %v5304
        %5314 = vmatpush.bf16.msra.mxu0 %v5303
        %5315 = vmatpush.bf16.msra.mxu0 %v5302
        %5316 = vmatpush.bf16.msra.mxu0 %v5301
        %5317 = vmatpush.bf16.msra.mxu0 %v5300
        %5318 = vmatpush.bf16.msra.mxu0 %v5299
        %5319 = vmatpush.bf16.msra.mxu0 %v5298
        %5320 = vmatpush.bf16.msra.mxu0 %v5297
        %5321 = vmatmul.bf16.gmra.mxu0 %v5097
        %v5322 = vpop.f32.mrf.mxu0
        %v5323 = vadd.f32 0.0, %v5322
        %v5324 = vpop.f32.mrf.mxu0
        %v5325 = vadd.f32 0.0, %v5324
        %5326 = vmatmul.bf16.gmra.mxu0 %v5106
        %v5327 = vpop.f32.mrf.mxu0
        %v5328 = vadd.f32 0.0, %v5327
        %v5329 = vpop.f32.mrf.mxu0
        %v5330 = vadd.f32 0.0, %v5329
        %5331 = vmatmul.bf16.gmra.mxu0 %v5115
        %v5332 = vpop.f32.mrf.mxu0
        %v5333 = vadd.f32 0.0, %v5332
        %v5334 = vpop.f32.mrf.mxu0
        %v5335 = vadd.f32 0.0, %v5334
        %5336 = vmatmul.bf16.gmra.mxu0 %v5124
        %v5337 = vpop.f32.mrf.mxu0
        %v5338 = vadd.f32 0.0, %v5337
        %v5339 = vpop.f32.mrf.mxu0
        %v5340 = vadd.f32 0.0, %v5339
        %5341 = vmatmul.bf16.gmra.mxu0 %v5133
        %v5342 = vpop.f32.mrf.mxu0
        %v5343 = vadd.f32 0.0, %v5342
        %v5344 = vpop.f32.mrf.mxu0
        %v5345 = vadd.f32 0.0, %v5344
        %5346 = vmatmul.bf16.gmra.mxu0 %v5142
        %v5347 = vpop.f32.mrf.mxu0
        %v5348 = vadd.f32 0.0, %v5347
        %v5349 = vpop.f32.mrf.mxu0
        %v5350 = vadd.f32 0.0, %v5349
        %5351 = vmatmul.bf16.gmra.mxu0 %v5151
        %v5352 = vpop.f32.mrf.mxu0
        %v5353 = vadd.f32 0.0, %v5352
        %v5354 = vpop.f32.mrf.mxu0
        %v5355 = vadd.f32 0.0, %v5354
        %5356 = vmatmul.bf16.gmra.mxu0 %v5160
        %v5357 = vpop.f32.mrf.mxu0
        %v5358 = vadd.f32 0.0, %v5357
        %v5359 = vpop.f32.mrf.mxu0
        %v5360 = vadd.f32 0.0, %v5359
        %5361 = vmatmul.bf16.gmra.mxu0 %v5169
        %v5362 = vpop.f32.mrf.mxu0
        %v5363 = vadd.f32 0.0, %v5362
        %v5364 = vpop.f32.mrf.mxu0
        %v5365 = vadd.f32 0.0, %v5364
        %5366 = vmatmul.bf16.gmra.mxu0 %v5178
        %v5367 = vpop.f32.mrf.mxu0
        %v5368 = vadd.f32 0.0, %v5367
        %v5369 = vpop.f32.mrf.mxu0
        %v5370 = vadd.f32 0.0, %v5369
        %5371 = vmatmul.bf16.gmra.mxu0 %v5187
        %v5372 = vpop.f32.mrf.mxu0
        %v5373 = vadd.f32 0.0, %v5372
        %v5374 = vpop.f32.mrf.mxu0
        %v5375 = vadd.f32 0.0, %v5374
        %5376 = vmatmul.bf16.gmra.mxu0 %v5196
        %v5377 = vpop.f32.mrf.mxu0
        %v5378 = vadd.f32 0.0, %v5377
        %v5379 = vpop.f32.mrf.mxu0
        %v5380 = vadd.f32 0.0, %v5379
        %5381 = vmatmul.bf16.gmra.mxu0 %v5205
        %v5382 = vpop.f32.mrf.mxu0
        %v5383 = vadd.f32 0.0, %v5382
        %v5384 = vpop.f32.mrf.mxu0
        %v5385 = vadd.f32 0.0, %v5384
        %5386 = vmatmul.bf16.gmra.mxu0 %v5214
        %v5387 = vpop.f32.mrf.mxu0
        %v5388 = vadd.f32 0.0, %v5387
        %v5389 = vpop.f32.mrf.mxu0
        %v5390 = vadd.f32 0.0, %v5389
        %5391 = vmatmul.bf16.gmra.mxu0 %v5223
        %v5392 = vpop.f32.mrf.mxu0
        %v5393 = vadd.f32 0.0, %v5392
        %v5394 = vpop.f32.mrf.mxu0
        %v5395 = vadd.f32 0.0, %v5394
        %5396 = vmatmul.bf16.gmra.mxu0 %v5232
        %v5397 = vpop.f32.mrf.mxu0
        %v5398 = vadd.f32 0.0, %v5397
        %v5399 = vpop.f32.mrf.mxu0
        %v5400 = vadd.f32 0.0, %v5399
        %5401 = vmatmul.bf16.gmra.mxu0 %v5241
        %v5402 = vpop.f32.mrf.mxu0
        %v5403 = vadd.f32 0.0, %v5402
        %v5404 = vpop.f32.mrf.mxu0
        %v5405 = vadd.f32 0.0, %v5404
        %5406 = vmatmul.bf16.gmra.mxu0 %v5246
        %v5407 = vpop.f32.mrf.mxu0
        %v5408 = vadd.f32 0.0, %v5407
        %v5409 = vpop.f32.mrf.mxu0
        %v5410 = vadd.f32 0.0, %v5409
        %5411 = vdwg.mxu0
        %v5412 = vadd.f32 %v4897, %v5323
        %v5413 = vadd.f32 %v4898, %v5325
        %v5414 = vadd.f32 %v4899, %v5328
        %v5415 = vadd.f32 %v4900, %v5330
        %v5416 = vadd.f32 %v4901, %v5333
        %v5417 = vadd.f32 %v4902, %v5335
        %v5418 = vadd.f32 %v4903, %v5338
        %v5419 = vadd.f32 %v4904, %v5340
        %v5420 = vadd.f32 %v4905, %v5343
        %v5421 = vadd.f32 %v4906, %v5345
        %v5422 = vadd.f32 %v4907, %v5348
        %v5423 = vadd.f32 %v4908, %v5350
        %v5424 = vadd.f32 %v4909, %v5353
        %v5425 = vadd.f32 %v4910, %v5355
        %v5426 = vadd.f32 %v4911, %v5358
        %v5427 = vadd.f32 %v4912, %v5360
        %v5428 = vadd.f32 %v4913, %v5363
        %v5429 = vadd.f32 %v4914, %v5365
        %v5430 = vadd.f32 %v4915, %v5368
        %v5431 = vadd.f32 %v4916, %v5370
        %v5432 = vadd.f32 %v4917, %v5373
        %v5433 = vadd.f32 %v4918, %v5375
        %v5434 = vadd.f32 %v4919, %v5378
        %v5435 = vadd.f32 %v4920, %v5380
        %v5436 = vadd.f32 %v4921, %v5383
        %v5437 = vadd.f32 %v4922, %v5385
        %v5438 = vadd.f32 %v4923, %v5388
        %v5439 = vadd.f32 %v4924, %v5390
        %v5440 = vadd.f32 %v4925, %v5393
        %v5441 = vadd.f32 %v4926, %v5395
        %v5442 = vadd.f32 %v4927, %v5398
        %v5443 = vadd.f32 %v4928, %v5400
        %v5444 = vadd.f32 %v4929, %v5403
        %v5445 = vadd.f32 %v4930, %v5405
        %v5446 = vadd.f32 %v4931, %v5408
        %v5447 = vadd.f32 %v4932, %v5410
        %v5448 = vld [vmem:[#allocation2 + $0x8] sm:$0xc]
        %s5449 = scalar_lea.vmem [#allocation6], 320
        %v5450 = vld [vmem:[%s5449] sm:$0xf]
        %v5451 = vld [vmem:[%s5449 + $0x4] sm:$0xf]
        %v5452 = vld [vmem:[%s5449 + $0x8] sm:$0xf]
        %v5453 = vld [vmem:[%s5449 + $0xc] sm:$0xf]
        %v5454 = vld [vmem:[%s5449 + $0x10] sm:$0xf]
        %v5455 = vld [vmem:[%s5449 + $0x14] sm:$0xf]
        %v5456 = vld [vmem:[%s5449 + $0x18] sm:$0xf]
        %v5457 = vld [vmem:[%s5449 + $0x1c] sm:$0xf]
        %v5458 = vld [vmem:[%s5449 + $0x20] sm:$0xf]
        %v5459 = vld [vmem:[%s5449 + $0x24] sm:$0xf]
        %v5460 = vld [vmem:[%s5449 + $0x28] sm:$0xf]
        %v5461 = vld [vmem:[%s5449 + $0x2c] sm:$0xf]
        %v5462 = vld [vmem:[%s5449 + $0x30] sm:$0xf]
        %v5463 = vld [vmem:[%s5449 + $0x34] sm:$0xf]
        %v5464 = vld [vmem:[%s5449 + $0x38] sm:$0xf]
        %v5465 = vld [vmem:[%s5449 + $0x3c] sm:$0xf]
        %v5467 = vunpack.c.l.b16 %v5448
        %v5468 = vpack.c.b16 %v5025, %v5467
        %vm5469 = vcmask 1045504
        %v5470 = vrot.slane %v5468, 2
        %v5471 = vrot.slane %v5062, 2
        %v5472 = vsel %vm5469, %v5470, %v5471
        %v5473 = vrot.slane %v5063, 2
        %v5474 = vsel %vm5469, %v5471, %v5473
        %v5475 = vrot.slane %v5064, 2
        %v5476 = vsel %vm5469, %v5473, %v5475
        %v5477 = vrot.slane %v5065, 2
        %v5478 = vsel %vm5469, %v5475, %v5477
        %v5479 = vrot.slane %v5066, 2
        %v5480 = vsel %vm5469, %v5477, %v5479
        %v5481 = vrot.slane %v5067, 2
        %v5482 = vsel %vm5469, %v5479, %v5481
        %v5483 = vrot.slane %v5068, 2
        %v5484 = vsel %vm5469, %v5481, %v5483
        %v5485 = vrot.slane %v5069, 2
        %v5486 = vsel %vm5469, %v5483, %v5485
        %v5487 = vrot.slane %v5070, 2
        %v5488 = vsel %vm5469, %v5485, %v5487
        %v5489 = vrot.slane %v5071, 2
        %v5490 = vsel %vm5469, %v5487, %v5489
        %v5491 = vrot.slane %v5072, 2
        %v5492 = vsel %vm5469, %v5489, %v5491
        %v5493 = vrot.slane %v5073, 2
        %v5494 = vsel %vm5469, %v5491, %v5493
        %v5495 = vrot.slane %v5074, 2
        %v5496 = vsel %vm5469, %v5493, %v5495
        %v5497 = vrot.slane %v5075, 2
        %v5498 = vsel %vm5469, %v5495, %v5497
        %v5499 = vrot.slane %v5076, 2
        %v5500 = vsel %vm5469, %v5497, %v5499
        %v5501 = vrot.slane %v5077, 2
        %v5502 = vsel %vm5469, %v5499, %v5501
        %v5503 = vrot.slane %v5078, 2
        %v5504 = vsel %vm5469, %v5501, %v5503
        %v5505 = vrot.slane %v5079, 2
        %v5506 = vsel %vm5469, %v5503, %v5505
        %v5541 = vunpack.c.l.b16 %v5450
        %v5542 = vunpack.c.l.b16 %v5451
        %v5543 = vunpack.c.l.b16 %v5452
        %v5544 = vunpack.c.l.b16 %v5453
        %v5545 = vunpack.c.l.b16 %v5454
        %v5546 = vunpack.c.l.b16 %v5455
        %v5547 = vunpack.c.l.b16 %v5456
        %v5548 = vunpack.c.l.b16 %v5457
        %v5549 = vunpack.c.l.b16 %v5458
        %v5550 = vunpack.c.l.b16 %v5459
        %v5551 = vunpack.c.l.b16 %v5460
        %v5552 = vunpack.c.l.b16 %v5461
        %v5553 = vunpack.c.l.b16 %v5462
        %v5554 = vunpack.c.l.b16 %v5463
        %v5555 = vunpack.c.l.b16 %v5464
        %v5556 = vunpack.c.l.b16 %v5465
        %v5557 = vpack.c.b16 %v5542, %v5541
        %v5558 = vpack.c.b16 %v5544, %v5543
        %v5559 = vpack.c.b16 %v5546, %v5545
        %v5560 = vpack.c.b16 %v5548, %v5547
        %v5561 = vpack.c.b16 %v5550, %v5549
        %v5562 = vpack.c.b16 %v5552, %v5551
        %v5563 = vpack.c.b16 %v5554, %v5553
        %v5564 = vpack.c.b16 %v5556, %v5555
        %5573 = vmatpush.bf16.msra.mxu0 %v5564
        %5574 = vmatpush.bf16.msra.mxu0 %v5563
        %5575 = vmatpush.bf16.msra.mxu0 %v5562
        %5576 = vmatpush.bf16.msra.mxu0 %v5561
        %5577 = vmatpush.bf16.msra.mxu0 %v5560
        %5578 = vmatpush.bf16.msra.mxu0 %v5559
        %5579 = vmatpush.bf16.msra.mxu0 %v5558
        %5580 = vmatpush.bf16.msra.mxu0 %v5557
        %5581 = vmatmul.bf16.gmra.mxu0 %v5472
        %v5582 = vpop.f32.mrf.mxu0
        %v5583 = vadd.f32 0.0, %v5582
        %v5584 = vpop.f32.mrf.mxu0
        %v5585 = vadd.f32 0.0, %v5584
        %5586 = vmatmul.bf16.gmra.mxu0 %v5474
        %v5587 = vpop.f32.mrf.mxu0
        %v5588 = vadd.f32 0.0, %v5587
        %v5589 = vpop.f32.mrf.mxu0
        %v5590 = vadd.f32 0.0, %v5589
        %5591 = vmatmul.bf16.gmra.mxu0 %v5476
        %v5592 = vpop.f32.mrf.mxu0
        %v5593 = vadd.f32 0.0, %v5592
        %v5594 = vpop.f32.mrf.mxu0
        %v5595 = vadd.f32 0.0, %v5594
        %5596 = vmatmul.bf16.gmra.mxu0 %v5478
        %v5597 = vpop.f32.mrf.mxu0
        %v5598 = vadd.f32 0.0, %v5597
        %v5599 = vpop.f32.mrf.mxu0
        %v5600 = vadd.f32 0.0, %v5599
        %5601 = vmatmul.bf16.gmra.mxu0 %v5480
        %v5602 = vpop.f32.mrf.mxu0
        %v5603 = vadd.f32 0.0, %v5602
        %v5604 = vpop.f32.mrf.mxu0
        %v5605 = vadd.f32 0.0, %v5604
        %5606 = vmatmul.bf16.gmra.mxu0 %v5482
        %v5607 = vpop.f32.mrf.mxu0
        %v5608 = vadd.f32 0.0, %v5607
        %v5609 = vpop.f32.mrf.mxu0
        %v5610 = vadd.f32 0.0, %v5609
        %5611 = vmatmul.bf16.gmra.mxu0 %v5484
        %v5612 = vpop.f32.mrf.mxu0
        %v5613 = vadd.f32 0.0, %v5612
        %v5614 = vpop.f32.mrf.mxu0
        %v5615 = vadd.f32 0.0, %v5614
        %5616 = vmatmul.bf16.gmra.mxu0 %v5486
        %v5617 = vpop.f32.mrf.mxu0
        %v5618 = vadd.f32 0.0, %v5617
        %v5619 = vpop.f32.mrf.mxu0
        %v5620 = vadd.f32 0.0, %v5619
        %5621 = vmatmul.bf16.gmra.mxu0 %v5488
        %v5622 = vpop.f32.mrf.mxu0
        %v5623 = vadd.f32 0.0, %v5622
        %v5624 = vpop.f32.mrf.mxu0
        %v5625 = vadd.f32 0.0, %v5624
        %5626 = vmatmul.bf16.gmra.mxu0 %v5490
        %v5627 = vpop.f32.mrf.mxu0
        %v5628 = vadd.f32 0.0, %v5627
        %v5629 = vpop.f32.mrf.mxu0
        %v5630 = vadd.f32 0.0, %v5629
        %5631 = vmatmul.bf16.gmra.mxu0 %v5492
        %v5632 = vpop.f32.mrf.mxu0
        %v5633 = vadd.f32 0.0, %v5632
        %v5634 = vpop.f32.mrf.mxu0
        %v5635 = vadd.f32 0.0, %v5634
        %5636 = vmatmul.bf16.gmra.mxu0 %v5494
        %v5637 = vpop.f32.mrf.mxu0
        %v5638 = vadd.f32 0.0, %v5637
        %v5639 = vpop.f32.mrf.mxu0
        %v5640 = vadd.f32 0.0, %v5639
        %5641 = vmatmul.bf16.gmra.mxu0 %v5496
        %v5642 = vpop.f32.mrf.mxu0
        %v5643 = vadd.f32 0.0, %v5642
        %v5644 = vpop.f32.mrf.mxu0
        %v5645 = vadd.f32 0.0, %v5644
        %5646 = vmatmul.bf16.gmra.mxu0 %v5498
        %v5647 = vpop.f32.mrf.mxu0
        %v5648 = vadd.f32 0.0, %v5647
        %v5649 = vpop.f32.mrf.mxu0
        %v5650 = vadd.f32 0.0, %v5649
        %5651 = vmatmul.bf16.gmra.mxu0 %v5500
        %v5652 = vpop.f32.mrf.mxu0
        %v5653 = vadd.f32 0.0, %v5652
        %v5654 = vpop.f32.mrf.mxu0
        %v5655 = vadd.f32 0.0, %v5654
        %5656 = vmatmul.bf16.gmra.mxu0 %v5502
        %v5657 = vpop.f32.mrf.mxu0
        %v5658 = vadd.f32 0.0, %v5657
        %v5659 = vpop.f32.mrf.mxu0
        %v5660 = vadd.f32 0.0, %v5659
        %5661 = vmatmul.bf16.gmra.mxu0 %v5504
        %v5662 = vpop.f32.mrf.mxu0
        %v5663 = vadd.f32 0.0, %v5662
        %v5664 = vpop.f32.mrf.mxu0
        %v5665 = vadd.f32 0.0, %v5664
        %5666 = vmatmul.bf16.gmra.mxu0 %v5506
        %v5667 = vpop.f32.mrf.mxu0
        %v5668 = vadd.f32 0.0, %v5667
        %v5669 = vpop.f32.mrf.mxu0
        %v5670 = vadd.f32 0.0, %v5669
        %5671 = vdwg.mxu0
        %v5672 = vadd.f32 %v5412, %v5583
        %v5673 = vadd.f32 %v5413, %v5585
        %v5674 = vadd.f32 %v5414, %v5588
        %v5675 = vadd.f32 %v5415, %v5590
        %v5676 = vadd.f32 %v5416, %v5593
        %v5677 = vadd.f32 %v5417, %v5595
        %v5678 = vadd.f32 %v5418, %v5598
        %v5679 = vadd.f32 %v5419, %v5600
        %v5680 = vadd.f32 %v5420, %v5603
        %v5681 = vadd.f32 %v5421, %v5605
        %v5682 = vadd.f32 %v5422, %v5608
        %v5683 = vadd.f32 %v5423, %v5610
        %v5684 = vadd.f32 %v5424, %v5613
        %v5685 = vadd.f32 %v5425, %v5615
        %v5686 = vadd.f32 %v5426, %v5618
        %v5687 = vadd.f32 %v5427, %v5620
        %v5688 = vadd.f32 %v5428, %v5623
        %v5689 = vadd.f32 %v5429, %v5625
        %v5690 = vadd.f32 %v5430, %v5628
        %v5691 = vadd.f32 %v5431, %v5630
        %v5692 = vadd.f32 %v5432, %v5633
        %v5693 = vadd.f32 %v5433, %v5635
        %v5694 = vadd.f32 %v5434, %v5638
        %v5695 = vadd.f32 %v5435, %v5640
        %v5696 = vadd.f32 %v5436, %v5643
        %v5697 = vadd.f32 %v5437, %v5645
        %v5698 = vadd.f32 %v5438, %v5648
        %v5699 = vadd.f32 %v5439, %v5650
        %v5700 = vadd.f32 %v5440, %v5653
        %v5701 = vadd.f32 %v5441, %v5655
        %v5702 = vadd.f32 %v5442, %v5658
        %v5703 = vadd.f32 %v5443, %v5660
        %v5704 = vadd.f32 %v5444, %v5663
        %v5705 = vadd.f32 %v5445, %v5665
        %v5706 = vadd.f32 %v5446, %v5668
        %v5707 = vadd.f32 %v5447, %v5670
        %v5708 = vld [vmem:[#allocation2 + $0x10] sm:$0xc]
        %v5709 = vld [vmem:[#allocation2 + $0x14] sm:$0xf]
        %v5710 = vld [vmem:[#allocation2 + $0x18] sm:$0xf]
        %v5711 = vld [vmem:[#allocation2 + $0x1c] sm:$0xf]
        %v5712 = vld [vmem:[#allocation2 + $0x20] sm:$0xf]
        %v5713 = vld [vmem:[#allocation2 + $0x24] sm:$0xf]
        %v5714 = vld [vmem:[#allocation2 + $0x28] sm:$0xf]
        %v5715 = vld [vmem:[#allocation2 + $0x2c] sm:$0xf]
        %v5716 = vld [vmem:[#allocation2 + $0x30] sm:$0xf]
        %v5717 = vld [vmem:[#allocation2 + $0x34] sm:$0xf]
        %v5718 = vld [vmem:[#allocation2 + $0x38] sm:$0xf]
        %v5719 = vld [vmem:[#allocation2 + $0x3c] sm:$0xf]
        %v5720 = vld [vmem:[#allocation2 + $0x40] sm:$0xf]
        %v5721 = vld [vmem:[#allocation2 + $0x44] sm:$0xf]
        %v5722 = vld [vmem:[#allocation2 + $0x48] sm:$0xf]
        %v5723 = vld [vmem:[#allocation2 + $0x4c] sm:$0xf]
        %v5724 = vld [vmem:[#allocation2 + $0x50] sm:$0xf]
        %v5725 = vld [vmem:[#allocation2 + $0x54] sm:$0xf]
        %v5726 = vld [vmem:[#allocation2 + $0x58] sm:$0xf]
        %v5727 = vld [vmem:[#allocation2 + $0x5c] sm:$0xf]
        %v5728 = vld [vmem:[#allocation2 + $0x60] sm:$0xf]
        %v5729 = vld [vmem:[#allocation2 + $0x64] sm:$0xf]
        %v5730 = vld [vmem:[#allocation2 + $0x68] sm:$0xf]
        %v5731 = vld [vmem:[#allocation2 + $0x6c] sm:$0xf]
        %v5732 = vld [vmem:[#allocation2 + $0x70] sm:$0xf]
        %v5733 = vld [vmem:[#allocation2 + $0x74] sm:$0xf]
        %v5734 = vld [vmem:[#allocation2 + $0x78] sm:$0xf]
        %v5735 = vld [vmem:[#allocation2 + $0x7c] sm:$0xf]
        %v5736 = vld [vmem:[#allocation2 + $0x80] sm:$0xf]
        %v5737 = vld [vmem:[#allocation2 + $0x84] sm:$0xf]
        %v5738 = vld [vmem:[#allocation2 + $0x88] sm:$0xf]
        %v5739 = vld [vmem:[#allocation2 + $0x8c] sm:$0xf]
        %v5740 = vld [vmem:[#allocation2 + $0x90] sm:$0xf]
        %v5741 = vld [vmem:[#allocation2 + $0x94] sm:$0xf]
        %v5742 = vld [vmem:[#allocation2 + $0x98] sm:$0xf]
        %v5743 = vld [vmem:[#allocation2 + $0x9c] sm:$0xf]
        %v5744 = vld [vmem:[#allocation2 + $0xa0] sm:$0x1]
        %s5745 = scalar_lea.vmem [#allocation6], 384
        %v5746 = vld [vmem:[%s5745] sm:$0xf]
        %v5747 = vld [vmem:[%s5745 + $0x4] sm:$0xf]
        %v5748 = vld [vmem:[%s5745 + $0x8] sm:$0xf]
        %v5749 = vld [vmem:[%s5745 + $0xc] sm:$0xf]
        %v5750 = vld [vmem:[%s5745 + $0x10] sm:$0xf]
        %v5751 = vld [vmem:[%s5745 + $0x14] sm:$0xf]
        %v5752 = vld [vmem:[%s5745 + $0x18] sm:$0xf]
        %v5753 = vld [vmem:[%s5745 + $0x1c] sm:$0xf]
        %v5754 = vld [vmem:[%s5745 + $0x20] sm:$0xf]
        %v5755 = vld [vmem:[%s5745 + $0x24] sm:$0xf]
        %v5756 = vld [vmem:[%s5745 + $0x28] sm:$0xf]
        %v5757 = vld [vmem:[%s5745 + $0x2c] sm:$0xf]
        %v5758 = vld [vmem:[%s5745 + $0x30] sm:$0xf]
        %v5759 = vld [vmem:[%s5745 + $0x34] sm:$0xf]
        %v5760 = vld [vmem:[%s5745 + $0x38] sm:$0xf]
        %v5761 = vld [vmem:[%s5745 + $0x3c] sm:$0xf]
        %v5799 = vunpack.c.l.b16 %v5708
        %v5800 = vunpack.c.l.b16 %v5709
        %v5801 = vunpack.c.l.b16 %v5710
        %v5802 = vunpack.c.l.b16 %v5711
        %v5803 = vunpack.c.l.b16 %v5712
        %v5804 = vunpack.c.l.b16 %v5713
        %v5805 = vunpack.c.l.b16 %v5714
        %v5806 = vunpack.c.l.b16 %v5715
        %v5807 = vunpack.c.l.b16 %v5716
        %v5808 = vunpack.c.l.b16 %v5717
        %v5809 = vunpack.c.l.b16 %v5718
        %v5810 = vunpack.c.l.b16 %v5719
        %v5811 = vunpack.c.l.b16 %v5720
        %v5812 = vunpack.c.l.b16 %v5721
        %v5813 = vunpack.c.l.b16 %v5722
        %v5814 = vunpack.c.l.b16 %v5723
        %v5815 = vunpack.c.l.b16 %v5724
        %v5816 = vunpack.c.l.b16 %v5725
        %v5817 = vunpack.c.l.b16 %v5726
        %v5818 = vunpack.c.l.b16 %v5727
        %v5819 = vunpack.c.l.b16 %v5728
        %v5820 = vunpack.c.l.b16 %v5729
        %v5821 = vunpack.c.l.b16 %v5730
        %v5822 = vunpack.c.l.b16 %v5731
        %v5823 = vunpack.c.l.b16 %v5732
        %v5824 = vunpack.c.l.b16 %v5733
        %v5825 = vunpack.c.l.b16 %v5734
        %v5826 = vunpack.c.l.b16 %v5735
        %v5827 = vunpack.c.l.b16 %v5736
        %v5828 = vunpack.c.l.b16 %v5737
        %v5829 = vunpack.c.l.b16 %v5738
        %v5830 = vunpack.c.l.b16 %v5739
        %v5831 = vunpack.c.l.b16 %v5740
        %v5832 = vunpack.c.l.b16 %v5741
        %v5833 = vunpack.c.l.b16 %v5742
        %v5834 = vunpack.c.l.b16 %v5743
        %v5835 = vunpack.c.l.b16 %v5744
        %v5836 = vpack.c.b16 %v5800, %v5799
        %v5837 = vpack.c.b16 %v5802, %v5801
        %v5838 = vpack.c.b16 %v5804, %v5803
        %v5839 = vpack.c.b16 %v5806, %v5805
        %v5840 = vpack.c.b16 %v5808, %v5807
        %v5841 = vpack.c.b16 %v5810, %v5809
        %v5842 = vpack.c.b16 %v5812, %v5811
        %v5843 = vpack.c.b16 %v5814, %v5813
        %v5844 = vpack.c.b16 %v5816, %v5815
        %v5845 = vpack.c.b16 %v5818, %v5817
        %v5846 = vpack.c.b16 %v5820, %v5819
        %v5847 = vpack.c.b16 %v5822, %v5821
        %v5848 = vpack.c.b16 %v5824, %v5823
        %v5849 = vpack.c.b16 %v5826, %v5825
        %v5850 = vpack.c.b16 %v5828, %v5827
        %v5851 = vpack.c.b16 %v5830, %v5829
        %v5852 = vpack.c.b16 %v5832, %v5831
        %v5853 = vpack.c.b16 %v5834, %v5833
        %v5854 = vpack.c.b16 %v5835, %v5835
        %v5855 = vrot.slane %v5836, 2
        %v5856 = vrot.slane %v5837, 2
        %v5857 = vsel %vm5469, %v5855, %v5856
        %v5858 = vrot.slane %v5838, 2
        %v5859 = vsel %vm5469, %v5856, %v5858
        %v5860 = vrot.slane %v5839, 2
        %v5861 = vsel %vm5469, %v5858, %v5860
        %v5862 = vrot.slane %v5840, 2
        %v5863 = vsel %vm5469, %v5860, %v5862
        %v5864 = vrot.slane %v5841, 2
        %v5865 = vsel %vm5469, %v5862, %v5864
        %v5866 = vrot.slane %v5842, 2
        %v5867 = vsel %vm5469, %v5864, %v5866
        %v5868 = vrot.slane %v5843, 2
        %v5869 = vsel %vm5469, %v5866, %v5868
        %v5870 = vrot.slane %v5844, 2
        %v5871 = vsel %vm5469, %v5868, %v5870
        %v5872 = vrot.slane %v5845, 2
        %v5873 = vsel %vm5469, %v5870, %v5872
        %v5874 = vrot.slane %v5846, 2
        %v5875 = vsel %vm5469, %v5872, %v5874
        %v5876 = vrot.slane %v5847, 2
        %v5877 = vsel %vm5469, %v5874, %v5876
        %v5878 = vrot.slane %v5848, 2
        %v5879 = vsel %vm5469, %v5876, %v5878
        %v5880 = vrot.slane %v5849, 2
        %v5881 = vsel %vm5469, %v5878, %v5880
        %v5882 = vrot.slane %v5850, 2
        %v5883 = vsel %vm5469, %v5880, %v5882
        %v5884 = vrot.slane %v5851, 2
        %v5885 = vsel %vm5469, %v5882, %v5884
        %v5886 = vrot.slane %v5852, 2
        %v5887 = vsel %vm5469, %v5884, %v5886
        %v5888 = vrot.slane %v5853, 2
        %v5889 = vsel %vm5469, %v5886, %v5888
        %v5890 = vrot.slane %v5854, 2
        %v5891 = vsel %vm5469, %v5888, %v5890
        %v5926 = vunpack.c.l.b16 %v5746
        %v5927 = vunpack.c.l.b16 %v5747
        %v5928 = vunpack.c.l.b16 %v5748
        %v5929 = vunpack.c.l.b16 %v5749
        %v5930 = vunpack.c.l.b16 %v5750
        %v5931 = vunpack.c.l.b16 %v5751
        %v5932 = vunpack.c.l.b16 %v5752
        %v5933 = vunpack.c.l.b16 %v5753
        %v5934 = vunpack.c.l.b16 %v5754
        %v5935 = vunpack.c.l.b16 %v5755
        %v5936 = vunpack.c.l.b16 %v5756
        %v5937 = vunpack.c.l.b16 %v5757
        %v5938 = vunpack.c.l.b16 %v5758
        %v5939 = vunpack.c.l.b16 %v5759
        %v5940 = vunpack.c.l.b16 %v5760
        %v5941 = vunpack.c.l.b16 %v5761
        %v5942 = vpack.c.b16 %v5927, %v5926
        %v5943 = vpack.c.b16 %v5929, %v5928
        %v5944 = vpack.c.b16 %v5931, %v5930
        %v5945 = vpack.c.b16 %v5933, %v5932
        %v5946 = vpack.c.b16 %v5935, %v5934
        %v5947 = vpack.c.b16 %v5937, %v5936
        %v5948 = vpack.c.b16 %v5939, %v5938
        %v5949 = vpack.c.b16 %v5941, %v5940
        %5958 = vmatpush.bf16.msra.mxu0 %v5949
        %5959 = vmatpush.bf16.msra.mxu0 %v5948
        %5960 = vmatpush.bf16.msra.mxu0 %v5947
        %5961 = vmatpush.bf16.msra.mxu0 %v5946
        %5962 = vmatpush.bf16.msra.mxu0 %v5945
        %5963 = vmatpush.bf16.msra.mxu0 %v5944
        %5964 = vmatpush.bf16.msra.mxu0 %v5943
        %5965 = vmatpush.bf16.msra.mxu0 %v5942
        %5966 = vmatmul.bf16.gmra.mxu0 %v5857
        %v5967 = vpop.f32.mrf.mxu0
        %v5968 = vadd.f32 0.0, %v5967
        %v5969 = vpop.f32.mrf.mxu0
        %v5970 = vadd.f32 0.0, %v5969
        %5971 = vmatmul.bf16.gmra.mxu0 %v5859
        %v5972 = vpop.f32.mrf.mxu0
        %v5973 = vadd.f32 0.0, %v5972
        %v5974 = vpop.f32.mrf.mxu0
        %v5975 = vadd.f32 0.0, %v5974
        %5976 = vmatmul.bf16.gmra.mxu0 %v5861
        %v5977 = vpop.f32.mrf.mxu0
        %v5978 = vadd.f32 0.0, %v5977
        %v5979 = vpop.f32.mrf.mxu0
        %v5980 = vadd.f32 0.0, %v5979
        %5981 = vmatmul.bf16.gmra.mxu0 %v5863
        %v5982 = vpop.f32.mrf.mxu0
        %v5983 = vadd.f32 0.0, %v5982
        %v5984 = vpop.f32.mrf.mxu0
        %v5985 = vadd.f32 0.0, %v5984
        %5986 = vmatmul.bf16.gmra.mxu0 %v5865
        %v5987 = vpop.f32.mrf.mxu0
        %v5988 = vadd.f32 0.0, %v5987
        %v5989 = vpop.f32.mrf.mxu0
        %v5990 = vadd.f32 0.0, %v5989
        %5991 = vmatmul.bf16.gmra.mxu0 %v5867
        %v5992 = vpop.f32.mrf.mxu0
        %v5993 = vadd.f32 0.0, %v5992
        %v5994 = vpop.f32.mrf.mxu0
        %v5995 = vadd.f32 0.0, %v5994
        %5996 = vmatmul.bf16.gmra.mxu0 %v5869
        %v5997 = vpop.f32.mrf.mxu0
        %v5998 = vadd.f32 0.0, %v5997
        %v5999 = vpop.f32.mrf.mxu0
        %v6000 = vadd.f32 0.0, %v5999
        %6001 = vmatmul.bf16.gmra.mxu0 %v5871
        %v6002 = vpop.f32.mrf.mxu0
        %v6003 = vadd.f32 0.0, %v6002
        %v6004 = vpop.f32.mrf.mxu0
        %v6005 = vadd.f32 0.0, %v6004
        %6006 = vmatmul.bf16.gmra.mxu0 %v5873
        %v6007 = vpop.f32.mrf.mxu0
        %v6008 = vadd.f32 0.0, %v6007
        %v6009 = vpop.f32.mrf.mxu0
        %v6010 = vadd.f32 0.0, %v6009
        %6011 = vmatmul.bf16.gmra.mxu0 %v5875
        %v6012 = vpop.f32.mrf.mxu0
        %v6013 = vadd.f32 0.0, %v6012
        %v6014 = vpop.f32.mrf.mxu0
        %v6015 = vadd.f32 0.0, %v6014
        %6016 = vmatmul.bf16.gmra.mxu0 %v5877
        %v6017 = vpop.f32.mrf.mxu0
        %v6018 = vadd.f32 0.0, %v6017
        %v6019 = vpop.f32.mrf.mxu0
        %v6020 = vadd.f32 0.0, %v6019
        %6021 = vmatmul.bf16.gmra.mxu0 %v5879
        %v6022 = vpop.f32.mrf.mxu0
        %v6023 = vadd.f32 0.0, %v6022
        %v6024 = vpop.f32.mrf.mxu0
        %v6025 = vadd.f32 0.0, %v6024
        %6026 = vmatmul.bf16.gmra.mxu0 %v5881
        %v6027 = vpop.f32.mrf.mxu0
        %v6028 = vadd.f32 0.0, %v6027
        %v6029 = vpop.f32.mrf.mxu0
        %v6030 = vadd.f32 0.0, %v6029
        %6031 = vmatmul.bf16.gmra.mxu0 %v5883
        %v6032 = vpop.f32.mrf.mxu0
        %v6033 = vadd.f32 0.0, %v6032
        %v6034 = vpop.f32.mrf.mxu0
        %v6035 = vadd.f32 0.0, %v6034
        %6036 = vmatmul.bf16.gmra.mxu0 %v5885
        %v6037 = vpop.f32.mrf.mxu0
        %v6038 = vadd.f32 0.0, %v6037
        %v6039 = vpop.f32.mrf.mxu0
        %v6040 = vadd.f32 0.0, %v6039
        %6041 = vmatmul.bf16.gmra.mxu0 %v5887
        %v6042 = vpop.f32.mrf.mxu0
        %v6043 = vadd.f32 0.0, %v6042
        %v6044 = vpop.f32.mrf.mxu0
        %v6045 = vadd.f32 0.0, %v6044
        %6046 = vmatmul.bf16.gmra.mxu0 %v5889
        %v6047 = vpop.f32.mrf.mxu0
        %v6048 = vadd.f32 0.0, %v6047
        %v6049 = vpop.f32.mrf.mxu0
        %v6050 = vadd.f32 0.0, %v6049
        %6051 = vmatmul.bf16.gmra.mxu0 %v5891
        %v6052 = vpop.f32.mrf.mxu0
        %v6053 = vadd.f32 0.0, %v6052
        %v6054 = vpop.f32.mrf.mxu0
        %v6055 = vadd.f32 0.0, %v6054
        %6056 = vdwg.mxu0
        %v6057 = vadd.f32 %v5672, %v5968
        %v6058 = vadd.f32 %v5673, %v5970
        %v6059 = vadd.f32 %v5674, %v5973
        %v6060 = vadd.f32 %v5675, %v5975
        %v6061 = vadd.f32 %v5676, %v5978
        %v6062 = vadd.f32 %v5677, %v5980
        %v6063 = vadd.f32 %v5678, %v5983
        %v6064 = vadd.f32 %v5679, %v5985
        %v6065 = vadd.f32 %v5680, %v5988
        %v6066 = vadd.f32 %v5681, %v5990
        %v6067 = vadd.f32 %v5682, %v5993
        %v6068 = vadd.f32 %v5683, %v5995
        %v6069 = vadd.f32 %v5684, %v5998
        %v6070 = vadd.f32 %v5685, %v6000
        %v6071 = vadd.f32 %v5686, %v6003
        %v6072 = vadd.f32 %v5687, %v6005
        %v6073 = vadd.f32 %v5688, %v6008
        %v6074 = vadd.f32 %v5689, %v6010
        %v6075 = vadd.f32 %v5690, %v6013
        %v6076 = vadd.f32 %v5691, %v6015
        %v6077 = vadd.f32 %v5692, %v6018
        %v6078 = vadd.f32 %v5693, %v6020
        %v6079 = vadd.f32 %v5694, %v6023
        %v6080 = vadd.f32 %v5695, %v6025
        %v6081 = vadd.f32 %v5696, %v6028
        %v6082 = vadd.f32 %v5697, %v6030
        %v6083 = vadd.f32 %v5698, %v6033
        %v6084 = vadd.f32 %v5699, %v6035
        %v6085 = vadd.f32 %v5700, %v6038
        %v6086 = vadd.f32 %v5701, %v6040
        %v6087 = vadd.f32 %v5702, %v6043
        %v6088 = vadd.f32 %v5703, %v6045
        %v6089 = vadd.f32 %v5704, %v6048
        %v6090 = vadd.f32 %v5705, %v6050
        %v6091 = vadd.f32 %v5706, %v6053
        %v6092 = vadd.f32 %v5707, %v6055
        %v6093 = vld [vmem:[#allocation2 + $0xa0] sm:$0x3]
        %s6094 = scalar_lea.vmem [#allocation6], 448
        %v6095 = vld [vmem:[%s6094] sm:$0xf]
        %v6096 = vld [vmem:[%s6094 + $0x4] sm:$0xf]
        %v6097 = vld [vmem:[%s6094 + $0x8] sm:$0xf]
        %v6098 = vld [vmem:[%s6094 + $0xc] sm:$0xf]
        %v6099 = vld [vmem:[%s6094 + $0x10] sm:$0xf]
        %v6100 = vld [vmem:[%s6094 + $0x14] sm:$0xf]
        %v6101 = vld [vmem:[%s6094 + $0x18] sm:$0xf]
        %v6102 = vld [vmem:[%s6094 + $0x1c] sm:$0xf]
        %v6103 = vld [vmem:[%s6094 + $0x20] sm:$0xf]
        %v6104 = vld [vmem:[%s6094 + $0x24] sm:$0xf]
        %v6105 = vld [vmem:[%s6094 + $0x28] sm:$0xf]
        %v6106 = vld [vmem:[%s6094 + $0x2c] sm:$0xf]
        %v6107 = vld [vmem:[%s6094 + $0x30] sm:$0xf]
        %v6108 = vld [vmem:[%s6094 + $0x34] sm:$0xf]
        %v6109 = vld [vmem:[%s6094 + $0x38] sm:$0xf]
        %v6110 = vld [vmem:[%s6094 + $0x3c] sm:$0xf]
        %v6112 = vunpack.c.l.b16 %v6093
        %v6113 = vpack.c.b16 %v6112, %v6112
        %vm6114 = vsmask.f32 5376
        %v6116 = vshrl.u32 %v5836, 16
        %v6118 = vrot.slane %v6116, 2
        %v6119 = vshll.u32 %v5836, 16
        %v6121 = vrot.slane %v6119, 3
        %v6122 = vor.u32 %v6118, %v6121
        %v6124 = vshrl.u32 %v5837, 16
        %v6126 = vrot.slane %v6124, 2
        %v6127 = vshll.u32 %v5837, 16
        %v6129 = vrot.slane %v6127, 3
        %v6130 = vor.u32 %v6126, %v6129
        %v6131 = vsel %vm6114, %v6122, %v6130
        %v6133 = vshrl.u32 %v5838, 16
        %v6135 = vrot.slane %v6133, 2
        %v6136 = vshll.u32 %v5838, 16
        %v6138 = vrot.slane %v6136, 3
        %v6139 = vor.u32 %v6135, %v6138
        %v6140 = vsel %vm6114, %v6130, %v6139
        %v6142 = vshrl.u32 %v5839, 16
        %v6144 = vrot.slane %v6142, 2
        %v6145 = vshll.u32 %v5839, 16
        %v6147 = vrot.slane %v6145, 3
        %v6148 = vor.u32 %v6144, %v6147
        %v6149 = vsel %vm6114, %v6139, %v6148
        %v6151 = vshrl.u32 %v5840, 16
        %v6153 = vrot.slane %v6151, 2
        %v6154 = vshll.u32 %v5840, 16
        %v6156 = vrot.slane %v6154, 3
        %v6157 = vor.u32 %v6153, %v6156
        %v6158 = vsel %vm6114, %v6148, %v6157
        %v6160 = vshrl.u32 %v5841, 16
        %v6162 = vrot.slane %v6160, 2
        %v6163 = vshll.u32 %v5841, 16
        %v6165 = vrot.slane %v6163, 3
        %v6166 = vor.u32 %v6162, %v6165
        %v6167 = vsel %vm6114, %v6157, %v6166
        %v6169 = vshrl.u32 %v5842, 16
        %v6171 = vrot.slane %v6169, 2
        %v6172 = vshll.u32 %v5842, 16
        %v6174 = vrot.slane %v6172, 3
        %v6175 = vor.u32 %v6171, %v6174
        %v6176 = vsel %vm6114, %v6166, %v6175
        %v6178 = vshrl.u32 %v5843, 16
        %v6180 = vrot.slane %v6178, 2
        %v6181 = vshll.u32 %v5843, 16
        %v6183 = vrot.slane %v6181, 3
        %v6184 = vor.u32 %v6180, %v6183
        %v6185 = vsel %vm6114, %v6175, %v6184
        %v6187 = vshrl.u32 %v5844, 16
        %v6189 = vrot.slane %v6187, 2
        %v6190 = vshll.u32 %v5844, 16
        %v6192 = vrot.slane %v6190, 3
        %v6193 = vor.u32 %v6189, %v6192
        %v6194 = vsel %vm6114, %v6184, %v6193
        %v6196 = vshrl.u32 %v5845, 16
        %v6198 = vrot.slane %v6196, 2
        %v6199 = vshll.u32 %v5845, 16
        %v6201 = vrot.slane %v6199, 3
        %v6202 = vor.u32 %v6198, %v6201
        %v6203 = vsel %vm6114, %v6193, %v6202
        %v6205 = vshrl.u32 %v5846, 16
        %v6207 = vrot.slane %v6205, 2
        %v6208 = vshll.u32 %v5846, 16
        %v6210 = vrot.slane %v6208, 3
        %v6211 = vor.u32 %v6207, %v6210
        %v6212 = vsel %vm6114, %v6202, %v6211
        %v6214 = vshrl.u32 %v5847, 16
        %v6216 = vrot.slane %v6214, 2
        %v6217 = vshll.u32 %v5847, 16
        %v6219 = vrot.slane %v6217, 3
        %v6220 = vor.u32 %v6216, %v6219
        %v6221 = vsel %vm6114, %v6211, %v6220
        %v6223 = vshrl.u32 %v5848, 16
        %v6225 = vrot.slane %v6223, 2
        %v6226 = vshll.u32 %v5848, 16
        %v6228 = vrot.slane %v6226, 3
        %v6229 = vor.u32 %v6225, %v6228
        %v6230 = vsel %vm6114, %v6220, %v6229
        %v6232 = vshrl.u32 %v5849, 16
        %v6234 = vrot.slane %v6232, 2
        %v6235 = vshll.u32 %v5849, 16
        %v6237 = vrot.slane %v6235, 3
        %v6238 = vor.u32 %v6234, %v6237
        %v6239 = vsel %vm6114, %v6229, %v6238
        %v6241 = vshrl.u32 %v5850, 16
        %v6243 = vrot.slane %v6241, 2
        %v6244 = vshll.u32 %v5850, 16
        %v6246 = vrot.slane %v6244, 3
        %v6247 = vor.u32 %v6243, %v6246
        %v6248 = vsel %vm6114, %v6238, %v6247
        %v6250 = vshrl.u32 %v5851, 16
        %v6252 = vrot.slane %v6250, 2
        %v6253 = vshll.u32 %v5851, 16
        %v6255 = vrot.slane %v6253, 3
        %v6256 = vor.u32 %v6252, %v6255
        %v6257 = vsel %vm6114, %v6247, %v6256
        %v6259 = vshrl.u32 %v5852, 16
        %v6261 = vrot.slane %v6259, 2
        %v6262 = vshll.u32 %v5852, 16
        %v6264 = vrot.slane %v6262, 3
        %v6265 = vor.u32 %v6261, %v6264
        %v6266 = vsel %vm6114, %v6256, %v6265
        %v6268 = vshrl.u32 %v5853, 16
        %v6270 = vrot.slane %v6268, 2
        %v6271 = vshll.u32 %v5853, 16
        %v6273 = vrot.slane %v6271, 3
        %v6274 = vor.u32 %v6270, %v6273
        %v6275 = vsel %vm6114, %v6265, %v6274
        %v6277 = vshrl.u32 %v6113, 16
        %v6279 = vrot.slane %v6277, 2
        %v6280 = vshll.u32 %v6113, 16
        %v6282 = vrot.slane %v6280, 3
        %v6283 = vor.u32 %v6279, %v6282
        %v6284 = vsel %vm6114, %v6274, %v6283
        %v6319 = vunpack.c.l.b16 %v6095
        %v6320 = vunpack.c.l.b16 %v6096
        %v6321 = vunpack.c.l.b16 %v6097
        %v6322 = vunpack.c.l.b16 %v6098
        %v6323 = vunpack.c.l.b16 %v6099
        %v6324 = vunpack.c.l.b16 %v6100
        %v6325 = vunpack.c.l.b16 %v6101
        %v6326 = vunpack.c.l.b16 %v6102
        %v6327 = vunpack.c.l.b16 %v6103
        %v6328 = vunpack.c.l.b16 %v6104
        %v6329 = vunpack.c.l.b16 %v6105
        %v6330 = vunpack.c.l.b16 %v6106
        %v6331 = vunpack.c.l.b16 %v6107
        %v6332 = vunpack.c.l.b16 %v6108
        %v6333 = vunpack.c.l.b16 %v6109
        %v6334 = vunpack.c.l.b16 %v6110
        %v6335 = vpack.c.b16 %v6320, %v6319
        %v6336 = vpack.c.b16 %v6322, %v6321
        %v6337 = vpack.c.b16 %v6324, %v6323
        %v6338 = vpack.c.b16 %v6326, %v6325
        %v6339 = vpack.c.b16 %v6328, %v6327
        %v6340 = vpack.c.b16 %v6330, %v6329
        %v6341 = vpack.c.b16 %v6332, %v6331
        %v6342 = vpack.c.b16 %v6334, %v6333
        %6351 = vmatpush.bf16.msra.mxu0 %v6342
        %6352 = vmatpush.bf16.msra.mxu0 %v6341
        %6353 = vmatpush.bf16.msra.mxu0 %v6340
        %6354 = vmatpush.bf16.msra.mxu0 %v6339
        %6355 = vmatpush.bf16.msra.mxu0 %v6338
        %6356 = vmatpush.bf16.msra.mxu0 %v6337
        %6357 = vmatpush.bf16.msra.mxu0 %v6336
        %6358 = vmatpush.bf16.msra.mxu0 %v6335
        %6359 = vmatmul.bf16.gmra.mxu0 %v6131
        %v6360 = vpop.f32.mrf.mxu0
        %v6361 = vadd.f32 0.0, %v6360
        %v6362 = vpop.f32.mrf.mxu0
        %v6363 = vadd.f32 0.0, %v6362
        %6364 = vmatmul.bf16.gmra.mxu0 %v6140
        %v6365 = vpop.f32.mrf.mxu0
        %v6366 = vadd.f32 0.0, %v6365
        %v6367 = vpop.f32.mrf.mxu0
        %v6368 = vadd.f32 0.0, %v6367
        %6369 = vmatmul.bf16.gmra.mxu0 %v6149
        %v6370 = vpop.f32.mrf.mxu0
        %v6371 = vadd.f32 0.0, %v6370
        %v6372 = vpop.f32.mrf.mxu0
        %v6373 = vadd.f32 0.0, %v6372
        %6374 = vmatmul.bf16.gmra.mxu0 %v6158
        %v6375 = vpop.f32.mrf.mxu0
        %v6376 = vadd.f32 0.0, %v6375
        %v6377 = vpop.f32.mrf.mxu0
        %v6378 = vadd.f32 0.0, %v6377
        %6379 = vmatmul.bf16.gmra.mxu0 %v6167
        %v6380 = vpop.f32.mrf.mxu0
        %v6381 = vadd.f32 0.0, %v6380
        %v6382 = vpop.f32.mrf.mxu0
        %v6383 = vadd.f32 0.0, %v6382
        %6384 = vmatmul.bf16.gmra.mxu0 %v6176
        %v6385 = vpop.f32.mrf.mxu0
        %v6386 = vadd.f32 0.0, %v6385
        %v6387 = vpop.f32.mrf.mxu0
        %v6388 = vadd.f32 0.0, %v6387
        %6389 = vmatmul.bf16.gmra.mxu0 %v6185
        %v6390 = vpop.f32.mrf.mxu0
        %v6391 = vadd.f32 0.0, %v6390
        %v6392 = vpop.f32.mrf.mxu0
        %v6393 = vadd.f32 0.0, %v6392
        %6394 = vmatmul.bf16.gmra.mxu0 %v6194
        %v6395 = vpop.f32.mrf.mxu0
        %v6396 = vadd.f32 0.0, %v6395
        %v6397 = vpop.f32.mrf.mxu0
        %v6398 = vadd.f32 0.0, %v6397
        %6399 = vmatmul.bf16.gmra.mxu0 %v6203
        %v6400 = vpop.f32.mrf.mxu0
        %v6401 = vadd.f32 0.0, %v6400
        %v6402 = vpop.f32.mrf.mxu0
        %v6403 = vadd.f32 0.0, %v6402
        %6404 = vmatmul.bf16.gmra.mxu0 %v6212
        %v6405 = vpop.f32.mrf.mxu0
        %v6406 = vadd.f32 0.0, %v6405
        %v6407 = vpop.f32.mrf.mxu0
        %v6408 = vadd.f32 0.0, %v6407
        %6409 = vmatmul.bf16.gmra.mxu0 %v6221
        %v6410 = vpop.f32.mrf.mxu0
        %v6411 = vadd.f32 0.0, %v6410
        %v6412 = vpop.f32.mrf.mxu0
        %v6413 = vadd.f32 0.0, %v6412
        %6414 = vmatmul.bf16.gmra.mxu0 %v6230
        %v6415 = vpop.f32.mrf.mxu0
        %v6416 = vadd.f32 0.0, %v6415
        %v6417 = vpop.f32.mrf.mxu0
        %v6418 = vadd.f32 0.0, %v6417
        %6419 = vmatmul.bf16.gmra.mxu0 %v6239
        %v6420 = vpop.f32.mrf.mxu0
        %v6421 = vadd.f32 0.0, %v6420
        %v6422 = vpop.f32.mrf.mxu0
        %v6423 = vadd.f32 0.0, %v6422
        %6424 = vmatmul.bf16.gmra.mxu0 %v6248
        %v6425 = vpop.f32.mrf.mxu0
        %v6426 = vadd.f32 0.0, %v6425
        %v6427 = vpop.f32.mrf.mxu0
        %v6428 = vadd.f32 0.0, %v6427
        %6429 = vmatmul.bf16.gmra.mxu0 %v6257
        %v6430 = vpop.f32.mrf.mxu0
        %v6431 = vadd.f32 0.0, %v6430
        %v6432 = vpop.f32.mrf.mxu0
        %v6433 = vadd.f32 0.0, %v6432
        %6434 = vmatmul.bf16.gmra.mxu0 %v6266
        %v6435 = vpop.f32.mrf.mxu0
        %v6436 = vadd.f32 0.0, %v6435
        %v6437 = vpop.f32.mrf.mxu0
        %v6438 = vadd.f32 0.0, %v6437
        %6439 = vmatmul.bf16.gmra.mxu0 %v6275
        %v6440 = vpop.f32.mrf.mxu0
        %v6441 = vadd.f32 0.0, %v6440
        %v6442 = vpop.f32.mrf.mxu0
        %v6443 = vadd.f32 0.0, %v6442
        %6444 = vmatmul.bf16.gmra.mxu0 %v6284
        %v6445 = vpop.f32.mrf.mxu0
        %v6446 = vadd.f32 0.0, %v6445
        %v6447 = vpop.f32.mrf.mxu0
        %v6448 = vadd.f32 0.0, %v6447
        %6449 = vdwg.mxu0
        %v6450 = vadd.f32 %v6057, %v6361
        %v6451 = vadd.f32 %v6058, %v6363
        %v6452 = vadd.f32 %v6059, %v6366
        %v6453 = vadd.f32 %v6060, %v6368
        %v6454 = vadd.f32 %v6061, %v6371
        %v6455 = vadd.f32 %v6062, %v6373
        %v6456 = vadd.f32 %v6063, %v6376
        %v6457 = vadd.f32 %v6064, %v6378
        %v6458 = vadd.f32 %v6065, %v6381
        %v6459 = vadd.f32 %v6066, %v6383
        %v6460 = vadd.f32 %v6067, %v6386
        %v6461 = vadd.f32 %v6068, %v6388
        %v6462 = vadd.f32 %v6069, %v6391
        %v6463 = vadd.f32 %v6070, %v6393
        %v6464 = vadd.f32 %v6071, %v6396
        %v6465 = vadd.f32 %v6072, %v6398
        %v6466 = vadd.f32 %v6073, %v6401
        %v6467 = vadd.f32 %v6074, %v6403
        %v6468 = vadd.f32 %v6075, %v6406
        %v6469 = vadd.f32 %v6076, %v6408
        %v6470 = vadd.f32 %v6077, %v6411
        %v6471 = vadd.f32 %v6078, %v6413
        %v6472 = vadd.f32 %v6079, %v6416
        %v6473 = vadd.f32 %v6080, %v6418
        %v6474 = vadd.f32 %v6081, %v6421
        %v6475 = vadd.f32 %v6082, %v6423
        %v6476 = vadd.f32 %v6083, %v6426
        %v6477 = vadd.f32 %v6084, %v6428
        %v6478 = vadd.f32 %v6085, %v6431
        %v6479 = vadd.f32 %v6086, %v6433
        %v6480 = vadd.f32 %v6087, %v6436
        %v6481 = vadd.f32 %v6088, %v6438
        %v6482 = vadd.f32 %v6089, %v6441
        %v6483 = vadd.f32 %v6090, %v6443
        %v6484 = vadd.f32 %v6091, %v6446
        %v6485 = vadd.f32 %v6092, %v6448
        %v6486 = vld [vmem:[#allocation2 + $0x10] sm:$0x8]
        %s6487 = scalar_lea.vmem [#allocation6], 512
        %v6488 = vld [vmem:[%s6487] sm:$0xf]
        %v6489 = vld [vmem:[%s6487 + $0x4] sm:$0xf]
        %v6490 = vld [vmem:[%s6487 + $0x8] sm:$0xf]
        %v6491 = vld [vmem:[%s6487 + $0xc] sm:$0xf]
        %v6492 = vld [vmem:[%s6487 + $0x10] sm:$0xf]
        %v6493 = vld [vmem:[%s6487 + $0x14] sm:$0xf]
        %v6494 = vld [vmem:[%s6487 + $0x18] sm:$0xf]
        %v6495 = vld [vmem:[%s6487 + $0x1c] sm:$0xf]
        %v6496 = vld [vmem:[%s6487 + $0x20] sm:$0xf]
        %v6497 = vld [vmem:[%s6487 + $0x24] sm:$0xf]
        %v6498 = vld [vmem:[%s6487 + $0x28] sm:$0xf]
        %v6499 = vld [vmem:[%s6487 + $0x2c] sm:$0xf]
        %v6500 = vld [vmem:[%s6487 + $0x30] sm:$0xf]
        %v6501 = vld [vmem:[%s6487 + $0x34] sm:$0xf]
        %v6502 = vld [vmem:[%s6487 + $0x38] sm:$0xf]
        %v6503 = vld [vmem:[%s6487 + $0x3c] sm:$0xf]
        %v6505 = vunpack.c.l.b16 %v6486
        %v6506 = vpack.c.b16 %v5800, %v6505
        %vm6507 = vcmask 1044480
        %v6508 = vrot.slane %v6506, 3
        %v6509 = vrot.slane %v5837, 3
        %v6510 = vsel %vm6507, %v6508, %v6509
        %v6511 = vrot.slane %v5838, 3
        %v6512 = vsel %vm6507, %v6509, %v6511
        %v6513 = vrot.slane %v5839, 3
        %v6514 = vsel %vm6507, %v6511, %v6513
        %v6515 = vrot.slane %v5840, 3
        %v6516 = vsel %vm6507, %v6513, %v6515
        %v6517 = vrot.slane %v5841, 3
        %v6518 = vsel %vm6507, %v6515, %v6517
        %v6519 = vrot.slane %v5842, 3
        %v6520 = vsel %vm6507, %v6517, %v6519
        %v6521 = vrot.slane %v5843, 3
        %v6522 = vsel %vm6507, %v6519, %v6521
        %v6523 = vrot.slane %v5844, 3
        %v6524 = vsel %vm6507, %v6521, %v6523
        %v6525 = vrot.slane %v5845, 3
        %v6526 = vsel %vm6507, %v6523, %v6525
        %v6527 = vrot.slane %v5846, 3
        %v6528 = vsel %vm6507, %v6525, %v6527
        %v6529 = vrot.slane %v5847, 3
        %v6530 = vsel %vm6507, %v6527, %v6529
        %v6531 = vrot.slane %v5848, 3
        %v6532 = vsel %vm6507, %v6529, %v6531
        %v6533 = vrot.slane %v5849, 3
        %v6534 = vsel %vm6507, %v6531, %v6533
        %v6535 = vrot.slane %v5850, 3
        %v6536 = vsel %vm6507, %v6533, %v6535
        %v6537 = vrot.slane %v5851, 3
        %v6538 = vsel %vm6507, %v6535, %v6537
        %v6539 = vrot.slane %v5852, 3
        %v6540 = vsel %vm6507, %v6537, %v6539
        %v6541 = vrot.slane %v5853, 3
        %v6542 = vsel %vm6507, %v6539, %v6541
        %v6543 = vrot.slane %v6113, 3
        %v6544 = vsel %vm6507, %v6541, %v6543
        %v6579 = vunpack.c.l.b16 %v6488
        %v6580 = vunpack.c.l.b16 %v6489
        %v6581 = vunpack.c.l.b16 %v6490
        %v6582 = vunpack.c.l.b16 %v6491
        %v6583 = vunpack.c.l.b16 %v6492
        %v6584 = vunpack.c.l.b16 %v6493
        %v6585 = vunpack.c.l.b16 %v6494
        %v6586 = vunpack.c.l.b16 %v6495
        %v6587 = vunpack.c.l.b16 %v6496
        %v6588 = vunpack.c.l.b16 %v6497
        %v6589 = vunpack.c.l.b16 %v6498
        %v6590 = vunpack.c.l.b16 %v6499
        %v6591 = vunpack.c.l.b16 %v6500
        %v6592 = vunpack.c.l.b16 %v6501
        %v6593 = vunpack.c.l.b16 %v6502
        %v6594 = vunpack.c.l.b16 %v6503
        %v6595 = vpack.c.b16 %v6580, %v6579
        %v6596 = vpack.c.b16 %v6582, %v6581
        %v6597 = vpack.c.b16 %v6584, %v6583
        %v6598 = vpack.c.b16 %v6586, %v6585
        %v6599 = vpack.c.b16 %v6588, %v6587
        %v6600 = vpack.c.b16 %v6590, %v6589
        %v6601 = vpack.c.b16 %v6592, %v6591
        %v6602 = vpack.c.b16 %v6594, %v6593
        %6611 = vmatpush.bf16.msra.mxu0 %v6602
        %6612 = vmatpush.bf16.msra.mxu0 %v6601
        %6613 = vmatpush.bf16.msra.mxu0 %v6600
        %6614 = vmatpush.bf16.msra.mxu0 %v6599
        %6615 = vmatpush.bf16.msra.mxu0 %v6598
        %6616 = vmatpush.bf16.msra.mxu0 %v6597
        %6617 = vmatpush.bf16.msra.mxu0 %v6596
        %6618 = vmatpush.bf16.msra.mxu0 %v6595
        %6619 = vmatmul.bf16.gmra.mxu0 %v6510
        %v6620 = vpop.f32.mrf.mxu0
        %v6621 = vadd.f32 0.0, %v6620
        %v6622 = vpop.f32.mrf.mxu0
        %v6623 = vadd.f32 0.0, %v6622
        %6624 = vmatmul.bf16.gmra.mxu0 %v6512
        %v6625 = vpop.f32.mrf.mxu0
        %v6626 = vadd.f32 0.0, %v6625
        %v6627 = vpop.f32.mrf.mxu0
        %v6628 = vadd.f32 0.0, %v6627
        %6629 = vmatmul.bf16.gmra.mxu0 %v6514
        %v6630 = vpop.f32.mrf.mxu0
        %v6631 = vadd.f32 0.0, %v6630
        %v6632 = vpop.f32.mrf.mxu0
        %v6633 = vadd.f32 0.0, %v6632
        %6634 = vmatmul.bf16.gmra.mxu0 %v6516
        %v6635 = vpop.f32.mrf.mxu0
        %v6636 = vadd.f32 0.0, %v6635
        %v6637 = vpop.f32.mrf.mxu0
        %v6638 = vadd.f32 0.0, %v6637
        %6639 = vmatmul.bf16.gmra.mxu0 %v6518
        %v6640 = vpop.f32.mrf.mxu0
        %v6641 = vadd.f32 0.0, %v6640
        %v6642 = vpop.f32.mrf.mxu0
        %v6643 = vadd.f32 0.0, %v6642
        %6644 = vmatmul.bf16.gmra.mxu0 %v6520
        %v6645 = vpop.f32.mrf.mxu0
        %v6646 = vadd.f32 0.0, %v6645
        %v6647 = vpop.f32.mrf.mxu0
        %v6648 = vadd.f32 0.0, %v6647
        %6649 = vmatmul.bf16.gmra.mxu0 %v6522
        %v6650 = vpop.f32.mrf.mxu0
        %v6651 = vadd.f32 0.0, %v6650
        %v6652 = vpop.f32.mrf.mxu0
        %v6653 = vadd.f32 0.0, %v6652
        %6654 = vmatmul.bf16.gmra.mxu0 %v6524
        %v6655 = vpop.f32.mrf.mxu0
        %v6656 = vadd.f32 0.0, %v6655
        %v6657 = vpop.f32.mrf.mxu0
        %v6658 = vadd.f32 0.0, %v6657
        %6659 = vmatmul.bf16.gmra.mxu0 %v6526
        %v6660 = vpop.f32.mrf.mxu0
        %v6661 = vadd.f32 0.0, %v6660
        %v6662 = vpop.f32.mrf.mxu0
        %v6663 = vadd.f32 0.0, %v6662
        %6664 = vmatmul.bf16.gmra.mxu0 %v6528
        %v6665 = vpop.f32.mrf.mxu0
        %v6666 = vadd.f32 0.0, %v6665
        %v6667 = vpop.f32.mrf.mxu0
        %v6668 = vadd.f32 0.0, %v6667
        %6669 = vmatmul.bf16.gmra.mxu0 %v6530
        %v6670 = vpop.f32.mrf.mxu0
        %v6671 = vadd.f32 0.0, %v6670
        %v6672 = vpop.f32.mrf.mxu0
        %v6673 = vadd.f32 0.0, %v6672
        %6674 = vmatmul.bf16.gmra.mxu0 %v6532
        %v6675 = vpop.f32.mrf.mxu0
        %v6676 = vadd.f32 0.0, %v6675
        %v6677 = vpop.f32.mrf.mxu0
        %v6678 = vadd.f32 0.0, %v6677
        %6679 = vmatmul.bf16.gmra.mxu0 %v6534
        %v6680 = vpop.f32.mrf.mxu0
        %v6681 = vadd.f32 0.0, %v6680
        %v6682 = vpop.f32.mrf.mxu0
        %v6683 = vadd.f32 0.0, %v6682
        %6684 = vmatmul.bf16.gmra.mxu0 %v6536
        %v6685 = vpop.f32.mrf.mxu0
        %v6686 = vadd.f32 0.0, %v6685
        %v6687 = vpop.f32.mrf.mxu0
        %v6688 = vadd.f32 0.0, %v6687
        %6689 = vmatmul.bf16.gmra.mxu0 %v6538
        %v6690 = vpop.f32.mrf.mxu0
        %v6691 = vadd.f32 0.0, %v6690
        %v6692 = vpop.f32.mrf.mxu0
        %v6693 = vadd.f32 0.0, %v6692
        %6694 = vmatmul.bf16.gmra.mxu0 %v6540
        %v6695 = vpop.f32.mrf.mxu0
        %v6696 = vadd.f32 0.0, %v6695
        %v6697 = vpop.f32.mrf.mxu0
        %v6698 = vadd.f32 0.0, %v6697
        %6699 = vmatmul.bf16.gmra.mxu0 %v6542
        %v6700 = vpop.f32.mrf.mxu0
        %v6701 = vadd.f32 0.0, %v6700
        %v6702 = vpop.f32.mrf.mxu0
        %v6703 = vadd.f32 0.0, %v6702
        %6704 = vmatmul.bf16.gmra.mxu0 %v6544
        %v6705 = vpop.f32.mrf.mxu0
        %v6706 = vadd.f32 0.0, %v6705
        %v6707 = vpop.f32.mrf.mxu0
        %v6708 = vadd.f32 0.0, %v6707
        %6709 = vdwg.mxu0
        %v6710 = vadd.f32 %v6450, %v6621
        %v6711 = vadd.f32 %v6451, %v6623
        %v6712 = vadd.f32 %v6452, %v6626
        %v6713 = vadd.f32 %v6453, %v6628
        %v6714 = vadd.f32 %v6454, %v6631
        %v6715 = vadd.f32 %v6455, %v6633
        %v6716 = vadd.f32 %v6456, %v6636
        %v6717 = vadd.f32 %v6457, %v6638
        %v6718 = vadd.f32 %v6458, %v6641
        %v6719 = vadd.f32 %v6459, %v6643
        %v6720 = vadd.f32 %v6460, %v6646
        %v6721 = vadd.f32 %v6461, %v6648
        %v6722 = vadd.f32 %v6462, %v6651
        %v6723 = vadd.f32 %v6463, %v6653
        %v6724 = vadd.f32 %v6464, %v6656
        %v6725 = vadd.f32 %v6465, %v6658
        %v6726 = vadd.f32 %v6466, %v6661
        %v6727 = vadd.f32 %v6467, %v6663
        %v6728 = vadd.f32 %v6468, %v6666
        %v6729 = vadd.f32 %v6469, %v6668
        %v6730 = vadd.f32 %v6470, %v6671
        %v6731 = vadd.f32 %v6471, %v6673
        %v6732 = vadd.f32 %v6472, %v6676
        %v6733 = vadd.f32 %v6473, %v6678
        %v6734 = vadd.f32 %v6474, %v6681
        %v6735 = vadd.f32 %v6475, %v6683
        %v6736 = vadd.f32 %v6476, %v6686
        %v6737 = vadd.f32 %v6477, %v6688
        %v6738 = vadd.f32 %v6478, %v6691
        %v6739 = vadd.f32 %v6479, %v6693
        %v6740 = vadd.f32 %v6480, %v6696
        %v6741 = vadd.f32 %v6481, %v6698
        %v6742 = vadd.f32 %v6482, %v6701
        %v6743 = vadd.f32 %v6483, %v6703
        %v6744 = vadd.f32 %v6484, %v6706
        %v6745 = vadd.f32 %v6485, %v6708
        %v6746 = vld [vmem:[%s2] sm:$0x1]
        %v6748 = vperm.slane %v6746, 0
        %v6750 = vmul.f32 %v6710, %v6748
        %v6751 = vmul.f32 %v6711, %v6748
        %v6752 = vmul.f32 %v6712, %v6748
        %v6753 = vmul.f32 %v6713, %v6748
        %v6754 = vmul.f32 %v6714, %v6748
        %v6755 = vmul.f32 %v6715, %v6748
        %v6756 = vmul.f32 %v6716, %v6748
        %v6757 = vmul.f32 %v6717, %v6748
        %v6758 = vmul.f32 %v6718, %v6748
        %v6759 = vmul.f32 %v6719, %v6748
        %v6760 = vmul.f32 %v6720, %v6748
        %v6761 = vmul.f32 %v6721, %v6748
        %v6762 = vmul.f32 %v6722, %v6748
        %v6763 = vmul.f32 %v6723, %v6748
        %v6764 = vmul.f32 %v6724, %v6748
        %v6765 = vmul.f32 %v6725, %v6748
        %v6766 = vmul.f32 %v6726, %v6748
        %v6767 = vmul.f32 %v6727, %v6748
        %v6768 = vmul.f32 %v6728, %v6748
        %v6769 = vmul.f32 %v6729, %v6748
        %v6770 = vmul.f32 %v6730, %v6748
        %v6771 = vmul.f32 %v6731, %v6748
        %v6772 = vmul.f32 %v6732, %v6748
        %v6773 = vmul.f32 %v6733, %v6748
        %v6774 = vmul.f32 %v6734, %v6748
        %v6775 = vmul.f32 %v6735, %v6748
        %v6776 = vmul.f32 %v6736, %v6748
        %v6777 = vmul.f32 %v6737, %v6748
        %v6778 = vmul.f32 %v6738, %v6748
        %v6779 = vmul.f32 %v6739, %v6748
        %v6780 = vmul.f32 %v6740, %v6748
        %v6781 = vmul.f32 %v6741, %v6748
        %v6782 = vmul.f32 %v6742, %v6748
        %v6783 = vmul.f32 %v6743, %v6748
        %v6784 = vmul.f32 %v6744, %v6748
        %v6785 = vmul.f32 %v6745, %v6748
        %v6786 = vld [vmem:[%s3] sm:$0x1]
        %v6788 = vperm.slane %v6786, 0
        %v6790 = vadd.f32 %v6750, %v6788
        %v6791 = vadd.f32 %v6751, %v6788
        %v6792 = vadd.f32 %v6752, %v6788
        %v6793 = vadd.f32 %v6753, %v6788
        %v6794 = vadd.f32 %v6754, %v6788
        %v6795 = vadd.f32 %v6755, %v6788
        %v6796 = vadd.f32 %v6756, %v6788
        %v6797 = vadd.f32 %v6757, %v6788
        %v6798 = vadd.f32 %v6758, %v6788
        %v6799 = vadd.f32 %v6759, %v6788
        %v6800 = vadd.f32 %v6760, %v6788
        %v6801 = vadd.f32 %v6761, %v6788
        %v6802 = vadd.f32 %v6762, %v6788
        %v6803 = vadd.f32 %v6763, %v6788
        %v6804 = vadd.f32 %v6764, %v6788
        %v6805 = vadd.f32 %v6765, %v6788
        %v6806 = vadd.f32 %v6766, %v6788
        %v6807 = vadd.f32 %v6767, %v6788
        %v6808 = vadd.f32 %v6768, %v6788
        %v6809 = vadd.f32 %v6769, %v6788
        %v6810 = vadd.f32 %v6770, %v6788
        %v6811 = vadd.f32 %v6771, %v6788
        %v6812 = vadd.f32 %v6772, %v6788
        %v6813 = vadd.f32 %v6773, %v6788
        %v6814 = vadd.f32 %v6774, %v6788
        %v6815 = vadd.f32 %v6775, %v6788
        %v6816 = vadd.f32 %v6776, %v6788
        %v6817 = vadd.f32 %v6777, %v6788
        %v6818 = vadd.f32 %v6778, %v6788
        %v6819 = vadd.f32 %v6779, %v6788
        %v6820 = vadd.f32 %v6780, %v6788
        %v6821 = vadd.f32 %v6781, %v6788
        %v6822 = vadd.f32 %v6782, %v6788
        %v6823 = vadd.f32 %v6783, %v6788
        %v6824 = vadd.f32 %v6784, %v6788
        %v6825 = vadd.f32 %v6785, %v6788
        %v6826 = vmax.f32 %v6790, 0.0
        %v6827 = vmax.f32 %v6791, 0.0
        %v6828 = vmax.f32 %v6792, 0.0
        %v6829 = vmax.f32 %v6793, 0.0
        %v6830 = vmax.f32 %v6794, 0.0
        %v6831 = vmax.f32 %v6795, 0.0
        %v6832 = vmax.f32 %v6796, 0.0
        %v6833 = vmax.f32 %v6797, 0.0
        %v6834 = vmax.f32 %v6798, 0.0
        %v6835 = vmax.f32 %v6799, 0.0
        %v6836 = vmax.f32 %v6800, 0.0
        %v6837 = vmax.f32 %v6801, 0.0
        %v6838 = vmax.f32 %v6802, 0.0
        %v6839 = vmax.f32 %v6803, 0.0
        %v6840 = vmax.f32 %v6804, 0.0
        %v6841 = vmax.f32 %v6805, 0.0
        %v6842 = vmax.f32 %v6806, 0.0
        %v6843 = vmax.f32 %v6807, 0.0
        %v6844 = vmax.f32 %v6808, 0.0
        %v6845 = vmax.f32 %v6809, 0.0
        %v6846 = vmax.f32 %v6810, 0.0
        %v6847 = vmax.f32 %v6811, 0.0
        %v6848 = vmax.f32 %v6812, 0.0
        %v6849 = vmax.f32 %v6813, 0.0
        %v6850 = vmax.f32 %v6814, 0.0
        %v6851 = vmax.f32 %v6815, 0.0
        %v6852 = vmax.f32 %v6816, 0.0
        %v6853 = vmax.f32 %v6817, 0.0
        %v6854 = vmax.f32 %v6818, 0.0
        %v6855 = vmax.f32 %v6819, 0.0
        %v6856 = vmax.f32 %v6820, 0.0
        %v6857 = vmax.f32 %v6821, 0.0
        %v6858 = vmax.f32 %v6822, 0.0
        %v6859 = vmax.f32 %v6823, 0.0
        %v6860 = vmax.f32 %v6824, 0.0
        %v6861 = vmax.f32 %v6825, 0.0
        %vm6862 = vcmp.eq.s32.totalorder %v2980, 1
        %vm6863 = vcmp.eq.s32.totalorder %v2981, 1
        %vm6864 = vcmp.eq.s32.totalorder %v2982, 1
        %vm6865 = vcmp.eq.s32.totalorder %v2983, 1
        %vm6866 = vcmp.eq.s32.totalorder %v2984, 1
        %vm6867 = vcmp.eq.s32.totalorder %v2985, 1
        %vm6868 = vcmp.eq.s32.totalorder %v2986, 1
        %vm6869 = vcmp.eq.s32.totalorder %v2987, 1
        %vm6870 = vcmp.eq.s32.totalorder %v2988, 1
        %vm6871 = vcmp.eq.s32.totalorder %v2989, 1
        %vm6872 = vcmp.eq.s32.totalorder %v2990, 1
        %vm6873 = vcmp.eq.s32.totalorder %v2991, 1
        %vm6874 = vcmp.eq.s32.totalorder %v2992, 1
        %vm6875 = vcmp.eq.s32.totalorder %v2993, 1
        %vm6876 = vcmp.eq.s32.totalorder %v2994, 1
        %vm6877 = vcmp.eq.s32.totalorder %v2995, 1
        %vm6878 = vcmp.eq.s32.totalorder %v2996, 1
        %vm6879 = vcmp.eq.s32.totalorder %v2997, 1
        %vm6880 = vcmp.eq.s32.totalorder %v2998, 1
        %vm6881 = vcmp.eq.s32.totalorder %v2999, 1
        %vm6882 = vcmp.eq.s32.totalorder %v3000, 1
        %vm6883 = vcmp.eq.s32.totalorder %v3001, 1
        %vm6884 = vcmp.eq.s32.totalorder %v3002, 1
        %vm6885 = vcmp.eq.s32.totalorder %v3003, 1
        %vm6886 = vcmp.eq.s32.totalorder %v3004, 1
        %vm6887 = vcmp.eq.s32.totalorder %v3005, 1
        %vm6888 = vcmp.eq.s32.totalorder %v3006, 1
        %vm6889 = vcmp.eq.s32.totalorder %v3007, 1
        %vm6890 = vcmp.eq.s32.totalorder %v3008, 1
        %vm6891 = vcmp.eq.s32.totalorder %v3009, 1
        %vm6892 = vcmp.eq.s32.totalorder %v3010, 1
        %vm6893 = vcmp.eq.s32.totalorder %v3011, 1
        %vm6894 = vcmp.eq.s32.totalorder %v3012, 1
        %vm6895 = vcmp.eq.s32.totalorder %v3013, 1
        %vm6896 = vcmp.eq.s32.totalorder %v3014, 1
        %vm6897 = vcmp.eq.s32.totalorder %v3015, 1
        %v6898 = vsel %vm6862, %v6826, 0.0
        %v6899 = vsel %vm6863, %v6827, 0.0
        %v6900 = vsel %vm6864, %v6828, 0.0
        %v6901 = vsel %vm6865, %v6829, 0.0
        %v6902 = vsel %vm6866, %v6830, 0.0
        %v6903 = vsel %vm6867, %v6831, 0.0
        %v6904 = vsel %vm6868, %v6832, 0.0
        %v6905 = vsel %vm6869, %v6833, 0.0
        %v6906 = vsel %vm6870, %v6834, 0.0
        %v6907 = vsel %vm6871, %v6835, 0.0
        %v6908 = vsel %vm6872, %v6836, 0.0
        %v6909 = vsel %vm6873, %v6837, 0.0
        %v6910 = vsel %vm6874, %v6838, 0.0
        %v6911 = vsel %vm6875, %v6839, 0.0
        %v6912 = vsel %vm6876, %v6840, 0.0
        %v6913 = vsel %vm6877, %v6841, 0.0
        %v6914 = vsel %vm6878, %v6842, 0.0
        %v6915 = vsel %vm6879, %v6843, 0.0
        %v6916 = vsel %vm6880, %v6844, 0.0
        %v6917 = vsel %vm6881, %v6845, 0.0
        %v6918 = vsel %vm6882, %v6846, 0.0
        %v6919 = vsel %vm6883, %v6847, 0.0
        %v6920 = vsel %vm6884, %v6848, 0.0
        %v6921 = vsel %vm6885, %v6849, 0.0
        %v6922 = vsel %vm6886, %v6850, 0.0
        %v6923 = vsel %vm6887, %v6851, 0.0
        %v6924 = vsel %vm6888, %v6852, 0.0
        %v6925 = vsel %vm6889, %v6853, 0.0
        %v6926 = vsel %vm6890, %v6854, 0.0
        %v6927 = vsel %vm6891, %v6855, 0.0
        %v6928 = vsel %vm6892, %v6856, 0.0
        %v6929 = vsel %vm6893, %v6857, 0.0
        %v6930 = vsel %vm6894, %v6858, 0.0
        %v6931 = vsel %vm6895, %v6859, 0.0
        %v6932 = vsel %vm6896, %v6860, 0.0
        %v6933 = vsel %vm6897, %v6861, 0.0
        %v6934 = vpack.c.bf16 %v6898, %v6898
        %v6935 = vpack.c.bf16 %v6899, %v6899
        %v6936 = vpack.c.bf16 %v6900, %v6900
        %v6937 = vpack.c.bf16 %v6901, %v6901
        %v6938 = vpack.c.bf16 %v6902, %v6902
        %v6939 = vpack.c.bf16 %v6903, %v6903
        %v6940 = vpack.c.bf16 %v6904, %v6904
        %v6941 = vpack.c.bf16 %v6905, %v6905
        %v6942 = vpack.c.bf16 %v6906, %v6906
        %v6943 = vpack.c.bf16 %v6907, %v6907
        %v6944 = vpack.c.bf16 %v6908, %v6908
        %v6945 = vpack.c.bf16 %v6909, %v6909
        %v6946 = vpack.c.bf16 %v6910, %v6910
        %v6947 = vpack.c.bf16 %v6911, %v6911
        %v6948 = vpack.c.bf16 %v6912, %v6912
        %v6949 = vpack.c.bf16 %v6913, %v6913
        %v6950 = vpack.c.bf16 %v6914, %v6914
        %v6951 = vpack.c.bf16 %v6915, %v6915
        %v6952 = vpack.c.bf16 %v6916, %v6916
        %v6953 = vpack.c.bf16 %v6917, %v6917
        %v6954 = vpack.c.bf16 %v6918, %v6918
        %v6955 = vpack.c.bf16 %v6919, %v6919
        %v6956 = vpack.c.bf16 %v6920, %v6920
        %v6957 = vpack.c.bf16 %v6921, %v6921
        %v6958 = vpack.c.bf16 %v6922, %v6922
        %v6959 = vpack.c.bf16 %v6923, %v6923
        %v6960 = vpack.c.bf16 %v6924, %v6924
        %v6961 = vpack.c.bf16 %v6925, %v6925
        %v6962 = vpack.c.bf16 %v6926, %v6926
        %v6963 = vpack.c.bf16 %v6927, %v6927
        %v6964 = vpack.c.bf16 %v6928, %v6928
        %v6965 = vpack.c.bf16 %v6929, %v6929
        %v6966 = vpack.c.bf16 %v6930, %v6930
        %v6967 = vpack.c.bf16 %v6931, %v6931
        %v6968 = vpack.c.bf16 %v6932, %v6932
        %v6969 = vpack.c.bf16 %v6933, %v6933
        %v6971 = vshrl.u32 %v6934, 16
        %v6973 = vrot.slane %v6971, 6
        %v6974 = vshll.u32 %v6934, 16
        %v6976 = vrot.slane %v6974, 7
        %v6977 = vor.u32 %v6973, %v6976
        %v6978 = vrot.slane %v6977, 4
        %v6980 = vshrl.u32 %v6935, 16
        %v6982 = vrot.slane %v6980, 6
        %v6983 = vshll.u32 %v6935, 16
        %v6985 = vrot.slane %v6983, 7
        %v6986 = vor.u32 %v6982, %v6985
        %v6987 = vsel %vm3099, %v6978, %v6986
        %v6988 = vrot.slane %v6986, 4
        %v6990 = vshrl.u32 %v6936, 16
        %v6992 = vrot.slane %v6990, 6
        %v6993 = vshll.u32 %v6936, 16
        %v6995 = vrot.slane %v6993, 7
        %v6996 = vor.u32 %v6992, %v6995
        %v6997 = vsel %vm3099, %v6988, %v6996
        %v6998 = vrot.slane %v6996, 4
        %v7000 = vshrl.u32 %v6937, 16
        %v7002 = vrot.slane %v7000, 6
        %v7003 = vshll.u32 %v6937, 16
        %v7005 = vrot.slane %v7003, 7
        %v7006 = vor.u32 %v7002, %v7005
        %v7007 = vsel %vm3099, %v6998, %v7006
        %v7008 = vrot.slane %v7006, 4
        %v7010 = vshrl.u32 %v6938, 16
        %v7012 = vrot.slane %v7010, 6
        %v7013 = vshll.u32 %v6938, 16
        %v7015 = vrot.slane %v7013, 7
        %v7016 = vor.u32 %v7012, %v7015
        %v7017 = vsel %vm3099, %v7008, %v7016
        %v7018 = vrot.slane %v7016, 4
        %v7020 = vshrl.u32 %v6939, 16
        %v7022 = vrot.slane %v7020, 6
        %v7023 = vshll.u32 %v6939, 16
        %v7025 = vrot.slane %v7023, 7
        %v7026 = vor.u32 %v7022, %v7025
        %v7027 = vsel %vm3099, %v7018, %v7026
        %v7028 = vrot.slane %v7026, 4
        %v7030 = vshrl.u32 %v6940, 16
        %v7032 = vrot.slane %v7030, 6
        %v7033 = vshll.u32 %v6940, 16
        %v7035 = vrot.slane %v7033, 7
        %v7036 = vor.u32 %v7032, %v7035
        %v7037 = vsel %vm3099, %v7028, %v7036
        %v7038 = vrot.slane %v7036, 4
        %v7040 = vshrl.u32 %v6941, 16
        %v7042 = vrot.slane %v7040, 6
        %v7043 = vshll.u32 %v6941, 16
        %v7045 = vrot.slane %v7043, 7
        %v7046 = vor.u32 %v7042, %v7045
        %v7047 = vsel %vm3099, %v7038, %v7046
        %v7048 = vrot.slane %v7046, 4
        %v7050 = vshrl.u32 %v6942, 16
        %v7052 = vrot.slane %v7050, 6
        %v7053 = vshll.u32 %v6942, 16
        %v7055 = vrot.slane %v7053, 7
        %v7056 = vor.u32 %v7052, %v7055
        %v7057 = vsel %vm3099, %v7048, %v7056
        %v7058 = vrot.slane %v7056, 4
        %v7060 = vshrl.u32 %v6943, 16
        %v7062 = vrot.slane %v7060, 6
        %v7063 = vshll.u32 %v6943, 16
        %v7065 = vrot.slane %v7063, 7
        %v7066 = vor.u32 %v7062, %v7065
        %v7067 = vsel %vm3099, %v7058, %v7066
        %v7068 = vrot.slane %v7066, 4
        %v7070 = vshrl.u32 %v6944, 16
        %v7072 = vrot.slane %v7070, 6
        %v7073 = vshll.u32 %v6944, 16
        %v7075 = vrot.slane %v7073, 7
        %v7076 = vor.u32 %v7072, %v7075
        %v7077 = vsel %vm3099, %v7068, %v7076
        %v7078 = vrot.slane %v7076, 4
        %v7080 = vshrl.u32 %v6945, 16
        %v7082 = vrot.slane %v7080, 6
        %v7083 = vshll.u32 %v6945, 16
        %v7085 = vrot.slane %v7083, 7
        %v7086 = vor.u32 %v7082, %v7085
        %v7087 = vsel %vm3099, %v7078, %v7086
        %v7088 = vrot.slane %v7086, 4
        %v7090 = vshrl.u32 %v6946, 16
        %v7092 = vrot.slane %v7090, 6
        %v7093 = vshll.u32 %v6946, 16
        %v7095 = vrot.slane %v7093, 7
        %v7096 = vor.u32 %v7092, %v7095
        %v7097 = vsel %vm3099, %v7088, %v7096
        %v7098 = vrot.slane %v7096, 4
        %v7100 = vshrl.u32 %v6947, 16
        %v7102 = vrot.slane %v7100, 6
        %v7103 = vshll.u32 %v6947, 16
        %v7105 = vrot.slane %v7103, 7
        %v7106 = vor.u32 %v7102, %v7105
        %v7107 = vsel %vm3099, %v7098, %v7106
        %v7108 = vrot.slane %v7106, 4
        %v7110 = vshrl.u32 %v6948, 16
        %v7112 = vrot.slane %v7110, 6
        %v7113 = vshll.u32 %v6948, 16
        %v7115 = vrot.slane %v7113, 7
        %v7116 = vor.u32 %v7112, %v7115
        %v7117 = vsel %vm3099, %v7108, %v7116
        %v7118 = vrot.slane %v7116, 4
        %v7120 = vshrl.u32 %v6949, 16
        %v7122 = vrot.slane %v7120, 6
        %v7123 = vshll.u32 %v6949, 16
        %v7125 = vrot.slane %v7123, 7
        %v7126 = vor.u32 %v7122, %v7125
        %v7127 = vsel %vm3099, %v7118, %v7126
        %v7128 = vrot.slane %v7126, 4
        %v7130 = vshrl.u32 %v6950, 16
        %v7132 = vrot.slane %v7130, 6
        %v7133 = vshll.u32 %v6950, 16
        %v7135 = vrot.slane %v7133, 7
        %v7136 = vor.u32 %v7132, %v7135
        %v7137 = vsel %vm3099, %v7128, %v7136
        %v7138 = vrot.slane %v7136, 4
        %v7140 = vshrl.u32 %v6951, 16
        %v7142 = vrot.slane %v7140, 6
        %v7143 = vshll.u32 %v6951, 16
        %v7145 = vrot.slane %v7143, 7
        %v7146 = vor.u32 %v7142, %v7145
        %v7147 = vsel %vm3099, %v7138, %v7146
        %v7148 = vrot.slane %v7146, 4
        %v7150 = vshrl.u32 %v6952, 16
        %v7152 = vrot.slane %v7150, 6
        %v7153 = vshll.u32 %v6952, 16
        %v7155 = vrot.slane %v7153, 7
        %v7156 = vor.u32 %v7152, %v7155
        %v7157 = vsel %vm3099, %v7148, %v7156
        %v7158 = vrot.slane %v7156, 4
        %v7160 = vshrl.u32 %v6953, 16
        %v7162 = vrot.slane %v7160, 6
        %v7163 = vshll.u32 %v6953, 16
        %v7165 = vrot.slane %v7163, 7
        %v7166 = vor.u32 %v7162, %v7165
        %v7167 = vsel %vm3099, %v7158, %v7166
        %v7168 = vrot.slane %v7166, 4
        %v7170 = vshrl.u32 %v6954, 16
        %v7172 = vrot.slane %v7170, 6
        %v7173 = vshll.u32 %v6954, 16
        %v7175 = vrot.slane %v7173, 7
        %v7176 = vor.u32 %v7172, %v7175
        %v7177 = vsel %vm3099, %v7168, %v7176
        %v7178 = vrot.slane %v7176, 4
        %v7180 = vshrl.u32 %v6955, 16
        %v7182 = vrot.slane %v7180, 6
        %v7183 = vshll.u32 %v6955, 16
        %v7185 = vrot.slane %v7183, 7
        %v7186 = vor.u32 %v7182, %v7185
        %v7187 = vsel %vm3099, %v7178, %v7186
        %v7188 = vrot.slane %v7186, 4
        %v7190 = vshrl.u32 %v6956, 16
        %v7192 = vrot.slane %v7190, 6
        %v7193 = vshll.u32 %v6956, 16
        %v7195 = vrot.slane %v7193, 7
        %v7196 = vor.u32 %v7192, %v7195
        %v7197 = vsel %vm3099, %v7188, %v7196
        %v7198 = vrot.slane %v7196, 4
        %v7200 = vshrl.u32 %v6957, 16
        %v7202 = vrot.slane %v7200, 6
        %v7203 = vshll.u32 %v6957, 16
        %v7205 = vrot.slane %v7203, 7
        %v7206 = vor.u32 %v7202, %v7205
        %v7207 = vsel %vm3099, %v7198, %v7206
        %v7208 = vrot.slane %v7206, 4
        %v7210 = vshrl.u32 %v6958, 16
        %v7212 = vrot.slane %v7210, 6
        %v7213 = vshll.u32 %v6958, 16
        %v7215 = vrot.slane %v7213, 7
        %v7216 = vor.u32 %v7212, %v7215
        %v7217 = vsel %vm3099, %v7208, %v7216
        %v7218 = vrot.slane %v7216, 4
        %v7220 = vshrl.u32 %v6959, 16
        %v7222 = vrot.slane %v7220, 6
        %v7223 = vshll.u32 %v6959, 16
        %v7225 = vrot.slane %v7223, 7
        %v7226 = vor.u32 %v7222, %v7225
        %v7227 = vsel %vm3099, %v7218, %v7226
        %v7228 = vrot.slane %v7226, 4
        %v7230 = vshrl.u32 %v6960, 16
        %v7232 = vrot.slane %v7230, 6
        %v7233 = vshll.u32 %v6960, 16
        %v7235 = vrot.slane %v7233, 7
        %v7236 = vor.u32 %v7232, %v7235
        %v7237 = vsel %vm3099, %v7228, %v7236
        %v7238 = vrot.slane %v7236, 4
        %v7240 = vshrl.u32 %v6961, 16
        %v7242 = vrot.slane %v7240, 6
        %v7243 = vshll.u32 %v6961, 16
        %v7245 = vrot.slane %v7243, 7
        %v7246 = vor.u32 %v7242, %v7245
        %v7247 = vsel %vm3099, %v7238, %v7246
        %v7248 = vrot.slane %v7246, 4
        %v7250 = vshrl.u32 %v6962, 16
        %v7252 = vrot.slane %v7250, 6
        %v7253 = vshll.u32 %v6962, 16
        %v7255 = vrot.slane %v7253, 7
        %v7256 = vor.u32 %v7252, %v7255
        %v7257 = vsel %vm3099, %v7248, %v7256
        %v7258 = vrot.slane %v7256, 4
        %v7260 = vshrl.u32 %v6963, 16
        %v7262 = vrot.slane %v7260, 6
        %v7263 = vshll.u32 %v6963, 16
        %v7265 = vrot.slane %v7263, 7
        %v7266 = vor.u32 %v7262, %v7265
        %v7267 = vsel %vm3099, %v7258, %v7266
        %v7268 = vrot.slane %v7266, 4
        %v7270 = vshrl.u32 %v6964, 16
        %v7272 = vrot.slane %v7270, 6
        %v7273 = vshll.u32 %v6964, 16
        %v7275 = vrot.slane %v7273, 7
        %v7276 = vor.u32 %v7272, %v7275
        %v7277 = vsel %vm3099, %v7268, %v7276
        %v7278 = vrot.slane %v7276, 4
        %v7280 = vshrl.u32 %v6965, 16
        %v7282 = vrot.slane %v7280, 6
        %v7283 = vshll.u32 %v6965, 16
        %v7285 = vrot.slane %v7283, 7
        %v7286 = vor.u32 %v7282, %v7285
        %v7287 = vsel %vm3099, %v7278, %v7286
        %v7288 = vrot.slane %v7286, 4
        %v7290 = vshrl.u32 %v6966, 16
        %v7292 = vrot.slane %v7290, 6
        %v7293 = vshll.u32 %v6966, 16
        %v7295 = vrot.slane %v7293, 7
        %v7296 = vor.u32 %v7292, %v7295
        %v7297 = vsel %vm3099, %v7288, %v7296
        %v7298 = vrot.slane %v7296, 4
        %v7300 = vshrl.u32 %v6967, 16
        %v7302 = vrot.slane %v7300, 6
        %v7303 = vshll.u32 %v6967, 16
        %v7305 = vrot.slane %v7303, 7
        %v7306 = vor.u32 %v7302, %v7305
        %v7307 = vsel %vm3099, %v7298, %v7306
        %v7308 = vrot.slane %v7306, 4
        %v7310 = vshrl.u32 %v6968, 16
        %v7312 = vrot.slane %v7310, 6
        %v7313 = vshll.u32 %v6968, 16
        %v7315 = vrot.slane %v7313, 7
        %v7316 = vor.u32 %v7312, %v7315
        %v7317 = vsel %vm3099, %v7308, %v7316
        %v7318 = vrot.slane %v7316, 4
        %v7320 = vshrl.u32 %v6969, 16
        %v7322 = vrot.slane %v7320, 6
        %v7323 = vshll.u32 %v6969, 16
        %v7325 = vrot.slane %v7323, 7
        %v7326 = vor.u32 %v7322, %v7325
        %v7327 = vsel %vm3099, %v7318, %v7326
        %v7328 = vrot.slane %v7322, 4
        %v7366 = vsel %vm3124, %v6977, %v4933
        %7367 = vst [vmem:[#allocation2 + $0x8] sm:$0xe] %v7366
        %7368 = vst [vmem:[#allocation2 + $0xc] sm:$0xf] %v6987
        %7369 = vst [vmem:[#allocation2 + $0x10] sm:$0xf] %v6997
        %7370 = vst [vmem:[#allocation2 + $0x14] sm:$0xf] %v7007
        %7371 = vst [vmem:[#allocation2 + $0x18] sm:$0xf] %v7017
        %7372 = vst [vmem:[#allocation2 + $0x1c] sm:$0xf] %v7027
        %7373 = vst [vmem:[#allocation2 + $0x20] sm:$0xf] %v7037
        %7374 = vst [vmem:[#allocation2 + $0x24] sm:$0xf] %v7047
        %7375 = vst [vmem:[#allocation2 + $0x28] sm:$0xf] %v7057
        %7376 = vst [vmem:[#allocation2 + $0x2c] sm:$0xf] %v7067
        %7377 = vst [vmem:[#allocation2 + $0x30] sm:$0xf] %v7077
        %7378 = vst [vmem:[#allocation2 + $0x34] sm:$0xf] %v7087
        %7379 = vst [vmem:[#allocation2 + $0x38] sm:$0xf] %v7097
        %7380 = vst [vmem:[#allocation2 + $0x3c] sm:$0xf] %v7107
        %7381 = vst [vmem:[#allocation2 + $0x40] sm:$0xf] %v7117
        %7382 = vst [vmem:[#allocation2 + $0x44] sm:$0xf] %v7127
        %7383 = vst [vmem:[#allocation2 + $0x48] sm:$0xf] %v7137
        %7384 = vst [vmem:[#allocation2 + $0x4c] sm:$0xf] %v7147
        %7385 = vst [vmem:[#allocation2 + $0x50] sm:$0xf] %v7157
        %7386 = vst [vmem:[#allocation2 + $0x54] sm:$0xf] %v7167
        %7387 = vst [vmem:[#allocation2 + $0x58] sm:$0xf] %v7177
        %7388 = vst [vmem:[#allocation2 + $0x5c] sm:$0xf] %v7187
        %7389 = vst [vmem:[#allocation2 + $0x60] sm:$0xf] %v7197
        %7390 = vst [vmem:[#allocation2 + $0x64] sm:$0xf] %v7207
        %7391 = vst [vmem:[#allocation2 + $0x68] sm:$0xf] %v7217
        %7392 = vst [vmem:[#allocation2 + $0x6c] sm:$0xf] %v7227
        %7393 = vst [vmem:[#allocation2 + $0x70] sm:$0xf] %v7237
        %7394 = vst [vmem:[#allocation2 + $0x74] sm:$0xf] %v7247
        %7395 = vst [vmem:[#allocation2 + $0x78] sm:$0xf] %v7257
        %7396 = vst [vmem:[#allocation2 + $0x7c] sm:$0xf] %v7267
        %7397 = vst [vmem:[#allocation2 + $0x80] sm:$0xf] %v7277
        %7398 = vst [vmem:[#allocation2 + $0x84] sm:$0xf] %v7287
        %7399 = vst [vmem:[#allocation2 + $0x88] sm:$0xf] %v7297
        %7400 = vst [vmem:[#allocation2 + $0x8c] sm:$0xf] %v7307
        %7401 = vst [vmem:[#allocation2 + $0x90] sm:$0xf] %v7317
        %7402 = vst [vmem:[#allocation2 + $0x94] sm:$0xf] %v7327
        %v7403 = vld [vmem:[#allocation2 + $0x98] sm:$0x1]
        %v7404 = vsel %vm3253, %v7328, %v7403
        %7405 = vst [vmem:[#allocation2 + $0x98] sm:$0x1] %v7404
        %v7406 = vld [vmem:[#allocation2] sm:$0xf]
        %v7407 = vld [vmem:[#allocation2 + $0x4] sm:$0xf]
        %v7408 = vld [vmem:[#allocation2 + $0x8] sm:$0xf]
        %v7409 = vld [vmem:[#allocation2 + $0xc] sm:$0xf]
        %v7410 = vld [vmem:[#allocation2 + $0x10] sm:$0xf]
        %v7411 = vld [vmem:[#allocation2 + $0x14] sm:$0xf]
        %v7412 = vld [vmem:[#allocation2 + $0x18] sm:$0xf]
        %v7413 = vld [vmem:[#allocation2 + $0x1c] sm:$0xf]
        %v7414 = vld [vmem:[#allocation2 + $0x20] sm:$0xf]
        %v7415 = vld [vmem:[#allocation2 + $0x24] sm:$0xf]
        %v7416 = vld [vmem:[#allocation2 + $0x28] sm:$0xf]
        %v7417 = vld [vmem:[#allocation2 + $0x2c] sm:$0xf]
        %v7418 = vld [vmem:[#allocation2 + $0x30] sm:$0xf]
        %v7419 = vld [vmem:[#allocation2 + $0x34] sm:$0xf]
        %v7420 = vld [vmem:[#allocation2 + $0x38] sm:$0xf]
        %v7421 = vld [vmem:[#allocation2 + $0x3c] sm:$0xf]
        %v7422 = vld [vmem:[#allocation2 + $0x40] sm:$0xf]
        %v7423 = vld [vmem:[#allocation2 + $0x44] sm:$0xf]
        %v7424 = vld [vmem:[#allocation2 + $0x48] sm:$0xf]
        %v7425 = vld [vmem:[#allocation2 + $0x4c] sm:$0xf]
        %v7426 = vld [vmem:[#allocation2 + $0x50] sm:$0xf]
        %v7427 = vld [vmem:[#allocation2 + $0x54] sm:$0xf]
        %v7428 = vld [vmem:[#allocation2 + $0x58] sm:$0xf]
        %v7429 = vld [vmem:[#allocation2 + $0x5c] sm:$0xf]
        %v7430 = vld [vmem:[#allocation2 + $0x60] sm:$0xf]
        %v7431 = vld [vmem:[#allocation2 + $0x64] sm:$0xf]
        %v7432 = vld [vmem:[#allocation2 + $0x68] sm:$0xf]
        %v7433 = vld [vmem:[#allocation2 + $0x6c] sm:$0xf]
        %v7434 = vld [vmem:[#allocation2 + $0x70] sm:$0xf]
        %v7435 = vld [vmem:[#allocation2 + $0x74] sm:$0xf]
        %v7436 = vld [vmem:[#allocation2 + $0x78] sm:$0xf]
        %v7437 = vld [vmem:[#allocation2 + $0x7c] sm:$0xf]
        %v7438 = vld [vmem:[#allocation2 + $0x80] sm:$0xf]
        %v7439 = vld [vmem:[#allocation2 + $0x84] sm:$0xf]
        %v7440 = vld [vmem:[#allocation2 + $0x88] sm:$0xf]
        %v7441 = vld [vmem:[#allocation2 + $0x8c] sm:$0x7]
        %v7442 = vld [vmem:[#allocation8] sm:$0xf]
        %v7443 = vld [vmem:[#allocation8 + $0x4] sm:$0xf]
        %v7444 = vld [vmem:[#allocation8 + $0x8] sm:$0xf]
        %v7445 = vld [vmem:[#allocation8 + $0xc] sm:$0xf]
        %v7446 = vld [vmem:[#allocation8 + $0x10] sm:$0xf]
        %v7447 = vld [vmem:[#allocation8 + $0x14] sm:$0xf]
        %v7448 = vld [vmem:[#allocation8 + $0x18] sm:$0xf]
        %v7449 = vld [vmem:[#allocation8 + $0x1c] sm:$0xf]
        %v7450 = vld [vmem:[#allocation8 + $0x20] sm:$0xf]
        %v7451 = vld [vmem:[#allocation8 + $0x24] sm:$0xf]
        %v7452 = vld [vmem:[#allocation8 + $0x28] sm:$0xf]
        %v7453 = vld [vmem:[#allocation8 + $0x2c] sm:$0xf]
        %v7454 = vld [vmem:[#allocation8 + $0x30] sm:$0xf]
        %v7455 = vld [vmem:[#allocation8 + $0x34] sm:$0xf]
        %v7456 = vld [vmem:[#allocation8 + $0x38] sm:$0xf]
        %v7457 = vld [vmem:[#allocation8 + $0x3c] sm:$0xf]
        %v7458 = vld [vmem:[#allocation2 + $0x8c] sm:$0xf]
        %s7459 = scalar_lea.vmem [#allocation8], 64
        %v7460 = vld [vmem:[%s7459] sm:$0xf]
        %v7461 = vld [vmem:[%s7459 + $0x4] sm:$0xf]
        %v7462 = vld [vmem:[%s7459 + $0x8] sm:$0xf]
        %v7463 = vld [vmem:[%s7459 + $0xc] sm:$0xf]
        %v7464 = vld [vmem:[%s7459 + $0x10] sm:$0xf]
        %v7465 = vld [vmem:[%s7459 + $0x14] sm:$0xf]
        %v7466 = vld [vmem:[%s7459 + $0x18] sm:$0xf]
        %v7467 = vld [vmem:[%s7459 + $0x1c] sm:$0xf]
        %v7468 = vld [vmem:[%s7459 + $0x20] sm:$0xf]
        %v7469 = vld [vmem:[%s7459 + $0x24] sm:$0xf]
        %v7470 = vld [vmem:[%s7459 + $0x28] sm:$0xf]
        %v7471 = vld [vmem:[%s7459 + $0x2c] sm:$0xf]
        %v7472 = vld [vmem:[%s7459 + $0x30] sm:$0xf]
        %v7473 = vld [vmem:[%s7459 + $0x34] sm:$0xf]
        %v7474 = vld [vmem:[%s7459 + $0x38] sm:$0xf]
        %v7475 = vld [vmem:[%s7459 + $0x3c] sm:$0xf]
        %v7512 = vunpack.c.l.b16 %v7406
        %v7513 = vunpack.c.l.b16 %v7407
        %v7514 = vunpack.c.l.b16 %v7408
        %v7515 = vunpack.c.l.b16 %v7409
        %v7516 = vunpack.c.l.b16 %v7410
        %v7517 = vunpack.c.l.b16 %v7411
        %v7518 = vunpack.c.l.b16 %v7412
        %v7519 = vunpack.c.l.b16 %v7413
        %v7520 = vunpack.c.l.b16 %v7414
        %v7521 = vunpack.c.l.b16 %v7415
        %v7522 = vunpack.c.l.b16 %v7416
        %v7523 = vunpack.c.l.b16 %v7417
        %v7524 = vunpack.c.l.b16 %v7418
        %v7525 = vunpack.c.l.b16 %v7419
        %v7526 = vunpack.c.l.b16 %v7420
        %v7527 = vunpack.c.l.b16 %v7421
        %v7528 = vunpack.c.l.b16 %v7422
        %v7529 = vunpack.c.l.b16 %v7423
        %v7530 = vunpack.c.l.b16 %v7424
        %v7531 = vunpack.c.l.b16 %v7425
        %v7532 = vunpack.c.l.b16 %v7426
        %v7533 = vunpack.c.l.b16 %v7427
        %v7534 = vunpack.c.l.b16 %v7428
        %v7535 = vunpack.c.l.b16 %v7429
        %v7536 = vunpack.c.l.b16 %v7430
        %v7537 = vunpack.c.l.b16 %v7431
        %v7538 = vunpack.c.l.b16 %v7432
        %v7539 = vunpack.c.l.b16 %v7433
        %v7540 = vunpack.c.l.b16 %v7434
        %v7541 = vunpack.c.l.b16 %v7435
        %v7542 = vunpack.c.l.b16 %v7436
        %v7543 = vunpack.c.l.b16 %v7437
        %v7544 = vunpack.c.l.b16 %v7438
        %v7545 = vunpack.c.l.b16 %v7439
        %v7546 = vunpack.c.l.b16 %v7440
        %v7547 = vunpack.c.l.b16 %v7458
        %v7548 = vpack.c.b16 %v7513, %v7512
        %v7549 = vpack.c.b16 %v7515, %v7514
        %v7550 = vpack.c.b16 %v7517, %v7516
        %v7551 = vpack.c.b16 %v7519, %v7518
        %v7552 = vpack.c.b16 %v7521, %v7520
        %v7553 = vpack.c.b16 %v7523, %v7522
        %v7554 = vpack.c.b16 %v7525, %v7524
        %v7555 = vpack.c.b16 %v7527, %v7526
        %v7556 = vpack.c.b16 %v7529, %v7528
        %v7557 = vpack.c.b16 %v7531, %v7530
        %v7558 = vpack.c.b16 %v7533, %v7532
        %v7559 = vpack.c.b16 %v7535, %v7534
        %v7560 = vpack.c.b16 %v7537, %v7536
        %v7561 = vpack.c.b16 %v7539, %v7538
        %v7562 = vpack.c.b16 %v7541, %v7540
        %v7563 = vpack.c.b16 %v7543, %v7542
        %v7564 = vpack.c.b16 %v7545, %v7544
        %v7565 = vpack.c.b16 %v7547, %v7546
        %v7567 = vshrl.u32 %v7548, 16
        %v7569 = vshll.u32 %v7548, 16
        %v7571 = vrot.slane %v7569, 1
        %v7572 = vor.u32 %v7567, %v7571
        %v7574 = vshll.u32 %v7549, 16
        %v7576 = vrot.slane %v7574, 1
        %v7577 = vsel %vm3819, %v7572, %v7576
        %v7578 = vshrl.u32 %v7549, 16
        %v7580 = vor.u32 %v7578, %v7576
        %v7582 = vshll.u32 %v7550, 16
        %v7584 = vrot.slane %v7582, 1
        %v7585 = vsel %vm3819, %v7580, %v7584
        %v7586 = vshrl.u32 %v7550, 16
        %v7588 = vor.u32 %v7586, %v7584
        %v7590 = vshll.u32 %v7551, 16
        %v7592 = vrot.slane %v7590, 1
        %v7593 = vsel %vm3819, %v7588, %v7592
        %v7594 = vshrl.u32 %v7551, 16
        %v7596 = vor.u32 %v7594, %v7592
        %v7598 = vshll.u32 %v7552, 16
        %v7600 = vrot.slane %v7598, 1
        %v7601 = vsel %vm3819, %v7596, %v7600
        %v7602 = vshrl.u32 %v7552, 16
        %v7604 = vor.u32 %v7602, %v7600
        %v7606 = vshll.u32 %v7553, 16
        %v7608 = vrot.slane %v7606, 1
        %v7609 = vsel %vm3819, %v7604, %v7608
        %v7610 = vshrl.u32 %v7553, 16
        %v7612 = vor.u32 %v7610, %v7608
        %v7614 = vshll.u32 %v7554, 16
        %v7616 = vrot.slane %v7614, 1
        %v7617 = vsel %vm3819, %v7612, %v7616
        %v7618 = vshrl.u32 %v7554, 16
        %v7620 = vor.u32 %v7618, %v7616
        %v7622 = vshll.u32 %v7555, 16
        %v7624 = vrot.slane %v7622, 1
        %v7625 = vsel %vm3819, %v7620, %v7624
        %v7626 = vshrl.u32 %v7555, 16
        %v7628 = vor.u32 %v7626, %v7624
        %v7630 = vshll.u32 %v7556, 16
        %v7632 = vrot.slane %v7630, 1
        %v7633 = vsel %vm3819, %v7628, %v7632
        %v7634 = vshrl.u32 %v7556, 16
        %v7636 = vor.u32 %v7634, %v7632
        %v7638 = vshll.u32 %v7557, 16
        %v7640 = vrot.slane %v7638, 1
        %v7641 = vsel %vm3819, %v7636, %v7640
        %v7642 = vshrl.u32 %v7557, 16
        %v7644 = vor.u32 %v7642, %v7640
        %v7646 = vshll.u32 %v7558, 16
        %v7648 = vrot.slane %v7646, 1
        %v7649 = vsel %vm3819, %v7644, %v7648
        %v7650 = vshrl.u32 %v7558, 16
        %v7652 = vor.u32 %v7650, %v7648
        %v7654 = vshll.u32 %v7559, 16
        %v7656 = vrot.slane %v7654, 1
        %v7657 = vsel %vm3819, %v7652, %v7656
        %v7658 = vshrl.u32 %v7559, 16
        %v7660 = vor.u32 %v7658, %v7656
        %v7662 = vshll.u32 %v7560, 16
        %v7664 = vrot.slane %v7662, 1
        %v7665 = vsel %vm3819, %v7660, %v7664
        %v7666 = vshrl.u32 %v7560, 16
        %v7668 = vor.u32 %v7666, %v7664
        %v7670 = vshll.u32 %v7561, 16
        %v7672 = vrot.slane %v7670, 1
        %v7673 = vsel %vm3819, %v7668, %v7672
        %v7674 = vshrl.u32 %v7561, 16
        %v7676 = vor.u32 %v7674, %v7672
        %v7678 = vshll.u32 %v7562, 16
        %v7680 = vrot.slane %v7678, 1
        %v7681 = vsel %vm3819, %v7676, %v7680
        %v7682 = vshrl.u32 %v7562, 16
        %v7684 = vor.u32 %v7682, %v7680
        %v7686 = vshll.u32 %v7563, 16
        %v7688 = vrot.slane %v7686, 1
        %v7689 = vsel %vm3819, %v7684, %v7688
        %v7690 = vshrl.u32 %v7563, 16
        %v7692 = vor.u32 %v7690, %v7688
        %v7694 = vshll.u32 %v7564, 16
        %v7696 = vrot.slane %v7694, 1
        %v7697 = vsel %vm3819, %v7692, %v7696
        %v7698 = vshrl.u32 %v7564, 16
        %v7700 = vor.u32 %v7698, %v7696
        %v7702 = vshll.u32 %v7565, 16
        %v7704 = vrot.slane %v7702, 1
        %v7705 = vsel %vm3819, %v7700, %v7704
        %v7706 = vshrl.u32 %v7565, 16
        %v7708 = vor.u32 %v7706, %v7704
        %v7743 = vunpack.c.l.b16 %v7460
        %v7744 = vunpack.c.l.b16 %v7461
        %v7745 = vunpack.c.l.b16 %v7462
        %v7746 = vunpack.c.l.b16 %v7463
        %v7747 = vunpack.c.l.b16 %v7464
        %v7748 = vunpack.c.l.b16 %v7465
        %v7749 = vunpack.c.l.b16 %v7466
        %v7750 = vunpack.c.l.b16 %v7467
        %v7751 = vunpack.c.l.b16 %v7468
        %v7752 = vunpack.c.l.b16 %v7469
        %v7753 = vunpack.c.l.b16 %v7470
        %v7754 = vunpack.c.l.b16 %v7471
        %v7755 = vunpack.c.l.b16 %v7472
        %v7756 = vunpack.c.l.b16 %v7473
        %v7757 = vunpack.c.l.b16 %v7474
        %v7758 = vunpack.c.l.b16 %v7475
        %v7759 = vpack.c.b16 %v7744, %v7743
        %v7760 = vpack.c.b16 %v7746, %v7745
        %v7761 = vpack.c.b16 %v7748, %v7747
        %v7762 = vpack.c.b16 %v7750, %v7749
        %v7763 = vpack.c.b16 %v7752, %v7751
        %v7764 = vpack.c.b16 %v7754, %v7753
        %v7765 = vpack.c.b16 %v7756, %v7755
        %v7766 = vpack.c.b16 %v7758, %v7757
        %7775 = vmatpush.bf16.msra.mxu0 %v7766
        %7776 = vmatpush.bf16.msra.mxu0 %v7765
        %7777 = vmatpush.bf16.msra.mxu0 %v7764
        %7778 = vmatpush.bf16.msra.mxu0 %v7763
        %7779 = vmatpush.bf16.msra.mxu0 %v7762
        %7780 = vmatpush.bf16.msra.mxu0 %v7761
        %7781 = vmatpush.bf16.msra.mxu0 %v7760
        %7782 = vmatpush.bf16.msra.mxu0 %v7759
        %7783 = vmatmul.bf16.gmra.mxu0 %v7577
        %v7784 = vpop.f32.mrf.mxu0
        %v7785 = vadd.f32 0.0, %v7784
        %v7786 = vpop.f32.mrf.mxu0
        %v7787 = vadd.f32 0.0, %v7786
        %7788 = vmatmul.bf16.gmra.mxu0 %v7585
        %v7789 = vpop.f32.mrf.mxu0
        %v7790 = vadd.f32 0.0, %v7789
        %v7791 = vpop.f32.mrf.mxu0
        %v7792 = vadd.f32 0.0, %v7791
        %7793 = vmatmul.bf16.gmra.mxu0 %v7593
        %v7794 = vpop.f32.mrf.mxu0
        %v7795 = vadd.f32 0.0, %v7794
        %v7796 = vpop.f32.mrf.mxu0
        %v7797 = vadd.f32 0.0, %v7796
        %7798 = vmatmul.bf16.gmra.mxu0 %v7601
        %v7799 = vpop.f32.mrf.mxu0
        %v7800 = vadd.f32 0.0, %v7799
        %v7801 = vpop.f32.mrf.mxu0
        %v7802 = vadd.f32 0.0, %v7801
        %7803 = vmatmul.bf16.gmra.mxu0 %v7609
        %v7804 = vpop.f32.mrf.mxu0
        %v7805 = vadd.f32 0.0, %v7804
        %v7806 = vpop.f32.mrf.mxu0
        %v7807 = vadd.f32 0.0, %v7806
        %7808 = vmatmul.bf16.gmra.mxu0 %v7617
        %v7809 = vpop.f32.mrf.mxu0
        %v7810 = vadd.f32 0.0, %v7809
        %v7811 = vpop.f32.mrf.mxu0
        %v7812 = vadd.f32 0.0, %v7811
        %7813 = vmatmul.bf16.gmra.mxu0 %v7625
        %v7814 = vpop.f32.mrf.mxu0
        %v7815 = vadd.f32 0.0, %v7814
        %v7816 = vpop.f32.mrf.mxu0
        %v7817 = vadd.f32 0.0, %v7816
        %7818 = vmatmul.bf16.gmra.mxu0 %v7633
        %v7819 = vpop.f32.mrf.mxu0
        %v7820 = vadd.f32 0.0, %v7819
        %v7821 = vpop.f32.mrf.mxu0
        %v7822 = vadd.f32 0.0, %v7821
        %7823 = vmatmul.bf16.gmra.mxu0 %v7641
        %v7824 = vpop.f32.mrf.mxu0
        %v7825 = vadd.f32 0.0, %v7824
        %v7826 = vpop.f32.mrf.mxu0
        %v7827 = vadd.f32 0.0, %v7826
        %7828 = vmatmul.bf16.gmra.mxu0 %v7649
        %v7829 = vpop.f32.mrf.mxu0
        %v7830 = vadd.f32 0.0, %v7829
        %v7831 = vpop.f32.mrf.mxu0
        %v7832 = vadd.f32 0.0, %v7831
        %7833 = vmatmul.bf16.gmra.mxu0 %v7657
        %v7834 = vpop.f32.mrf.mxu0
        %v7835 = vadd.f32 0.0, %v7834
        %v7836 = vpop.f32.mrf.mxu0
        %v7837 = vadd.f32 0.0, %v7836
        %7838 = vmatmul.bf16.gmra.mxu0 %v7665
        %v7839 = vpop.f32.mrf.mxu0
        %v7840 = vadd.f32 0.0, %v7839
        %v7841 = vpop.f32.mrf.mxu0
        %v7842 = vadd.f32 0.0, %v7841
        %7843 = vmatmul.bf16.gmra.mxu0 %v7673
        %v7844 = vpop.f32.mrf.mxu0
        %v7845 = vadd.f32 0.0, %v7844
        %v7846 = vpop.f32.mrf.mxu0
        %v7847 = vadd.f32 0.0, %v7846
        %7848 = vmatmul.bf16.gmra.mxu0 %v7681
        %v7849 = vpop.f32.mrf.mxu0
        %v7850 = vadd.f32 0.0, %v7849
        %v7851 = vpop.f32.mrf.mxu0
        %v7852 = vadd.f32 0.0, %v7851
        %7853 = vmatmul.bf16.gmra.mxu0 %v7689
        %v7854 = vpop.f32.mrf.mxu0
        %v7855 = vadd.f32 0.0, %v7854
        %v7856 = vpop.f32.mrf.mxu0
        %v7857 = vadd.f32 0.0, %v7856
        %7858 = vmatmul.bf16.gmra.mxu0 %v7697
        %v7859 = vpop.f32.mrf.mxu0
        %v7860 = vadd.f32 0.0, %v7859
        %v7861 = vpop.f32.mrf.mxu0
        %v7862 = vadd.f32 0.0, %v7861
        %7863 = vmatmul.bf16.gmra.mxu0 %v7705
        %v7864 = vpop.f32.mrf.mxu0
        %v7865 = vadd.f32 0.0, %v7864
        %v7866 = vpop.f32.mrf.mxu0
        %v7867 = vadd.f32 0.0, %v7866
        %7868 = vmatmul.bf16.gmra.mxu0 %v7708
        %v7869 = vpop.f32.mrf.mxu0
        %v7870 = vadd.f32 0.0, %v7869
        %v7871 = vpop.f32.mrf.mxu0
        %v7872 = vadd.f32 0.0, %v7871
        %7873 = vdwg.mxu0
        %v7875 = vunpack.c.l.b16 %v7441
        %v7876 = vpack.c.b16 %v7875, %v7546
        %v7911 = vunpack.c.l.b16 %v7442
        %v7912 = vunpack.c.l.b16 %v7443
        %v7913 = vunpack.c.l.b16 %v7444
        %v7914 = vunpack.c.l.b16 %v7445
        %v7915 = vunpack.c.l.b16 %v7446
        %v7916 = vunpack.c.l.b16 %v7447
        %v7917 = vunpack.c.l.b16 %v7448
        %v7918 = vunpack.c.l.b16 %v7449
        %v7919 = vunpack.c.l.b16 %v7450
        %v7920 = vunpack.c.l.b16 %v7451
        %v7921 = vunpack.c.l.b16 %v7452
        %v7922 = vunpack.c.l.b16 %v7453
        %v7923 = vunpack.c.l.b16 %v7454
        %v7924 = vunpack.c.l.b16 %v7455
        %v7925 = vunpack.c.l.b16 %v7456
        %v7926 = vunpack.c.l.b16 %v7457
        %v7927 = vpack.c.b16 %v7912, %v7911
        %v7928 = vpack.c.b16 %v7914, %v7913
        %v7929 = vpack.c.b16 %v7916, %v7915
        %v7930 = vpack.c.b16 %v7918, %v7917
        %v7931 = vpack.c.b16 %v7920, %v7919
        %v7932 = vpack.c.b16 %v7922, %v7921
        %v7933 = vpack.c.b16 %v7924, %v7923
        %v7934 = vpack.c.b16 %v7926, %v7925
        %7943 = vmatpush.bf16.msra.mxu0 %v7934
        %7944 = vmatpush.bf16.msra.mxu0 %v7933
        %7945 = vmatpush.bf16.msra.mxu0 %v7932
        %7946 = vmatpush.bf16.msra.mxu0 %v7931
        %7947 = vmatpush.bf16.msra.mxu0 %v7930
        %7948 = vmatpush.bf16.msra.mxu0 %v7929
        %7949 = vmatpush.bf16.msra.mxu0 %v7928
        %7950 = vmatpush.bf16.msra.mxu0 %v7927
        %7951 = vmatmul.bf16.gmra.mxu0 %v7548
        %v7952 = vpop.f32.mrf.mxu0
        %v7953 = vadd.f32 %v7785, %v7952
        %v7954 = vpop.f32.mrf.mxu0
        %v7955 = vadd.f32 %v7787, %v7954
        %7956 = vmatmul.bf16.gmra.mxu0 %v7549
        %v7957 = vpop.f32.mrf.mxu0
        %v7958 = vadd.f32 %v7790, %v7957
        %v7959 = vpop.f32.mrf.mxu0
        %v7960 = vadd.f32 %v7792, %v7959
        %7961 = vmatmul.bf16.gmra.mxu0 %v7550
        %v7962 = vpop.f32.mrf.mxu0
        %v7963 = vadd.f32 %v7795, %v7962
        %v7964 = vpop.f32.mrf.mxu0
        %v7965 = vadd.f32 %v7797, %v7964
        %7966 = vmatmul.bf16.gmra.mxu0 %v7551
        %v7967 = vpop.f32.mrf.mxu0
        %v7968 = vadd.f32 %v7800, %v7967
        %v7969 = vpop.f32.mrf.mxu0
        %v7970 = vadd.f32 %v7802, %v7969
        %7971 = vmatmul.bf16.gmra.mxu0 %v7552
        %v7972 = vpop.f32.mrf.mxu0
        %v7973 = vadd.f32 %v7805, %v7972
        %v7974 = vpop.f32.mrf.mxu0
        %v7975 = vadd.f32 %v7807, %v7974
        %7976 = vmatmul.bf16.gmra.mxu0 %v7553
        %v7977 = vpop.f32.mrf.mxu0
        %v7978 = vadd.f32 %v7810, %v7977
        %v7979 = vpop.f32.mrf.mxu0
        %v7980 = vadd.f32 %v7812, %v7979
        %7981 = vmatmul.bf16.gmra.mxu0 %v7554
        %v7982 = vpop.f32.mrf.mxu0
        %v7983 = vadd.f32 %v7815, %v7982
        %v7984 = vpop.f32.mrf.mxu0
        %v7985 = vadd.f32 %v7817, %v7984
        %7986 = vmatmul.bf16.gmra.mxu0 %v7555
        %v7987 = vpop.f32.mrf.mxu0
        %v7988 = vadd.f32 %v7820, %v7987
        %v7989 = vpop.f32.mrf.mxu0
        %v7990 = vadd.f32 %v7822, %v7989
        %7991 = vmatmul.bf16.gmra.mxu0 %v7556
        %v7992 = vpop.f32.mrf.mxu0
        %v7993 = vadd.f32 %v7825, %v7992
        %v7994 = vpop.f32.mrf.mxu0
        %v7995 = vadd.f32 %v7827, %v7994
        %7996 = vmatmul.bf16.gmra.mxu0 %v7557
        %v7997 = vpop.f32.mrf.mxu0
        %v7998 = vadd.f32 %v7830, %v7997
        %v7999 = vpop.f32.mrf.mxu0
        %v8000 = vadd.f32 %v7832, %v7999
        %8001 = vmatmul.bf16.gmra.mxu0 %v7558
        %v8002 = vpop.f32.mrf.mxu0
        %v8003 = vadd.f32 %v7835, %v8002
        %v8004 = vpop.f32.mrf.mxu0
        %v8005 = vadd.f32 %v7837, %v8004
        %8006 = vmatmul.bf16.gmra.mxu0 %v7559
        %v8007 = vpop.f32.mrf.mxu0
        %v8008 = vadd.f32 %v7840, %v8007
        %v8009 = vpop.f32.mrf.mxu0
        %v8010 = vadd.f32 %v7842, %v8009
        %8011 = vmatmul.bf16.gmra.mxu0 %v7560
        %v8012 = vpop.f32.mrf.mxu0
        %v8013 = vadd.f32 %v7845, %v8012
        %v8014 = vpop.f32.mrf.mxu0
        %v8015 = vadd.f32 %v7847, %v8014
        %8016 = vmatmul.bf16.gmra.mxu0 %v7561
        %v8017 = vpop.f32.mrf.mxu0
        %v8018 = vadd.f32 %v7850, %v8017
        %v8019 = vpop.f32.mrf.mxu0
        %v8020 = vadd.f32 %v7852, %v8019
        %8021 = vmatmul.bf16.gmra.mxu0 %v7562
        %v8022 = vpop.f32.mrf.mxu0
        %v8023 = vadd.f32 %v7855, %v8022
        %v8024 = vpop.f32.mrf.mxu0
        %v8025 = vadd.f32 %v7857, %v8024
        %8026 = vmatmul.bf16.gmra.mxu0 %v7563
        %v8027 = vpop.f32.mrf.mxu0
        %v8028 = vadd.f32 %v7860, %v8027
        %v8029 = vpop.f32.mrf.mxu0
        %v8030 = vadd.f32 %v7862, %v8029
        %8031 = vmatmul.bf16.gmra.mxu0 %v7564
        %v8032 = vpop.f32.mrf.mxu0
        %v8033 = vadd.f32 %v7865, %v8032
        %v8034 = vpop.f32.mrf.mxu0
        %v8035 = vadd.f32 %v7867, %v8034
        %8036 = vmatmul.bf16.gmra.mxu0 %v7876
        %v8037 = vpop.f32.mrf.mxu0
        %v8038 = vadd.f32 %v7870, %v8037
        %v8039 = vpop.f32.mrf.mxu0
        %v8040 = vadd.f32 %v7872, %v8039
        %8041 = vdwg.mxu0
        %v8042 = vld [vmem:[#allocation2] sm:$0xe]
        %s8043 = scalar_lea.vmem [#allocation8], 128
        %v8044 = vld [vmem:[%s8043] sm:$0xf]
        %v8045 = vld [vmem:[%s8043 + $0x4] sm:$0xf]
        %v8046 = vld [vmem:[%s8043 + $0x8] sm:$0xf]
        %v8047 = vld [vmem:[%s8043 + $0xc] sm:$0xf]
        %v8048 = vld [vmem:[%s8043 + $0x10] sm:$0xf]
        %v8049 = vld [vmem:[%s8043 + $0x14] sm:$0xf]
        %v8050 = vld [vmem:[%s8043 + $0x18] sm:$0xf]
        %v8051 = vld [vmem:[%s8043 + $0x1c] sm:$0xf]
        %v8052 = vld [vmem:[%s8043 + $0x20] sm:$0xf]
        %v8053 = vld [vmem:[%s8043 + $0x24] sm:$0xf]
        %v8054 = vld [vmem:[%s8043 + $0x28] sm:$0xf]
        %v8055 = vld [vmem:[%s8043 + $0x2c] sm:$0xf]
        %v8056 = vld [vmem:[%s8043 + $0x30] sm:$0xf]
        %v8057 = vld [vmem:[%s8043 + $0x34] sm:$0xf]
        %v8058 = vld [vmem:[%s8043 + $0x38] sm:$0xf]
        %v8059 = vld [vmem:[%s8043 + $0x3c] sm:$0xf]
        %v8061 = vunpack.c.l.b16 %v8042
        %v8062 = vpack.c.b16 %v7513, %v8061
        %v8063 = vrot.slane %v8062, 1
        %v8064 = vrot.slane %v7549, 1
        %v8065 = vsel %vm4317, %v8063, %v8064
        %v8066 = vrot.slane %v7550, 1
        %v8067 = vsel %vm4317, %v8064, %v8066
        %v8068 = vrot.slane %v7551, 1
        %v8069 = vsel %vm4317, %v8066, %v8068
        %v8070 = vrot.slane %v7552, 1
        %v8071 = vsel %vm4317, %v8068, %v8070
        %v8072 = vrot.slane %v7553, 1
        %v8073 = vsel %vm4317, %v8070, %v8072
        %v8074 = vrot.slane %v7554, 1
        %v8075 = vsel %vm4317, %v8072, %v8074
        %v8076 = vrot.slane %v7555, 1
        %v8077 = vsel %vm4317, %v8074, %v8076
        %v8078 = vrot.slane %v7556, 1
        %v8079 = vsel %vm4317, %v8076, %v8078
        %v8080 = vrot.slane %v7557, 1
        %v8081 = vsel %vm4317, %v8078, %v8080
        %v8082 = vrot.slane %v7558, 1
        %v8083 = vsel %vm4317, %v8080, %v8082
        %v8084 = vrot.slane %v7559, 1
        %v8085 = vsel %vm4317, %v8082, %v8084
        %v8086 = vrot.slane %v7560, 1
        %v8087 = vsel %vm4317, %v8084, %v8086
        %v8088 = vrot.slane %v7561, 1
        %v8089 = vsel %vm4317, %v8086, %v8088
        %v8090 = vrot.slane %v7562, 1
        %v8091 = vsel %vm4317, %v8088, %v8090
        %v8092 = vrot.slane %v7563, 1
        %v8093 = vsel %vm4317, %v8090, %v8092
        %v8094 = vrot.slane %v7564, 1
        %v8095 = vsel %vm4317, %v8092, %v8094
        %v8096 = vrot.slane %v7565, 1
        %v8097 = vsel %vm4317, %v8094, %v8096
        %v8132 = vunpack.c.l.b16 %v8044
        %v8133 = vunpack.c.l.b16 %v8045
        %v8134 = vunpack.c.l.b16 %v8046
        %v8135 = vunpack.c.l.b16 %v8047
        %v8136 = vunpack.c.l.b16 %v8048
        %v8137 = vunpack.c.l.b16 %v8049
        %v8138 = vunpack.c.l.b16 %v8050
        %v8139 = vunpack.c.l.b16 %v8051
        %v8140 = vunpack.c.l.b16 %v8052
        %v8141 = vunpack.c.l.b16 %v8053
        %v8142 = vunpack.c.l.b16 %v8054
        %v8143 = vunpack.c.l.b16 %v8055
        %v8144 = vunpack.c.l.b16 %v8056
        %v8145 = vunpack.c.l.b16 %v8057
        %v8146 = vunpack.c.l.b16 %v8058
        %v8147 = vunpack.c.l.b16 %v8059
        %v8148 = vpack.c.b16 %v8133, %v8132
        %v8149 = vpack.c.b16 %v8135, %v8134
        %v8150 = vpack.c.b16 %v8137, %v8136
        %v8151 = vpack.c.b16 %v8139, %v8138
        %v8152 = vpack.c.b16 %v8141, %v8140
        %v8153 = vpack.c.b16 %v8143, %v8142
        %v8154 = vpack.c.b16 %v8145, %v8144
        %v8155 = vpack.c.b16 %v8147, %v8146
        %8164 = vmatpush.bf16.msra.mxu0 %v8155
        %8165 = vmatpush.bf16.msra.mxu0 %v8154
        %8166 = vmatpush.bf16.msra.mxu0 %v8153
        %8167 = vmatpush.bf16.msra.mxu0 %v8152
        %8168 = vmatpush.bf16.msra.mxu0 %v8151
        %8169 = vmatpush.bf16.msra.mxu0 %v8150
        %8170 = vmatpush.bf16.msra.mxu0 %v8149
        %8171 = vmatpush.bf16.msra.mxu0 %v8148
        %8172 = vmatmul.bf16.gmra.mxu0 %v8065
        %v8173 = vpop.f32.mrf.mxu0
        %v8174 = vadd.f32 0.0, %v8173
        %v8175 = vpop.f32.mrf.mxu0
        %v8176 = vadd.f32 0.0, %v8175
        %8177 = vmatmul.bf16.gmra.mxu0 %v8067
        %v8178 = vpop.f32.mrf.mxu0
        %v8179 = vadd.f32 0.0, %v8178
        %v8180 = vpop.f32.mrf.mxu0
        %v8181 = vadd.f32 0.0, %v8180
        %8182 = vmatmul.bf16.gmra.mxu0 %v8069
        %v8183 = vpop.f32.mrf.mxu0
        %v8184 = vadd.f32 0.0, %v8183
        %v8185 = vpop.f32.mrf.mxu0
        %v8186 = vadd.f32 0.0, %v8185
        %8187 = vmatmul.bf16.gmra.mxu0 %v8071
        %v8188 = vpop.f32.mrf.mxu0
        %v8189 = vadd.f32 0.0, %v8188
        %v8190 = vpop.f32.mrf.mxu0
        %v8191 = vadd.f32 0.0, %v8190
        %8192 = vmatmul.bf16.gmra.mxu0 %v8073
        %v8193 = vpop.f32.mrf.mxu0
        %v8194 = vadd.f32 0.0, %v8193
        %v8195 = vpop.f32.mrf.mxu0
        %v8196 = vadd.f32 0.0, %v8195
        %8197 = vmatmul.bf16.gmra.mxu0 %v8075
        %v8198 = vpop.f32.mrf.mxu0
        %v8199 = vadd.f32 0.0, %v8198
        %v8200 = vpop.f32.mrf.mxu0
        %v8201 = vadd.f32 0.0, %v8200
        %8202 = vmatmul.bf16.gmra.mxu0 %v8077
        %v8203 = vpop.f32.mrf.mxu0
        %v8204 = vadd.f32 0.0, %v8203
        %v8205 = vpop.f32.mrf.mxu0
        %v8206 = vadd.f32 0.0, %v8205
        %8207 = vmatmul.bf16.gmra.mxu0 %v8079
        %v8208 = vpop.f32.mrf.mxu0
        %v8209 = vadd.f32 0.0, %v8208
        %v8210 = vpop.f32.mrf.mxu0
        %v8211 = vadd.f32 0.0, %v8210
        %8212 = vmatmul.bf16.gmra.mxu0 %v8081
        %v8213 = vpop.f32.mrf.mxu0
        %v8214 = vadd.f32 0.0, %v8213
        %v8215 = vpop.f32.mrf.mxu0
        %v8216 = vadd.f32 0.0, %v8215
        %8217 = vmatmul.bf16.gmra.mxu0 %v8083
        %v8218 = vpop.f32.mrf.mxu0
        %v8219 = vadd.f32 0.0, %v8218
        %v8220 = vpop.f32.mrf.mxu0
        %v8221 = vadd.f32 0.0, %v8220
        %8222 = vmatmul.bf16.gmra.mxu0 %v8085
        %v8223 = vpop.f32.mrf.mxu0
        %v8224 = vadd.f32 0.0, %v8223
        %v8225 = vpop.f32.mrf.mxu0
        %v8226 = vadd.f32 0.0, %v8225
        %8227 = vmatmul.bf16.gmra.mxu0 %v8087
        %v8228 = vpop.f32.mrf.mxu0
        %v8229 = vadd.f32 0.0, %v8228
        %v8230 = vpop.f32.mrf.mxu0
        %v8231 = vadd.f32 0.0, %v8230
        %8232 = vmatmul.bf16.gmra.mxu0 %v8089
        %v8233 = vpop.f32.mrf.mxu0
        %v8234 = vadd.f32 0.0, %v8233
        %v8235 = vpop.f32.mrf.mxu0
        %v8236 = vadd.f32 0.0, %v8235
        %8237 = vmatmul.bf16.gmra.mxu0 %v8091
        %v8238 = vpop.f32.mrf.mxu0
        %v8239 = vadd.f32 0.0, %v8238
        %v8240 = vpop.f32.mrf.mxu0
        %v8241 = vadd.f32 0.0, %v8240
        %8242 = vmatmul.bf16.gmra.mxu0 %v8093
        %v8243 = vpop.f32.mrf.mxu0
        %v8244 = vadd.f32 0.0, %v8243
        %v8245 = vpop.f32.mrf.mxu0
        %v8246 = vadd.f32 0.0, %v8245
        %8247 = vmatmul.bf16.gmra.mxu0 %v8095
        %v8248 = vpop.f32.mrf.mxu0
        %v8249 = vadd.f32 0.0, %v8248
        %v8250 = vpop.f32.mrf.mxu0
        %v8251 = vadd.f32 0.0, %v8250
        %8252 = vmatmul.bf16.gmra.mxu0 %v8097
        %v8253 = vpop.f32.mrf.mxu0
        %v8254 = vadd.f32 0.0, %v8253
        %v8255 = vpop.f32.mrf.mxu0
        %v8256 = vadd.f32 0.0, %v8255
        %8257 = vmatmul.bf16.gmra.mxu0 %v8096
        %v8258 = vpop.f32.mrf.mxu0
        %v8259 = vadd.f32 0.0, %v8258
        %v8260 = vpop.f32.mrf.mxu0
        %v8261 = vadd.f32 0.0, %v8260
        %8262 = vdwg.mxu0
        %v8263 = vadd.f32 %v7953, %v8174
        %v8264 = vadd.f32 %v7955, %v8176
        %v8265 = vadd.f32 %v7958, %v8179
        %v8266 = vadd.f32 %v7960, %v8181
        %v8267 = vadd.f32 %v7963, %v8184
        %v8268 = vadd.f32 %v7965, %v8186
        %v8269 = vadd.f32 %v7968, %v8189
        %v8270 = vadd.f32 %v7970, %v8191
        %v8271 = vadd.f32 %v7973, %v8194
        %v8272 = vadd.f32 %v7975, %v8196
        %v8273 = vadd.f32 %v7978, %v8199
        %v8274 = vadd.f32 %v7980, %v8201
        %v8275 = vadd.f32 %v7983, %v8204
        %v8276 = vadd.f32 %v7985, %v8206
        %v8277 = vadd.f32 %v7988, %v8209
        %v8278 = vadd.f32 %v7990, %v8211
        %v8279 = vadd.f32 %v7993, %v8214
        %v8280 = vadd.f32 %v7995, %v8216
        %v8281 = vadd.f32 %v7998, %v8219
        %v8282 = vadd.f32 %v8000, %v8221
        %v8283 = vadd.f32 %v8003, %v8224
        %v8284 = vadd.f32 %v8005, %v8226
        %v8285 = vadd.f32 %v8008, %v8229
        %v8286 = vadd.f32 %v8010, %v8231
        %v8287 = vadd.f32 %v8013, %v8234
        %v8288 = vadd.f32 %v8015, %v8236
        %v8289 = vadd.f32 %v8018, %v8239
        %v8290 = vadd.f32 %v8020, %v8241
        %v8291 = vadd.f32 %v8023, %v8244
        %v8292 = vadd.f32 %v8025, %v8246
        %v8293 = vadd.f32 %v8028, %v8249
        %v8294 = vadd.f32 %v8030, %v8251
        %v8295 = vadd.f32 %v8033, %v8254
        %v8296 = vadd.f32 %v8035, %v8256
        %v8297 = vadd.f32 %v8038, %v8259
        %v8298 = vadd.f32 %v8040, %v8261
        %v8299 = vld [vmem:[#allocation2 + $0x8] sm:$0xe]
        %v8300 = vld [vmem:[#allocation2 + $0xc] sm:$0xf]
        %v8301 = vld [vmem:[#allocation2 + $0x10] sm:$0xf]
        %v8302 = vld [vmem:[#allocation2 + $0x14] sm:$0xf]
        %v8303 = vld [vmem:[#allocation2 + $0x18] sm:$0xf]
        %v8304 = vld [vmem:[#allocation2 + $0x1c] sm:$0xf]
        %v8305 = vld [vmem:[#allocation2 + $0x20] sm:$0xf]
        %v8306 = vld [vmem:[#allocation2 + $0x24] sm:$0xf]
        %v8307 = vld [vmem:[#allocation2 + $0x28] sm:$0xf]
        %v8308 = vld [vmem:[#allocation2 + $0x2c] sm:$0xf]
        %v8309 = vld [vmem:[#allocation2 + $0x30] sm:$0xf]
        %v8310 = vld [vmem:[#allocation2 + $0x34] sm:$0xf]
        %v8311 = vld [vmem:[#allocation2 + $0x38] sm:$0xf]
        %v8312 = vld [vmem:[#allocation2 + $0x3c] sm:$0xf]
        %v8313 = vld [vmem:[#allocation2 + $0x40] sm:$0xf]
        %v8314 = vld [vmem:[#allocation2 + $0x44] sm:$0xf]
        %v8315 = vld [vmem:[#allocation2 + $0x48] sm:$0xf]
        %v8316 = vld [vmem:[#allocation2 + $0x4c] sm:$0xf]
        %v8317 = vld [vmem:[#allocation2 + $0x50] sm:$0xf]
        %v8318 = vld [vmem:[#allocation2 + $0x54] sm:$0xf]
        %v8319 = vld [vmem:[#allocation2 + $0x58] sm:$0xf]
        %v8320 = vld [vmem:[#allocation2 + $0x5c] sm:$0xf]
        %v8321 = vld [vmem:[#allocation2 + $0x60] sm:$0xf]
        %v8322 = vld [vmem:[#allocation2 + $0x64] sm:$0xf]
        %v8323 = vld [vmem:[#allocation2 + $0x68] sm:$0xf]
        %v8324 = vld [vmem:[#allocation2 + $0x6c] sm:$0xf]
        %v8325 = vld [vmem:[#allocation2 + $0x70] sm:$0xf]
        %v8326 = vld [vmem:[#allocation2 + $0x74] sm:$0xf]
        %v8327 = vld [vmem:[#allocation2 + $0x78] sm:$0xf]
        %v8328 = vld [vmem:[#allocation2 + $0x7c] sm:$0xf]
        %v8329 = vld [vmem:[#allocation2 + $0x80] sm:$0xf]
        %v8330 = vld [vmem:[#allocation2 + $0x84] sm:$0xf]
        %v8331 = vld [vmem:[#allocation2 + $0x88] sm:$0xf]
        %v8332 = vld [vmem:[#allocation2 + $0x8c] sm:$0xf]
        %v8333 = vld [vmem:[#allocation2 + $0x90] sm:$0xf]
        %v8334 = vld [vmem:[#allocation2 + $0x94] sm:$0xf]
        %s8335 = scalar_lea.vmem [#allocation8], 192
        %v8336 = vld [vmem:[%s8335] sm:$0xf]
        %v8337 = vld [vmem:[%s8335 + $0x4] sm:$0xf]
        %v8338 = vld [vmem:[%s8335 + $0x8] sm:$0xf]
        %v8339 = vld [vmem:[%s8335 + $0xc] sm:$0xf]
        %v8340 = vld [vmem:[%s8335 + $0x10] sm:$0xf]
        %v8341 = vld [vmem:[%s8335 + $0x14] sm:$0xf]
        %v8342 = vld [vmem:[%s8335 + $0x18] sm:$0xf]
        %v8343 = vld [vmem:[%s8335 + $0x1c] sm:$0xf]
        %v8344 = vld [vmem:[%s8335 + $0x20] sm:$0xf]
        %v8345 = vld [vmem:[%s8335 + $0x24] sm:$0xf]
        %v8346 = vld [vmem:[%s8335 + $0x28] sm:$0xf]
        %v8347 = vld [vmem:[%s8335 + $0x2c] sm:$0xf]
        %v8348 = vld [vmem:[%s8335 + $0x30] sm:$0xf]
        %v8349 = vld [vmem:[%s8335 + $0x34] sm:$0xf]
        %v8350 = vld [vmem:[%s8335 + $0x38] sm:$0xf]
        %v8351 = vld [vmem:[%s8335 + $0x3c] sm:$0xf]
        %v8388 = vunpack.c.l.b16 %v8299
        %v8389 = vunpack.c.l.b16 %v8300
        %v8390 = vunpack.c.l.b16 %v8301
        %v8391 = vunpack.c.l.b16 %v8302
        %v8392 = vunpack.c.l.b16 %v8303
        %v8393 = vunpack.c.l.b16 %v8304
        %v8394 = vunpack.c.l.b16 %v8305
        %v8395 = vunpack.c.l.b16 %v8306
        %v8396 = vunpack.c.l.b16 %v8307
        %v8397 = vunpack.c.l.b16 %v8308
        %v8398 = vunpack.c.l.b16 %v8309
        %v8399 = vunpack.c.l.b16 %v8310
        %v8400 = vunpack.c.l.b16 %v8311
        %v8401 = vunpack.c.l.b16 %v8312
        %v8402 = vunpack.c.l.b16 %v8313
        %v8403 = vunpack.c.l.b16 %v8314
        %v8404 = vunpack.c.l.b16 %v8315
        %v8405 = vunpack.c.l.b16 %v8316
        %v8406 = vunpack.c.l.b16 %v8317
        %v8407 = vunpack.c.l.b16 %v8318
        %v8408 = vunpack.c.l.b16 %v8319
        %v8409 = vunpack.c.l.b16 %v8320
        %v8410 = vunpack.c.l.b16 %v8321
        %v8411 = vunpack.c.l.b16 %v8322
        %v8412 = vunpack.c.l.b16 %v8323
        %v8413 = vunpack.c.l.b16 %v8324
        %v8414 = vunpack.c.l.b16 %v8325
        %v8415 = vunpack.c.l.b16 %v8326
        %v8416 = vunpack.c.l.b16 %v8327
        %v8417 = vunpack.c.l.b16 %v8328
        %v8418 = vunpack.c.l.b16 %v8329
        %v8419 = vunpack.c.l.b16 %v8330
        %v8420 = vunpack.c.l.b16 %v8331
        %v8421 = vunpack.c.l.b16 %v8332
        %v8422 = vunpack.c.l.b16 %v8333
        %v8423 = vunpack.c.l.b16 %v8334
        %v8424 = vpack.c.b16 %v8389, %v8388
        %v8425 = vpack.c.b16 %v8391, %v8390
        %v8426 = vpack.c.b16 %v8393, %v8392
        %v8427 = vpack.c.b16 %v8395, %v8394
        %v8428 = vpack.c.b16 %v8397, %v8396
        %v8429 = vpack.c.b16 %v8399, %v8398
        %v8430 = vpack.c.b16 %v8401, %v8400
        %v8431 = vpack.c.b16 %v8403, %v8402
        %v8432 = vpack.c.b16 %v8405, %v8404
        %v8433 = vpack.c.b16 %v8407, %v8406
        %v8434 = vpack.c.b16 %v8409, %v8408
        %v8435 = vpack.c.b16 %v8411, %v8410
        %v8436 = vpack.c.b16 %v8413, %v8412
        %v8437 = vpack.c.b16 %v8415, %v8414
        %v8438 = vpack.c.b16 %v8417, %v8416
        %v8439 = vpack.c.b16 %v8419, %v8418
        %v8440 = vpack.c.b16 %v8421, %v8420
        %v8441 = vpack.c.b16 %v8423, %v8422
        %v8442 = vrot.slane %v8424, 1
        %v8443 = vrot.slane %v8425, 1
        %v8444 = vsel %vm4317, %v8442, %v8443
        %v8445 = vrot.slane %v8426, 1
        %v8446 = vsel %vm4317, %v8443, %v8445
        %v8447 = vrot.slane %v8427, 1
        %v8448 = vsel %vm4317, %v8445, %v8447
        %v8449 = vrot.slane %v8428, 1
        %v8450 = vsel %vm4317, %v8447, %v8449
        %v8451 = vrot.slane %v8429, 1
        %v8452 = vsel %vm4317, %v8449, %v8451
        %v8453 = vrot.slane %v8430, 1
        %v8454 = vsel %vm4317, %v8451, %v8453
        %v8455 = vrot.slane %v8431, 1
        %v8456 = vsel %vm4317, %v8453, %v8455
        %v8457 = vrot.slane %v8432, 1
        %v8458 = vsel %vm4317, %v8455, %v8457
        %v8459 = vrot.slane %v8433, 1
        %v8460 = vsel %vm4317, %v8457, %v8459
        %v8461 = vrot.slane %v8434, 1
        %v8462 = vsel %vm4317, %v8459, %v8461
        %v8463 = vrot.slane %v8435, 1
        %v8464 = vsel %vm4317, %v8461, %v8463
        %v8465 = vrot.slane %v8436, 1
        %v8466 = vsel %vm4317, %v8463, %v8465
        %v8467 = vrot.slane %v8437, 1
        %v8468 = vsel %vm4317, %v8465, %v8467
        %v8469 = vrot.slane %v8438, 1
        %v8470 = vsel %vm4317, %v8467, %v8469
        %v8471 = vrot.slane %v8439, 1
        %v8472 = vsel %vm4317, %v8469, %v8471
        %v8473 = vrot.slane %v8440, 1
        %v8474 = vsel %vm4317, %v8471, %v8473
        %v8475 = vrot.slane %v8441, 1
        %v8476 = vsel %vm4317, %v8473, %v8475
        %v8511 = vunpack.c.l.b16 %v8336
        %v8512 = vunpack.c.l.b16 %v8337
        %v8513 = vunpack.c.l.b16 %v8338
        %v8514 = vunpack.c.l.b16 %v8339
        %v8515 = vunpack.c.l.b16 %v8340
        %v8516 = vunpack.c.l.b16 %v8341
        %v8517 = vunpack.c.l.b16 %v8342
        %v8518 = vunpack.c.l.b16 %v8343
        %v8519 = vunpack.c.l.b16 %v8344
        %v8520 = vunpack.c.l.b16 %v8345
        %v8521 = vunpack.c.l.b16 %v8346
        %v8522 = vunpack.c.l.b16 %v8347
        %v8523 = vunpack.c.l.b16 %v8348
        %v8524 = vunpack.c.l.b16 %v8349
        %v8525 = vunpack.c.l.b16 %v8350
        %v8526 = vunpack.c.l.b16 %v8351
        %v8527 = vpack.c.b16 %v8512, %v8511
        %v8528 = vpack.c.b16 %v8514, %v8513
        %v8529 = vpack.c.b16 %v8516, %v8515
        %v8530 = vpack.c.b16 %v8518, %v8517
        %v8531 = vpack.c.b16 %v8520, %v8519
        %v8532 = vpack.c.b16 %v8522, %v8521
        %v8533 = vpack.c.b16 %v8524, %v8523
        %v8534 = vpack.c.b16 %v8526, %v8525
        %8543 = vmatpush.bf16.msra.mxu0 %v8534
        %8544 = vmatpush.bf16.msra.mxu0 %v8533
        %8545 = vmatpush.bf16.msra.mxu0 %v8532
        %8546 = vmatpush.bf16.msra.mxu0 %v8531
        %8547 = vmatpush.bf16.msra.mxu0 %v8530
        %8548 = vmatpush.bf16.msra.mxu0 %v8529
        %8549 = vmatpush.bf16.msra.mxu0 %v8528
        %8550 = vmatpush.bf16.msra.mxu0 %v8527
        %8551 = vmatmul.bf16.gmra.mxu0 %v8444
        %v8552 = vpop.f32.mrf.mxu0
        %v8553 = vadd.f32 0.0, %v8552
        %v8554 = vpop.f32.mrf.mxu0
        %v8555 = vadd.f32 0.0, %v8554
        %8556 = vmatmul.bf16.gmra.mxu0 %v8446
        %v8557 = vpop.f32.mrf.mxu0
        %v8558 = vadd.f32 0.0, %v8557
        %v8559 = vpop.f32.mrf.mxu0
        %v8560 = vadd.f32 0.0, %v8559
        %8561 = vmatmul.bf16.gmra.mxu0 %v8448
        %v8562 = vpop.f32.mrf.mxu0
        %v8563 = vadd.f32 0.0, %v8562
        %v8564 = vpop.f32.mrf.mxu0
        %v8565 = vadd.f32 0.0, %v8564
        %8566 = vmatmul.bf16.gmra.mxu0 %v8450
        %v8567 = vpop.f32.mrf.mxu0
        %v8568 = vadd.f32 0.0, %v8567
        %v8569 = vpop.f32.mrf.mxu0
        %v8570 = vadd.f32 0.0, %v8569
        %8571 = vmatmul.bf16.gmra.mxu0 %v8452
        %v8572 = vpop.f32.mrf.mxu0
        %v8573 = vadd.f32 0.0, %v8572
        %v8574 = vpop.f32.mrf.mxu0
        %v8575 = vadd.f32 0.0, %v8574
        %8576 = vmatmul.bf16.gmra.mxu0 %v8454
        %v8577 = vpop.f32.mrf.mxu0
        %v8578 = vadd.f32 0.0, %v8577
        %v8579 = vpop.f32.mrf.mxu0
        %v8580 = vadd.f32 0.0, %v8579
        %8581 = vmatmul.bf16.gmra.mxu0 %v8456
        %v8582 = vpop.f32.mrf.mxu0
        %v8583 = vadd.f32 0.0, %v8582
        %v8584 = vpop.f32.mrf.mxu0
        %v8585 = vadd.f32 0.0, %v8584
        %8586 = vmatmul.bf16.gmra.mxu0 %v8458
        %v8587 = vpop.f32.mrf.mxu0
        %v8588 = vadd.f32 0.0, %v8587
        %v8589 = vpop.f32.mrf.mxu0
        %v8590 = vadd.f32 0.0, %v8589
        %8591 = vmatmul.bf16.gmra.mxu0 %v8460
        %v8592 = vpop.f32.mrf.mxu0
        %v8593 = vadd.f32 0.0, %v8592
        %v8594 = vpop.f32.mrf.mxu0
        %v8595 = vadd.f32 0.0, %v8594
        %8596 = vmatmul.bf16.gmra.mxu0 %v8462
        %v8597 = vpop.f32.mrf.mxu0
        %v8598 = vadd.f32 0.0, %v8597
        %v8599 = vpop.f32.mrf.mxu0
        %v8600 = vadd.f32 0.0, %v8599
        %8601 = vmatmul.bf16.gmra.mxu0 %v8464
        %v8602 = vpop.f32.mrf.mxu0
        %v8603 = vadd.f32 0.0, %v8602
        %v8604 = vpop.f32.mrf.mxu0
        %v8605 = vadd.f32 0.0, %v8604
        %8606 = vmatmul.bf16.gmra.mxu0 %v8466
        %v8607 = vpop.f32.mrf.mxu0
        %v8608 = vadd.f32 0.0, %v8607
        %v8609 = vpop.f32.mrf.mxu0
        %v8610 = vadd.f32 0.0, %v8609
        %8611 = vmatmul.bf16.gmra.mxu0 %v8468
        %v8612 = vpop.f32.mrf.mxu0
        %v8613 = vadd.f32 0.0, %v8612
        %v8614 = vpop.f32.mrf.mxu0
        %v8615 = vadd.f32 0.0, %v8614
        %8616 = vmatmul.bf16.gmra.mxu0 %v8470
        %v8617 = vpop.f32.mrf.mxu0
        %v8618 = vadd.f32 0.0, %v8617
        %v8619 = vpop.f32.mrf.mxu0
        %v8620 = vadd.f32 0.0, %v8619
        %8621 = vmatmul.bf16.gmra.mxu0 %v8472
        %v8622 = vpop.f32.mrf.mxu0
        %v8623 = vadd.f32 0.0, %v8622
        %v8624 = vpop.f32.mrf.mxu0
        %v8625 = vadd.f32 0.0, %v8624
        %8626 = vmatmul.bf16.gmra.mxu0 %v8474
        %v8627 = vpop.f32.mrf.mxu0
        %v8628 = vadd.f32 0.0, %v8627
        %v8629 = vpop.f32.mrf.mxu0
        %v8630 = vadd.f32 0.0, %v8629
        %8631 = vmatmul.bf16.gmra.mxu0 %v8476
        %v8632 = vpop.f32.mrf.mxu0
        %v8633 = vadd.f32 0.0, %v8632
        %v8634 = vpop.f32.mrf.mxu0
        %v8635 = vadd.f32 0.0, %v8634
        %8636 = vmatmul.bf16.gmra.mxu0 %v8475
        %v8637 = vpop.f32.mrf.mxu0
        %v8638 = vadd.f32 0.0, %v8637
        %v8639 = vpop.f32.mrf.mxu0
        %v8640 = vadd.f32 0.0, %v8639
        %8641 = vdwg.mxu0
        %v8642 = vadd.f32 %v8263, %v8553
        %v8643 = vadd.f32 %v8264, %v8555
        %v8644 = vadd.f32 %v8265, %v8558
        %v8645 = vadd.f32 %v8266, %v8560
        %v8646 = vadd.f32 %v8267, %v8563
        %v8647 = vadd.f32 %v8268, %v8565
        %v8648 = vadd.f32 %v8269, %v8568
        %v8649 = vadd.f32 %v8270, %v8570
        %v8650 = vadd.f32 %v8271, %v8573
        %v8651 = vadd.f32 %v8272, %v8575
        %v8652 = vadd.f32 %v8273, %v8578
        %v8653 = vadd.f32 %v8274, %v8580
        %v8654 = vadd.f32 %v8275, %v8583
        %v8655 = vadd.f32 %v8276, %v8585
        %v8656 = vadd.f32 %v8277, %v8588
        %v8657 = vadd.f32 %v8278, %v8590
        %v8658 = vadd.f32 %v8279, %v8593
        %v8659 = vadd.f32 %v8280, %v8595
        %v8660 = vadd.f32 %v8281, %v8598
        %v8661 = vadd.f32 %v8282, %v8600
        %v8662 = vadd.f32 %v8283, %v8603
        %v8663 = vadd.f32 %v8284, %v8605
        %v8664 = vadd.f32 %v8285, %v8608
        %v8665 = vadd.f32 %v8286, %v8610
        %v8666 = vadd.f32 %v8287, %v8613
        %v8667 = vadd.f32 %v8288, %v8615
        %v8668 = vadd.f32 %v8289, %v8618
        %v8669 = vadd.f32 %v8290, %v8620
        %v8670 = vadd.f32 %v8291, %v8623
        %v8671 = vadd.f32 %v8292, %v8625
        %v8672 = vadd.f32 %v8293, %v8628
        %v8673 = vadd.f32 %v8294, %v8630
        %v8674 = vadd.f32 %v8295, %v8633
        %v8675 = vadd.f32 %v8296, %v8635
        %v8676 = vadd.f32 %v8297, %v8638
        %v8677 = vadd.f32 %v8298, %v8640
        %v8678 = vld [vmem:[#allocation2 + $0x8] sm:$0xe]
        %v8679 = vld [vmem:[#allocation2 + $0xc] sm:$0xf]
        %v8680 = vld [vmem:[#allocation2 + $0x10] sm:$0xf]
        %v8681 = vld [vmem:[#allocation2 + $0x14] sm:$0xf]
        %v8682 = vld [vmem:[#allocation2 + $0x18] sm:$0xf]
        %v8683 = vld [vmem:[#allocation2 + $0x1c] sm:$0xf]
        %v8684 = vld [vmem:[#allocation2 + $0x20] sm:$0xf]
        %v8685 = vld [vmem:[#allocation2 + $0x24] sm:$0xf]
        %v8686 = vld [vmem:[#allocation2 + $0x28] sm:$0xf]
        %v8687 = vld [vmem:[#allocation2 + $0x2c] sm:$0xf]
        %v8688 = vld [vmem:[#allocation2 + $0x30] sm:$0xf]
        %v8689 = vld [vmem:[#allocation2 + $0x34] sm:$0xf]
        %v8690 = vld [vmem:[#allocation2 + $0x38] sm:$0xf]
        %v8691 = vld [vmem:[#allocation2 + $0x3c] sm:$0xf]
        %v8692 = vld [vmem:[#allocation2 + $0x40] sm:$0xf]
        %v8693 = vld [vmem:[#allocation2 + $0x44] sm:$0xf]
        %v8694 = vld [vmem:[#allocation2 + $0x48] sm:$0xf]
        %v8695 = vld [vmem:[#allocation2 + $0x4c] sm:$0xf]
        %v8696 = vld [vmem:[#allocation2 + $0x50] sm:$0xf]
        %v8697 = vld [vmem:[#allocation2 + $0x54] sm:$0xf]
        %v8698 = vld [vmem:[#allocation2 + $0x58] sm:$0xf]
        %v8699 = vld [vmem:[#allocation2 + $0x5c] sm:$0xf]
        %v8700 = vld [vmem:[#allocation2 + $0x60] sm:$0xf]
        %v8701 = vld [vmem:[#allocation2 + $0x64] sm:$0xf]
        %v8702 = vld [vmem:[#allocation2 + $0x68] sm:$0xf]
        %v8703 = vld [vmem:[#allocation2 + $0x6c] sm:$0xf]
        %v8704 = vld [vmem:[#allocation2 + $0x70] sm:$0xf]
        %v8705 = vld [vmem:[#allocation2 + $0x74] sm:$0xf]
        %v8706 = vld [vmem:[#allocation2 + $0x78] sm:$0xf]
        %v8707 = vld [vmem:[#allocation2 + $0x7c] sm:$0xf]
        %v8708 = vld [vmem:[#allocation2 + $0x80] sm:$0xf]
        %v8709 = vld [vmem:[#allocation2 + $0x84] sm:$0xf]
        %v8710 = vld [vmem:[#allocation2 + $0x88] sm:$0xf]
        %v8711 = vld [vmem:[#allocation2 + $0x8c] sm:$0xf]
        %v8712 = vld [vmem:[#allocation2 + $0x90] sm:$0xf]
        %v8713 = vld [vmem:[#allocation2 + $0x94] sm:$0xf]
        %v8714 = vld [vmem:[#allocation2 + $0x98] sm:$0x1]
        %s8715 = scalar_lea.vmem [#allocation8], 256
        %v8716 = vld [vmem:[%s8715] sm:$0xf]
        %v8717 = vld [vmem:[%s8715 + $0x4] sm:$0xf]
        %v8718 = vld [vmem:[%s8715 + $0x8] sm:$0xf]
        %v8719 = vld [vmem:[%s8715 + $0xc] sm:$0xf]
        %v8720 = vld [vmem:[%s8715 + $0x10] sm:$0xf]
        %v8721 = vld [vmem:[%s8715 + $0x14] sm:$0xf]
        %v8722 = vld [vmem:[%s8715 + $0x18] sm:$0xf]
        %v8723 = vld [vmem:[%s8715 + $0x1c] sm:$0xf]
        %v8724 = vld [vmem:[%s8715 + $0x20] sm:$0xf]
        %v8725 = vld [vmem:[%s8715 + $0x24] sm:$0xf]
        %v8726 = vld [vmem:[%s8715 + $0x28] sm:$0xf]
        %v8727 = vld [vmem:[%s8715 + $0x2c] sm:$0xf]
        %v8728 = vld [vmem:[%s8715 + $0x30] sm:$0xf]
        %v8729 = vld [vmem:[%s8715 + $0x34] sm:$0xf]
        %v8730 = vld [vmem:[%s8715 + $0x38] sm:$0xf]
        %v8731 = vld [vmem:[%s8715 + $0x3c] sm:$0xf]
        %v8769 = vunpack.c.l.b16 %v8678
        %v8770 = vunpack.c.l.b16 %v8679
        %v8771 = vunpack.c.l.b16 %v8680
        %v8772 = vunpack.c.l.b16 %v8681
        %v8773 = vunpack.c.l.b16 %v8682
        %v8774 = vunpack.c.l.b16 %v8683
        %v8775 = vunpack.c.l.b16 %v8684
        %v8776 = vunpack.c.l.b16 %v8685
        %v8777 = vunpack.c.l.b16 %v8686
        %v8778 = vunpack.c.l.b16 %v8687
        %v8779 = vunpack.c.l.b16 %v8688
        %v8780 = vunpack.c.l.b16 %v8689
        %v8781 = vunpack.c.l.b16 %v8690
        %v8782 = vunpack.c.l.b16 %v8691
        %v8783 = vunpack.c.l.b16 %v8692
        %v8784 = vunpack.c.l.b16 %v8693
        %v8785 = vunpack.c.l.b16 %v8694
        %v8786 = vunpack.c.l.b16 %v8695
        %v8787 = vunpack.c.l.b16 %v8696
        %v8788 = vunpack.c.l.b16 %v8697
        %v8789 = vunpack.c.l.b16 %v8698
        %v8790 = vunpack.c.l.b16 %v8699
        %v8791 = vunpack.c.l.b16 %v8700
        %v8792 = vunpack.c.l.b16 %v8701
        %v8793 = vunpack.c.l.b16 %v8702
        %v8794 = vunpack.c.l.b16 %v8703
        %v8795 = vunpack.c.l.b16 %v8704
        %v8796 = vunpack.c.l.b16 %v8705
        %v8797 = vunpack.c.l.b16 %v8706
        %v8798 = vunpack.c.l.b16 %v8707
        %v8799 = vunpack.c.l.b16 %v8708
        %v8800 = vunpack.c.l.b16 %v8709
        %v8801 = vunpack.c.l.b16 %v8710
        %v8802 = vunpack.c.l.b16 %v8711
        %v8803 = vunpack.c.l.b16 %v8712
        %v8804 = vunpack.c.l.b16 %v8713
        %v8805 = vunpack.c.l.b16 %v8714
        %v8806 = vpack.c.b16 %v8770, %v8769
        %v8807 = vpack.c.b16 %v8772, %v8771
        %v8808 = vpack.c.b16 %v8774, %v8773
        %v8809 = vpack.c.b16 %v8776, %v8775
        %v8810 = vpack.c.b16 %v8778, %v8777
        %v8811 = vpack.c.b16 %v8780, %v8779
        %v8812 = vpack.c.b16 %v8782, %v8781
        %v8813 = vpack.c.b16 %v8784, %v8783
        %v8814 = vpack.c.b16 %v8786, %v8785
        %v8815 = vpack.c.b16 %v8788, %v8787
        %v8816 = vpack.c.b16 %v8790, %v8789
        %v8817 = vpack.c.b16 %v8792, %v8791
        %v8818 = vpack.c.b16 %v8794, %v8793
        %v8819 = vpack.c.b16 %v8796, %v8795
        %v8820 = vpack.c.b16 %v8798, %v8797
        %v8821 = vpack.c.b16 %v8800, %v8799
        %v8822 = vpack.c.b16 %v8802, %v8801
        %v8823 = vpack.c.b16 %v8804, %v8803
        %v8824 = vpack.c.b16 %v8805, %v8805
        %v8826 = vshrl.u32 %v8806, 16
        %v8828 = vrot.slane %v8826, 1
        %v8829 = vshll.u32 %v8806, 16
        %v8831 = vrot.slane %v8829, 2
        %v8832 = vor.u32 %v8828, %v8831
        %v8834 = vshrl.u32 %v8807, 16
        %v8836 = vrot.slane %v8834, 1
        %v8837 = vshll.u32 %v8807, 16
        %v8839 = vrot.slane %v8837, 2
        %v8840 = vor.u32 %v8836, %v8839
        %v8841 = vsel %vm5080, %v8832, %v8840
        %v8843 = vshrl.u32 %v8808, 16
        %v8845 = vrot.slane %v8843, 1
        %v8846 = vshll.u32 %v8808, 16
        %v8848 = vrot.slane %v8846, 2
        %v8849 = vor.u32 %v8845, %v8848
        %v8850 = vsel %vm5080, %v8840, %v8849
        %v8852 = vshrl.u32 %v8809, 16
        %v8854 = vrot.slane %v8852, 1
        %v8855 = vshll.u32 %v8809, 16
        %v8857 = vrot.slane %v8855, 2
        %v8858 = vor.u32 %v8854, %v8857
        %v8859 = vsel %vm5080, %v8849, %v8858
        %v8861 = vshrl.u32 %v8810, 16
        %v8863 = vrot.slane %v8861, 1
        %v8864 = vshll.u32 %v8810, 16
        %v8866 = vrot.slane %v8864, 2
        %v8867 = vor.u32 %v8863, %v8866
        %v8868 = vsel %vm5080, %v8858, %v8867
        %v8870 = vshrl.u32 %v8811, 16
        %v8872 = vrot.slane %v8870, 1
        %v8873 = vshll.u32 %v8811, 16
        %v8875 = vrot.slane %v8873, 2
        %v8876 = vor.u32 %v8872, %v8875
        %v8877 = vsel %vm5080, %v8867, %v8876
        %v8879 = vshrl.u32 %v8812, 16
        %v8881 = vrot.slane %v8879, 1
        %v8882 = vshll.u32 %v8812, 16
        %v8884 = vrot.slane %v8882, 2
        %v8885 = vor.u32 %v8881, %v8884
        %v8886 = vsel %vm5080, %v8876, %v8885
        %v8888 = vshrl.u32 %v8813, 16
        %v8890 = vrot.slane %v8888, 1
        %v8891 = vshll.u32 %v8813, 16
        %v8893 = vrot.slane %v8891, 2
        %v8894 = vor.u32 %v8890, %v8893
        %v8895 = vsel %vm5080, %v8885, %v8894
        %v8897 = vshrl.u32 %v8814, 16
        %v8899 = vrot.slane %v8897, 1
        %v8900 = vshll.u32 %v8814, 16
        %v8902 = vrot.slane %v8900, 2
        %v8903 = vor.u32 %v8899, %v8902
        %v8904 = vsel %vm5080, %v8894, %v8903
        %v8906 = vshrl.u32 %v8815, 16
        %v8908 = vrot.slane %v8906, 1
        %v8909 = vshll.u32 %v8815, 16
        %v8911 = vrot.slane %v8909, 2
        %v8912 = vor.u32 %v8908, %v8911
        %v8913 = vsel %vm5080, %v8903, %v8912
        %v8915 = vshrl.u32 %v8816, 16
        %v8917 = vrot.slane %v8915, 1
        %v8918 = vshll.u32 %v8816, 16
        %v8920 = vrot.slane %v8918, 2
        %v8921 = vor.u32 %v8917, %v8920
        %v8922 = vsel %vm5080, %v8912, %v8921
        %v8924 = vshrl.u32 %v8817, 16
        %v8926 = vrot.slane %v8924, 1
        %v8927 = vshll.u32 %v8817, 16
        %v8929 = vrot.slane %v8927, 2
        %v8930 = vor.u32 %v8926, %v8929
        %v8931 = vsel %vm5080, %v8921, %v8930
        %v8933 = vshrl.u32 %v8818, 16
        %v8935 = vrot.slane %v8933, 1
        %v8936 = vshll.u32 %v8818, 16
        %v8938 = vrot.slane %v8936, 2
        %v8939 = vor.u32 %v8935, %v8938
        %v8940 = vsel %vm5080, %v8930, %v8939
        %v8942 = vshrl.u32 %v8819, 16
        %v8944 = vrot.slane %v8942, 1
        %v8945 = vshll.u32 %v8819, 16
        %v8947 = vrot.slane %v8945, 2
        %v8948 = vor.u32 %v8944, %v8947
        %v8949 = vsel %vm5080, %v8939, %v8948
        %v8951 = vshrl.u32 %v8820, 16
        %v8953 = vrot.slane %v8951, 1
        %v8954 = vshll.u32 %v8820, 16
        %v8956 = vrot.slane %v8954, 2
        %v8957 = vor.u32 %v8953, %v8956
        %v8958 = vsel %vm5080, %v8948, %v8957
        %v8960 = vshrl.u32 %v8821, 16
        %v8962 = vrot.slane %v8960, 1
        %v8963 = vshll.u32 %v8821, 16
        %v8965 = vrot.slane %v8963, 2
        %v8966 = vor.u32 %v8962, %v8965
        %v8967 = vsel %vm5080, %v8957, %v8966
        %v8969 = vshrl.u32 %v8822, 16
        %v8971 = vrot.slane %v8969, 1
        %v8972 = vshll.u32 %v8822, 16
        %v8974 = vrot.slane %v8972, 2
        %v8975 = vor.u32 %v8971, %v8974
        %v8976 = vsel %vm5080, %v8966, %v8975
        %v8978 = vshrl.u32 %v8823, 16
        %v8980 = vrot.slane %v8978, 1
        %v8981 = vshll.u32 %v8823, 16
        %v8983 = vrot.slane %v8981, 2
        %v8984 = vor.u32 %v8980, %v8983
        %v8985 = vsel %vm5080, %v8975, %v8984
        %v8987 = vshll.u32 %v8824, 16
        %v8989 = vrot.slane %v8987, 2
        %v8990 = vsel %vm5080, %v8984, %v8989
        %v9025 = vunpack.c.l.b16 %v8716
        %v9026 = vunpack.c.l.b16 %v8717
        %v9027 = vunpack.c.l.b16 %v8718
        %v9028 = vunpack.c.l.b16 %v8719
        %v9029 = vunpack.c.l.b16 %v8720
        %v9030 = vunpack.c.l.b16 %v8721
        %v9031 = vunpack.c.l.b16 %v8722
        %v9032 = vunpack.c.l.b16 %v8723
        %v9033 = vunpack.c.l.b16 %v8724
        %v9034 = vunpack.c.l.b16 %v8725
        %v9035 = vunpack.c.l.b16 %v8726
        %v9036 = vunpack.c.l.b16 %v8727
        %v9037 = vunpack.c.l.b16 %v8728
        %v9038 = vunpack.c.l.b16 %v8729
        %v9039 = vunpack.c.l.b16 %v8730
        %v9040 = vunpack.c.l.b16 %v8731
        %v9041 = vpack.c.b16 %v9026, %v9025
        %v9042 = vpack.c.b16 %v9028, %v9027
        %v9043 = vpack.c.b16 %v9030, %v9029
        %v9044 = vpack.c.b16 %v9032, %v9031
        %v9045 = vpack.c.b16 %v9034, %v9033
        %v9046 = vpack.c.b16 %v9036, %v9035
        %v9047 = vpack.c.b16 %v9038, %v9037
        %v9048 = vpack.c.b16 %v9040, %v9039
        %9057 = vmatpush.bf16.msra.mxu0 %v9048
        %9058 = vmatpush.bf16.msra.mxu0 %v9047
        %9059 = vmatpush.bf16.msra.mxu0 %v9046
        %9060 = vmatpush.bf16.msra.mxu0 %v9045
        %9061 = vmatpush.bf16.msra.mxu0 %v9044
        %9062 = vmatpush.bf16.msra.mxu0 %v9043
        %9063 = vmatpush.bf16.msra.mxu0 %v9042
        %9064 = vmatpush.bf16.msra.mxu0 %v9041
        %9065 = vmatmul.bf16.gmra.mxu0 %v8841
        %v9066 = vpop.f32.mrf.mxu0
        %v9067 = vadd.f32 0.0, %v9066
        %v9068 = vpop.f32.mrf.mxu0
        %v9069 = vadd.f32 0.0, %v9068
        %9070 = vmatmul.bf16.gmra.mxu0 %v8850
        %v9071 = vpop.f32.mrf.mxu0
        %v9072 = vadd.f32 0.0, %v9071
        %v9073 = vpop.f32.mrf.mxu0
        %v9074 = vadd.f32 0.0, %v9073
        %9075 = vmatmul.bf16.gmra.mxu0 %v8859
        %v9076 = vpop.f32.mrf.mxu0
        %v9077 = vadd.f32 0.0, %v9076
        %v9078 = vpop.f32.mrf.mxu0
        %v9079 = vadd.f32 0.0, %v9078
        %9080 = vmatmul.bf16.gmra.mxu0 %v8868
        %v9081 = vpop.f32.mrf.mxu0
        %v9082 = vadd.f32 0.0, %v9081
        %v9083 = vpop.f32.mrf.mxu0
        %v9084 = vadd.f32 0.0, %v9083
        %9085 = vmatmul.bf16.gmra.mxu0 %v8877
        %v9086 = vpop.f32.mrf.mxu0
        %v9087 = vadd.f32 0.0, %v9086
        %v9088 = vpop.f32.mrf.mxu0
        %v9089 = vadd.f32 0.0, %v9088
        %9090 = vmatmul.bf16.gmra.mxu0 %v8886
        %v9091 = vpop.f32.mrf.mxu0
        %v9092 = vadd.f32 0.0, %v9091
        %v9093 = vpop.f32.mrf.mxu0
        %v9094 = vadd.f32 0.0, %v9093
        %9095 = vmatmul.bf16.gmra.mxu0 %v8895
        %v9096 = vpop.f32.mrf.mxu0
        %v9097 = vadd.f32 0.0, %v9096
        %v9098 = vpop.f32.mrf.mxu0
        %v9099 = vadd.f32 0.0, %v9098
        %9100 = vmatmul.bf16.gmra.mxu0 %v8904
        %v9101 = vpop.f32.mrf.mxu0
        %v9102 = vadd.f32 0.0, %v9101
        %v9103 = vpop.f32.mrf.mxu0
        %v9104 = vadd.f32 0.0, %v9103
        %9105 = vmatmul.bf16.gmra.mxu0 %v8913
        %v9106 = vpop.f32.mrf.mxu0
        %v9107 = vadd.f32 0.0, %v9106
        %v9108 = vpop.f32.mrf.mxu0
        %v9109 = vadd.f32 0.0, %v9108
        %9110 = vmatmul.bf16.gmra.mxu0 %v8922
        %v9111 = vpop.f32.mrf.mxu0
        %v9112 = vadd.f32 0.0, %v9111
        %v9113 = vpop.f32.mrf.mxu0
        %v9114 = vadd.f32 0.0, %v9113
        %9115 = vmatmul.bf16.gmra.mxu0 %v8931
        %v9116 = vpop.f32.mrf.mxu0
        %v9117 = vadd.f32 0.0, %v9116
        %v9118 = vpop.f32.mrf.mxu0
        %v9119 = vadd.f32 0.0, %v9118
        %9120 = vmatmul.bf16.gmra.mxu0 %v8940
        %v9121 = vpop.f32.mrf.mxu0
        %v9122 = vadd.f32 0.0, %v9121
        %v9123 = vpop.f32.mrf.mxu0
        %v9124 = vadd.f32 0.0, %v9123
        %9125 = vmatmul.bf16.gmra.mxu0 %v8949
        %v9126 = vpop.f32.mrf.mxu0
        %v9127 = vadd.f32 0.0, %v9126
        %v9128 = vpop.f32.mrf.mxu0
        %v9129 = vadd.f32 0.0, %v9128
        %9130 = vmatmul.bf16.gmra.mxu0 %v8958
        %v9131 = vpop.f32.mrf.mxu0
        %v9132 = vadd.f32 0.0, %v9131
        %v9133 = vpop.f32.mrf.mxu0
        %v9134 = vadd.f32 0.0, %v9133
        %9135 = vmatmul.bf16.gmra.mxu0 %v8967
        %v9136 = vpop.f32.mrf.mxu0
        %v9137 = vadd.f32 0.0, %v9136
        %v9138 = vpop.f32.mrf.mxu0
        %v9139 = vadd.f32 0.0, %v9138
        %9140 = vmatmul.bf16.gmra.mxu0 %v8976
        %v9141 = vpop.f32.mrf.mxu0
        %v9142 = vadd.f32 0.0, %v9141
        %v9143 = vpop.f32.mrf.mxu0
        %v9144 = vadd.f32 0.0, %v9143
        %9145 = vmatmul.bf16.gmra.mxu0 %v8985
        %v9146 = vpop.f32.mrf.mxu0
        %v9147 = vadd.f32 0.0, %v9146
        %v9148 = vpop.f32.mrf.mxu0
        %v9149 = vadd.f32 0.0, %v9148
        %9150 = vmatmul.bf16.gmra.mxu0 %v8990
        %v9151 = vpop.f32.mrf.mxu0
        %v9152 = vadd.f32 0.0, %v9151
        %v9153 = vpop.f32.mrf.mxu0
        %v9154 = vadd.f32 0.0, %v9153
        %9155 = vdwg.mxu0
        %v9156 = vadd.f32 %v8642, %v9067
        %v9157 = vadd.f32 %v8643, %v9069
        %v9158 = vadd.f32 %v8644, %v9072
        %v9159 = vadd.f32 %v8645, %v9074
        %v9160 = vadd.f32 %v8646, %v9077
        %v9161 = vadd.f32 %v8647, %v9079
        %v9162 = vadd.f32 %v8648, %v9082
        %v9163 = vadd.f32 %v8649, %v9084
        %v9164 = vadd.f32 %v8650, %v9087
        %v9165 = vadd.f32 %v8651, %v9089
        %v9166 = vadd.f32 %v8652, %v9092
        %v9167 = vadd.f32 %v8653, %v9094
        %v9168 = vadd.f32 %v8654, %v9097
        %v9169 = vadd.f32 %v8655, %v9099
        %v9170 = vadd.f32 %v8656, %v9102
        %v9171 = vadd.f32 %v8657, %v9104
        %v9172 = vadd.f32 %v8658, %v9107
        %v9173 = vadd.f32 %v8659, %v9109
        %v9174 = vadd.f32 %v8660, %v9112
        %v9175 = vadd.f32 %v8661, %v9114
        %v9176 = vadd.f32 %v8662, %v9117
        %v9177 = vadd.f32 %v8663, %v9119
        %v9178 = vadd.f32 %v8664, %v9122
        %v9179 = vadd.f32 %v8665, %v9124
        %v9180 = vadd.f32 %v8666, %v9127
        %v9181 = vadd.f32 %v8667, %v9129
        %v9182 = vadd.f32 %v8668, %v9132
        %v9183 = vadd.f32 %v8669, %v9134
        %v9184 = vadd.f32 %v8670, %v9137
        %v9185 = vadd.f32 %v8671, %v9139
        %v9186 = vadd.f32 %v8672, %v9142
        %v9187 = vadd.f32 %v8673, %v9144
        %v9188 = vadd.f32 %v8674, %v9147
        %v9189 = vadd.f32 %v8675, %v9149
        %v9190 = vadd.f32 %v8676, %v9152
        %v9191 = vadd.f32 %v8677, %v9154
        %v9192 = vld [vmem:[#allocation2 + $0x8] sm:$0xc]
        %s9193 = scalar_lea.vmem [#allocation8], 320
        %v9194 = vld [vmem:[%s9193] sm:$0xf]
        %v9195 = vld [vmem:[%s9193 + $0x4] sm:$0xf]
        %v9196 = vld [vmem:[%s9193 + $0x8] sm:$0xf]
        %v9197 = vld [vmem:[%s9193 + $0xc] sm:$0xf]
        %v9198 = vld [vmem:[%s9193 + $0x10] sm:$0xf]
        %v9199 = vld [vmem:[%s9193 + $0x14] sm:$0xf]
        %v9200 = vld [vmem:[%s9193 + $0x18] sm:$0xf]
        %v9201 = vld [vmem:[%s9193 + $0x1c] sm:$0xf]
        %v9202 = vld [vmem:[%s9193 + $0x20] sm:$0xf]
        %v9203 = vld [vmem:[%s9193 + $0x24] sm:$0xf]
        %v9204 = vld [vmem:[%s9193 + $0x28] sm:$0xf]
        %v9205 = vld [vmem:[%s9193 + $0x2c] sm:$0xf]
        %v9206 = vld [vmem:[%s9193 + $0x30] sm:$0xf]
        %v9207 = vld [vmem:[%s9193 + $0x34] sm:$0xf]
        %v9208 = vld [vmem:[%s9193 + $0x38] sm:$0xf]
        %v9209 = vld [vmem:[%s9193 + $0x3c] sm:$0xf]
        %v9211 = vunpack.c.l.b16 %v9192
        %v9212 = vpack.c.b16 %v8770, %v9211
        %v9213 = vrot.slane %v9212, 2
        %v9214 = vrot.slane %v8807, 2
        %v9215 = vsel %vm5469, %v9213, %v9214
        %v9216 = vrot.slane %v8808, 2
        %v9217 = vsel %vm5469, %v9214, %v9216
        %v9218 = vrot.slane %v8809, 2
        %v9219 = vsel %vm5469, %v9216, %v9218
        %v9220 = vrot.slane %v8810, 2
        %v9221 = vsel %vm5469, %v9218, %v9220
        %v9222 = vrot.slane %v8811, 2
        %v9223 = vsel %vm5469, %v9220, %v9222
        %v9224 = vrot.slane %v8812, 2
        %v9225 = vsel %vm5469, %v9222, %v9224
        %v9226 = vrot.slane %v8813, 2
        %v9227 = vsel %vm5469, %v9224, %v9226
        %v9228 = vrot.slane %v8814, 2
        %v9229 = vsel %vm5469, %v9226, %v9228
        %v9230 = vrot.slane %v8815, 2
        %v9231 = vsel %vm5469, %v9228, %v9230
        %v9232 = vrot.slane %v8816, 2
        %v9233 = vsel %vm5469, %v9230, %v9232
        %v9234 = vrot.slane %v8817, 2
        %v9235 = vsel %vm5469, %v9232, %v9234
        %v9236 = vrot.slane %v8818, 2
        %v9237 = vsel %vm5469, %v9234, %v9236
        %v9238 = vrot.slane %v8819, 2
        %v9239 = vsel %vm5469, %v9236, %v9238
        %v9240 = vrot.slane %v8820, 2
        %v9241 = vsel %vm5469, %v9238, %v9240
        %v9242 = vrot.slane %v8821, 2
        %v9243 = vsel %vm5469, %v9240, %v9242
        %v9244 = vrot.slane %v8822, 2
        %v9245 = vsel %vm5469, %v9242, %v9244
        %v9246 = vrot.slane %v8823, 2
        %v9247 = vsel %vm5469, %v9244, %v9246
        %v9248 = vrot.slane %v8824, 2
        %v9249 = vsel %vm5469, %v9246, %v9248
        %v9284 = vunpack.c.l.b16 %v9194
        %v9285 = vunpack.c.l.b16 %v9195
        %v9286 = vunpack.c.l.b16 %v9196
        %v9287 = vunpack.c.l.b16 %v9197
        %v9288 = vunpack.c.l.b16 %v9198
        %v9289 = vunpack.c.l.b16 %v9199
        %v9290 = vunpack.c.l.b16 %v9200
        %v9291 = vunpack.c.l.b16 %v9201
        %v9292 = vunpack.c.l.b16 %v9202
        %v9293 = vunpack.c.l.b16 %v9203
        %v9294 = vunpack.c.l.b16 %v9204
        %v9295 = vunpack.c.l.b16 %v9205
        %v9296 = vunpack.c.l.b16 %v9206
        %v9297 = vunpack.c.l.b16 %v9207
        %v9298 = vunpack.c.l.b16 %v9208
        %v9299 = vunpack.c.l.b16 %v9209
        %v9300 = vpack.c.b16 %v9285, %v9284
        %v9301 = vpack.c.b16 %v9287, %v9286
        %v9302 = vpack.c.b16 %v9289, %v9288
        %v9303 = vpack.c.b16 %v9291, %v9290
        %v9304 = vpack.c.b16 %v9293, %v9292
        %v9305 = vpack.c.b16 %v9295, %v9294
        %v9306 = vpack.c.b16 %v9297, %v9296
        %v9307 = vpack.c.b16 %v9299, %v9298
        %9316 = vmatpush.bf16.msra.mxu0 %v9307
        %9317 = vmatpush.bf16.msra.mxu0 %v9306
        %9318 = vmatpush.bf16.msra.mxu0 %v9305
        %9319 = vmatpush.bf16.msra.mxu0 %v9304
        %9320 = vmatpush.bf16.msra.mxu0 %v9303
        %9321 = vmatpush.bf16.msra.mxu0 %v9302
        %9322 = vmatpush.bf16.msra.mxu0 %v9301
        %9323 = vmatpush.bf16.msra.mxu0 %v9300
        %9324 = vmatmul.bf16.gmra.mxu0 %v9215
        %v9325 = vpop.f32.mrf.mxu0
        %v9326 = vadd.f32 0.0, %v9325
        %v9327 = vpop.f32.mrf.mxu0
        %v9328 = vadd.f32 0.0, %v9327
        %9329 = vmatmul.bf16.gmra.mxu0 %v9217
        %v9330 = vpop.f32.mrf.mxu0
        %v9331 = vadd.f32 0.0, %v9330
        %v9332 = vpop.f32.mrf.mxu0
        %v9333 = vadd.f32 0.0, %v9332
        %9334 = vmatmul.bf16.gmra.mxu0 %v9219
        %v9335 = vpop.f32.mrf.mxu0
        %v9336 = vadd.f32 0.0, %v9335
        %v9337 = vpop.f32.mrf.mxu0
        %v9338 = vadd.f32 0.0, %v9337
        %9339 = vmatmul.bf16.gmra.mxu0 %v9221
        %v9340 = vpop.f32.mrf.mxu0
        %v9341 = vadd.f32 0.0, %v9340
        %v9342 = vpop.f32.mrf.mxu0
        %v9343 = vadd.f32 0.0, %v9342
        %9344 = vmatmul.bf16.gmra.mxu0 %v9223
        %v9345 = vpop.f32.mrf.mxu0
        %v9346 = vadd.f32 0.0, %v9345
        %v9347 = vpop.f32.mrf.mxu0
        %v9348 = vadd.f32 0.0, %v9347
        %9349 = vmatmul.bf16.gmra.mxu0 %v9225
        %v9350 = vpop.f32.mrf.mxu0
        %v9351 = vadd.f32 0.0, %v9350
        %v9352 = vpop.f32.mrf.mxu0
        %v9353 = vadd.f32 0.0, %v9352
        %9354 = vmatmul.bf16.gmra.mxu0 %v9227
        %v9355 = vpop.f32.mrf.mxu0
        %v9356 = vadd.f32 0.0, %v9355
        %v9357 = vpop.f32.mrf.mxu0
        %v9358 = vadd.f32 0.0, %v9357
        %9359 = vmatmul.bf16.gmra.mxu0 %v9229
        %v9360 = vpop.f32.mrf.mxu0
        %v9361 = vadd.f32 0.0, %v9360
        %v9362 = vpop.f32.mrf.mxu0
        %v9363 = vadd.f32 0.0, %v9362
        %9364 = vmatmul.bf16.gmra.mxu0 %v9231
        %v9365 = vpop.f32.mrf.mxu0
        %v9366 = vadd.f32 0.0, %v9365
        %v9367 = vpop.f32.mrf.mxu0
        %v9368 = vadd.f32 0.0, %v9367
        %9369 = vmatmul.bf16.gmra.mxu0 %v9233
        %v9370 = vpop.f32.mrf.mxu0
        %v9371 = vadd.f32 0.0, %v9370
        %v9372 = vpop.f32.mrf.mxu0
        %v9373 = vadd.f32 0.0, %v9372
        %9374 = vmatmul.bf16.gmra.mxu0 %v9235
        %v9375 = vpop.f32.mrf.mxu0
        %v9376 = vadd.f32 0.0, %v9375
        %v9377 = vpop.f32.mrf.mxu0
        %v9378 = vadd.f32 0.0, %v9377
        %9379 = vmatmul.bf16.gmra.mxu0 %v9237
        %v9380 = vpop.f32.mrf.mxu0
        %v9381 = vadd.f32 0.0, %v9380
        %v9382 = vpop.f32.mrf.mxu0
        %v9383 = vadd.f32 0.0, %v9382
        %9384 = vmatmul.bf16.gmra.mxu0 %v9239
        %v9385 = vpop.f32.mrf.mxu0
        %v9386 = vadd.f32 0.0, %v9385
        %v9387 = vpop.f32.mrf.mxu0
        %v9388 = vadd.f32 0.0, %v9387
        %9389 = vmatmul.bf16.gmra.mxu0 %v9241
        %v9390 = vpop.f32.mrf.mxu0
        %v9391 = vadd.f32 0.0, %v9390
        %v9392 = vpop.f32.mrf.mxu0
        %v9393 = vadd.f32 0.0, %v9392
        %9394 = vmatmul.bf16.gmra.mxu0 %v9243
        %v9395 = vpop.f32.mrf.mxu0
        %v9396 = vadd.f32 0.0, %v9395
        %v9397 = vpop.f32.mrf.mxu0
        %v9398 = vadd.f32 0.0, %v9397
        %9399 = vmatmul.bf16.gmra.mxu0 %v9245
        %v9400 = vpop.f32.mrf.mxu0
        %v9401 = vadd.f32 0.0, %v9400
        %v9402 = vpop.f32.mrf.mxu0
        %v9403 = vadd.f32 0.0, %v9402
        %9404 = vmatmul.bf16.gmra.mxu0 %v9247
        %v9405 = vpop.f32.mrf.mxu0
        %v9406 = vadd.f32 0.0, %v9405
        %v9407 = vpop.f32.mrf.mxu0
        %v9408 = vadd.f32 0.0, %v9407
        %9409 = vmatmul.bf16.gmra.mxu0 %v9249
        %v9410 = vpop.f32.mrf.mxu0
        %v9411 = vadd.f32 0.0, %v9410
        %v9412 = vpop.f32.mrf.mxu0
        %v9413 = vadd.f32 0.0, %v9412
        %9414 = vdwg.mxu0
        %v9415 = vadd.f32 %v9156, %v9326
        %v9416 = vadd.f32 %v9157, %v9328
        %v9417 = vadd.f32 %v9158, %v9331
        %v9418 = vadd.f32 %v9159, %v9333
        %v9419 = vadd.f32 %v9160, %v9336
        %v9420 = vadd.f32 %v9161, %v9338
        %v9421 = vadd.f32 %v9162, %v9341
        %v9422 = vadd.f32 %v9163, %v9343
        %v9423 = vadd.f32 %v9164, %v9346
        %v9424 = vadd.f32 %v9165, %v9348
        %v9425 = vadd.f32 %v9166, %v9351
        %v9426 = vadd.f32 %v9167, %v9353
        %v9427 = vadd.f32 %v9168, %v9356
        %v9428 = vadd.f32 %v9169, %v9358
        %v9429 = vadd.f32 %v9170, %v9361
        %v9430 = vadd.f32 %v9171, %v9363
        %v9431 = vadd.f32 %v9172, %v9366
        %v9432 = vadd.f32 %v9173, %v9368
        %v9433 = vadd.f32 %v9174, %v9371
        %v9434 = vadd.f32 %v9175, %v9373
        %v9435 = vadd.f32 %v9176, %v9376
        %v9436 = vadd.f32 %v9177, %v9378
        %v9437 = vadd.f32 %v9178, %v9381
        %v9438 = vadd.f32 %v9179, %v9383
        %v9439 = vadd.f32 %v9180, %v9386
        %v9440 = vadd.f32 %v9181, %v9388
        %v9441 = vadd.f32 %v9182, %v9391
        %v9442 = vadd.f32 %v9183, %v9393
        %v9443 = vadd.f32 %v9184, %v9396
        %v9444 = vadd.f32 %v9185, %v9398
        %v9445 = vadd.f32 %v9186, %v9401
        %v9446 = vadd.f32 %v9187, %v9403
        %v9447 = vadd.f32 %v9188, %v9406
        %v9448 = vadd.f32 %v9189, %v9408
        %v9449 = vadd.f32 %v9190, %v9411
        %v9450 = vadd.f32 %v9191, %v9413
        %v9451 = vld [vmem:[#allocation2 + $0x10] sm:$0xc]
        %v9452 = vld [vmem:[#allocation2 + $0x14] sm:$0xf]
        %v9453 = vld [vmem:[#allocation2 + $0x18] sm:$0xf]
        %v9454 = vld [vmem:[#allocation2 + $0x1c] sm:$0xf]
        %v9455 = vld [vmem:[#allocation2 + $0x20] sm:$0xf]
        %v9456 = vld [vmem:[#allocation2 + $0x24] sm:$0xf]
        %v9457 = vld [vmem:[#allocation2 + $0x28] sm:$0xf]
        %v9458 = vld [vmem:[#allocation2 + $0x2c] sm:$0xf]
        %v9459 = vld [vmem:[#allocation2 + $0x30] sm:$0xf]
        %v9460 = vld [vmem:[#allocation2 + $0x34] sm:$0xf]
        %v9461 = vld [vmem:[#allocation2 + $0x38] sm:$0xf]
        %v9462 = vld [vmem:[#allocation2 + $0x3c] sm:$0xf]
        %v9463 = vld [vmem:[#allocation2 + $0x40] sm:$0xf]
        %v9464 = vld [vmem:[#allocation2 + $0x44] sm:$0xf]
        %v9465 = vld [vmem:[#allocation2 + $0x48] sm:$0xf]
        %v9466 = vld [vmem:[#allocation2 + $0x4c] sm:$0xf]
        %v9467 = vld [vmem:[#allocation2 + $0x50] sm:$0xf]
        %v9468 = vld [vmem:[#allocation2 + $0x54] sm:$0xf]
        %v9469 = vld [vmem:[#allocation2 + $0x58] sm:$0xf]
        %v9470 = vld [vmem:[#allocation2 + $0x5c] sm:$0xf]
        %v9471 = vld [vmem:[#allocation2 + $0x60] sm:$0xf]
        %v9472 = vld [vmem:[#allocation2 + $0x64] sm:$0xf]
        %v9473 = vld [vmem:[#allocation2 + $0x68] sm:$0xf]
        %v9474 = vld [vmem:[#allocation2 + $0x6c] sm:$0xf]
        %v9475 = vld [vmem:[#allocation2 + $0x70] sm:$0xf]
        %v9476 = vld [vmem:[#allocation2 + $0x74] sm:$0xf]
        %v9477 = vld [vmem:[#allocation2 + $0x78] sm:$0xf]
        %v9478 = vld [vmem:[#allocation2 + $0x7c] sm:$0xf]
        %v9479 = vld [vmem:[#allocation2 + $0x80] sm:$0xf]
        %v9480 = vld [vmem:[#allocation2 + $0x84] sm:$0xf]
        %v9481 = vld [vmem:[#allocation2 + $0x88] sm:$0xf]
        %v9482 = vld [vmem:[#allocation2 + $0x8c] sm:$0xf]
        %v9483 = vld [vmem:[#allocation2 + $0x90] sm:$0xf]
        %v9484 = vld [vmem:[#allocation2 + $0x94] sm:$0xf]
        %v9485 = vld [vmem:[#allocation2 + $0x98] sm:$0xf]
        %v9486 = vld [vmem:[#allocation2 + $0x9c] sm:$0xf]
        %v9487 = vld [vmem:[#allocation2 + $0xa0] sm:$0x1]
        %s9488 = scalar_lea.vmem [#allocation8], 384
        %v9489 = vld [vmem:[%s9488] sm:$0xf]
        %v9490 = vld [vmem:[%s9488 + $0x4] sm:$0xf]
        %v9491 = vld [vmem:[%s9488 + $0x8] sm:$0xf]
        %v9492 = vld [vmem:[%s9488 + $0xc] sm:$0xf]
        %v9493 = vld [vmem:[%s9488 + $0x10] sm:$0xf]
        %v9494 = vld [vmem:[%s9488 + $0x14] sm:$0xf]
        %v9495 = vld [vmem:[%s9488 + $0x18] sm:$0xf]
        %v9496 = vld [vmem:[%s9488 + $0x1c] sm:$0xf]
        %v9497 = vld [vmem:[%s9488 + $0x20] sm:$0xf]
        %v9498 = vld [vmem:[%s9488 + $0x24] sm:$0xf]
        %v9499 = vld [vmem:[%s9488 + $0x28] sm:$0xf]
        %v9500 = vld [vmem:[%s9488 + $0x2c] sm:$0xf]
        %v9501 = vld [vmem:[%s9488 + $0x30] sm:$0xf]
        %v9502 = vld [vmem:[%s9488 + $0x34] sm:$0xf]
        %v9503 = vld [vmem:[%s9488 + $0x38] sm:$0xf]
        %v9504 = vld [vmem:[%s9488 + $0x3c] sm:$0xf]
        %v9542 = vunpack.c.l.b16 %v9451
        %v9543 = vunpack.c.l.b16 %v9452
        %v9544 = vunpack.c.l.b16 %v9453
        %v9545 = vunpack.c.l.b16 %v9454
        %v9546 = vunpack.c.l.b16 %v9455
        %v9547 = vunpack.c.l.b16 %v9456
        %v9548 = vunpack.c.l.b16 %v9457
        %v9549 = vunpack.c.l.b16 %v9458
        %v9550 = vunpack.c.l.b16 %v9459
        %v9551 = vunpack.c.l.b16 %v9460
        %v9552 = vunpack.c.l.b16 %v9461
        %v9553 = vunpack.c.l.b16 %v9462
        %v9554 = vunpack.c.l.b16 %v9463
        %v9555 = vunpack.c.l.b16 %v9464
        %v9556 = vunpack.c.l.b16 %v9465
        %v9557 = vunpack.c.l.b16 %v9466
        %v9558 = vunpack.c.l.b16 %v9467
        %v9559 = vunpack.c.l.b16 %v9468
        %v9560 = vunpack.c.l.b16 %v9469
        %v9561 = vunpack.c.l.b16 %v9470
        %v9562 = vunpack.c.l.b16 %v9471
        %v9563 = vunpack.c.l.b16 %v9472
        %v9564 = vunpack.c.l.b16 %v9473
        %v9565 = vunpack.c.l.b16 %v9474
        %v9566 = vunpack.c.l.b16 %v9475
        %v9567 = vunpack.c.l.b16 %v9476
        %v9568 = vunpack.c.l.b16 %v9477
        %v9569 = vunpack.c.l.b16 %v9478
        %v9570 = vunpack.c.l.b16 %v9479
        %v9571 = vunpack.c.l.b16 %v9480
        %v9572 = vunpack.c.l.b16 %v9481
        %v9573 = vunpack.c.l.b16 %v9482
        %v9574 = vunpack.c.l.b16 %v9483
        %v9575 = vunpack.c.l.b16 %v9484
        %v9576 = vunpack.c.l.b16 %v9485
        %v9577 = vunpack.c.l.b16 %v9486
        %v9578 = vunpack.c.l.b16 %v9487
        %v9579 = vpack.c.b16 %v9543, %v9542
        %v9580 = vpack.c.b16 %v9545, %v9544
        %v9581 = vpack.c.b16 %v9547, %v9546
        %v9582 = vpack.c.b16 %v9549, %v9548
        %v9583 = vpack.c.b16 %v9551, %v9550
        %v9584 = vpack.c.b16 %v9553, %v9552
        %v9585 = vpack.c.b16 %v9555, %v9554
        %v9586 = vpack.c.b16 %v9557, %v9556
        %v9587 = vpack.c.b16 %v9559, %v9558
        %v9588 = vpack.c.b16 %v9561, %v9560
        %v9589 = vpack.c.b16 %v9563, %v9562
        %v9590 = vpack.c.b16 %v9565, %v9564
        %v9591 = vpack.c.b16 %v9567, %v9566
        %v9592 = vpack.c.b16 %v9569, %v9568
        %v9593 = vpack.c.b16 %v9571, %v9570
        %v9594 = vpack.c.b16 %v9573, %v9572
        %v9595 = vpack.c.b16 %v9575, %v9574
        %v9596 = vpack.c.b16 %v9577, %v9576
        %v9597 = vpack.c.b16 %v9578, %v9578
        %v9598 = vrot.slane %v9579, 2
        %v9599 = vrot.slane %v9580, 2
        %v9600 = vsel %vm5469, %v9598, %v9599
        %v9601 = vrot.slane %v9581, 2
        %v9602 = vsel %vm5469, %v9599, %v9601
        %v9603 = vrot.slane %v9582, 2
        %v9604 = vsel %vm5469, %v9601, %v9603
        %v9605 = vrot.slane %v9583, 2
        %v9606 = vsel %vm5469, %v9603, %v9605
        %v9607 = vrot.slane %v9584, 2
        %v9608 = vsel %vm5469, %v9605, %v9607
        %v9609 = vrot.slane %v9585, 2
        %v9610 = vsel %vm5469, %v9607, %v9609
        %v9611 = vrot.slane %v9586, 2
        %v9612 = vsel %vm5469, %v9609, %v9611
        %v9613 = vrot.slane %v9587, 2
        %v9614 = vsel %vm5469, %v9611, %v9613
        %v9615 = vrot.slane %v9588, 2
        %v9616 = vsel %vm5469, %v9613, %v9615
        %v9617 = vrot.slane %v9589, 2
        %v9618 = vsel %vm5469, %v9615, %v9617
        %v9619 = vrot.slane %v9590, 2
        %v9620 = vsel %vm5469, %v9617, %v9619
        %v9621 = vrot.slane %v9591, 2
        %v9622 = vsel %vm5469, %v9619, %v9621
        %v9623 = vrot.slane %v9592, 2
        %v9624 = vsel %vm5469, %v9621, %v9623
        %v9625 = vrot.slane %v9593, 2
        %v9626 = vsel %vm5469, %v9623, %v9625
        %v9627 = vrot.slane %v9594, 2
        %v9628 = vsel %vm5469, %v9625, %v9627
        %v9629 = vrot.slane %v9595, 2
        %v9630 = vsel %vm5469, %v9627, %v9629
        %v9631 = vrot.slane %v9596, 2
        %v9632 = vsel %vm5469, %v9629, %v9631
        %v9633 = vrot.slane %v9597, 2
        %v9634 = vsel %vm5469, %v9631, %v9633
        %v9669 = vunpack.c.l.b16 %v9489
        %v9670 = vunpack.c.l.b16 %v9490
        %v9671 = vunpack.c.l.b16 %v9491
        %v9672 = vunpack.c.l.b16 %v9492
        %v9673 = vunpack.c.l.b16 %v9493
        %v9674 = vunpack.c.l.b16 %v9494
        %v9675 = vunpack.c.l.b16 %v9495
        %v9676 = vunpack.c.l.b16 %v9496
        %v9677 = vunpack.c.l.b16 %v9497
        %v9678 = vunpack.c.l.b16 %v9498
        %v9679 = vunpack.c.l.b16 %v9499
        %v9680 = vunpack.c.l.b16 %v9500
        %v9681 = vunpack.c.l.b16 %v9501
        %v9682 = vunpack.c.l.b16 %v9502
        %v9683 = vunpack.c.l.b16 %v9503
        %v9684 = vunpack.c.l.b16 %v9504
        %v9685 = vpack.c.b16 %v9670, %v9669
        %v9686 = vpack.c.b16 %v9672, %v9671
        %v9687 = vpack.c.b16 %v9674, %v9673
        %v9688 = vpack.c.b16 %v9676, %v9675
        %v9689 = vpack.c.b16 %v9678, %v9677
        %v9690 = vpack.c.b16 %v9680, %v9679
        %v9691 = vpack.c.b16 %v9682, %v9681
        %v9692 = vpack.c.b16 %v9684, %v9683
        %9701 = vmatpush.bf16.msra.mxu0 %v9692
        %9702 = vmatpush.bf16.msra.mxu0 %v9691
        %9703 = vmatpush.bf16.msra.mxu0 %v9690
        %9704 = vmatpush.bf16.msra.mxu0 %v9689
        %9705 = vmatpush.bf16.msra.mxu0 %v9688
        %9706 = vmatpush.bf16.msra.mxu0 %v9687
        %9707 = vmatpush.bf16.msra.mxu0 %v9686
        %9708 = vmatpush.bf16.msra.mxu0 %v9685
        %9709 = vmatmul.bf16.gmra.mxu0 %v9600
        %v9710 = vpop.f32.mrf.mxu0
        %v9711 = vadd.f32 0.0, %v9710
        %v9712 = vpop.f32.mrf.mxu0
        %v9713 = vadd.f32 0.0, %v9712
        %9714 = vmatmul.bf16.gmra.mxu0 %v9602
        %v9715 = vpop.f32.mrf.mxu0
        %v9716 = vadd.f32 0.0, %v9715
        %v9717 = vpop.f32.mrf.mxu0
        %v9718 = vadd.f32 0.0, %v9717
        %9719 = vmatmul.bf16.gmra.mxu0 %v9604
        %v9720 = vpop.f32.mrf.mxu0
        %v9721 = vadd.f32 0.0, %v9720
        %v9722 = vpop.f32.mrf.mxu0
        %v9723 = vadd.f32 0.0, %v9722
        %9724 = vmatmul.bf16.gmra.mxu0 %v9606
        %v9725 = vpop.f32.mrf.mxu0
        %v9726 = vadd.f32 0.0, %v9725
        %v9727 = vpop.f32.mrf.mxu0
        %v9728 = vadd.f32 0.0, %v9727
        %9729 = vmatmul.bf16.gmra.mxu0 %v9608
        %v9730 = vpop.f32.mrf.mxu0
        %v9731 = vadd.f32 0.0, %v9730
        %v9732 = vpop.f32.mrf.mxu0
        %v9733 = vadd.f32 0.0, %v9732
        %9734 = vmatmul.bf16.gmra.mxu0 %v9610
        %v9735 = vpop.f32.mrf.mxu0
        %v9736 = vadd.f32 0.0, %v9735
        %v9737 = vpop.f32.mrf.mxu0
        %v9738 = vadd.f32 0.0, %v9737
        %9739 = vmatmul.bf16.gmra.mxu0 %v9612
        %v9740 = vpop.f32.mrf.mxu0
        %v9741 = vadd.f32 0.0, %v9740
        %v9742 = vpop.f32.mrf.mxu0
        %v9743 = vadd.f32 0.0, %v9742
        %9744 = vmatmul.bf16.gmra.mxu0 %v9614
        %v9745 = vpop.f32.mrf.mxu0
        %v9746 = vadd.f32 0.0, %v9745
        %v9747 = vpop.f32.mrf.mxu0
        %v9748 = vadd.f32 0.0, %v9747
        %9749 = vmatmul.bf16.gmra.mxu0 %v9616
        %v9750 = vpop.f32.mrf.mxu0
        %v9751 = vadd.f32 0.0, %v9750
        %v9752 = vpop.f32.mrf.mxu0
        %v9753 = vadd.f32 0.0, %v9752
        %9754 = vmatmul.bf16.gmra.mxu0 %v9618
        %v9755 = vpop.f32.mrf.mxu0
        %v9756 = vadd.f32 0.0, %v9755
        %v9757 = vpop.f32.mrf.mxu0
        %v9758 = vadd.f32 0.0, %v9757
        %9759 = vmatmul.bf16.gmra.mxu0 %v9620
        %v9760 = vpop.f32.mrf.mxu0
        %v9761 = vadd.f32 0.0, %v9760
        %v9762 = vpop.f32.mrf.mxu0
        %v9763 = vadd.f32 0.0, %v9762
        %9764 = vmatmul.bf16.gmra.mxu0 %v9622
        %v9765 = vpop.f32.mrf.mxu0
        %v9766 = vadd.f32 0.0, %v9765
        %v9767 = vpop.f32.mrf.mxu0
        %v9768 = vadd.f32 0.0, %v9767
        %9769 = vmatmul.bf16.gmra.mxu0 %v9624
        %v9770 = vpop.f32.mrf.mxu0
        %v9771 = vadd.f32 0.0, %v9770
        %v9772 = vpop.f32.mrf.mxu0
        %v9773 = vadd.f32 0.0, %v9772
        %9774 = vmatmul.bf16.gmra.mxu0 %v9626
        %v9775 = vpop.f32.mrf.mxu0
        %v9776 = vadd.f32 0.0, %v9775
        %v9777 = vpop.f32.mrf.mxu0
        %v9778 = vadd.f32 0.0, %v9777
        %9779 = vmatmul.bf16.gmra.mxu0 %v9628
        %v9780 = vpop.f32.mrf.mxu0
        %v9781 = vadd.f32 0.0, %v9780
        %v9782 = vpop.f32.mrf.mxu0
        %v9783 = vadd.f32 0.0, %v9782
        %9784 = vmatmul.bf16.gmra.mxu0 %v9630
        %v9785 = vpop.f32.mrf.mxu0
        %v9786 = vadd.f32 0.0, %v9785
        %v9787 = vpop.f32.mrf.mxu0
        %v9788 = vadd.f32 0.0, %v9787
        %9789 = vmatmul.bf16.gmra.mxu0 %v9632
        %v9790 = vpop.f32.mrf.mxu0
        %v9791 = vadd.f32 0.0, %v9790
        %v9792 = vpop.f32.mrf.mxu0
        %v9793 = vadd.f32 0.0, %v9792
        %9794 = vmatmul.bf16.gmra.mxu0 %v9634
        %v9795 = vpop.f32.mrf.mxu0
        %v9796 = vadd.f32 0.0, %v9795
        %v9797 = vpop.f32.mrf.mxu0
        %v9798 = vadd.f32 0.0, %v9797
        %9799 = vdwg.mxu0
        %v9800 = vadd.f32 %v9415, %v9711
        %v9801 = vadd.f32 %v9416, %v9713
        %v9802 = vadd.f32 %v9417, %v9716
        %v9803 = vadd.f32 %v9418, %v9718
        %v9804 = vadd.f32 %v9419, %v9721
        %v9805 = vadd.f32 %v9420, %v9723
        %v9806 = vadd.f32 %v9421, %v9726
        %v9807 = vadd.f32 %v9422, %v9728
        %v9808 = vadd.f32 %v9423, %v9731
        %v9809 = vadd.f32 %v9424, %v9733
        %v9810 = vadd.f32 %v9425, %v9736
        %v9811 = vadd.f32 %v9426, %v9738
        %v9812 = vadd.f32 %v9427, %v9741
        %v9813 = vadd.f32 %v9428, %v9743
        %v9814 = vadd.f32 %v9429, %v9746
        %v9815 = vadd.f32 %v9430, %v9748
        %v9816 = vadd.f32 %v9431, %v9751
        %v9817 = vadd.f32 %v9432, %v9753
        %v9818 = vadd.f32 %v9433, %v9756
        %v9819 = vadd.f32 %v9434, %v9758
        %v9820 = vadd.f32 %v9435, %v9761
        %v9821 = vadd.f32 %v9436, %v9763
        %v9822 = vadd.f32 %v9437, %v9766
        %v9823 = vadd.f32 %v9438, %v9768
        %v9824 = vadd.f32 %v9439, %v9771
        %v9825 = vadd.f32 %v9440, %v9773
        %v9826 = vadd.f32 %v9441, %v9776
        %v9827 = vadd.f32 %v9442, %v9778
        %v9828 = vadd.f32 %v9443, %v9781
        %v9829 = vadd.f32 %v9444, %v9783
        %v9830 = vadd.f32 %v9445, %v9786
        %v9831 = vadd.f32 %v9446, %v9788
        %v9832 = vadd.f32 %v9447, %v9791
        %v9833 = vadd.f32 %v9448, %v9793
        %v9834 = vadd.f32 %v9449, %v9796
        %v9835 = vadd.f32 %v9450, %v9798
        %v9836 = vld [vmem:[#allocation2 + $0xa0] sm:$0x3]
        %s9837 = scalar_lea.vmem [#allocation8], 448
        %v9838 = vld [vmem:[%s9837] sm:$0xf]
        %v9839 = vld [vmem:[%s9837 + $0x4] sm:$0xf]
        %v9840 = vld [vmem:[%s9837 + $0x8] sm:$0xf]
        %v9841 = vld [vmem:[%s9837 + $0xc] sm:$0xf]
        %v9842 = vld [vmem:[%s9837 + $0x10] sm:$0xf]
        %v9843 = vld [vmem:[%s9837 + $0x14] sm:$0xf]
        %v9844 = vld [vmem:[%s9837 + $0x18] sm:$0xf]
        %v9845 = vld [vmem:[%s9837 + $0x1c] sm:$0xf]
        %v9846 = vld [vmem:[%s9837 + $0x20] sm:$0xf]
        %v9847 = vld [vmem:[%s9837 + $0x24] sm:$0xf]
        %v9848 = vld [vmem:[%s9837 + $0x28] sm:$0xf]
        %v9849 = vld [vmem:[%s9837 + $0x2c] sm:$0xf]
        %v9850 = vld [vmem:[%s9837 + $0x30] sm:$0xf]
        %v9851 = vld [vmem:[%s9837 + $0x34] sm:$0xf]
        %v9852 = vld [vmem:[%s9837 + $0x38] sm:$0xf]
        %v9853 = vld [vmem:[%s9837 + $0x3c] sm:$0xf]
        %v9855 = vunpack.c.l.b16 %v9836
        %v9856 = vpack.c.b16 %v9855, %v9855
        %v9858 = vshrl.u32 %v9579, 16
        %v9860 = vrot.slane %v9858, 2
        %v9861 = vshll.u32 %v9579, 16
        %v9863 = vrot.slane %v9861, 3
        %v9864 = vor.u32 %v9860, %v9863
        %v9866 = vshrl.u32 %v9580, 16
        %v9868 = vrot.slane %v9866, 2
        %v9869 = vshll.u32 %v9580, 16
        %v9871 = vrot.slane %v9869, 3
        %v9872 = vor.u32 %v9868, %v9871
        %v9873 = vsel %vm6114, %v9864, %v9872
        %v9875 = vshrl.u32 %v9581, 16
        %v9877 = vrot.slane %v9875, 2
        %v9878 = vshll.u32 %v9581, 16
        %v9880 = vrot.slane %v9878, 3
        %v9881 = vor.u32 %v9877, %v9880
        %v9882 = vsel %vm6114, %v9872, %v9881
        %v9884 = vshrl.u32 %v9582, 16
        %v9886 = vrot.slane %v9884, 2
        %v9887 = vshll.u32 %v9582, 16
        %v9889 = vrot.slane %v9887, 3
        %v9890 = vor.u32 %v9886, %v9889
        %v9891 = vsel %vm6114, %v9881, %v9890
        %v9893 = vshrl.u32 %v9583, 16
        %v9895 = vrot.slane %v9893, 2
        %v9896 = vshll.u32 %v9583, 16
        %v9898 = vrot.slane %v9896, 3
        %v9899 = vor.u32 %v9895, %v9898
        %v9900 = vsel %vm6114, %v9890, %v9899
        %v9902 = vshrl.u32 %v9584, 16
        %v9904 = vrot.slane %v9902, 2
        %v9905 = vshll.u32 %v9584, 16
        %v9907 = vrot.slane %v9905, 3
        %v9908 = vor.u32 %v9904, %v9907
        %v9909 = vsel %vm6114, %v9899, %v9908
        %v9911 = vshrl.u32 %v9585, 16
        %v9913 = vrot.slane %v9911, 2
        %v9914 = vshll.u32 %v9585, 16
        %v9916 = vrot.slane %v9914, 3
        %v9917 = vor.u32 %v9913, %v9916
        %v9918 = vsel %vm6114, %v9908, %v9917
        %v9920 = vshrl.u32 %v9586, 16
        %v9922 = vrot.slane %v9920, 2
        %v9923 = vshll.u32 %v9586, 16
        %v9925 = vrot.slane %v9923, 3
        %v9926 = vor.u32 %v9922, %v9925
        %v9927 = vsel %vm6114, %v9917, %v9926
        %v9929 = vshrl.u32 %v9587, 16
        %v9931 = vrot.slane %v9929, 2
        %v9932 = vshll.u32 %v9587, 16
        %v9934 = vrot.slane %v9932, 3
        %v9935 = vor.u32 %v9931, %v9934
        %v9936 = vsel %vm6114, %v9926, %v9935
        %v9938 = vshrl.u32 %v9588, 16
        %v9940 = vrot.slane %v9938, 2
        %v9941 = vshll.u32 %v9588, 16
        %v9943 = vrot.slane %v9941, 3
        %v9944 = vor.u32 %v9940, %v9943
        %v9945 = vsel %vm6114, %v9935, %v9944
        %v9947 = vshrl.u32 %v9589, 16
        %v9949 = vrot.slane %v9947, 2
        %v9950 = vshll.u32 %v9589, 16
        %v9952 = vrot.slane %v9950, 3
        %v9953 = vor.u32 %v9949, %v9952
        %v9954 = vsel %vm6114, %v9944, %v9953
        %v9956 = vshrl.u32 %v9590, 16
        %v9958 = vrot.slane %v9956, 2
        %v9959 = vshll.u32 %v9590, 16
        %v9961 = vrot.slane %v9959, 3
        %v9962 = vor.u32 %v9958, %v9961
        %v9963 = vsel %vm6114, %v9953, %v9962
        %v9965 = vshrl.u32 %v9591, 16
        %v9967 = vrot.slane %v9965, 2
        %v9968 = vshll.u32 %v9591, 16
        %v9970 = vrot.slane %v9968, 3
        %v9971 = vor.u32 %v9967, %v9970
        %v9972 = vsel %vm6114, %v9962, %v9971
        %v9974 = vshrl.u32 %v9592, 16
        %v9976 = vrot.slane %v9974, 2
        %v9977 = vshll.u32 %v9592, 16
        %v9979 = vrot.slane %v9977, 3
        %v9980 = vor.u32 %v9976, %v9979
        %v9981 = vsel %vm6114, %v9971, %v9980
        %v9983 = vshrl.u32 %v9593, 16
        %v9985 = vrot.slane %v9983, 2
        %v9986 = vshll.u32 %v9593, 16
        %v9988 = vrot.slane %v9986, 3
        %v9989 = vor.u32 %v9985, %v9988
        %v9990 = vsel %vm6114, %v9980, %v9989
        %v9992 = vshrl.u32 %v9594, 16
        %v9994 = vrot.slane %v9992, 2
        %v9995 = vshll.u32 %v9594, 16
        %v9997 = vrot.slane %v9995, 3
        %v9998 = vor.u32 %v9994, %v9997
        %v9999 = vsel %vm6114, %v9989, %v9998
        %v10001 = vshrl.u32 %v9595, 16
        %v10003 = vrot.slane %v10001, 2
        %v10004 = vshll.u32 %v9595, 16
        %v10006 = vrot.slane %v10004, 3
        %v10007 = vor.u32 %v10003, %v10006
        %v10008 = vsel %vm6114, %v9998, %v10007
        %v10010 = vshrl.u32 %v9596, 16
        %v10012 = vrot.slane %v10010, 2
        %v10013 = vshll.u32 %v9596, 16
        %v10015 = vrot.slane %v10013, 3
        %v10016 = vor.u32 %v10012, %v10015
        %v10017 = vsel %vm6114, %v10007, %v10016
        %v10019 = vshrl.u32 %v9856, 16
        %v10021 = vrot.slane %v10019, 2
        %v10022 = vshll.u32 %v9856, 16
        %v10024 = vrot.slane %v10022, 3
        %v10025 = vor.u32 %v10021, %v10024
        %v10026 = vsel %vm6114, %v10016, %v10025
        %v10061 = vunpack.c.l.b16 %v9838
        %v10062 = vunpack.c.l.b16 %v9839
        %v10063 = vunpack.c.l.b16 %v9840
        %v10064 = vunpack.c.l.b16 %v9841
        %v10065 = vunpack.c.l.b16 %v9842
        %v10066 = vunpack.c.l.b16 %v9843
        %v10067 = vunpack.c.l.b16 %v9844
        %v10068 = vunpack.c.l.b16 %v9845
        %v10069 = vunpack.c.l.b16 %v9846
        %v10070 = vunpack.c.l.b16 %v9847
        %v10071 = vunpack.c.l.b16 %v9848
        %v10072 = vunpack.c.l.b16 %v9849
        %v10073 = vunpack.c.l.b16 %v9850
        %v10074 = vunpack.c.l.b16 %v9851
        %v10075 = vunpack.c.l.b16 %v9852
        %v10076 = vunpack.c.l.b16 %v9853
        %v10077 = vpack.c.b16 %v10062, %v10061
        %v10078 = vpack.c.b16 %v10064, %v10063
        %v10079 = vpack.c.b16 %v10066, %v10065
        %v10080 = vpack.c.b16 %v10068, %v10067
        %v10081 = vpack.c.b16 %v10070, %v10069
        %v10082 = vpack.c.b16 %v10072, %v10071
        %v10083 = vpack.c.b16 %v10074, %v10073
        %v10084 = vpack.c.b16 %v10076, %v10075
        %10093 = vmatpush.bf16.msra.mxu0 %v10084
        %10094 = vmatpush.bf16.msra.mxu0 %v10083
        %10095 = vmatpush.bf16.msra.mxu0 %v10082
        %10096 = vmatpush.bf16.msra.mxu0 %v10081
        %10097 = vmatpush.bf16.msra.mxu0 %v10080
        %10098 = vmatpush.bf16.msra.mxu0 %v10079
        %10099 = vmatpush.bf16.msra.mxu0 %v10078
        %10100 = vmatpush.bf16.msra.mxu0 %v10077
        %10101 = vmatmul.bf16.gmra.mxu0 %v9873
        %v10102 = vpop.f32.mrf.mxu0
        %v10103 = vadd.f32 0.0, %v10102
        %v10104 = vpop.f32.mrf.mxu0
        %v10105 = vadd.f32 0.0, %v10104
        %10106 = vmatmul.bf16.gmra.mxu0 %v9882
        %v10107 = vpop.f32.mrf.mxu0
        %v10108 = vadd.f32 0.0, %v10107
        %v10109 = vpop.f32.mrf.mxu0
        %v10110 = vadd.f32 0.0, %v10109
        %10111 = vmatmul.bf16.gmra.mxu0 %v9891
        %v10112 = vpop.f32.mrf.mxu0
        %v10113 = vadd.f32 0.0, %v10112
        %v10114 = vpop.f32.mrf.mxu0
        %v10115 = vadd.f32 0.0, %v10114
        %10116 = vmatmul.bf16.gmra.mxu0 %v9900
        %v10117 = vpop.f32.mrf.mxu0
        %v10118 = vadd.f32 0.0, %v10117
        %v10119 = vpop.f32.mrf.mxu0
        %v10120 = vadd.f32 0.0, %v10119
        %10121 = vmatmul.bf16.gmra.mxu0 %v9909
        %v10122 = vpop.f32.mrf.mxu0
        %v10123 = vadd.f32 0.0, %v10122
        %v10124 = vpop.f32.mrf.mxu0
        %v10125 = vadd.f32 0.0, %v10124
        %10126 = vmatmul.bf16.gmra.mxu0 %v9918
        %v10127 = vpop.f32.mrf.mxu0
        %v10128 = vadd.f32 0.0, %v10127
        %v10129 = vpop.f32.mrf.mxu0
        %v10130 = vadd.f32 0.0, %v10129
        %10131 = vmatmul.bf16.gmra.mxu0 %v9927
        %v10132 = vpop.f32.mrf.mxu0
        %v10133 = vadd.f32 0.0, %v10132
        %v10134 = vpop.f32.mrf.mxu0
        %v10135 = vadd.f32 0.0, %v10134
        %10136 = vmatmul.bf16.gmra.mxu0 %v9936
        %v10137 = vpop.f32.mrf.mxu0
        %v10138 = vadd.f32 0.0, %v10137
        %v10139 = vpop.f32.mrf.mxu0
        %v10140 = vadd.f32 0.0, %v10139
        %10141 = vmatmul.bf16.gmra.mxu0 %v9945
        %v10142 = vpop.f32.mrf.mxu0
        %v10143 = vadd.f32 0.0, %v10142
        %v10144 = vpop.f32.mrf.mxu0
        %v10145 = vadd.f32 0.0, %v10144
        %10146 = vmatmul.bf16.gmra.mxu0 %v9954
        %v10147 = vpop.f32.mrf.mxu0
        %v10148 = vadd.f32 0.0, %v10147
        %v10149 = vpop.f32.mrf.mxu0
        %v10150 = vadd.f32 0.0, %v10149
        %10151 = vmatmul.bf16.gmra.mxu0 %v9963
        %v10152 = vpop.f32.mrf.mxu0
        %v10153 = vadd.f32 0.0, %v10152
        %v10154 = vpop.f32.mrf.mxu0
        %v10155 = vadd.f32 0.0, %v10154
        %10156 = vmatmul.bf16.gmra.mxu0 %v9972
        %v10157 = vpop.f32.mrf.mxu0
        %v10158 = vadd.f32 0.0, %v10157
        %v10159 = vpop.f32.mrf.mxu0
        %v10160 = vadd.f32 0.0, %v10159
        %10161 = vmatmul.bf16.gmra.mxu0 %v9981
        %v10162 = vpop.f32.mrf.mxu0
        %v10163 = vadd.f32 0.0, %v10162
        %v10164 = vpop.f32.mrf.mxu0
        %v10165 = vadd.f32 0.0, %v10164
        %10166 = vmatmul.bf16.gmra.mxu0 %v9990
        %v10167 = vpop.f32.mrf.mxu0
        %v10168 = vadd.f32 0.0, %v10167
        %v10169 = vpop.f32.mrf.mxu0
        %v10170 = vadd.f32 0.0, %v10169
        %10171 = vmatmul.bf16.gmra.mxu0 %v9999
        %v10172 = vpop.f32.mrf.mxu0
        %v10173 = vadd.f32 0.0, %v10172
        %v10174 = vpop.f32.mrf.mxu0
        %v10175 = vadd.f32 0.0, %v10174
        %10176 = vmatmul.bf16.gmra.mxu0 %v10008
        %v10177 = vpop.f32.mrf.mxu0
        %v10178 = vadd.f32 0.0, %v10177
        %v10179 = vpop.f32.mrf.mxu0
        %v10180 = vadd.f32 0.0, %v10179
        %10181 = vmatmul.bf16.gmra.mxu0 %v10017
        %v10182 = vpop.f32.mrf.mxu0
        %v10183 = vadd.f32 0.0, %v10182
        %v10184 = vpop.f32.mrf.mxu0
        %v10185 = vadd.f32 0.0, %v10184
        %10186 = vmatmul.bf16.gmra.mxu0 %v10026
        %v10187 = vpop.f32.mrf.mxu0
        %v10188 = vadd.f32 0.0, %v10187
        %v10189 = vpop.f32.mrf.mxu0
        %v10190 = vadd.f32 0.0, %v10189
        %10191 = vdwg.mxu0
        %v10192 = vadd.f32 %v9800, %v10103
        %v10193 = vadd.f32 %v9801, %v10105
        %v10194 = vadd.f32 %v9802, %v10108
        %v10195 = vadd.f32 %v9803, %v10110
        %v10196 = vadd.f32 %v9804, %v10113
        %v10197 = vadd.f32 %v9805, %v10115
        %v10198 = vadd.f32 %v9806, %v10118
        %v10199 = vadd.f32 %v9807, %v10120
        %v10200 = vadd.f32 %v9808, %v10123
        %v10201 = vadd.f32 %v9809, %v10125
        %v10202 = vadd.f32 %v9810, %v10128
        %v10203 = vadd.f32 %v9811, %v10130
        %v10204 = vadd.f32 %v9812, %v10133
        %v10205 = vadd.f32 %v9813, %v10135
        %v10206 = vadd.f32 %v9814, %v10138
        %v10207 = vadd.f32 %v9815, %v10140
        %v10208 = vadd.f32 %v9816, %v10143
        %v10209 = vadd.f32 %v9817, %v10145
        %v10210 = vadd.f32 %v9818, %v10148
        %v10211 = vadd.f32 %v9819, %v10150
        %v10212 = vadd.f32 %v9820, %v10153
        %v10213 = vadd.f32 %v9821, %v10155
        %v10214 = vadd.f32 %v9822, %v10158
        %v10215 = vadd.f32 %v9823, %v10160
        %v10216 = vadd.f32 %v9824, %v10163
        %v10217 = vadd.f32 %v9825, %v10165
        %v10218 = vadd.f32 %v9826, %v10168
        %v10219 = vadd.f32 %v9827, %v10170
        %v10220 = vadd.f32 %v9828, %v10173
        %v10221 = vadd.f32 %v9829, %v10175
        %v10222 = vadd.f32 %v9830, %v10178
        %v10223 = vadd.f32 %v9831, %v10180
        %v10224 = vadd.f32 %v9832, %v10183
        %v10225 = vadd.f32 %v9833, %v10185
        %v10226 = vadd.f32 %v9834, %v10188
        %v10227 = vadd.f32 %v9835, %v10190
        %v10228 = vld [vmem:[#allocation2 + $0x10] sm:$0x8]
        %s10229 = scalar_lea.vmem [#allocation8], 512
        %v10230 = vld [vmem:[%s10229] sm:$0xf]
        %v10231 = vld [vmem:[%s10229 + $0x4] sm:$0xf]
        %v10232 = vld [vmem:[%s10229 + $0x8] sm:$0xf]
        %v10233 = vld [vmem:[%s10229 + $0xc] sm:$0xf]
        %v10234 = vld [vmem:[%s10229 + $0x10] sm:$0xf]
        %v10235 = vld [vmem:[%s10229 + $0x14] sm:$0xf]
        %v10236 = vld [vmem:[%s10229 + $0x18] sm:$0xf]
        %v10237 = vld [vmem:[%s10229 + $0x1c] sm:$0xf]
        %v10238 = vld [vmem:[%s10229 + $0x20] sm:$0xf]
        %v10239 = vld [vmem:[%s10229 + $0x24] sm:$0xf]
        %v10240 = vld [vmem:[%s10229 + $0x28] sm:$0xf]
        %v10241 = vld [vmem:[%s10229 + $0x2c] sm:$0xf]
        %v10242 = vld [vmem:[%s10229 + $0x30] sm:$0xf]
        %v10243 = vld [vmem:[%s10229 + $0x34] sm:$0xf]
        %v10244 = vld [vmem:[%s10229 + $0x38] sm:$0xf]
        %v10245 = vld [vmem:[%s10229 + $0x3c] sm:$0xf]
        %v10247 = vunpack.c.l.b16 %v10228
        %v10248 = vpack.c.b16 %v9543, %v10247
        %v10249 = vrot.slane %v10248, 3
        %v10250 = vrot.slane %v9580, 3
        %v10251 = vsel %vm6507, %v10249, %v10250
        %v10252 = vrot.slane %v9581, 3
        %v10253 = vsel %vm6507, %v10250, %v10252
        %v10254 = vrot.slane %v9582, 3
        %v10255 = vsel %vm6507, %v10252, %v10254
        %v10256 = vrot.slane %v9583, 3
        %v10257 = vsel %vm6507, %v10254, %v10256
        %v10258 = vrot.slane %v9584, 3
        %v10259 = vsel %vm6507, %v10256, %v10258
        %v10260 = vrot.slane %v9585, 3
        %v10261 = vsel %vm6507, %v10258, %v10260
        %v10262 = vrot.slane %v9586, 3
        %v10263 = vsel %vm6507, %v10260, %v10262
        %v10264 = vrot.slane %v9587, 3
        %v10265 = vsel %vm6507, %v10262, %v10264
        %v10266 = vrot.slane %v9588, 3
        %v10267 = vsel %vm6507, %v10264, %v10266
        %v10268 = vrot.slane %v9589, 3
        %v10269 = vsel %vm6507, %v10266, %v10268
        %v10270 = vrot.slane %v9590, 3
        %v10271 = vsel %vm6507, %v10268, %v10270
        %v10272 = vrot.slane %v9591, 3
        %v10273 = vsel %vm6507, %v10270, %v10272
        %v10274 = vrot.slane %v9592, 3
        %v10275 = vsel %vm6507, %v10272, %v10274
        %v10276 = vrot.slane %v9593, 3
        %v10277 = vsel %vm6507, %v10274, %v10276
        %v10278 = vrot.slane %v9594, 3
        %v10279 = vsel %vm6507, %v10276, %v10278
        %v10280 = vrot.slane %v9595, 3
        %v10281 = vsel %vm6507, %v10278, %v10280
        %v10282 = vrot.slane %v9596, 3
        %v10283 = vsel %vm6507, %v10280, %v10282
        %v10284 = vrot.slane %v9856, 3
        %v10285 = vsel %vm6507, %v10282, %v10284
        %v10320 = vunpack.c.l.b16 %v10230
        %v10321 = vunpack.c.l.b16 %v10231
        %v10322 = vunpack.c.l.b16 %v10232
        %v10323 = vunpack.c.l.b16 %v10233
        %v10324 = vunpack.c.l.b16 %v10234
        %v10325 = vunpack.c.l.b16 %v10235
        %v10326 = vunpack.c.l.b16 %v10236
        %v10327 = vunpack.c.l.b16 %v10237
        %v10328 = vunpack.c.l.b16 %v10238
        %v10329 = vunpack.c.l.b16 %v10239
        %v10330 = vunpack.c.l.b16 %v10240
        %v10331 = vunpack.c.l.b16 %v10241
        %v10332 = vunpack.c.l.b16 %v10242
        %v10333 = vunpack.c.l.b16 %v10243
        %v10334 = vunpack.c.l.b16 %v10244
        %v10335 = vunpack.c.l.b16 %v10245
        %v10336 = vpack.c.b16 %v10321, %v10320
        %v10337 = vpack.c.b16 %v10323, %v10322
        %v10338 = vpack.c.b16 %v10325, %v10324
        %v10339 = vpack.c.b16 %v10327, %v10326
        %v10340 = vpack.c.b16 %v10329, %v10328
        %v10341 = vpack.c.b16 %v10331, %v10330
        %v10342 = vpack.c.b16 %v10333, %v10332
        %v10343 = vpack.c.b16 %v10335, %v10334
        %10352 = vmatpush.bf16.msra.mxu0 %v10343
        %10353 = vmatpush.bf16.msra.mxu0 %v10342
        %10354 = vmatpush.bf16.msra.mxu0 %v10341
        %10355 = vmatpush.bf16.msra.mxu0 %v10340
        %10356 = vmatpush.bf16.msra.mxu0 %v10339
        %10357 = vmatpush.bf16.msra.mxu0 %v10338
        %10358 = vmatpush.bf16.msra.mxu0 %v10337
        %10359 = vmatpush.bf16.msra.mxu0 %v10336
        %10360 = vmatmul.bf16.gmra.mxu0 %v10251
        %v10361 = vpop.f32.mrf.mxu0
        %v10362 = vadd.f32 0.0, %v10361
        %v10363 = vpop.f32.mrf.mxu0
        %v10364 = vadd.f32 0.0, %v10363
        %10365 = vmatmul.bf16.gmra.mxu0 %v10253
        %v10366 = vpop.f32.mrf.mxu0
        %v10367 = vadd.f32 0.0, %v10366
        %v10368 = vpop.f32.mrf.mxu0
        %v10369 = vadd.f32 0.0, %v10368
        %10370 = vmatmul.bf16.gmra.mxu0 %v10255
        %v10371 = vpop.f32.mrf.mxu0
        %v10372 = vadd.f32 0.0, %v10371
        %v10373 = vpop.f32.mrf.mxu0
        %v10374 = vadd.f32 0.0, %v10373
        %10375 = vmatmul.bf16.gmra.mxu0 %v10257
        %v10376 = vpop.f32.mrf.mxu0
        %v10377 = vadd.f32 0.0, %v10376
        %v10378 = vpop.f32.mrf.mxu0
        %v10379 = vadd.f32 0.0, %v10378
        %10380 = vmatmul.bf16.gmra.mxu0 %v10259
        %v10381 = vpop.f32.mrf.mxu0
        %v10382 = vadd.f32 0.0, %v10381
        %v10383 = vpop.f32.mrf.mxu0
        %v10384 = vadd.f32 0.0, %v10383
        %10385 = vmatmul.bf16.gmra.mxu0 %v10261
        %v10386 = vpop.f32.mrf.mxu0
        %v10387 = vadd.f32 0.0, %v10386
        %v10388 = vpop.f32.mrf.mxu0
        %v10389 = vadd.f32 0.0, %v10388
        %10390 = vmatmul.bf16.gmra.mxu0 %v10263
        %v10391 = vpop.f32.mrf.mxu0
        %v10392 = vadd.f32 0.0, %v10391
        %v10393 = vpop.f32.mrf.mxu0
        %v10394 = vadd.f32 0.0, %v10393
        %10395 = vmatmul.bf16.gmra.mxu0 %v10265
        %v10396 = vpop.f32.mrf.mxu0
        %v10397 = vadd.f32 0.0, %v10396
        %v10398 = vpop.f32.mrf.mxu0
        %v10399 = vadd.f32 0.0, %v10398
        %10400 = vmatmul.bf16.gmra.mxu0 %v10267
        %v10401 = vpop.f32.mrf.mxu0
        %v10402 = vadd.f32 0.0, %v10401
        %v10403 = vpop.f32.mrf.mxu0
        %v10404 = vadd.f32 0.0, %v10403
        %10405 = vmatmul.bf16.gmra.mxu0 %v10269
        %v10406 = vpop.f32.mrf.mxu0
        %v10407 = vadd.f32 0.0, %v10406
        %v10408 = vpop.f32.mrf.mxu0
        %v10409 = vadd.f32 0.0, %v10408
        %10410 = vmatmul.bf16.gmra.mxu0 %v10271
        %v10411 = vpop.f32.mrf.mxu0
        %v10412 = vadd.f32 0.0, %v10411
        %v10413 = vpop.f32.mrf.mxu0
        %v10414 = vadd.f32 0.0, %v10413
        %10415 = vmatmul.bf16.gmra.mxu0 %v10273
        %v10416 = vpop.f32.mrf.mxu0
        %v10417 = vadd.f32 0.0, %v10416
        %v10418 = vpop.f32.mrf.mxu0
        %v10419 = vadd.f32 0.0, %v10418
        %10420 = vmatmul.bf16.gmra.mxu0 %v10275
        %v10421 = vpop.f32.mrf.mxu0
        %v10422 = vadd.f32 0.0, %v10421
        %v10423 = vpop.f32.mrf.mxu0
        %v10424 = vadd.f32 0.0, %v10423
        %10425 = vmatmul.bf16.gmra.mxu0 %v10277
        %v10426 = vpop.f32.mrf.mxu0
        %v10427 = vadd.f32 0.0, %v10426
        %v10428 = vpop.f32.mrf.mxu0
        %v10429 = vadd.f32 0.0, %v10428
        %10430 = vmatmul.bf16.gmra.mxu0 %v10279
        %v10431 = vpop.f32.mrf.mxu0
        %v10432 = vadd.f32 0.0, %v10431
        %v10433 = vpop.f32.mrf.mxu0
        %v10434 = vadd.f32 0.0, %v10433
        %10435 = vmatmul.bf16.gmra.mxu0 %v10281
        %v10436 = vpop.f32.mrf.mxu0
        %v10437 = vadd.f32 0.0, %v10436
        %v10438 = vpop.f32.mrf.mxu0
        %v10439 = vadd.f32 0.0, %v10438
        %10440 = vmatmul.bf16.gmra.mxu0 %v10283
        %v10441 = vpop.f32.mrf.mxu0
        %v10442 = vadd.f32 0.0, %v10441
        %v10443 = vpop.f32.mrf.mxu0
        %v10444 = vadd.f32 0.0, %v10443
        %10445 = vmatmul.bf16.gmra.mxu0 %v10285
        %v10446 = vpop.f32.mrf.mxu0
        %v10447 = vadd.f32 0.0, %v10446
        %v10448 = vpop.f32.mrf.mxu0
        %v10449 = vadd.f32 0.0, %v10448
        %10450 = vdwg.mxu0
        %v10451 = vadd.f32 %v10192, %v10362
        %v10452 = vadd.f32 %v10193, %v10364
        %v10453 = vadd.f32 %v10194, %v10367
        %v10454 = vadd.f32 %v10195, %v10369
        %v10455 = vadd.f32 %v10196, %v10372
        %v10456 = vadd.f32 %v10197, %v10374
        %v10457 = vadd.f32 %v10198, %v10377
        %v10458 = vadd.f32 %v10199, %v10379
        %v10459 = vadd.f32 %v10200, %v10382
        %v10460 = vadd.f32 %v10201, %v10384
        %v10461 = vadd.f32 %v10202, %v10387
        %v10462 = vadd.f32 %v10203, %v10389
        %v10463 = vadd.f32 %v10204, %v10392
        %v10464 = vadd.f32 %v10205, %v10394
        %v10465 = vadd.f32 %v10206, %v10397
        %v10466 = vadd.f32 %v10207, %v10399
        %v10467 = vadd.f32 %v10208, %v10402
        %v10468 = vadd.f32 %v10209, %v10404
        %v10469 = vadd.f32 %v10210, %v10407
        %v10470 = vadd.f32 %v10211, %v10409
        %v10471 = vadd.f32 %v10212, %v10412
        %v10472 = vadd.f32 %v10213, %v10414
        %v10473 = vadd.f32 %v10214, %v10417
        %v10474 = vadd.f32 %v10215, %v10419
        %v10475 = vadd.f32 %v10216, %v10422
        %v10476 = vadd.f32 %v10217, %v10424
        %v10477 = vadd.f32 %v10218, %v10427
        %v10478 = vadd.f32 %v10219, %v10429
        %v10479 = vadd.f32 %v10220, %v10432
        %v10480 = vadd.f32 %v10221, %v10434
        %v10481 = vadd.f32 %v10222, %v10437
        %v10482 = vadd.f32 %v10223, %v10439
        %v10483 = vadd.f32 %v10224, %v10442
        %v10484 = vadd.f32 %v10225, %v10444
        %v10485 = vadd.f32 %v10226, %v10447
        %v10486 = vadd.f32 %v10227, %v10449
        %v10487 = vld [vmem:[%s5] sm:$0x1]
        %v10489 = vperm.slane %v10487, 0
        %v10491 = vmul.f32 %v10451, %v10489
        %v10492 = vmul.f32 %v10452, %v10489
        %v10493 = vmul.f32 %v10453, %v10489
        %v10494 = vmul.f32 %v10454, %v10489
        %v10495 = vmul.f32 %v10455, %v10489
        %v10496 = vmul.f32 %v10456, %v10489
        %v10497 = vmul.f32 %v10457, %v10489
        %v10498 = vmul.f32 %v10458, %v10489
        %v10499 = vmul.f32 %v10459, %v10489
        %v10500 = vmul.f32 %v10460, %v10489
        %v10501 = vmul.f32 %v10461, %v10489
        %v10502 = vmul.f32 %v10462, %v10489
        %v10503 = vmul.f32 %v10463, %v10489
        %v10504 = vmul.f32 %v10464, %v10489
        %v10505 = vmul.f32 %v10465, %v10489
        %v10506 = vmul.f32 %v10466, %v10489
        %v10507 = vmul.f32 %v10467, %v10489
        %v10508 = vmul.f32 %v10468, %v10489
        %v10509 = vmul.f32 %v10469, %v10489
        %v10510 = vmul.f32 %v10470, %v10489
        %v10511 = vmul.f32 %v10471, %v10489
        %v10512 = vmul.f32 %v10472, %v10489
        %v10513 = vmul.f32 %v10473, %v10489
        %v10514 = vmul.f32 %v10474, %v10489
        %v10515 = vmul.f32 %v10475, %v10489
        %v10516 = vmul.f32 %v10476, %v10489
        %v10517 = vmul.f32 %v10477, %v10489
        %v10518 = vmul.f32 %v10478, %v10489
        %v10519 = vmul.f32 %v10479, %v10489
        %v10520 = vmul.f32 %v10480, %v10489
        %v10521 = vmul.f32 %v10481, %v10489
        %v10522 = vmul.f32 %v10482, %v10489
        %v10523 = vmul.f32 %v10483, %v10489
        %v10524 = vmul.f32 %v10484, %v10489
        %v10525 = vmul.f32 %v10485, %v10489
        %v10526 = vmul.f32 %v10486, %v10489
        %v10527 = vld [vmem:[%s6] sm:$0x1]
        %v10529 = vperm.slane %v10527, 0
        %v10531 = vadd.f32 %v10491, %v10529
        %v10532 = vadd.f32 %v10492, %v10529
        %v10533 = vadd.f32 %v10493, %v10529
        %v10534 = vadd.f32 %v10494, %v10529
        %v10535 = vadd.f32 %v10495, %v10529
        %v10536 = vadd.f32 %v10496, %v10529
        %v10537 = vadd.f32 %v10497, %v10529
        %v10538 = vadd.f32 %v10498, %v10529
        %v10539 = vadd.f32 %v10499, %v10529
        %v10540 = vadd.f32 %v10500, %v10529
        %v10541 = vadd.f32 %v10501, %v10529
        %v10542 = vadd.f32 %v10502, %v10529
        %v10543 = vadd.f32 %v10503, %v10529
        %v10544 = vadd.f32 %v10504, %v10529
        %v10545 = vadd.f32 %v10505, %v10529
        %v10546 = vadd.f32 %v10506, %v10529
        %v10547 = vadd.f32 %v10507, %v10529
        %v10548 = vadd.f32 %v10508, %v10529
        %v10549 = vadd.f32 %v10509, %v10529
        %v10550 = vadd.f32 %v10510, %v10529
        %v10551 = vadd.f32 %v10511, %v10529
        %v10552 = vadd.f32 %v10512, %v10529
        %v10553 = vadd.f32 %v10513, %v10529
        %v10554 = vadd.f32 %v10514, %v10529
        %v10555 = vadd.f32 %v10515, %v10529
        %v10556 = vadd.f32 %v10516, %v10529
        %v10557 = vadd.f32 %v10517, %v10529
        %v10558 = vadd.f32 %v10518, %v10529
        %v10559 = vadd.f32 %v10519, %v10529
        %v10560 = vadd.f32 %v10520, %v10529
        %v10561 = vadd.f32 %v10521, %v10529
        %v10562 = vadd.f32 %v10522, %v10529
        %v10563 = vadd.f32 %v10523, %v10529
        %v10564 = vadd.f32 %v10524, %v10529
        %v10565 = vadd.f32 %v10525, %v10529
        %v10566 = vadd.f32 %v10526, %v10529
        %v10567 = vmul.f32 %v10531, %v3016
        %v10568 = vmul.f32 %v10532, %v3017
        %v10569 = vmul.f32 %v10533, %v3018
        %v10570 = vmul.f32 %v10534, %v3019
        %v10571 = vmul.f32 %v10535, %v3020
        %v10572 = vmul.f32 %v10536, %v3021
        %v10573 = vmul.f32 %v10537, %v3022
        %v10574 = vmul.f32 %v10538, %v3023
        %v10575 = vmul.f32 %v10539, %v3024
        %v10576 = vmul.f32 %v10540, %v3025
        %v10577 = vmul.f32 %v10541, %v3026
        %v10578 = vmul.f32 %v10542, %v3027
        %v10579 = vmul.f32 %v10543, %v3028
        %v10580 = vmul.f32 %v10544, %v3029
        %v10581 = vmul.f32 %v10545, %v3030
        %v10582 = vmul.f32 %v10546, %v3031
        %v10583 = vmul.f32 %v10547, %v3032
        %v10584 = vmul.f32 %v10548, %v3033
        %v10585 = vmul.f32 %v10549, %v3034
        %v10586 = vmul.f32 %v10550, %v3035
        %v10587 = vmul.f32 %v10551, %v3036
        %v10588 = vmul.f32 %v10552, %v3037
        %v10589 = vmul.f32 %v10553, %v3038
        %v10590 = vmul.f32 %v10554, %v3039
        %v10591 = vmul.f32 %v10555, %v3040
        %v10592 = vmul.f32 %v10556, %v3041
        %v10593 = vmul.f32 %v10557, %v3042
        %v10594 = vmul.f32 %v10558, %v3043
        %v10595 = vmul.f32 %v10559, %v3044
        %v10596 = vmul.f32 %v10560, %v3045
        %v10597 = vmul.f32 %v10561, %v3046
        %v10598 = vmul.f32 %v10562, %v3047
        %v10599 = vmul.f32 %v10563, %v3048
        %v10600 = vmul.f32 %v10564, %v3049
        %v10601 = vmul.f32 %v10565, %v3050
        %v10602 = vmul.f32 %v10566, %v3051
        %v10603 = vadd.f32 %v10567, %v10568
        %v10604 = vadd.f32 %v10603, %v10569
        %v10605 = vadd.f32 %v10604, %v10570
        %v10606 = vadd.f32 %v10605, %v10571
        %v10607 = vadd.f32 %v10606, %v10572
        %v10608 = vadd.f32 %v10607, %v10573
        %v10609 = vadd.f32 %v10608, %v10574
        %v10610 = vadd.f32 %v10609, %v10575
        %v10611 = vadd.f32 %v10610, %v10576
        %v10612 = vadd.f32 %v10611, %v10577
        %v10613 = vadd.f32 %v10612, %v10578
        %v10614 = vadd.f32 %v10613, %v10579
        %v10615 = vadd.f32 %v10614, %v10580
        %v10616 = vadd.f32 %v10615, %v10581
        %v10617 = vadd.f32 %v10616, %v10582
        %v10618 = vadd.f32 %v10617, %v10583
        %v10619 = vadd.f32 %v10618, %v10584
        %v10620 = vadd.f32 %v10619, %v10585
        %v10621 = vadd.f32 %v10620, %v10586
        %v10622 = vadd.f32 %v10621, %v10587
        %v10623 = vadd.f32 %v10622, %v10588
        %v10624 = vadd.f32 %v10623, %v10589
        %v10625 = vadd.f32 %v10624, %v10590
        %v10626 = vadd.f32 %v10625, %v10591
        %v10627 = vadd.f32 %v10626, %v10592
        %v10628 = vadd.f32 %v10627, %v10593
        %v10629 = vadd.f32 %v10628, %v10594
        %v10630 = vadd.f32 %v10629, %v10595
        %v10631 = vadd.f32 %v10630, %v10596
        %v10632 = vadd.f32 %v10631, %v10597
        %v10633 = vadd.f32 %v10632, %v10598
        %v10634 = vadd.f32 %v10633, %v10599
        %v10635 = vadd.f32 %v10634, %v10600
        %v10636 = vadd.f32 %v10635, %v10601
        %vm10637 = vcmask 1045504
        %v10638 = vsel %vm10637, %v10602, 0.0
        %v10639 = vadd.f32 %v10636, %v10638
        %v10640 = vrot.slane %v10639, 4
        %v10641 = vadd.f32 %v10639, %v10640
        %v10642 = vrot.slane %v10641, 2
        %v10643 = vadd.f32 %v10641, %v10642
        %v10644 = vrot.slane %v10643, 1
        %v10645 = vadd.f32 %v10643, %v10644
        %v10646 = vmul.f32 %v10645, 0.00390625
        %v10647 = vld [vmem:[%s7] sm:$0xff]
        %v10648 = vld [vmem:[%s7 + $0x8] sm:$0xff]
        %v10649 = vld [vmem:[%s7 + $0x10] sm:$0xff]
        %v10650 = vld [vmem:[%s7 + $0x18] sm:$0xff]
        %v10651 = vld [vmem:[%s7 + $0x20] sm:$0xff]
        %v10652 = vld [vmem:[%s7 + $0x28] sm:$0xff]
        %v10653 = vld [vmem:[%s7 + $0x30] sm:$0xff]
        %v10654 = vld [vmem:[%s7 + $0x38] sm:$0xff]
        %v10655 = vld [vmem:[%s7 + $0x40] sm:$0xff]
        %v10656 = vld [vmem:[%s7 + $0x48] sm:$0xff]
        %v10657 = vld [vmem:[%s7 + $0x50] sm:$0xff]
        %v10658 = vld [vmem:[%s7 + $0x58] sm:$0xff]
        %v10659 = vld [vmem:[%s7 + $0x60] sm:$0xff]
        %v10660 = vld [vmem:[%s7 + $0x68] sm:$0xff]
        %v10661 = vld [vmem:[%s7 + $0x70] sm:$0xff]
        %v10662 = vld [vmem:[%s7 + $0x78] sm:$0xff]
        %10663 = vmatpush.msra.mxu0 %v10662
        %10664 = vmatpush.msra.mxu0 %v10661
        %10665 = vmatpush.msra.mxu0 %v10660
        %10666 = vmatpush.msra.mxu0 %v10659
        %10667 = vmatpush.msra.mxu0 %v10658
        %10668 = vmatpush.msra.mxu0 %v10657
        %10669 = vmatpush.msra.mxu0 %v10656
        %10670 = vmatpush.msra.mxu0 %v10655
        %10671 = vmatpush.msra.mxu0 %v10654
        %10672 = vmatpush.msra.mxu0 %v10653
        %10673 = vmatpush.msra.mxu0 %v10652
        %10674 = vmatpush.msra.mxu0 %v10651
        %10675 = vmatpush.msra.mxu0 %v10650
        %10676 = vmatpush.msra.mxu0 %v10649
        %10677 = vmatpush.msra.mxu0 %v10648
        %10678 = vmatpush.msra.mxu0 %v10647
        %10679 = vmatmul.f32.gmra.mxu0 %v10646
        %v10680 = vpop.f32.mrf.mxu0
        %v10681 = vadd.f32 0.0, %v10680
        %10682 = vdwg.mxu0
        %v10683 = vmax.f32 %v10681, 0.0
        %v10684 = vld [vmem:[%s8] sm:$0xff]
        %vm10685 = vcmask 64512
        %v10687 = vsel %vm10685, %v10683, 0
        %10689 = vmatpush.msra.mxu0 0.0
        %10690 = vmatpush.msra.mxu0 0.0
        %10691 = vmatpush.msra.mxu0 0.0
        %10692 = vmatpush.msra.mxu0 0.0
        %10693 = vmatpush.msra.mxu0 0.0
        %10694 = vmatpush.msra.mxu0 0.0
        %10695 = vmatpush.msra.mxu0 0.0
        %10696 = vmatpush.msra.mxu0 0.0
        %10697 = vmatpush.msra.mxu0 0.0
        %10698 = vmatpush.msra.mxu0 0.0
        %10699 = vmatpush.msra.mxu0 0.0
        %10700 = vmatpush.msra.mxu0 0.0
        %10701 = vmatpush.msra.mxu0 0.0
        %10702 = vmatpush.msra.mxu0 0.0
        %10703 = vmatpush.msra.mxu0 0.0
        %10704 = vmatpush.msra.mxu0 %v10684
        %10705 = vmatmul.f32.gmra.mxu0 %v10687
        %v10706 = vpop.f32.mrf.mxu0
        %v10707 = vadd.f32 0.0, %v10706
        %10708 = vdwg.mxu0
        %v10709 = vxor.u32 %v10707, 2147483648
        %v10710 = vmul.f32 %v10709, 1.442695
        %v10711 = vpow.pop %v10710
        %v10712 = vadd.f32 %v10711, 1.0
        %v10713 = vrcp.pop %v10712
        %v10714 = vmul.f32 %v10712, %v10713
        %v10715 = vsub.f32 1.0, %v10714
        %v10716 = vmul.f32 %v10713, %v10715
        %v10717 = vadd.f32 %v10713, %v10716
        %vm10718 = vweird.f32 %v10712
        %vm10719 = vweird.f32 %v10713
        %vm10720 = vmor %vm10718, %vm10719
        %v10721 = vsel %vm10720, %v10713, %v10717
        %v10722 = vand.u32 2147483647, %v10712
        %vm10723 = vcmp.eq.f32.partialorder %v10722, 8.507059e+37
        %v10724 = vand.u32 %v10712, 2147483648
        %v10725 = vor.u32 1.1754944e-38, %v10724
        %v10726 = vsel %vm10723, %v10725, %v10721
        %v10727 = vmul.f32 1.0, %v10726
        %v10728 = vperm.slane %v10727, 0
        %v10729 = vmul.f32 %v10531, %v10728
        %v10730 = vmul.f32 %v10532, %v10728
        %v10731 = vld [vmem:[%s340] sm:$0xff]
        %v10732 = vld [vmem:[%s340 + $0x8] sm:$0xff]
        %v10733 = vadd.f32 %v10729, %v10731
        %v10734 = vadd.f32 %v10730, %v10732
        %v10735 = vmax.f32 %v10733, 0.0
        %v10736 = vmax.f32 %v10734, 0.0
        %10737 = vst [vmem:[%s385] sm:$0xff] %v10735
        %10738 = vst [vmem:[%s385 + $0x8] sm:$0xff] %v10736
        %v10739 = vmul.f32 %v10533, %v10728
        %v10740 = vmul.f32 %v10534, %v10728
        %v10741 = vmul.f32 %v10535, %v10728
        %v10742 = vld [vmem:[%s3134] sm:$0xff]
        %v10743 = vld [vmem:[%s3134 + $0x8] sm:$0xff]
        %vm10746 = vcmask 1041408
        %v10747 = vrot.slane %v10742, 6
        %v10748 = vrot.slane %v10743, 6
        %v10749 = vsel %vm10746, %v10747, %v10748
        %v10753 = vadd.f32 %v10739, %v10747
        %v10754 = vadd.f32 %v10740, %v10749
        %v10755 = vadd.f32 %v10741, %v10748
        %v10756 = vmax.f32 %v10753, 0.0
        %v10757 = vmax.f32 %v10754, 0.0
        %v10758 = vmax.f32 %v10755, 0.0
        %s10759 = scalar_lea.vmem %s385, 16 [#allocation9]
        %10760 = vst [vmem:[%s10759 - $0x2] sm:$0xfc] %v10756
        %10761 = vst [vmem:[%s10759 + $0x6] sm:$0xff] %v10757
        %10762 = vst [vmem:[%s10759 + $0xe] sm:$0x3] %v10758
        %v10763 = vmul.f32 %v10536, %v10728
        %v10764 = vmul.f32 %v10537, %v10728
        %v10765 = vld [vmem:[%s3176] sm:$0xff]
        %v10766 = vld [vmem:[%s3176 + $0x8] sm:$0xff]
        %vm10769 = vcmask 1043456
        %v10770 = vrot.slane %v10765, 4
        %v10771 = vrot.slane %v10766, 4
        %v10772 = vsel %vm10769, %v10770, %v10771
        %v10776 = vadd.f32 %v10741, %v10770
        %v10777 = vadd.f32 %v10763, %v10772
        %v10778 = vadd.f32 %v10764, %v10771
        %v10779 = vmax.f32 %v10776, 0.0
        %v10780 = vmax.f32 %v10777, 0.0
        %v10781 = vmax.f32 %v10778, 0.0
        %s10782 = scalar_lea.vmem %s385, 32 [#allocation9]
        %10783 = vst [vmem:[%s10782 - $0x4] sm:$0xf0] %v10779
        %10784 = vst [vmem:[%s10782 + $0x4] sm:$0xff] %v10780
        %10785 = vst [vmem:[%s10782 + $0xc] sm:$0xf] %v10781
        %v10786 = vmul.f32 %v10538, %v10728
        %v10787 = vmul.f32 %v10539, %v10728
        %v10788 = vld [vmem:[%s3218] sm:$0xff]
        %v10789 = vld [vmem:[%s3218 + $0x8] sm:$0xff]
        %v10792 = vrot.slane %v10788, 2
        %v10793 = vrot.slane %v10789, 2
        %v10794 = vsel %vm10637, %v10792, %v10793
        %v10798 = vadd.f32 %v10764, %v10792
        %v10799 = vadd.f32 %v10786, %v10794
        %v10800 = vadd.f32 %v10787, %v10793
        %v10801 = vmax.f32 %v10798, 0.0
        %v10802 = vmax.f32 %v10799, 0.0
        %v10803 = vmax.f32 %v10800, 0.0
        %s10804 = scalar_lea.vmem %s385, 48 [#allocation9]
        %10805 = vst [vmem:[%s10804 - $0x6] sm:$0xc0] %v10801
        %10806 = vst [vmem:[%s10804 + $0x2] sm:$0xff] %v10802
        %10807 = vst [vmem:[%s10804 + $0xa] sm:$0x3f] %v10803
        %v10808 = vmul.f32 %v10540, %v10728
        %v10809 = vmul.f32 %v10541, %v10728
        %v10810 = vld [vmem:[%s3257] sm:$0xff]
        %v10811 = vld [vmem:[%s3257 + $0x8] sm:$0xff]
        %v10812 = vadd.f32 %v10808, %v10810
        %v10813 = vadd.f32 %v10809, %v10811
        %v10814 = vmax.f32 %v10812, 0.0
        %v10815 = vmax.f32 %v10813, 0.0
        %s10816 = scalar_lea.vmem %s385, 64 [#allocation9]
        %10817 = vst [vmem:[%s10816] sm:$0xff] %v10814
        %10818 = vst [vmem:[%s10816 + $0x8] sm:$0xff] %v10815
        %v10819 = vmul.f32 %v10542, %v10728
        %v10820 = vmul.f32 %v10543, %v10728
        %v10821 = vmul.f32 %v10544, %v10728
        %v10822 = vld [vmem:[%s3291] sm:$0xff]
        %v10823 = vld [vmem:[%s3291 + $0x8] sm:$0xff]
        %v10826 = vrot.slane %v10822, 6
        %v10827 = vrot.slane %v10823, 6
        %v10828 = vsel %vm10746, %v10826, %v10827
        %v10832 = vadd.f32 %v10819, %v10826
        %v10833 = vadd.f32 %v10820, %v10828
        %v10834 = vadd.f32 %v10821, %v10827
        %v10835 = vmax.f32 %v10832, 0.0
        %v10836 = vmax.f32 %v10833, 0.0
        %v10837 = vmax.f32 %v10834, 0.0
        %s10838 = scalar_lea.vmem %s385, 80 [#allocation9]
        %10839 = vst [vmem:[%s10838 - $0x2] sm:$0xfc] %v10835
        %10840 = vst [vmem:[%s10838 + $0x6] sm:$0xff] %v10836
        %10841 = vst [vmem:[%s10838 + $0xe] sm:$0x3] %v10837
        %v10842 = vmul.f32 %v10545, %v10728
        %v10843 = vmul.f32 %v10546, %v10728
        %v10844 = vld [vmem:[%s3325] sm:$0xff]
        %v10845 = vld [vmem:[%s3325 + $0x8] sm:$0xff]
        %v10848 = vrot.slane %v10844, 4
        %v10849 = vrot.slane %v10845, 4
        %v10850 = vsel %vm10769, %v10848, %v10849
        %v10854 = vadd.f32 %v10821, %v10848
        %v10855 = vadd.f32 %v10842, %v10850
        %v10856 = vadd.f32 %v10843, %v10849
        %v10857 = vmax.f32 %v10854, 0.0
        %v10858 = vmax.f32 %v10855, 0.0
        %v10859 = vmax.f32 %v10856, 0.0
        %s10860 = scalar_lea.vmem %s385, 96 [#allocation9]
        %10861 = vst [vmem:[%s10860 - $0x4] sm:$0xf0] %v10857
        %10862 = vst [vmem:[%s10860 + $0x4] sm:$0xff] %v10858
        %10863 = vst [vmem:[%s10860 + $0xc] sm:$0xf] %v10859
        %v10864 = vmul.f32 %v10547, %v10728
        %v10865 = vmul.f32 %v10548, %v10728
        %v10866 = vld [vmem:[%s3359] sm:$0xff]
        %v10867 = vld [vmem:[%s3359 + $0x8] sm:$0xff]
        %v10870 = vrot.slane %v10866, 2
        %v10871 = vrot.slane %v10867, 2
        %v10872 = vsel %vm10637, %v10870, %v10871
        %v10876 = vadd.f32 %v10843, %v10870
        %v10877 = vadd.f32 %v10864, %v10872
        %v10878 = vadd.f32 %v10865, %v10871
        %v10879 = vmax.f32 %v10876, 0.0
        %v10880 = vmax.f32 %v10877, 0.0
        %v10881 = vmax.f32 %v10878, 0.0
        %s10882 = scalar_lea.vmem %s385, 112 [#allocation9]
        %10883 = vst [vmem:[%s10882 - $0x6] sm:$0xc0] %v10879
        %10884 = vst [vmem:[%s10882 + $0x2] sm:$0xff] %v10880
        %10885 = vst [vmem:[%s10882 + $0xa] sm:$0x3f] %v10881
        %v10886 = vmul.f32 %v10549, %v10728
        %v10887 = vmul.f32 %v10550, %v10728
        %v10888 = vld [vmem:[%s3391] sm:$0xff]
        %v10889 = vld [vmem:[%s3391 + $0x8] sm:$0xff]
        %v10890 = vadd.f32 %v10886, %v10888
        %v10891 = vadd.f32 %v10887, %v10889
        %v10892 = vmax.f32 %v10890, 0.0
        %v10893 = vmax.f32 %v10891, 0.0
        %s10894 = scalar_lea.vmem %s385, 128 [#allocation9]
        %10895 = vst [vmem:[%s10894] sm:$0xff] %v10892
        %10896 = vst [vmem:[%s10894 + $0x8] sm:$0xff] %v10893
        %v10897 = vmul.f32 %v10551, %v10728
        %v10898 = vmul.f32 %v10552, %v10728
        %v10899 = vmul.f32 %v10553, %v10728
        %v10900 = vld [vmem:[%s3425] sm:$0xff]
        %v10901 = vld [vmem:[%s3425 + $0x8] sm:$0xff]
        %v10904 = vrot.slane %v10900, 6
        %v10905 = vrot.slane %v10901, 6
        %v10906 = vsel %vm10746, %v10904, %v10905
        %v10910 = vadd.f32 %v10897, %v10904
        %v10911 = vadd.f32 %v10898, %v10906
        %v10912 = vadd.f32 %v10899, %v10905
        %v10913 = vmax.f32 %v10910, 0.0
        %v10914 = vmax.f32 %v10911, 0.0
        %v10915 = vmax.f32 %v10912, 0.0
        %s10916 = scalar_lea.vmem %s385, 144 [#allocation9]
        %10917 = vst [vmem:[%s10916 - $0x2] sm:$0xfc] %v10913
        %10918 = vst [vmem:[%s10916 + $0x6] sm:$0xff] %v10914
        %10919 = vst [vmem:[%s10916 + $0xe] sm:$0x3] %v10915
        %v10920 = vmul.f32 %v10554, %v10728
        %v10921 = vmul.f32 %v10555, %v10728
        %v10922 = vld [vmem:[%s3459] sm:$0xff]
        %v10923 = vld [vmem:[%s3459 + $0x8] sm:$0xff]
        %v10926 = vrot.slane %v10922, 4
        %v10927 = vrot.slane %v10923, 4
        %v10928 = vsel %vm10769, %v10926, %v10927
        %v10932 = vadd.f32 %v10899, %v10926
        %v10933 = vadd.f32 %v10920, %v10928
        %v10934 = vadd.f32 %v10921, %v10927
        %v10935 = vmax.f32 %v10932, 0.0
        %v10936 = vmax.f32 %v10933, 0.0
        %v10937 = vmax.f32 %v10934, 0.0
        %s10938 = scalar_lea.vmem %s385, 160 [#allocation9]
        %10939 = vst [vmem:[%s10938 - $0x4] sm:$0xf0] %v10935
        %10940 = vst [vmem:[%s10938 + $0x4] sm:$0xff] %v10936
        %10941 = vst [vmem:[%s10938 + $0xc] sm:$0xf] %v10937
        %v10942 = vmul.f32 %v10556, %v10728
        %v10943 = vmul.f32 %v10557, %v10728
        %v10944 = vld [vmem:[%s3493] sm:$0xff]
        %v10945 = vld [vmem:[%s3493 + $0x8] sm:$0xff]
        %v10948 = vrot.slane %v10944, 2
        %v10949 = vrot.slane %v10945, 2
        %v10950 = vsel %vm10637, %v10948, %v10949
        %v10954 = vadd.f32 %v10921, %v10948
        %v10955 = vadd.f32 %v10942, %v10950
        %v10956 = vadd.f32 %v10943, %v10949
        %v10957 = vmax.f32 %v10954, 0.0
        %v10958 = vmax.f32 %v10955, 0.0
        %v10959 = vmax.f32 %v10956, 0.0
        %s10960 = scalar_lea.vmem %s385, 176 [#allocation9]
        %10961 = vst [vmem:[%s10960 - $0x6] sm:$0xc0] %v10957
        %10962 = vst [vmem:[%s10960 + $0x2] sm:$0xff] %v10958
        %10963 = vst [vmem:[%s10960 + $0xa] sm:$0x3f] %v10959
        %v10964 = vmul.f32 %v10558, %v10728
        %v10965 = vmul.f32 %v10559, %v10728
        %v10966 = vld [vmem:[%s3525] sm:$0xff]
        %v10967 = vld [vmem:[%s3525 + $0x8] sm:$0xff]
        %v10968 = vadd.f32 %v10964, %v10966
        %v10969 = vadd.f32 %v10965, %v10967
        %v10970 = vmax.f32 %v10968, 0.0
        %v10971 = vmax.f32 %v10969, 0.0
        %s10972 = scalar_lea.vmem %s385, 192 [#allocation9]
        %10973 = vst [vmem:[%s10972] sm:$0xff] %v10970
        %10974 = vst [vmem:[%s10972 + $0x8] sm:$0xff] %v10971
        %v10975 = vmul.f32 %v10560, %v10728
        %v10976 = vmul.f32 %v10561, %v10728
        %v10977 = vmul.f32 %v10562, %v10728
        %v10978 = vld [vmem:[%s3559] sm:$0xff]
        %v10979 = vld [vmem:[%s3559 + $0x8] sm:$0xff]
        %v10982 = vrot.slane %v10978, 6
        %v10983 = vrot.slane %v10979, 6
        %v10984 = vsel %vm10746, %v10982, %v10983
        %v10988 = vadd.f32 %v10975, %v10982
        %v10989 = vadd.f32 %v10976, %v10984
        %v10990 = vadd.f32 %v10977, %v10983
        %v10991 = vmax.f32 %v10988, 0.0
        %v10992 = vmax.f32 %v10989, 0.0
        %v10993 = vmax.f32 %v10990, 0.0
        %s10994 = scalar_lea.vmem %s385, 208 [#allocation9]
        %10995 = vst [vmem:[%s10994 - $0x2] sm:$0xfc] %v10991
        %10996 = vst [vmem:[%s10994 + $0x6] sm:$0xff] %v10992
        %10997 = vst [vmem:[%s10994 + $0xe] sm:$0x3] %v10993
        %v10998 = vmul.f32 %v10563, %v10728
        %v10999 = vmul.f32 %v10564, %v10728
        %v11000 = vld [vmem:[%s3593] sm:$0xff]
        %v11001 = vld [vmem:[%s3593 + $0x8] sm:$0xff]
        %v11004 = vrot.slane %v11000, 4
        %v11005 = vrot.slane %v11001, 4
        %v11006 = vsel %vm10769, %v11004, %v11005
        %v11010 = vadd.f32 %v10977, %v11004
        %v11011 = vadd.f32 %v10998, %v11006
        %v11012 = vadd.f32 %v10999, %v11005
        %v11013 = vmax.f32 %v11010, 0.0
        %v11014 = vmax.f32 %v11011, 0.0
        %v11015 = vmax.f32 %v11012, 0.0
        %s11016 = scalar_lea.vmem %s385, 224 [#allocation9]
        %11017 = vst [vmem:[%s11016 - $0x4] sm:$0xf0] %v11013
        %11018 = vst [vmem:[%s11016 + $0x4] sm:$0xff] %v11014
        %11019 = vst [vmem:[%s11016 + $0xc] sm:$0xf] %v11015
        %v11020 = vmul.f32 %v10565, %v10728
        %v11021 = vmul.f32 %v10566, %v10728
        %v11022 = vld [vmem:[%s3627] sm:$0xff]
        %v11023 = vld [vmem:[%s3627 + $0x8] sm:$0xff]
        %v11026 = vrot.slane %v11022, 2
        %v11027 = vrot.slane %v11023, 2
        %v11028 = vsel %vm10637, %v11026, %v11027
        %v11032 = vadd.f32 %v10999, %v11026
        %v11033 = vadd.f32 %v11020, %v11028
        %v11034 = vadd.f32 %v11021, %v11027
        %v11035 = vmax.f32 %v11032, 0.0
        %v11036 = vmax.f32 %v11033, 0.0
        %v11037 = vmax.f32 %v11034, 0.0
        %s11038 = scalar_lea.vmem %s385, 240 [#allocation9]
        %11039 = vst [vmem:[%s11038 - $0x6] sm:$0xc0] %v11035
        %11040 = vst [vmem:[%s11038 + $0x2] sm:$0xff] %v11036
        %11041 = vst [vmem:[%s11038 + $0xa] sm:$0x3f] %v11037
        %s11042 = sand.u32 %s229, 1
        %s11043 = scalar_lea.sflag [#allocation5], %s11042
        %s11044 = sand.u32 %s229, 1
        %s11045 = smul.addr %s11044, 256
        %s11046 = scalar_lea.vmem [#allocation9], %s11045
        // Predicated region
        $region69: #{tpu_custom_call.1} parent=55 // pred_check
          %p11047 = pneg %p239
        $region70: #{tpu_custom_call.1} parent=55 // pred_check_branch
          %11049 = sbr.rel (%p11047) target = $region72
        $region71: #{tpu_custom_call.1} parent=55 // pred_region
          %11051 = vsyncadd %s11043, 0
          %s11052 = smul.addr %s27, 32
          %s11053 = smul.addr %s11052, 8
          %s11054 = scalar_lea.hbm %s9, %s11053
          %s11055 = sshll.u32 %s11046, 4
          %s11056 = int_to_ptr.vmem [resolvable:$true] %s11055
          %s11057 = sshll.u32 %s11054, 4
          %s11058 = int_to_ptr.hbm [resolvable:$true] %s11057
          %11063 = dma.vmem_to_hbm [thread:$0]  %s11056, 4096, %s11058, %s11043, 128, 128, 8
        $region72: #{tpu_custom_call.1} parent=55 // pred_fallthru
          _
      $region56: #{tpu_custom_call.1} parent=5 // pred_fallthru
        _
      %p11064 = scmp.le.s32.totalorder 2, %s22
      // Predicated region
      $region73: #{tpu_custom_call.1} parent=5 // pred_check
        %p11065 = pneg %p11064
      $region74: #{tpu_custom_call.1} parent=5 // pred_check_branch
        %11067 = sbr.rel (%p11065) target = $region76
      $region75: #{tpu_custom_call.1} parent=5 // pred_region
        %s11068 = ssub.s32 %s22, 2
        // Predicated region
        $region77: #{tpu_custom_call.1} parent=75 // pred_check
          %p11069 = pneg %p245
        $region78: #{tpu_custom_call.1} parent=75 // pred_check_branch
          %11071 = sbr.rel (%p11069) target = $region80
        $region79: #{tpu_custom_call.1} parent=75 // pred_region
          %s11072 = sand.u32 %s230, 1
          %s11073 = scalar_lea.sflag [#allocation5], %s11072
          %s11074 = sand.u32 %s230, 1
          %s11075 = smul.addr %s11074, 256
          %s11076 = scalar_lea.vmem [#allocation9], %s11075
          %11078 = dma.done %s11073, 4096
        $region80: #{tpu_custom_call.1} parent=75 // pred_fallthru
          _
      $region76: #{tpu_custom_call.1} parent=5 // pred_fallthru
        _
    $region6: #{tpu_custom_call.1} parent=1 // loop_footer
      %s26 = sadd.s32 1, %s22
    $region7: #{tpu_custom_call.1} parent=1 // loop_footer_branch
      %21 = sbr.rel target = $region3
    $region8: #{tpu_custom_call.1} parent=1 // loop_exit
      _
    %11079 = vsyncpa [#allocation4], 1
    %s11080 = scalar_lea.sflag [#allocation4], 1
    %11081 = vsyncpa %s11080, 1
    %11082 = vsyncpa [#allocation7], 1
    %11083 = vsyncpa [#allocation5], 1
    %s11084 = scalar_lea.sflag [#allocation5], 1
    %11085 = vsyncpa %s11084, 1

</llo_original>
